<compile_context>
chip_gen: v7x
topology: tpu7x:2x2x1
jax: 0.10.0
libtpu: 0.0.40
codegen_flags: <defaults>
</compile_context>

<pallas_src>
import jax
import jax.numpy as jnp
from jax.experimental import pallas as pl
from jax.experimental.pallas import tpu as pltpu  # noqa: F401  (TPU backend assumed)


# ----------------------------- Pallas kernel -----------------------------

def _fused_model_kernel(x_ref, wexp_ref, g0_ref, g1_ref, b1_ref, w2exp_ref, b2_ref,
                        v2_ref, v4_ref):
    """Whole forward pass in one kernel.

    x_ref    : (Cin*H, W)        input, NCHW flattened to (c*H + i, j)
    wexp_ref : (2*C1*OH, Cin*H)  convT1 weights expanded over (kj, out_chan, out_row) with the
                                 padding=1 row-crop already applied
    g0/g1    : (W, OW)           column placement + crop selection matrices (tap kj = 0 / 1)
    b1_ref   : (C1*OH, 1)        convT1 bias repeated per output row
    w2exp_ref: (C2*OH2, C1*OH)   convT2 (1x1) weights expanded over rows, with its row-crop
    b2_ref   : (C2*OH2, 1)
    v2_ref   : (C1*OH, OW)       sigmoid(v1)          (== NCHW up to a free reshape)
    v4_ref   : (C2*OH2, OW2)     sigmoid(convT2(v1))  (== NCHW up to a free reshape)
    """
    hp = jax.lax.Precision.HIGHEST

    # Channel mix + output-row placement + row crop for conv_transpose_1 (both kj taps at once).
    t = jnp.dot(wexp_ref[...], x_ref[...],
                preferred_element_type=jnp.float32, precision=hp)        # (2*C1*OH, W)

    # Column placement + column crop via the two tap-selection matmuls, then bias -> v1.
    half = wexp_ref.shape[0] // 2
    v1 = (jnp.dot(t[:half, :], g0_ref[...],
                  preferred_element_type=jnp.float32, precision=hp)
          + jnp.dot(t[half:, :], g1_ref[...],
                    preferred_element_type=jnp.float32, precision=hp)
          + b1_ref[...])                                                  # (C1*OH, OW)

    v2_ref[...] = jax.nn.sigmoid(v1)

    # 1x1 transposed conv (pure channel mix) with padding=1: row crop is folded into w2exp,
    # column crop is a static lane slice taken BEFORE the sigmoid.
    v3 = jnp.dot(w2exp_ref[...], v1,
                 preferred_element_type=jnp.float32, precision=hp) + b2_ref[...]  # (C2*OH2, OW)
    ow2 = v4_ref.shape[1]
    v4_ref[...] = jax.nn.sigmoid(v3[:, 1:1 + ow2])


# ----------------------------- one-time weight expansion -----------------------------

def prepare_constants(params, H, W):
    """Expand the ConvTranspose weights ONCE into matmul-friendly constant matrices.

    Derivation (stride == kernel == 2, padding == 1):
      v1[o, r, c] = sum_ci x[ci, (r+1)//2, (c+1)//2] * w1[ci, o, (r+1)%2, (c+1)%2] + b1[o]
    so the row index / row-parity / crop go into `wexp`, and the column index / parity / crop
    go into the (W, OW) selection matrices g0 (kj=0) and g1 (kj=1).
    """
    w1, b1, w2, b2 = params
    cin, c1 = w1.shape[0], w1.shape[1]
    c2 = w2.shape[1]
    OH, OW = 2 * H - 2, 2 * W - 2      # conv_transpose_1 output size (padding=1 crop applied)
    OH2 = OH - 2                        # conv_transpose_2 output rows (padding=1 crop)
    f32 = jnp.float32

    r = jnp.arange(OH)
    row_sel = (jnp.arange(H)[None, :] == ((r + 1) // 2)[:, None]).astype(f32)      # (OH, H)
    w1_r = jnp.take(w1.astype(f32), (r + 1) % 2, axis=2)                            # (Cin, C1, OH, 2)
    # rows ordered (kj, o, r)  /  cols ordered (ci, i)  -> matches x flattened as (ci*H + i, j)
    wexp = jnp.einsum('cork,ri->korci', w1_r, row_sel).reshape(2 * c1 * OH, cin * H)

    j = jnp.arange(W)[:, None]
    c = jnp.arange(OW)[None, :]
    g0 = (2 * j == c + 1).astype(f32)          # tap kj = 0 lands on odd output columns
    g1 = (2 * j + 1 == c + 1).astype(f32)      # tap kj = 1 lands on even output columns
    b1e = jnp.repeat(b1.astype(f32), OH)[:, None]                                   # (C1*OH, 1)

    # conv_transpose_2 (1x1, padding=1): channel mix + row crop folded into one matrix.
    row_sel2 = (jnp.arange(OH)[None, :] == (jnp.arange(OH2)[:, None] + 1)).astype(f32)  # (OH2, OH)
    w2exp = jnp.einsum('oa,sr->asor', w2[:, :, 0, 0].astype(f32),
                       row_sel2).reshape(c2 * OH2, c1 * OH)
    b2e = jnp.repeat(b2.astype(f32), OH2)[:, None]                                  # (C2*OH2, 1)

    return (wexp, g0, g1, b1e, w2exp, b2e)


# ----------------------------- forward wrapper -----------------------------

def _full_spec(shape):
    # single-block spec: block == full array (satisfies the (8,128) rule trivially)
    return pl.BlockSpec(shape, lambda: (0,) * len(shape))


@jax.jit
def model_forward(x_nchw, consts):
    """Forward pass of the PyTorch Model. Returns (v2, v4) in NCHW.

    # TODO(synk): the original `v5 = v4 + v2` is not broadcast-compatible
    # ((1,6,2H-4,2W-4) vs (1,8,2H-2,2W-2)) and raises in PyTorch itself, so the add is
    # not performed; we return (v2, v4) instead of fabricating a v5.
    """
    wexp, g0, g1, b1e, w2exp, b2e = consts
    _, cin, H, W = x_nchw.shape
    OH, OW = 2 * H - 2, 2 * W - 2
    OH2, OW2 = OH - 2, OW - 2
    c1 = b1e.shape[0] // OH
    c2 = b2e.shape[0] // OH2

    x_flat = x_nchw[0].reshape(cin * H, W)   # free: NCHW is already (c*H + i, j) row-major

    v2_flat, v4_flat = pl.pallas_call(
        _fused_model_kernel,
        out_shape=(jax.ShapeDtypeStruct((c1 * OH, OW), jnp.float32),
                   jax.ShapeDtypeStruct((c2 * OH2, OW2), jnp.float32)),
        in_specs=[_full_spec(x_flat.shape), _full_spec(wexp.shape),
                  _full_spec(g0.shape), _full_spec(g1.shape), _full_spec(b1e.shape),
                  _full_spec(w2exp.shape), _full_spec(b2e.shape)],
        out_specs=(_full_spec((c1 * OH, OW)), _full_spec((c2 * OH2, OW2))),
        # NOTE: single block, no grid -- the whole problem is a few hundred KB of VMEM.
        # If scaled up (batch>1 / 64x64+ spatial), add a grid over row blocks and mark it
        # dimension_semantics=("parallel",) so v7x's two TensorCores split the work, and
        # re-derive tile sizes against its 64 MiB VMEM.
    )(x_flat, wexp, g0, g1, b1e, w2exp, b2e)

    # Outputs are already NCHW-ordered: only free reshapes, no transposes.
    v2 = v2_flat.reshape(1, c1, OH, OW)
    v4 = v4_flat.reshape(1, c2, OH2, OW2)
    return v2, v4


# ----------------------------- pure-JAX reference -----------------------------

def reference_forward(x_nchw, params):
    w1, b1, w2, b2 = params
    x = x_nchw[0]
    cin, H, W = x.shape
    c1 = w1.shape[1]
    out_full = jnp.zeros((c1, 2 * H, 2 * W), jnp.float32)
    for ki in range(2):
        for kj in range(2):
            contrib = jnp.einsum('ihw,io->ohw', x, w1[:, :, ki, kj], precision='highest')
            out_full = out_full.at[:, ki::2, kj::2].add(contrib)
    v1 = out_full[:, 1:-1, 1:-1] + b1[:, None, None]
    v2 = jax.nn.sigmoid(v1)
    v3 = jnp.einsum('ihw,io->ohw', v1[:, 1:-1, 1:-1], w2[:, :, 0, 0],
                    precision='highest') + b2[:, None, None]
    v4 = jax.nn.sigmoid(v3)
    return v2[None], v4[None]


# ----------------------------- main -----------------------------

if __name__ == "__main__":
    key = jax.random.PRNGKey(0)
    kx, kw1, kb1, kw2, kb2 = jax.random.split(key, 5)

    # Small shapes consistent with the module (original input was (1, 7, 64, 64)).
    H = W = 16
    x1 = jax.random.normal(kx, (1, 7, H, W), dtype=jnp.float32)

    # ConvTranspose2d weights use the PyTorch layout (in_ch, out_ch, kH, kW).
    w1 = 0.1 * jax.random.normal(kw1, (7, 8, 2, 2), dtype=jnp.float32)
    b1 = 0.1 * jax.random.normal(kb1, (8,), dtype=jnp.float32)
    w2 = 0.1 * jax.random.normal(kw2, (8, 6, 1, 1), dtype=jnp.float32)
    b2 = 0.1 * jax.random.normal(kb2, (6,), dtype=jnp.float32)
    params = (w1, b1, w2, b2)

    # One-time weight expansion (kept out of the per-call path).
    consts = prepare_constants(params, H, W)

    v2, v4 = model_forward(x1, consts)
    jax.block_until_ready((v2, v4))

    v2_ref, v4_ref = reference_forward(x1, params)
    assert v2.shape == (1, 8, 2 * H - 2, 2 * W - 2)
    assert v4.shape == (1, 6, 2 * H - 4, 2 * W - 4)
    assert bool(jnp.allclose(v2, v2_ref, atol=2e-3, rtol=2e-3))
    assert bool(jnp.allclose(v4, v4_ref, atol=2e-3, rtol=2e-3))

    print("KERNEL_OK")
</pallas_src>

<mosaic_0001>
module attributes {stable_mosaic.version = 11 : i64} {
  func.func @_fused_model_kernel(%arg0: memref<112x16xf32, #tpu.memory_space<vmem>>, %arg1: memref<480x112xf32, #tpu.memory_space<vmem>>, %arg2: memref<16x30xf32, #tpu.memory_space<vmem>>, %arg3: memref<16x30xf32, #tpu.memory_space<vmem>>, %arg4: memref<240x1xf32, #tpu.memory_space<vmem>>, %arg5: memref<168x240xf32, #tpu.memory_space<vmem>>, %arg6: memref<168x1xf32, #tpu.memory_space<vmem>>, %arg7: memref<240x30xf32, #tpu.memory_space<vmem>>, %arg8: memref<168x28xf32, #tpu.memory_space<vmem>>) attributes {dimension_semantics = [], scalar_prefetch = 0 : i64, scratch_operands = 0 : i64, tpu.core_type = #tpu.core_type<tc>} {
    %c0 = arith.constant 0 : index
    %c0_0 = arith.constant 0 : index
    %0 = vector.load %arg1[%c0, %c0_0] : memref<480x112xf32, #tpu.memory_space<vmem>>, vector<480x112xf32>
    %c0_1 = arith.constant 0 : index
    %c0_2 = arith.constant 0 : index
    %1 = vector.load %arg0[%c0_1, %c0_2] : memref<112x16xf32, #tpu.memory_space<vmem>>, vector<112x16xf32>
    %cst = arith.constant dense<0.000000e+00> : vector<480x16xf32>
    %2 = tpu.matmul %0, %1, %cst {dimension_numbers = #tpu.dot_dimension_numbers<[1], [0], [0], [1], [0, 0, 1, 1], [], []>, precision = #tpu.contract_precision<fp32>} : vector<480x112xf32>, vector<112x16xf32>, vector<480x16xf32> -> vector<480x16xf32>
    %3 = vector.extract_strided_slice %2 {offsets = [0, 0], sizes = [240, 16], strides = [1, 1]} : vector<480x16xf32> to vector<240x16xf32>
    %c0_3 = arith.constant 0 : index
    %c0_4 = arith.constant 0 : index
    %4 = vector.load %arg2[%c0_3, %c0_4] : memref<16x30xf32, #tpu.memory_space<vmem>>, vector<16x30xf32>
    %cst_5 = arith.constant dense<0.000000e+00> : vector<240x30xf32>
    %5 = tpu.matmul %3, %4, %cst_5 {dimension_numbers = #tpu.dot_dimension_numbers<[1], [0], [0], [1], [0, 0, 1, 1], [], []>, precision = #tpu.contract_precision<fp32>} : vector<240x16xf32>, vector<16x30xf32>, vector<240x30xf32> -> vector<240x30xf32>
    %6 = vector.extract_strided_slice %2 {offsets = [240, 0], sizes = [240, 16], strides = [1, 1]} : vector<480x16xf32> to vector<240x16xf32>
    %c0_6 = arith.constant 0 : index
    %c0_7 = arith.constant 0 : index
    %7 = vector.load %arg3[%c0_6, %c0_7] : memref<16x30xf32, #tpu.memory_space<vmem>>, vector<16x30xf32>
    %cst_8 = arith.constant dense<0.000000e+00> : vector<240x30xf32>
    %8 = tpu.matmul %6, %7, %cst_8 {dimension_numbers = #tpu.dot_dimension_numbers<[1], [0], [0], [1], [0, 0, 1, 1], [], []>, precision = #tpu.contract_precision<fp32>} : vector<240x16xf32>, vector<16x30xf32>, vector<240x30xf32> -> vector<240x30xf32>
    %9 = arith.addf %5, %8 : vector<240x30xf32>
    %c0_9 = arith.constant 0 : index
    %c0_10 = arith.constant 0 : index
    %10 = vector.load %arg4[%c0_9, %c0_10] : memref<240x1xf32, #tpu.memory_space<vmem>>, vector<240x1xf32>
    %11 = vector.broadcast %10 : vector<240x1xf32> to vector<240x30xf32>
    %12 = arith.addf %9, %11 : vector<240x30xf32>
    %13 = arith.negf %12 : vector<240x30xf32>
    %14 = math.exp %13 : vector<240x30xf32>
    %cst_11 = arith.constant 1.000000e+00 : f32
    %15 = vector.broadcast %cst_11 : f32 to vector<240x30xf32>
    %16 = arith.addf %15, %14 : vector<240x30xf32>
    %17 = arith.divf %15, %16 : vector<240x30xf32>
    %c0_12 = arith.constant 0 : index
    %c0_13 = arith.constant 0 : index
    %18 = vector.load %arg7[%c0_12, %c0_13] : memref<240x30xf32, #tpu.memory_space<vmem>>, vector<240x30xf32>
    tpu.vector_store %arg7[%c0_12, %c0_13], %17 {strides = array<i32>} : memref<240x30xf32, #tpu.memory_space<vmem>>, vector<240x30xf32>,
    %c0_14 = arith.constant 0 : index
    %c0_15 = arith.constant 0 : index
    %19 = vector.load %arg5[%c0_14, %c0_15] : memref<168x240xf32, #tpu.memory_space<vmem>>, vector<168x240xf32>
    %cst_16 = arith.constant dense<0.000000e+00> : vector<168x30xf32>
    %20 = tpu.matmul %19, %12, %cst_16 {dimension_numbers = #tpu.dot_dimension_numbers<[1], [0], [0], [1], [0, 0, 1, 1], [], []>, precision = #tpu.contract_precision<fp32>} : vector<168x240xf32>, vector<240x30xf32>, vector<168x30xf32> -> vector<168x30xf32>
    %c0_17 = arith.constant 0 : index
    %c0_18 = arith.constant 0 : index
    %21 = vector.load %arg6[%c0_17, %c0_18] : memref<168x1xf32, #tpu.memory_space<vmem>>, vector<168x1xf32>
    %22 = vector.broadcast %21 : vector<168x1xf32> to vector<168x30xf32>
    %23 = arith.addf %20, %22 : vector<168x30xf32>
    %24 = vector.extract_strided_slice %23 {offsets = [0, 1], sizes = [168, 28], strides = [1, 1]} : vector<168x30xf32> to vector<168x28xf32>
    %25 = arith.negf %24 : vector<168x28xf32>
    %26 = math.exp %25 : vector<168x28xf32>
    %cst_19 = arith.constant 1.000000e+00 : f32
    %27 = vector.broadcast %cst_19 : f32 to vector<168x28xf32>
    %28 = arith.addf %27, %26 : vector<168x28xf32>
    %29 = arith.divf %27, %28 : vector<168x28xf32>
    %c0_20 = arith.constant 0 : index
    %c0_21 = arith.constant 0 : index
    %30 = vector.load %arg8[%c0_20, %c0_21] : memref<168x28xf32, #tpu.memory_space<vmem>>, vector<168x28xf32>
    tpu.vector_store %arg8[%c0_20, %c0_21], %29 {strides = array<i32>} : memref<168x28xf32, #tpu.memory_space<vmem>>, vector<168x28xf32>,
    return
  }
}

</mosaic_0001>

<llo_original>
// kernel: model_forward.1
$region0: #{model_forward.1}
  #allocation0 [shape = 'u32[]', space=smem, size = 0x4, offset = 0x4, fixed_abs, tag = 'smem constant byte address 0x4 - core index']
  #allocation1 [shape = 'u32[144,128]{1,0:T(1,128)}', space=vmem, size = 0x12000, scoped, tag = 'internal scratch']
  %s0 = inlined_call_operand.vmem [shape: f32[112,16], index: 0, kind: input, shape index: {}]
  %s1 = inlined_call_operand.vmem [shape: f32[480,112], index: 1, kind: input, shape index: {}]
  %s2 = inlined_call_operand.vmem [shape: f32[16,30], index: 2, kind: input, shape index: {}]
  %s3 = inlined_call_operand.vmem [shape: f32[16,30], index: 3, kind: input, shape index: {}]
  %s4 = inlined_call_operand.vmem [shape: f32[240,1], index: 4, kind: input, shape index: {}]
  %s5 = inlined_call_operand.vmem [shape: f32[168,240], index: 5, kind: input, shape index: {}]
  %s6 = inlined_call_operand.vmem [shape: f32[168,1], index: 6, kind: input, shape index: {}]
  %s7 = inlined_call_operand.vmem [shape: f32[240,30], index: 7, kind: output, shape index: {0}]
  %s8 = inlined_call_operand.hbm [shape: f32[168,28], index: 8, kind: output, shape index: {1}]
  %9 = xla_tuple %s7, %s8
  %s10 = sld [smem:[#allocation0]]
  $region46: #{model_forward.1} parent=0
    _
  %s12 = ssub.s32 1, %s10
  %s13 = scalar_select 0, %s12, %s10
  $region1: #{model_forward.1} parent=0
    #allocation2 [shape = 'u8[86016]{0}', space=vmem, size = 0x15000, scoped, tag = 'output window, operand 1, single buffered']
    #allocation3 [shape = 's32[1]{0}', space=sflag, size = 0x4, scoped, tag = 'scoped memory for model_forward.1']
    %14 = vsyncpa [#allocation3], 0
    // Predicated region
    $region2: #{model_forward.1} parent=1 // pred_check
      _
    $region3: #{model_forward.1} parent=1 // pred_check_branch
      %16 = sbr.rel (0) target = $region5
    $region4: #{model_forward.1} parent=1 // pred_region
      _
    $region5: #{model_forward.1} parent=1 // pred_fallthru
      _
    // Predicated region
    $region6: #{model_forward.1} parent=1 // pred_check
      _
    $region7: #{model_forward.1} parent=1 // pred_check_branch
      %18 = sbr.rel (0) target = $region9
    $region8: #{model_forward.1} parent=1 // pred_region
      _
    $region9: #{model_forward.1} parent=1 // pred_fallthru
      _
    // Predicated region
    $region10: #{model_forward.1} parent=1 // pred_check
      _
    $region11: #{model_forward.1} parent=1 // pred_check_branch
      %20 = sbr.rel (0) target = $region13
    $region12: #{model_forward.1} parent=1 // pred_region
      _
    $region13: #{model_forward.1} parent=1 // pred_fallthru
      _
    // Predicated region
    $region14: #{model_forward.1} parent=1 // pred_check
      _
    $region15: #{model_forward.1} parent=1 // pred_check_branch
      %22 = sbr.rel (0) target = $region17
    $region16: #{model_forward.1} parent=1 // pred_region
      _
    $region17: #{model_forward.1} parent=1 // pred_fallthru
      _
    // Predicated region
    $region18: #{model_forward.1} parent=1 // pred_check
      _
    $region19: #{model_forward.1} parent=1 // pred_check_branch
      %24 = sbr.rel (0) target = $region21
    $region20: #{model_forward.1} parent=1 // pred_region
      _
    $region21: #{model_forward.1} parent=1 // pred_fallthru
      _
    // Predicated region
    $region22: #{model_forward.1} parent=1 // pred_check
      _
    $region23: #{model_forward.1} parent=1 // pred_check_branch
      %26 = sbr.rel (0) target = $region25
    $region24: #{model_forward.1} parent=1 // pred_region
      _
    $region25: #{model_forward.1} parent=1 // pred_fallthru
      _
    // Predicated region
    $region26: #{model_forward.1} parent=1 // pred_check
      _
    $region27: #{model_forward.1} parent=1 // pred_check_branch
      %28 = sbr.rel (0) target = $region29
    $region28: #{model_forward.1} parent=1 // pred_region
      _
    $region29: #{model_forward.1} parent=1 // pred_fallthru
      _
    %v29 = vld [vmem:[%s1] sm:$0xff]
    %v30 = vld [vmem:[%s1 + $0x8] sm:$0xff]
    %v31 = vld [vmem:[%s1 + $0x10] sm:$0xff]
    %v32 = vld [vmem:[%s1 + $0x18] sm:$0xff]
    %v33 = vld [vmem:[%s1 + $0x20] sm:$0xff]
    %v34 = vld [vmem:[%s1 + $0x28] sm:$0xff]
    %v35 = vld [vmem:[%s1 + $0x30] sm:$0xff]
    %v36 = vld [vmem:[%s1 + $0x38] sm:$0xff]
    %v37 = vld [vmem:[%s1 + $0x40] sm:$0xff]
    %v38 = vld [vmem:[%s1 + $0x48] sm:$0xff]
    %v39 = vld [vmem:[%s1 + $0x50] sm:$0xff]
    %v40 = vld [vmem:[%s1 + $0x58] sm:$0xff]
    %v41 = vld [vmem:[%s1 + $0x60] sm:$0xff]
    %v42 = vld [vmem:[%s1 + $0x68] sm:$0xff]
    %v43 = vld [vmem:[%s1 + $0x70] sm:$0xff]
    %v44 = vld [vmem:[%s1 + $0x78] sm:$0xff]
    %v45 = vld [vmem:[%s1 + $0x80] sm:$0xff]
    %v46 = vld [vmem:[%s1 + $0x88] sm:$0xff]
    %v47 = vld [vmem:[%s1 + $0x90] sm:$0xff]
    %v48 = vld [vmem:[%s1 + $0x98] sm:$0xff]
    %v49 = vld [vmem:[%s1 + $0xa0] sm:$0xff]
    %v50 = vld [vmem:[%s1 + $0xa8] sm:$0xff]
    %v51 = vld [vmem:[%s1 + $0xb0] sm:$0xff]
    %v52 = vld [vmem:[%s1 + $0xb8] sm:$0xff]
    %v53 = vld [vmem:[%s1 + $0xc0] sm:$0xff]
    %v54 = vld [vmem:[%s1 + $0xc8] sm:$0xff]
    %v55 = vld [vmem:[%s1 + $0xd0] sm:$0xff]
    %v56 = vld [vmem:[%s1 + $0xd8] sm:$0xff]
    %v57 = vld [vmem:[%s1 + $0xe0] sm:$0xff]
    %v58 = vld [vmem:[%s1 + $0xe8] sm:$0xff]
    %v59 = vld [vmem:[%s1 + $0xf0] sm:$0xff]
    %v60 = vld [vmem:[%s1 + $0xf8] sm:$0xff]
    %v61 = vld [vmem:[%s1 + $0x100] sm:$0xff]
    %v62 = vld [vmem:[%s1 + $0x108] sm:$0xff]
    %v63 = vld [vmem:[%s1 + $0x110] sm:$0xff]
    %v64 = vld [vmem:[%s1 + $0x118] sm:$0xff]
    %v65 = vld [vmem:[%s1 + $0x120] sm:$0xff]
    %v66 = vld [vmem:[%s1 + $0x128] sm:$0xff]
    %v67 = vld [vmem:[%s1 + $0x130] sm:$0xff]
    %v68 = vld [vmem:[%s1 + $0x138] sm:$0xff]
    %v69 = vld [vmem:[%s1 + $0x140] sm:$0xff]
    %v70 = vld [vmem:[%s1 + $0x148] sm:$0xff]
    %v71 = vld [vmem:[%s1 + $0x150] sm:$0xff]
    %v72 = vld [vmem:[%s1 + $0x158] sm:$0xff]
    %v73 = vld [vmem:[%s1 + $0x160] sm:$0xff]
    %v74 = vld [vmem:[%s1 + $0x168] sm:$0xff]
    %v75 = vld [vmem:[%s1 + $0x170] sm:$0xff]
    %v76 = vld [vmem:[%s1 + $0x178] sm:$0xff]
    %v77 = vld [vmem:[%s1 + $0x180] sm:$0xff]
    %v78 = vld [vmem:[%s1 + $0x188] sm:$0xff]
    %v79 = vld [vmem:[%s1 + $0x190] sm:$0xff]
    %v80 = vld [vmem:[%s1 + $0x198] sm:$0xff]
    %v81 = vld [vmem:[%s1 + $0x1a0] sm:$0xff]
    %v82 = vld [vmem:[%s1 + $0x1a8] sm:$0xff]
    %v83 = vld [vmem:[%s1 + $0x1b0] sm:$0xff]
    %v84 = vld [vmem:[%s1 + $0x1b8] sm:$0xff]
    %v85 = vld [vmem:[%s1 + $0x1c0] sm:$0xff]
    %v86 = vld [vmem:[%s1 + $0x1c8] sm:$0xff]
    %v87 = vld [vmem:[%s1 + $0x1d0] sm:$0xff]
    %v88 = vld [vmem:[%s1 + $0x1d8] sm:$0xff]
    %v89 = vld [vmem:[%s0] sm:$0xff]
    %v90 = vld [vmem:[%s0 + $0x8] sm:$0xff]
    %v91 = vld [vmem:[%s0 + $0x10] sm:$0xff]
    %v92 = vld [vmem:[%s0 + $0x18] sm:$0xff]
    %v93 = vld [vmem:[%s0 + $0x20] sm:$0xff]
    %v94 = vld [vmem:[%s0 + $0x28] sm:$0xff]
    %v95 = vld [vmem:[%s0 + $0x30] sm:$0xff]
    %v96 = vld [vmem:[%s0 + $0x38] sm:$0xff]
    %v97 = vld [vmem:[%s0 + $0x40] sm:$0xff]
    %v98 = vld [vmem:[%s0 + $0x48] sm:$0xff]
    %v99 = vld [vmem:[%s0 + $0x50] sm:$0xff]
    %v100 = vld [vmem:[%s0 + $0x58] sm:$0xff]
    %v101 = vld [vmem:[%s0 + $0x60] sm:$0xff]
    %v102 = vld [vmem:[%s0 + $0x68] sm:$0xff]
    %vm103 = vcmask 916480
    %v105 = vsel %vm103, %v29, 0
    %v108 = vsel %vm103, %v30, 0
    %v111 = vsel %vm103, %v31, 0
    %v114 = vsel %vm103, %v32, 0
    %v117 = vsel %vm103, %v33, 0
    %v120 = vsel %vm103, %v34, 0
    %v123 = vsel %vm103, %v35, 0
    %v126 = vsel %vm103, %v36, 0
    %v129 = vsel %vm103, %v37, 0
    %v132 = vsel %vm103, %v38, 0
    %v135 = vsel %vm103, %v39, 0
    %v138 = vsel %vm103, %v40, 0
    %v141 = vsel %vm103, %v41, 0
    %v144 = vsel %vm103, %v42, 0
    %v147 = vsel %vm103, %v43, 0
    %v150 = vsel %vm103, %v44, 0
    %v153 = vsel %vm103, %v45, 0
    %v156 = vsel %vm103, %v46, 0
    %v159 = vsel %vm103, %v47, 0
    %v162 = vsel %vm103, %v48, 0
    %v165 = vsel %vm103, %v49, 0
    %v168 = vsel %vm103, %v50, 0
    %v171 = vsel %vm103, %v51, 0
    %v174 = vsel %vm103, %v52, 0
    %v177 = vsel %vm103, %v53, 0
    %v180 = vsel %vm103, %v54, 0
    %v183 = vsel %vm103, %v55, 0
    %v186 = vsel %vm103, %v56, 0
    %v189 = vsel %vm103, %v57, 0
    %v192 = vsel %vm103, %v58, 0
    %v195 = vsel %vm103, %v59, 0
    %v198 = vsel %vm103, %v60, 0
    %v201 = vsel %vm103, %v61, 0
    %v204 = vsel %vm103, %v62, 0
    %v207 = vsel %vm103, %v63, 0
    %v210 = vsel %vm103, %v64, 0
    %v213 = vsel %vm103, %v65, 0
    %v216 = vsel %vm103, %v66, 0
    %v219 = vsel %vm103, %v67, 0
    %v222 = vsel %vm103, %v68, 0
    %v225 = vsel %vm103, %v69, 0
    %v228 = vsel %vm103, %v70, 0
    %v231 = vsel %vm103, %v71, 0
    %v234 = vsel %vm103, %v72, 0
    %v237 = vsel %vm103, %v73, 0
    %v240 = vsel %vm103, %v74, 0
    %v243 = vsel %vm103, %v75, 0
    %v246 = vsel %vm103, %v76, 0
    %v249 = vsel %vm103, %v77, 0
    %v252 = vsel %vm103, %v78, 0
    %v255 = vsel %vm103, %v79, 0
    %v258 = vsel %vm103, %v80, 0
    %v261 = vsel %vm103, %v81, 0
    %v264 = vsel %vm103, %v82, 0
    %v267 = vsel %vm103, %v83, 0
    %v270 = vsel %vm103, %v84, 0
    %v273 = vsel %vm103, %v85, 0
    %v276 = vsel %vm103, %v86, 0
    %v279 = vsel %vm103, %v87, 0
    %v282 = vsel %vm103, %v88, 0
    %284 = vmatprep.subr.mxu0 0.0
    %v285 = vand.u32 %v89, 4294901760
    %286 = vmatpush1.msra.mxu0 %v285
    %287 = vmatprep.subr.mxu0 0.0
    %v288 = vand.u32 %v90, 4294901760
    %289 = vmatpush1.msra.mxu0 %v288
    %290 = vmatprep.subr.mxu0 0.0
    %v291 = vand.u32 %v91, 4294901760
    %292 = vmatpush1.msra.mxu0 %v291
    %293 = vmatprep.subr.mxu0 0.0
    %v294 = vand.u32 %v92, 4294901760
    %295 = vmatpush1.msra.mxu0 %v294
    %296 = vmatprep.subr.mxu0 0.0
    %v297 = vand.u32 %v93, 4294901760
    %298 = vmatpush1.msra.mxu0 %v297
    %299 = vmatprep.subr.mxu0 0.0
    %v300 = vand.u32 %v94, 4294901760
    %301 = vmatpush1.msra.mxu0 %v300
    %302 = vmatprep.subr.mxu0 0.0
    %v303 = vand.u32 %v95, 4294901760
    %304 = vmatpush1.msra.mxu0 %v303
    %305 = vmatprep.subr.mxu0 0.0
    %v306 = vand.u32 %v96, 4294901760
    %307 = vmatpush1.msra.mxu0 %v306
    %308 = vmatprep.subr.mxu0 0.0
    %v309 = vand.u32 %v97, 4294901760
    %310 = vmatpush1.msra.mxu0 %v309
    %311 = vmatprep.subr.mxu0 0.0
    %v312 = vand.u32 %v98, 4294901760
    %313 = vmatpush1.msra.mxu0 %v312
    %314 = vmatprep.subr.mxu0 0.0
    %v315 = vand.u32 %v99, 4294901760
    %316 = vmatpush1.msra.mxu0 %v315
    %317 = vmatprep.subr.mxu0 0.0
    %v318 = vand.u32 %v100, 4294901760
    %319 = vmatpush1.msra.mxu0 %v318
    %320 = vmatprep.subr.mxu0 0.0
    %v321 = vand.u32 %v101, 4294901760
    %322 = vmatpush1.msra.mxu0 %v321
    %323 = vmatprep.subr.mxu0 0.0
    %v324 = vand.u32 %v102, 4294901760
    %325 = vmatpush1.msra.mxu0 %v324
    %326 = vmatprep.subr.mxu0 0.0
    %327 = vmatpush1.msra.mxu0 0.0
    %328 = vmatprep.subr.mxu0 0.0
    %329 = vmatpush1.msra.mxu0 0.0
    %330 = vmatprep.subr.mxu0 0.0
    %331 = vmatpush1.msra.mxu0 0.0
    %332 = vmatprep.subr.mxu0 0.0
    %333 = vmatpush1.msra.mxu0 0.0
    %334 = vmatprep.subr.mxu0 0.0
    %335 = vmatpush1.msra.mxu0 0.0
    %336 = vmatprep.subr.mxu0 0.0
    %337 = vmatpush1.msra.mxu0 0.0
    %338 = vmatprep.subr.mxu0 0.0
    %339 = vmatpush1.msra.mxu0 0.0
    %340 = vmatprep.subr.mxu0 0.0
    %341 = vmatpush1.msra.mxu0 0.0
    %342 = vmatprep.subr.mxu0 0.0
    %343 = vmatpush1.msra.mxu0 0.0
    %344 = vmatprep.subr.mxu0 0.0
    %345 = vmatpush1.msra.mxu0 0.0
    %346 = vmatprep.subr.mxu0 0.0
    %347 = vmatpush1.msra.mxu0 0.0
    %348 = vmatprep.subr.mxu0 0.0
    %349 = vmatpush1.msra.mxu0 0.0
    %350 = vmatprep.subr.mxu0 0.0
    %351 = vmatpush1.msra.mxu0 0.0
    %352 = vmatprep.subr.mxu0 0.0
    %353 = vmatpush1.msra.mxu0 0.0
    %354 = vmatprep.subr.mxu0 0.0
    %355 = vmatpush1.msra.mxu0 0.0
    %356 = vmatprep.subr.mxu0 0.0
    %357 = vmatpush1.msra.mxu0 0.0
    %358 = vmatprep.subr.mxu0 0.0
    %359 = vmatpush1.msra.mxu0 0.0
    %360 = vmatprep.subr.mxu0 0.0
    %361 = vmatpush1.msra.mxu0 0.0
    %362 = vmatprep.mubr.f32.mxu0 0.0
    %v363 = vand.u32 %v105, 4294901760
    %v364 = vsub.f32 %v105, %v363
    %v365 = vand.u32 %v364, 4294901760
    %v366 = vsub.f32 %v364, %v365
    %v367 = vand.u32 %v366, 4294901760
    %368 = vmatmul.mubr.f32.gmra.mrb[0].mxu0 %v367
    %v369 = vpop.f32.mrb[0].mxu0
    %v370 = vadd.f32 0.0, %v369
    %v371 = vpop.f32.mrb[0].mxu0
    %372 = vmatprep.mubr.f32.mxu0 0.0
    %v373 = vand.u32 %v108, 4294901760
    %v374 = vsub.f32 %v108, %v373
    %v375 = vand.u32 %v374, 4294901760
    %v376 = vsub.f32 %v374, %v375
    %v377 = vand.u32 %v376, 4294901760
    %378 = vmatmul.mubr.f32.gmra.mrb[0].mxu0 %v377
    %v379 = vpop.f32.mrb[0].mxu0
    %v380 = vadd.f32 0.0, %v379
    %v381 = vpop.f32.mrb[0].mxu0
    %382 = vmatprep.mubr.f32.mxu0 0.0
    %v383 = vand.u32 %v111, 4294901760
    %v384 = vsub.f32 %v111, %v383
    %v385 = vand.u32 %v384, 4294901760
    %v386 = vsub.f32 %v384, %v385
    %v387 = vand.u32 %v386, 4294901760
    %388 = vmatmul.mubr.f32.gmra.mrb[0].mxu0 %v387
    %v389 = vpop.f32.mrb[0].mxu0
    %v390 = vadd.f32 0.0, %v389
    %v391 = vpop.f32.mrb[0].mxu0
    %392 = vmatprep.mubr.f32.mxu0 0.0
    %v393 = vand.u32 %v114, 4294901760
    %v394 = vsub.f32 %v114, %v393
    %v395 = vand.u32 %v394, 4294901760
    %v396 = vsub.f32 %v394, %v395
    %v397 = vand.u32 %v396, 4294901760
    %398 = vmatmul.mubr.f32.gmra.mrb[0].mxu0 %v397
    %v399 = vpop.f32.mrb[0].mxu0
    %v400 = vadd.f32 0.0, %v399
    %v401 = vpop.f32.mrb[0].mxu0
    %402 = vmatprep.mubr.f32.mxu0 0.0
    %v403 = vand.u32 %v117, 4294901760
    %v404 = vsub.f32 %v117, %v403
    %v405 = vand.u32 %v404, 4294901760
    %v406 = vsub.f32 %v404, %v405
    %v407 = vand.u32 %v406, 4294901760
    %408 = vmatmul.mubr.f32.gmra.mrb[0].mxu0 %v407
    %v409 = vpop.f32.mrb[0].mxu0
    %v410 = vadd.f32 0.0, %v409
    %v411 = vpop.f32.mrb[0].mxu0
    %412 = vmatprep.mubr.f32.mxu0 0.0
    %v413 = vand.u32 %v120, 4294901760
    %v414 = vsub.f32 %v120, %v413
    %v415 = vand.u32 %v414, 4294901760
    %v416 = vsub.f32 %v414, %v415
    %v417 = vand.u32 %v416, 4294901760
    %418 = vmatmul.mubr.f32.gmra.mrb[0].mxu0 %v417
    %v419 = vpop.f32.mrb[0].mxu0
    %v420 = vadd.f32 0.0, %v419
    %v421 = vpop.f32.mrb[0].mxu0
    %422 = vmatprep.mubr.f32.mxu0 0.0
    %v423 = vand.u32 %v123, 4294901760
    %v424 = vsub.f32 %v123, %v423
    %v425 = vand.u32 %v424, 4294901760
    %v426 = vsub.f32 %v424, %v425
    %v427 = vand.u32 %v426, 4294901760
    %428 = vmatmul.mubr.f32.gmra.mrb[0].mxu0 %v427
    %v429 = vpop.f32.mrb[0].mxu0
    %v430 = vadd.f32 0.0, %v429
    %v431 = vpop.f32.mrb[0].mxu0
    %432 = vmatprep.mubr.f32.mxu0 0.0
    %v433 = vand.u32 %v126, 4294901760
    %v434 = vsub.f32 %v126, %v433
    %v435 = vand.u32 %v434, 4294901760
    %v436 = vsub.f32 %v434, %v435
    %v437 = vand.u32 %v436, 4294901760
    %438 = vmatmul.mubr.f32.gmra.mrb[0].mxu0 %v437
    %v439 = vpop.f32.mrb[0].mxu0
    %v440 = vadd.f32 0.0, %v439
    %v441 = vpop.f32.mrb[0].mxu0
    %442 = vmatprep.mubr.f32.mxu0 0.0
    %v443 = vand.u32 %v129, 4294901760
    %v444 = vsub.f32 %v129, %v443
    %v445 = vand.u32 %v444, 4294901760
    %v446 = vsub.f32 %v444, %v445
    %v447 = vand.u32 %v446, 4294901760
    %448 = vmatmul.mubr.f32.gmra.mrb[0].mxu0 %v447
    %v449 = vpop.f32.mrb[0].mxu0
    %v450 = vadd.f32 0.0, %v449
    %v451 = vpop.f32.mrb[0].mxu0
    %452 = vmatprep.mubr.f32.mxu0 0.0
    %v453 = vand.u32 %v132, 4294901760
    %v454 = vsub.f32 %v132, %v453
    %v455 = vand.u32 %v454, 4294901760
    %v456 = vsub.f32 %v454, %v455
    %v457 = vand.u32 %v456, 4294901760
    %458 = vmatmul.mubr.f32.gmra.mrb[0].mxu0 %v457
    %v459 = vpop.f32.mrb[0].mxu0
    %v460 = vadd.f32 0.0, %v459
    %v461 = vpop.f32.mrb[0].mxu0
    %462 = vmatprep.mubr.f32.mxu0 0.0
    %v463 = vand.u32 %v135, 4294901760
    %v464 = vsub.f32 %v135, %v463
    %v465 = vand.u32 %v464, 4294901760
    %v466 = vsub.f32 %v464, %v465
    %v467 = vand.u32 %v466, 4294901760
    %468 = vmatmul.mubr.f32.gmra.mrb[0].mxu0 %v467
    %v469 = vpop.f32.mrb[0].mxu0
    %v470 = vadd.f32 0.0, %v469
    %v471 = vpop.f32.mrb[0].mxu0
    %472 = vmatprep.mubr.f32.mxu0 0.0
    %v473 = vand.u32 %v138, 4294901760
    %v474 = vsub.f32 %v138, %v473
    %v475 = vand.u32 %v474, 4294901760
    %v476 = vsub.f32 %v474, %v475
    %v477 = vand.u32 %v476, 4294901760
    %478 = vmatmul.mubr.f32.gmra.mrb[0].mxu0 %v477
    %v479 = vpop.f32.mrb[0].mxu0
    %v480 = vadd.f32 0.0, %v479
    %v481 = vpop.f32.mrb[0].mxu0
    %482 = vmatprep.mubr.f32.mxu0 0.0
    %v483 = vand.u32 %v141, 4294901760
    %v484 = vsub.f32 %v141, %v483
    %v485 = vand.u32 %v484, 4294901760
    %v486 = vsub.f32 %v484, %v485
    %v487 = vand.u32 %v486, 4294901760
    %488 = vmatmul.mubr.f32.gmra.mrb[0].mxu0 %v487
    %v489 = vpop.f32.mrb[0].mxu0
    %v490 = vadd.f32 0.0, %v489
    %v491 = vpop.f32.mrb[0].mxu0
    %492 = vmatprep.mubr.f32.mxu0 0.0
    %v493 = vand.u32 %v144, 4294901760
    %v494 = vsub.f32 %v144, %v493
    %v495 = vand.u32 %v494, 4294901760
    %v496 = vsub.f32 %v494, %v495
    %v497 = vand.u32 %v496, 4294901760
    %498 = vmatmul.mubr.f32.gmra.mrb[0].mxu0 %v497
    %v499 = vpop.f32.mrb[0].mxu0
    %v500 = vadd.f32 0.0, %v499
    %v501 = vpop.f32.mrb[0].mxu0
    %502 = vmatprep.mubr.f32.mxu0 0.0
    %v503 = vand.u32 %v147, 4294901760
    %v504 = vsub.f32 %v147, %v503
    %v505 = vand.u32 %v504, 4294901760
    %v506 = vsub.f32 %v504, %v505
    %v507 = vand.u32 %v506, 4294901760
    %508 = vmatmul.mubr.f32.gmra.mrb[0].mxu0 %v507
    %v509 = vpop.f32.mrb[0].mxu0
    %v510 = vadd.f32 0.0, %v509
    %v511 = vpop.f32.mrb[0].mxu0
    %512 = vmatprep.mubr.f32.mxu0 0.0
    %v513 = vand.u32 %v150, 4294901760
    %v514 = vsub.f32 %v150, %v513
    %v515 = vand.u32 %v514, 4294901760
    %v516 = vsub.f32 %v514, %v515
    %v517 = vand.u32 %v516, 4294901760
    %518 = vmatmul.mubr.f32.gmra.mrb[0].mxu0 %v517
    %v519 = vpop.f32.mrb[0].mxu0
    %v520 = vadd.f32 0.0, %v519
    %v521 = vpop.f32.mrb[0].mxu0
    %522 = vmatprep.mubr.f32.mxu0 0.0
    %v523 = vand.u32 %v153, 4294901760
    %v524 = vsub.f32 %v153, %v523
    %v525 = vand.u32 %v524, 4294901760
    %v526 = vsub.f32 %v524, %v525
    %v527 = vand.u32 %v526, 4294901760
    %528 = vmatmul.mubr.f32.gmra.mrb[0].mxu0 %v527
    %v529 = vpop.f32.mrb[0].mxu0
    %v530 = vadd.f32 0.0, %v529
    %v531 = vpop.f32.mrb[0].mxu0
    %532 = vmatprep.mubr.f32.mxu0 0.0
    %v533 = vand.u32 %v156, 4294901760
    %v534 = vsub.f32 %v156, %v533
    %v535 = vand.u32 %v534, 4294901760
    %v536 = vsub.f32 %v534, %v535
    %v537 = vand.u32 %v536, 4294901760
    %538 = vmatmul.mubr.f32.gmra.mrb[0].mxu0 %v537
    %v539 = vpop.f32.mrb[0].mxu0
    %v540 = vadd.f32 0.0, %v539
    %v541 = vpop.f32.mrb[0].mxu0
    %542 = vmatprep.mubr.f32.mxu0 0.0
    %v543 = vand.u32 %v159, 4294901760
    %v544 = vsub.f32 %v159, %v543
    %v545 = vand.u32 %v544, 4294901760
    %v546 = vsub.f32 %v544, %v545
    %v547 = vand.u32 %v546, 4294901760
    %548 = vmatmul.mubr.f32.gmra.mrb[0].mxu0 %v547
    %v549 = vpop.f32.mrb[0].mxu0
    %v550 = vadd.f32 0.0, %v549
    %v551 = vpop.f32.mrb[0].mxu0
    %552 = vmatprep.mubr.f32.mxu0 0.0
    %v553 = vand.u32 %v162, 4294901760
    %v554 = vsub.f32 %v162, %v553
    %v555 = vand.u32 %v554, 4294901760
    %v556 = vsub.f32 %v554, %v555
    %v557 = vand.u32 %v556, 4294901760
    %558 = vmatmul.mubr.f32.gmra.mrb[0].mxu0 %v557
    %v559 = vpop.f32.mrb[0].mxu0
    %v560 = vadd.f32 0.0, %v559
    %v561 = vpop.f32.mrb[0].mxu0
    %562 = vmatprep.mubr.f32.mxu0 0.0
    %v563 = vand.u32 %v165, 4294901760
    %v564 = vsub.f32 %v165, %v563
    %v565 = vand.u32 %v564, 4294901760
    %v566 = vsub.f32 %v564, %v565
    %v567 = vand.u32 %v566, 4294901760
    %568 = vmatmul.mubr.f32.gmra.mrb[0].mxu0 %v567
    %v569 = vpop.f32.mrb[0].mxu0
    %v570 = vadd.f32 0.0, %v569
    %v571 = vpop.f32.mrb[0].mxu0
    %572 = vmatprep.mubr.f32.mxu0 0.0
    %v573 = vand.u32 %v168, 4294901760
    %v574 = vsub.f32 %v168, %v573
    %v575 = vand.u32 %v574, 4294901760
    %v576 = vsub.f32 %v574, %v575
    %v577 = vand.u32 %v576, 4294901760
    %578 = vmatmul.mubr.f32.gmra.mrb[0].mxu0 %v577
    %v579 = vpop.f32.mrb[0].mxu0
    %v580 = vadd.f32 0.0, %v579
    %v581 = vpop.f32.mrb[0].mxu0
    %582 = vmatprep.mubr.f32.mxu0 0.0
    %v583 = vand.u32 %v171, 4294901760
    %v584 = vsub.f32 %v171, %v583
    %v585 = vand.u32 %v584, 4294901760
    %v586 = vsub.f32 %v584, %v585
    %v587 = vand.u32 %v586, 4294901760
    %588 = vmatmul.mubr.f32.gmra.mrb[0].mxu0 %v587
    %v589 = vpop.f32.mrb[0].mxu0
    %v590 = vadd.f32 0.0, %v589
    %v591 = vpop.f32.mrb[0].mxu0
    %592 = vmatprep.mubr.f32.mxu0 0.0
    %v593 = vand.u32 %v174, 4294901760
    %v594 = vsub.f32 %v174, %v593
    %v595 = vand.u32 %v594, 4294901760
    %v596 = vsub.f32 %v594, %v595
    %v597 = vand.u32 %v596, 4294901760
    %598 = vmatmul.mubr.f32.gmra.mrb[0].mxu0 %v597
    %v599 = vpop.f32.mrb[0].mxu0
    %v600 = vadd.f32 0.0, %v599
    %v601 = vpop.f32.mrb[0].mxu0
    %602 = vmatprep.mubr.f32.mxu0 0.0
    %v603 = vand.u32 %v177, 4294901760
    %v604 = vsub.f32 %v177, %v603
    %v605 = vand.u32 %v604, 4294901760
    %v606 = vsub.f32 %v604, %v605
    %v607 = vand.u32 %v606, 4294901760
    %608 = vmatmul.mubr.f32.gmra.mrb[0].mxu0 %v607
    %v609 = vpop.f32.mrb[0].mxu0
    %v610 = vadd.f32 0.0, %v609
    %v611 = vpop.f32.mrb[0].mxu0
    %612 = vmatprep.mubr.f32.mxu0 0.0
    %v613 = vand.u32 %v180, 4294901760
    %v614 = vsub.f32 %v180, %v613
    %v615 = vand.u32 %v614, 4294901760
    %v616 = vsub.f32 %v614, %v615
    %v617 = vand.u32 %v616, 4294901760
    %618 = vmatmul.mubr.f32.gmra.mrb[0].mxu0 %v617
    %v619 = vpop.f32.mrb[0].mxu0
    %v620 = vadd.f32 0.0, %v619
    %v621 = vpop.f32.mrb[0].mxu0
    %622 = vmatprep.mubr.f32.mxu0 0.0
    %v623 = vand.u32 %v183, 4294901760
    %v624 = vsub.f32 %v183, %v623
    %v625 = vand.u32 %v624, 4294901760
    %v626 = vsub.f32 %v624, %v625
    %v627 = vand.u32 %v626, 4294901760
    %628 = vmatmul.mubr.f32.gmra.mrb[0].mxu0 %v627
    %v629 = vpop.f32.mrb[0].mxu0
    %v630 = vadd.f32 0.0, %v629
    %v631 = vpop.f32.mrb[0].mxu0
    %632 = vmatprep.mubr.f32.mxu0 0.0
    %v633 = vand.u32 %v186, 4294901760
    %v634 = vsub.f32 %v186, %v633
    %v635 = vand.u32 %v634, 4294901760
    %v636 = vsub.f32 %v634, %v635
    %v637 = vand.u32 %v636, 4294901760
    %638 = vmatmul.mubr.f32.gmra.mrb[0].mxu0 %v637
    %v639 = vpop.f32.mrb[0].mxu0
    %v640 = vadd.f32 0.0, %v639
    %v641 = vpop.f32.mrb[0].mxu0
    %642 = vmatprep.mubr.f32.mxu0 0.0
    %v643 = vand.u32 %v189, 4294901760
    %v644 = vsub.f32 %v189, %v643
    %v645 = vand.u32 %v644, 4294901760
    %v646 = vsub.f32 %v644, %v645
    %v647 = vand.u32 %v646, 4294901760
    %648 = vmatmul.mubr.f32.gmra.mrb[0].mxu0 %v647
    %v649 = vpop.f32.mrb[0].mxu0
    %v650 = vadd.f32 0.0, %v649
    %v651 = vpop.f32.mrb[0].mxu0
    %652 = vmatprep.mubr.f32.mxu0 0.0
    %v653 = vand.u32 %v192, 4294901760
    %v654 = vsub.f32 %v192, %v653
    %v655 = vand.u32 %v654, 4294901760
    %v656 = vsub.f32 %v654, %v655
    %v657 = vand.u32 %v656, 4294901760
    %658 = vmatmul.mubr.f32.gmra.mrb[0].mxu0 %v657
    %v659 = vpop.f32.mrb[0].mxu0
    %v660 = vadd.f32 0.0, %v659
    %v661 = vpop.f32.mrb[0].mxu0
    %662 = vmatprep.mubr.f32.mxu0 0.0
    %v663 = vand.u32 %v195, 4294901760
    %v664 = vsub.f32 %v195, %v663
    %v665 = vand.u32 %v664, 4294901760
    %v666 = vsub.f32 %v664, %v665
    %v667 = vand.u32 %v666, 4294901760
    %668 = vmatmul.mubr.f32.gmra.mrb[0].mxu0 %v667
    %v669 = vpop.f32.mrb[0].mxu0
    %v670 = vadd.f32 0.0, %v669
    %v671 = vpop.f32.mrb[0].mxu0
    %672 = vmatprep.mubr.f32.mxu0 0.0
    %v673 = vand.u32 %v198, 4294901760
    %v674 = vsub.f32 %v198, %v673
    %v675 = vand.u32 %v674, 4294901760
    %v676 = vsub.f32 %v674, %v675
    %v677 = vand.u32 %v676, 4294901760
    %678 = vmatmul.mubr.f32.gmra.mrb[0].mxu0 %v677
    %v679 = vpop.f32.mrb[0].mxu0
    %v680 = vadd.f32 0.0, %v679
    %v681 = vpop.f32.mrb[0].mxu0
    %682 = vmatprep.mubr.f32.mxu0 0.0
    %v683 = vand.u32 %v201, 4294901760
    %v684 = vsub.f32 %v201, %v683
    %v685 = vand.u32 %v684, 4294901760
    %v686 = vsub.f32 %v684, %v685
    %v687 = vand.u32 %v686, 4294901760
    %688 = vmatmul.mubr.f32.gmra.mrb[0].mxu0 %v687
    %v689 = vpop.f32.mrb[0].mxu0
    %v690 = vadd.f32 0.0, %v689
    %v691 = vpop.f32.mrb[0].mxu0
    %692 = vmatprep.mubr.f32.mxu0 0.0
    %v693 = vand.u32 %v204, 4294901760
    %v694 = vsub.f32 %v204, %v693
    %v695 = vand.u32 %v694, 4294901760
    %v696 = vsub.f32 %v694, %v695
    %v697 = vand.u32 %v696, 4294901760
    %698 = vmatmul.mubr.f32.gmra.mrb[0].mxu0 %v697
    %v699 = vpop.f32.mrb[0].mxu0
    %v700 = vadd.f32 0.0, %v699
    %v701 = vpop.f32.mrb[0].mxu0
    %702 = vmatprep.mubr.f32.mxu0 0.0
    %v703 = vand.u32 %v207, 4294901760
    %v704 = vsub.f32 %v207, %v703
    %v705 = vand.u32 %v704, 4294901760
    %v706 = vsub.f32 %v704, %v705
    %v707 = vand.u32 %v706, 4294901760
    %708 = vmatmul.mubr.f32.gmra.mrb[0].mxu0 %v707
    %v709 = vpop.f32.mrb[0].mxu0
    %v710 = vadd.f32 0.0, %v709
    %v711 = vpop.f32.mrb[0].mxu0
    %712 = vmatprep.mubr.f32.mxu0 0.0
    %v713 = vand.u32 %v210, 4294901760
    %v714 = vsub.f32 %v210, %v713
    %v715 = vand.u32 %v714, 4294901760
    %v716 = vsub.f32 %v714, %v715
    %v717 = vand.u32 %v716, 4294901760
    %718 = vmatmul.mubr.f32.gmra.mrb[0].mxu0 %v717
    %v719 = vpop.f32.mrb[0].mxu0
    %v720 = vadd.f32 0.0, %v719
    %v721 = vpop.f32.mrb[0].mxu0
    %722 = vmatprep.mubr.f32.mxu0 0.0
    %v723 = vand.u32 %v213, 4294901760
    %v724 = vsub.f32 %v213, %v723
    %v725 = vand.u32 %v724, 4294901760
    %v726 = vsub.f32 %v724, %v725
    %v727 = vand.u32 %v726, 4294901760
    %728 = vmatmul.mubr.f32.gmra.mrb[0].mxu0 %v727
    %v729 = vpop.f32.mrb[0].mxu0
    %v730 = vadd.f32 0.0, %v729
    %v731 = vpop.f32.mrb[0].mxu0
    %732 = vmatprep.mubr.f32.mxu0 0.0
    %v733 = vand.u32 %v216, 4294901760
    %v734 = vsub.f32 %v216, %v733
    %v735 = vand.u32 %v734, 4294901760
    %v736 = vsub.f32 %v734, %v735
    %v737 = vand.u32 %v736, 4294901760
    %738 = vmatmul.mubr.f32.gmra.mrb[0].mxu0 %v737
    %v739 = vpop.f32.mrb[0].mxu0
    %v740 = vadd.f32 0.0, %v739
    %v741 = vpop.f32.mrb[0].mxu0
    %742 = vmatprep.mubr.f32.mxu0 0.0
    %v743 = vand.u32 %v219, 4294901760
    %v744 = vsub.f32 %v219, %v743
    %v745 = vand.u32 %v744, 4294901760
    %v746 = vsub.f32 %v744, %v745
    %v747 = vand.u32 %v746, 4294901760
    %748 = vmatmul.mubr.f32.gmra.mrb[0].mxu0 %v747
    %v749 = vpop.f32.mrb[0].mxu0
    %v750 = vadd.f32 0.0, %v749
    %v751 = vpop.f32.mrb[0].mxu0
    %752 = vmatprep.mubr.f32.mxu0 0.0
    %v753 = vand.u32 %v222, 4294901760
    %v754 = vsub.f32 %v222, %v753
    %v755 = vand.u32 %v754, 4294901760
    %v756 = vsub.f32 %v754, %v755
    %v757 = vand.u32 %v756, 4294901760
    %758 = vmatmul.mubr.f32.gmra.mrb[0].mxu0 %v757
    %v759 = vpop.f32.mrb[0].mxu0
    %v760 = vadd.f32 0.0, %v759
    %v761 = vpop.f32.mrb[0].mxu0
    %762 = vmatprep.mubr.f32.mxu0 0.0
    %v763 = vand.u32 %v225, 4294901760
    %v764 = vsub.f32 %v225, %v763
    %v765 = vand.u32 %v764, 4294901760
    %v766 = vsub.f32 %v764, %v765
    %v767 = vand.u32 %v766, 4294901760
    %768 = vmatmul.mubr.f32.gmra.mrb[0].mxu0 %v767
    %v769 = vpop.f32.mrb[0].mxu0
    %v770 = vadd.f32 0.0, %v769
    %v771 = vpop.f32.mrb[0].mxu0
    %772 = vmatprep.mubr.f32.mxu0 0.0
    %v773 = vand.u32 %v228, 4294901760
    %v774 = vsub.f32 %v228, %v773
    %v775 = vand.u32 %v774, 4294901760
    %v776 = vsub.f32 %v774, %v775
    %v777 = vand.u32 %v776, 4294901760
    %778 = vmatmul.mubr.f32.gmra.mrb[0].mxu0 %v777
    %v779 = vpop.f32.mrb[0].mxu0
    %v780 = vadd.f32 0.0, %v779
    %v781 = vpop.f32.mrb[0].mxu0
    %782 = vmatprep.mubr.f32.mxu0 0.0
    %v783 = vand.u32 %v231, 4294901760
    %v784 = vsub.f32 %v231, %v783
    %v785 = vand.u32 %v784, 4294901760
    %v786 = vsub.f32 %v784, %v785
    %v787 = vand.u32 %v786, 4294901760
    %788 = vmatmul.mubr.f32.gmra.mrb[0].mxu0 %v787
    %v789 = vpop.f32.mrb[0].mxu0
    %v790 = vadd.f32 0.0, %v789
    %v791 = vpop.f32.mrb[0].mxu0
    %792 = vmatprep.mubr.f32.mxu0 0.0
    %v793 = vand.u32 %v234, 4294901760
    %v794 = vsub.f32 %v234, %v793
    %v795 = vand.u32 %v794, 4294901760
    %v796 = vsub.f32 %v794, %v795
    %v797 = vand.u32 %v796, 4294901760
    %798 = vmatmul.mubr.f32.gmra.mrb[0].mxu0 %v797
    %v799 = vpop.f32.mrb[0].mxu0
    %v800 = vadd.f32 0.0, %v799
    %v801 = vpop.f32.mrb[0].mxu0
    %802 = vmatprep.mubr.f32.mxu0 0.0
    %v803 = vand.u32 %v237, 4294901760
    %v804 = vsub.f32 %v237, %v803
    %v805 = vand.u32 %v804, 4294901760
    %v806 = vsub.f32 %v804, %v805
    %v807 = vand.u32 %v806, 4294901760
    %808 = vmatmul.mubr.f32.gmra.mrb[0].mxu0 %v807
    %v809 = vpop.f32.mrb[0].mxu0
    %v810 = vadd.f32 0.0, %v809
    %v811 = vpop.f32.mrb[0].mxu0
    %812 = vmatprep.mubr.f32.mxu0 0.0
    %v813 = vand.u32 %v240, 4294901760
    %v814 = vsub.f32 %v240, %v813
    %v815 = vand.u32 %v814, 4294901760
    %v816 = vsub.f32 %v814, %v815
    %v817 = vand.u32 %v816, 4294901760
    %818 = vmatmul.mubr.f32.gmra.mrb[0].mxu0 %v817
    %v819 = vpop.f32.mrb[0].mxu0
    %v820 = vadd.f32 0.0, %v819
    %v821 = vpop.f32.mrb[0].mxu0
    %822 = vmatprep.mubr.f32.mxu0 0.0
    %v823 = vand.u32 %v243, 4294901760
    %v824 = vsub.f32 %v243, %v823
    %v825 = vand.u32 %v824, 4294901760
    %v826 = vsub.f32 %v824, %v825
    %v827 = vand.u32 %v826, 4294901760
    %828 = vmatmul.mubr.f32.gmra.mrb[0].mxu0 %v827
    %v829 = vpop.f32.mrb[0].mxu0
    %v830 = vadd.f32 0.0, %v829
    %v831 = vpop.f32.mrb[0].mxu0
    %832 = vmatprep.mubr.f32.mxu0 0.0
    %v833 = vand.u32 %v246, 4294901760
    %v834 = vsub.f32 %v246, %v833
    %v835 = vand.u32 %v834, 4294901760
    %v836 = vsub.f32 %v834, %v835
    %v837 = vand.u32 %v836, 4294901760
    %838 = vmatmul.mubr.f32.gmra.mrb[0].mxu0 %v837
    %v839 = vpop.f32.mrb[0].mxu0
    %v840 = vadd.f32 0.0, %v839
    %v841 = vpop.f32.mrb[0].mxu0
    %842 = vmatprep.mubr.f32.mxu0 0.0
    %v843 = vand.u32 %v249, 4294901760
    %v844 = vsub.f32 %v249, %v843
    %v845 = vand.u32 %v844, 4294901760
    %v846 = vsub.f32 %v844, %v845
    %v847 = vand.u32 %v846, 4294901760
    %848 = vmatmul.mubr.f32.gmra.mrb[0].mxu0 %v847
    %v849 = vpop.f32.mrb[0].mxu0
    %v850 = vadd.f32 0.0, %v849
    %v851 = vpop.f32.mrb[0].mxu0
    %852 = vmatprep.mubr.f32.mxu0 0.0
    %v853 = vand.u32 %v252, 4294901760
    %v854 = vsub.f32 %v252, %v853
    %v855 = vand.u32 %v854, 4294901760
    %v856 = vsub.f32 %v854, %v855
    %v857 = vand.u32 %v856, 4294901760
    %858 = vmatmul.mubr.f32.gmra.mrb[0].mxu0 %v857
    %v859 = vpop.f32.mrb[0].mxu0
    %v860 = vadd.f32 0.0, %v859
    %v861 = vpop.f32.mrb[0].mxu0
    %862 = vmatprep.mubr.f32.mxu0 0.0
    %v863 = vand.u32 %v255, 4294901760
    %v864 = vsub.f32 %v255, %v863
    %v865 = vand.u32 %v864, 4294901760
    %v866 = vsub.f32 %v864, %v865
    %v867 = vand.u32 %v866, 4294901760
    %868 = vmatmul.mubr.f32.gmra.mrb[0].mxu0 %v867
    %v869 = vpop.f32.mrb[0].mxu0
    %v870 = vadd.f32 0.0, %v869
    %v871 = vpop.f32.mrb[0].mxu0
    %872 = vmatprep.mubr.f32.mxu0 0.0
    %v873 = vand.u32 %v258, 4294901760
    %v874 = vsub.f32 %v258, %v873
    %v875 = vand.u32 %v874, 4294901760
    %v876 = vsub.f32 %v874, %v875
    %v877 = vand.u32 %v876, 4294901760
    %878 = vmatmul.mubr.f32.gmra.mrb[0].mxu0 %v877
    %v879 = vpop.f32.mrb[0].mxu0
    %v880 = vadd.f32 0.0, %v879
    %v881 = vpop.f32.mrb[0].mxu0
    %882 = vmatprep.mubr.f32.mxu0 0.0
    %v883 = vand.u32 %v261, 4294901760
    %v884 = vsub.f32 %v261, %v883
    %v885 = vand.u32 %v884, 4294901760
    %v886 = vsub.f32 %v884, %v885
    %v887 = vand.u32 %v886, 4294901760
    %888 = vmatmul.mubr.f32.gmra.mrb[0].mxu0 %v887
    %v889 = vpop.f32.mrb[0].mxu0
    %v890 = vadd.f32 0.0, %v889
    %v891 = vpop.f32.mrb[0].mxu0
    %892 = vmatprep.mubr.f32.mxu0 0.0
    %v893 = vand.u32 %v264, 4294901760
    %v894 = vsub.f32 %v264, %v893
    %v895 = vand.u32 %v894, 4294901760
    %v896 = vsub.f32 %v894, %v895
    %v897 = vand.u32 %v896, 4294901760
    %898 = vmatmul.mubr.f32.gmra.mrb[0].mxu0 %v897
    %v899 = vpop.f32.mrb[0].mxu0
    %v900 = vadd.f32 0.0, %v899
    %v901 = vpop.f32.mrb[0].mxu0
    %902 = vmatprep.mubr.f32.mxu0 0.0
    %v903 = vand.u32 %v267, 4294901760
    %v904 = vsub.f32 %v267, %v903
    %v905 = vand.u32 %v904, 4294901760
    %v906 = vsub.f32 %v904, %v905
    %v907 = vand.u32 %v906, 4294901760
    %908 = vmatmul.mubr.f32.gmra.mrb[0].mxu0 %v907
    %v909 = vpop.f32.mrb[0].mxu0
    %v910 = vadd.f32 0.0, %v909
    %v911 = vpop.f32.mrb[0].mxu0
    %912 = vmatprep.mubr.f32.mxu0 0.0
    %v913 = vand.u32 %v270, 4294901760
    %v914 = vsub.f32 %v270, %v913
    %v915 = vand.u32 %v914, 4294901760
    %v916 = vsub.f32 %v914, %v915
    %v917 = vand.u32 %v916, 4294901760
    %918 = vmatmul.mubr.f32.gmra.mrb[0].mxu0 %v917
    %v919 = vpop.f32.mrb[0].mxu0
    %v920 = vadd.f32 0.0, %v919
    %v921 = vpop.f32.mrb[0].mxu0
    %922 = vmatprep.mubr.f32.mxu0 0.0
    %v923 = vand.u32 %v273, 4294901760
    %v924 = vsub.f32 %v273, %v923
    %v925 = vand.u32 %v924, 4294901760
    %v926 = vsub.f32 %v924, %v925
    %v927 = vand.u32 %v926, 4294901760
    %928 = vmatmul.mubr.f32.gmra.mrb[0].mxu0 %v927
    %v929 = vpop.f32.mrb[0].mxu0
    %v930 = vadd.f32 0.0, %v929
    %v931 = vpop.f32.mrb[0].mxu0
    %932 = vmatprep.mubr.f32.mxu0 0.0
    %v933 = vand.u32 %v276, 4294901760
    %v934 = vsub.f32 %v276, %v933
    %v935 = vand.u32 %v934, 4294901760
    %v936 = vsub.f32 %v934, %v935
    %v937 = vand.u32 %v936, 4294901760
    %938 = vmatmul.mubr.f32.gmra.mrb[0].mxu0 %v937
    %v939 = vpop.f32.mrb[0].mxu0
    %v940 = vadd.f32 0.0, %v939
    %v941 = vpop.f32.mrb[0].mxu0
    %942 = vmatprep.mubr.f32.mxu0 0.0
    %v943 = vand.u32 %v279, 4294901760
    %v944 = vsub.f32 %v279, %v943
    %v945 = vand.u32 %v944, 4294901760
    %v946 = vsub.f32 %v944, %v945
    %v947 = vand.u32 %v946, 4294901760
    %948 = vmatmul.mubr.f32.gmra.mrb[0].mxu0 %v947
    %v949 = vpop.f32.mrb[0].mxu0
    %v950 = vadd.f32 0.0, %v949
    %v951 = vpop.f32.mrb[0].mxu0
    %952 = vmatprep.mubr.f32.mxu0 0.0
    %v953 = vand.u32 %v282, 4294901760
    %v954 = vsub.f32 %v282, %v953
    %v955 = vand.u32 %v954, 4294901760
    %v956 = vsub.f32 %v954, %v955
    %v957 = vand.u32 %v956, 4294901760
    %958 = vmatmul.mubr.f32.gmra.mrb[0].mxu0 %v957
    %v959 = vpop.f32.mrb[0].mxu0
    %v960 = vadd.f32 0.0, %v959
    %v961 = vpop.f32.mrb[0].mxu0
    %962 = vdwg.mxu0
    %963 = vmatprep.subr.mxu0 0.0
    %v964 = vand.u32 %v89, 4294901760
    %v965 = vsub.f32 %v89, %v964
    %v966 = vand.u32 %v965, 4294901760
    %v967 = vsub.f32 %v965, %v966
    %v968 = vand.u32 %v967, 4294901760
    %969 = vmatpush1.msra.mxu0 %v968
    %970 = vmatprep.subr.mxu0 0.0
    %v971 = vand.u32 %v90, 4294901760
    %v972 = vsub.f32 %v90, %v971
    %v973 = vand.u32 %v972, 4294901760
    %v974 = vsub.f32 %v972, %v973
    %v975 = vand.u32 %v974, 4294901760
    %976 = vmatpush1.msra.mxu0 %v975
    %977 = vmatprep.subr.mxu0 0.0
    %v978 = vand.u32 %v91, 4294901760
    %v979 = vsub.f32 %v91, %v978
    %v980 = vand.u32 %v979, 4294901760
    %v981 = vsub.f32 %v979, %v980
    %v982 = vand.u32 %v981, 4294901760
    %983 = vmatpush1.msra.mxu0 %v982
    %984 = vmatprep.subr.mxu0 0.0
    %v985 = vand.u32 %v92, 4294901760
    %v986 = vsub.f32 %v92, %v985
    %v987 = vand.u32 %v986, 4294901760
    %v988 = vsub.f32 %v986, %v987
    %v989 = vand.u32 %v988, 4294901760
    %990 = vmatpush1.msra.mxu0 %v989
    %991 = vmatprep.subr.mxu0 0.0
    %v992 = vand.u32 %v93, 4294901760
    %v993 = vsub.f32 %v93, %v992
    %v994 = vand.u32 %v993, 4294901760
    %v995 = vsub.f32 %v993, %v994
    %v996 = vand.u32 %v995, 4294901760
    %997 = vmatpush1.msra.mxu0 %v996
    %998 = vmatprep.subr.mxu0 0.0
    %v999 = vand.u32 %v94, 4294901760
    %v1000 = vsub.f32 %v94, %v999
    %v1001 = vand.u32 %v1000, 4294901760
    %v1002 = vsub.f32 %v1000, %v1001
    %v1003 = vand.u32 %v1002, 4294901760
    %1004 = vmatpush1.msra.mxu0 %v1003
    %1005 = vmatprep.subr.mxu0 0.0
    %v1006 = vand.u32 %v95, 4294901760
    %v1007 = vsub.f32 %v95, %v1006
    %v1008 = vand.u32 %v1007, 4294901760
    %v1009 = vsub.f32 %v1007, %v1008
    %v1010 = vand.u32 %v1009, 4294901760
    %1011 = vmatpush1.msra.mxu0 %v1010
    %1012 = vmatprep.subr.mxu0 0.0
    %v1013 = vand.u32 %v96, 4294901760
    %v1014 = vsub.f32 %v96, %v1013
    %v1015 = vand.u32 %v1014, 4294901760
    %v1016 = vsub.f32 %v1014, %v1015
    %v1017 = vand.u32 %v1016, 4294901760
    %1018 = vmatpush1.msra.mxu0 %v1017
    %1019 = vmatprep.subr.mxu0 0.0
    %v1020 = vand.u32 %v97, 4294901760
    %v1021 = vsub.f32 %v97, %v1020
    %v1022 = vand.u32 %v1021, 4294901760
    %v1023 = vsub.f32 %v1021, %v1022
    %v1024 = vand.u32 %v1023, 4294901760
    %1025 = vmatpush1.msra.mxu0 %v1024
    %1026 = vmatprep.subr.mxu0 0.0
    %v1027 = vand.u32 %v98, 4294901760
    %v1028 = vsub.f32 %v98, %v1027
    %v1029 = vand.u32 %v1028, 4294901760
    %v1030 = vsub.f32 %v1028, %v1029
    %v1031 = vand.u32 %v1030, 4294901760
    %1032 = vmatpush1.msra.mxu0 %v1031
    %1033 = vmatprep.subr.mxu0 0.0
    %v1034 = vand.u32 %v99, 4294901760
    %v1035 = vsub.f32 %v99, %v1034
    %v1036 = vand.u32 %v1035, 4294901760
    %v1037 = vsub.f32 %v1035, %v1036
    %v1038 = vand.u32 %v1037, 4294901760
    %1039 = vmatpush1.msra.mxu0 %v1038
    %1040 = vmatprep.subr.mxu0 0.0
    %v1041 = vand.u32 %v100, 4294901760
    %v1042 = vsub.f32 %v100, %v1041
    %v1043 = vand.u32 %v1042, 4294901760
    %v1044 = vsub.f32 %v1042, %v1043
    %v1045 = vand.u32 %v1044, 4294901760
    %1046 = vmatpush1.msra.mxu0 %v1045
    %1047 = vmatprep.subr.mxu0 0.0
    %v1048 = vand.u32 %v101, 4294901760
    %v1049 = vsub.f32 %v101, %v1048
    %v1050 = vand.u32 %v1049, 4294901760
    %v1051 = vsub.f32 %v1049, %v1050
    %v1052 = vand.u32 %v1051, 4294901760
    %1053 = vmatpush1.msra.mxu0 %v1052
    %1054 = vmatprep.subr.mxu0 0.0
    %v1055 = vand.u32 %v102, 4294901760
    %v1056 = vsub.f32 %v102, %v1055
    %v1057 = vand.u32 %v1056, 4294901760
    %v1058 = vsub.f32 %v1056, %v1057
    %v1059 = vand.u32 %v1058, 4294901760
    %1060 = vmatpush1.msra.mxu0 %v1059
    %1061 = vmatprep.subr.mxu0 0.0
    %1062 = vmatpush1.msra.mxu0 0.0
    %1063 = vmatprep.subr.mxu0 0.0
    %1064 = vmatpush1.msra.mxu0 0.0
    %1065 = vmatprep.subr.mxu0 0.0
    %1066 = vmatpush1.msra.mxu0 0.0
    %1067 = vmatprep.subr.mxu0 0.0
    %1068 = vmatpush1.msra.mxu0 0.0
    %1069 = vmatprep.subr.mxu0 0.0
    %1070 = vmatpush1.msra.mxu0 0.0
    %1071 = vmatprep.subr.mxu0 0.0
    %1072 = vmatpush1.msra.mxu0 0.0
    %1073 = vmatprep.subr.mxu0 0.0
    %1074 = vmatpush1.msra.mxu0 0.0
    %1075 = vmatprep.subr.mxu0 0.0
    %1076 = vmatpush1.msra.mxu0 0.0
    %1077 = vmatprep.subr.mxu0 0.0
    %1078 = vmatpush1.msra.mxu0 0.0
    %1079 = vmatprep.subr.mxu0 0.0
    %1080 = vmatpush1.msra.mxu0 0.0
    %1081 = vmatprep.subr.mxu0 0.0
    %1082 = vmatpush1.msra.mxu0 0.0
    %1083 = vmatprep.subr.mxu0 0.0
    %1084 = vmatpush1.msra.mxu0 0.0
    %1085 = vmatprep.subr.mxu0 0.0
    %1086 = vmatpush1.msra.mxu0 0.0
    %1087 = vmatprep.subr.mxu0 0.0
    %1088 = vmatpush1.msra.mxu0 0.0
    %1089 = vmatprep.subr.mxu0 0.0
    %1090 = vmatpush1.msra.mxu0 0.0
    %1091 = vmatprep.subr.mxu0 0.0
    %1092 = vmatpush1.msra.mxu0 0.0
    %1093 = vmatprep.subr.mxu0 0.0
    %1094 = vmatpush1.msra.mxu0 0.0
    %1095 = vmatprep.subr.mxu0 0.0
    %1096 = vmatpush1.msra.mxu0 0.0
    %1097 = vmatprep.mubr.f32.mxu0 0.0
    %v1098 = vand.u32 %v105, 4294901760
    %1099 = vmatmul.mubr.f32.gmra.mrb[0].mxu0 %v1098
    %v1100 = vpop.f32.mrb[0].mxu0
    %v1101 = vadd.f32 %v370, %v1100
    %v1102 = vpop.f32.mrb[0].mxu0
    %1103 = vmatprep.mubr.f32.mxu0 0.0
    %v1104 = vand.u32 %v108, 4294901760
    %1105 = vmatmul.mubr.f32.gmra.mrb[0].mxu0 %v1104
    %v1106 = vpop.f32.mrb[0].mxu0
    %v1107 = vadd.f32 %v380, %v1106
    %v1108 = vpop.f32.mrb[0].mxu0
    %1109 = vmatprep.mubr.f32.mxu0 0.0
    %v1110 = vand.u32 %v111, 4294901760
    %1111 = vmatmul.mubr.f32.gmra.mrb[0].mxu0 %v1110
    %v1112 = vpop.f32.mrb[0].mxu0
    %v1113 = vadd.f32 %v390, %v1112
    %v1114 = vpop.f32.mrb[0].mxu0
    %1115 = vmatprep.mubr.f32.mxu0 0.0
    %v1116 = vand.u32 %v114, 4294901760
    %1117 = vmatmul.mubr.f32.gmra.mrb[0].mxu0 %v1116
    %v1118 = vpop.f32.mrb[0].mxu0
    %v1119 = vadd.f32 %v400, %v1118
    %v1120 = vpop.f32.mrb[0].mxu0
    %1121 = vmatprep.mubr.f32.mxu0 0.0
    %v1122 = vand.u32 %v117, 4294901760
    %1123 = vmatmul.mubr.f32.gmra.mrb[0].mxu0 %v1122
    %v1124 = vpop.f32.mrb[0].mxu0
    %v1125 = vadd.f32 %v410, %v1124
    %v1126 = vpop.f32.mrb[0].mxu0
    %1127 = vmatprep.mubr.f32.mxu0 0.0
    %v1128 = vand.u32 %v120, 4294901760
    %1129 = vmatmul.mubr.f32.gmra.mrb[0].mxu0 %v1128
    %v1130 = vpop.f32.mrb[0].mxu0
    %v1131 = vadd.f32 %v420, %v1130
    %v1132 = vpop.f32.mrb[0].mxu0
    %1133 = vmatprep.mubr.f32.mxu0 0.0
    %v1134 = vand.u32 %v123, 4294901760
    %1135 = vmatmul.mubr.f32.gmra.mrb[0].mxu0 %v1134
    %v1136 = vpop.f32.mrb[0].mxu0
    %v1137 = vadd.f32 %v430, %v1136
    %v1138 = vpop.f32.mrb[0].mxu0
    %1139 = vmatprep.mubr.f32.mxu0 0.0
    %v1140 = vand.u32 %v126, 4294901760
    %1141 = vmatmul.mubr.f32.gmra.mrb[0].mxu0 %v1140
    %v1142 = vpop.f32.mrb[0].mxu0
    %v1143 = vadd.f32 %v440, %v1142
    %v1144 = vpop.f32.mrb[0].mxu0
    %1145 = vmatprep.mubr.f32.mxu0 0.0
    %v1146 = vand.u32 %v129, 4294901760
    %1147 = vmatmul.mubr.f32.gmra.mrb[0].mxu0 %v1146
    %v1148 = vpop.f32.mrb[0].mxu0
    %v1149 = vadd.f32 %v450, %v1148
    %v1150 = vpop.f32.mrb[0].mxu0
    %1151 = vmatprep.mubr.f32.mxu0 0.0
    %v1152 = vand.u32 %v132, 4294901760
    %1153 = vmatmul.mubr.f32.gmra.mrb[0].mxu0 %v1152
    %v1154 = vpop.f32.mrb[0].mxu0
    %v1155 = vadd.f32 %v460, %v1154
    %v1156 = vpop.f32.mrb[0].mxu0
    %1157 = vmatprep.mubr.f32.mxu0 0.0
    %v1158 = vand.u32 %v135, 4294901760
    %1159 = vmatmul.mubr.f32.gmra.mrb[0].mxu0 %v1158
    %v1160 = vpop.f32.mrb[0].mxu0
    %v1161 = vadd.f32 %v470, %v1160
    %v1162 = vpop.f32.mrb[0].mxu0
    %1163 = vmatprep.mubr.f32.mxu0 0.0
    %v1164 = vand.u32 %v138, 4294901760
    %1165 = vmatmul.mubr.f32.gmra.mrb[0].mxu0 %v1164
    %v1166 = vpop.f32.mrb[0].mxu0
    %v1167 = vadd.f32 %v480, %v1166
    %v1168 = vpop.f32.mrb[0].mxu0
    %1169 = vmatprep.mubr.f32.mxu0 0.0
    %v1170 = vand.u32 %v141, 4294901760
    %1171 = vmatmul.mubr.f32.gmra.mrb[0].mxu0 %v1170
    %v1172 = vpop.f32.mrb[0].mxu0
    %v1173 = vadd.f32 %v490, %v1172
    %v1174 = vpop.f32.mrb[0].mxu0
    %1175 = vmatprep.mubr.f32.mxu0 0.0
    %v1176 = vand.u32 %v144, 4294901760
    %1177 = vmatmul.mubr.f32.gmra.mrb[0].mxu0 %v1176
    %v1178 = vpop.f32.mrb[0].mxu0
    %v1179 = vadd.f32 %v500, %v1178
    %v1180 = vpop.f32.mrb[0].mxu0
    %1181 = vmatprep.mubr.f32.mxu0 0.0
    %v1182 = vand.u32 %v147, 4294901760
    %1183 = vmatmul.mubr.f32.gmra.mrb[0].mxu0 %v1182
    %v1184 = vpop.f32.mrb[0].mxu0
    %v1185 = vadd.f32 %v510, %v1184
    %v1186 = vpop.f32.mrb[0].mxu0
    %1187 = vmatprep.mubr.f32.mxu0 0.0
    %v1188 = vand.u32 %v150, 4294901760
    %1189 = vmatmul.mubr.f32.gmra.mrb[0].mxu0 %v1188
    %v1190 = vpop.f32.mrb[0].mxu0
    %v1191 = vadd.f32 %v520, %v1190
    %v1192 = vpop.f32.mrb[0].mxu0
    %1193 = vmatprep.mubr.f32.mxu0 0.0
    %v1194 = vand.u32 %v153, 4294901760
    %1195 = vmatmul.mubr.f32.gmra.mrb[0].mxu0 %v1194
    %v1196 = vpop.f32.mrb[0].mxu0
    %v1197 = vadd.f32 %v530, %v1196
    %v1198 = vpop.f32.mrb[0].mxu0
    %1199 = vmatprep.mubr.f32.mxu0 0.0
    %v1200 = vand.u32 %v156, 4294901760
    %1201 = vmatmul.mubr.f32.gmra.mrb[0].mxu0 %v1200
    %v1202 = vpop.f32.mrb[0].mxu0
    %v1203 = vadd.f32 %v540, %v1202
    %v1204 = vpop.f32.mrb[0].mxu0
    %1205 = vmatprep.mubr.f32.mxu0 0.0
    %v1206 = vand.u32 %v159, 4294901760
    %1207 = vmatmul.mubr.f32.gmra.mrb[0].mxu0 %v1206
    %v1208 = vpop.f32.mrb[0].mxu0
    %v1209 = vadd.f32 %v550, %v1208
    %v1210 = vpop.f32.mrb[0].mxu0
    %1211 = vmatprep.mubr.f32.mxu0 0.0
    %v1212 = vand.u32 %v162, 4294901760
    %1213 = vmatmul.mubr.f32.gmra.mrb[0].mxu0 %v1212
    %v1214 = vpop.f32.mrb[0].mxu0
    %v1215 = vadd.f32 %v560, %v1214
    %v1216 = vpop.f32.mrb[0].mxu0
    %1217 = vmatprep.mubr.f32.mxu0 0.0
    %v1218 = vand.u32 %v165, 4294901760
    %1219 = vmatmul.mubr.f32.gmra.mrb[0].mxu0 %v1218
    %v1220 = vpop.f32.mrb[0].mxu0
    %v1221 = vadd.f32 %v570, %v1220
    %v1222 = vpop.f32.mrb[0].mxu0
    %1223 = vmatprep.mubr.f32.mxu0 0.0
    %v1224 = vand.u32 %v168, 4294901760
    %1225 = vmatmul.mubr.f32.gmra.mrb[0].mxu0 %v1224
    %v1226 = vpop.f32.mrb[0].mxu0
    %v1227 = vadd.f32 %v580, %v1226
    %v1228 = vpop.f32.mrb[0].mxu0
    %1229 = vmatprep.mubr.f32.mxu0 0.0
    %v1230 = vand.u32 %v171, 4294901760
    %1231 = vmatmul.mubr.f32.gmra.mrb[0].mxu0 %v1230
    %v1232 = vpop.f32.mrb[0].mxu0
    %v1233 = vadd.f32 %v590, %v1232
    %v1234 = vpop.f32.mrb[0].mxu0
    %1235 = vmatprep.mubr.f32.mxu0 0.0
    %v1236 = vand.u32 %v174, 4294901760
    %1237 = vmatmul.mubr.f32.gmra.mrb[0].mxu0 %v1236
    %v1238 = vpop.f32.mrb[0].mxu0
    %v1239 = vadd.f32 %v600, %v1238
    %v1240 = vpop.f32.mrb[0].mxu0
    %1241 = vmatprep.mubr.f32.mxu0 0.0
    %v1242 = vand.u32 %v177, 4294901760
    %1243 = vmatmul.mubr.f32.gmra.mrb[0].mxu0 %v1242
    %v1244 = vpop.f32.mrb[0].mxu0
    %v1245 = vadd.f32 %v610, %v1244
    %v1246 = vpop.f32.mrb[0].mxu0
    %1247 = vmatprep.mubr.f32.mxu0 0.0
    %v1248 = vand.u32 %v180, 4294901760
    %1249 = vmatmul.mubr.f32.gmra.mrb[0].mxu0 %v1248
    %v1250 = vpop.f32.mrb[0].mxu0
    %v1251 = vadd.f32 %v620, %v1250
    %v1252 = vpop.f32.mrb[0].mxu0
    %1253 = vmatprep.mubr.f32.mxu0 0.0
    %v1254 = vand.u32 %v183, 4294901760
    %1255 = vmatmul.mubr.f32.gmra.mrb[0].mxu0 %v1254
    %v1256 = vpop.f32.mrb[0].mxu0
    %v1257 = vadd.f32 %v630, %v1256
    %v1258 = vpop.f32.mrb[0].mxu0
    %1259 = vmatprep.mubr.f32.mxu0 0.0
    %v1260 = vand.u32 %v186, 4294901760
    %1261 = vmatmul.mubr.f32.gmra.mrb[0].mxu0 %v1260
    %v1262 = vpop.f32.mrb[0].mxu0
    %v1263 = vadd.f32 %v640, %v1262
    %v1264 = vpop.f32.mrb[0].mxu0
    %1265 = vmatprep.mubr.f32.mxu0 0.0
    %v1266 = vand.u32 %v189, 4294901760
    %1267 = vmatmul.mubr.f32.gmra.mrb[0].mxu0 %v1266
    %v1268 = vpop.f32.mrb[0].mxu0
    %v1269 = vadd.f32 %v650, %v1268
    %v1270 = vpop.f32.mrb[0].mxu0
    %1271 = vmatprep.mubr.f32.mxu0 0.0
    %v1272 = vand.u32 %v192, 4294901760
    %1273 = vmatmul.mubr.f32.gmra.mrb[0].mxu0 %v1272
    %v1274 = vpop.f32.mrb[0].mxu0
    %v1275 = vadd.f32 %v660, %v1274
    %v1276 = vpop.f32.mrb[0].mxu0
    %1277 = vmatprep.mubr.f32.mxu0 0.0
    %v1278 = vand.u32 %v195, 4294901760
    %1279 = vmatmul.mubr.f32.gmra.mrb[0].mxu0 %v1278
    %v1280 = vpop.f32.mrb[0].mxu0
    %v1281 = vadd.f32 %v670, %v1280
    %v1282 = vpop.f32.mrb[0].mxu0
    %1283 = vmatprep.mubr.f32.mxu0 0.0
    %v1284 = vand.u32 %v198, 4294901760
    %1285 = vmatmul.mubr.f32.gmra.mrb[0].mxu0 %v1284
    %v1286 = vpop.f32.mrb[0].mxu0
    %v1287 = vadd.f32 %v680, %v1286
    %v1288 = vpop.f32.mrb[0].mxu0
    %1289 = vmatprep.mubr.f32.mxu0 0.0
    %v1290 = vand.u32 %v201, 4294901760
    %1291 = vmatmul.mubr.f32.gmra.mrb[0].mxu0 %v1290
    %v1292 = vpop.f32.mrb[0].mxu0
    %v1293 = vadd.f32 %v690, %v1292
    %v1294 = vpop.f32.mrb[0].mxu0
    %1295 = vmatprep.mubr.f32.mxu0 0.0
    %v1296 = vand.u32 %v204, 4294901760
    %1297 = vmatmul.mubr.f32.gmra.mrb[0].mxu0 %v1296
    %v1298 = vpop.f32.mrb[0].mxu0
    %v1299 = vadd.f32 %v700, %v1298
    %v1300 = vpop.f32.mrb[0].mxu0
    %1301 = vmatprep.mubr.f32.mxu0 0.0
    %v1302 = vand.u32 %v207, 4294901760
    %1303 = vmatmul.mubr.f32.gmra.mrb[0].mxu0 %v1302
    %v1304 = vpop.f32.mrb[0].mxu0
    %v1305 = vadd.f32 %v710, %v1304
    %v1306 = vpop.f32.mrb[0].mxu0
    %1307 = vmatprep.mubr.f32.mxu0 0.0
    %v1308 = vand.u32 %v210, 4294901760
    %1309 = vmatmul.mubr.f32.gmra.mrb[0].mxu0 %v1308
    %v1310 = vpop.f32.mrb[0].mxu0
    %v1311 = vadd.f32 %v720, %v1310
    %v1312 = vpop.f32.mrb[0].mxu0
    %1313 = vmatprep.mubr.f32.mxu0 0.0
    %v1314 = vand.u32 %v213, 4294901760
    %1315 = vmatmul.mubr.f32.gmra.mrb[0].mxu0 %v1314
    %v1316 = vpop.f32.mrb[0].mxu0
    %v1317 = vadd.f32 %v730, %v1316
    %v1318 = vpop.f32.mrb[0].mxu0
    %1319 = vmatprep.mubr.f32.mxu0 0.0
    %v1320 = vand.u32 %v216, 4294901760
    %1321 = vmatmul.mubr.f32.gmra.mrb[0].mxu0 %v1320
    %v1322 = vpop.f32.mrb[0].mxu0
    %v1323 = vadd.f32 %v740, %v1322
    %v1324 = vpop.f32.mrb[0].mxu0
    %1325 = vmatprep.mubr.f32.mxu0 0.0
    %v1326 = vand.u32 %v219, 4294901760
    %1327 = vmatmul.mubr.f32.gmra.mrb[0].mxu0 %v1326
    %v1328 = vpop.f32.mrb[0].mxu0
    %v1329 = vadd.f32 %v750, %v1328
    %v1330 = vpop.f32.mrb[0].mxu0
    %1331 = vmatprep.mubr.f32.mxu0 0.0
    %v1332 = vand.u32 %v222, 4294901760
    %1333 = vmatmul.mubr.f32.gmra.mrb[0].mxu0 %v1332
    %v1334 = vpop.f32.mrb[0].mxu0
    %v1335 = vadd.f32 %v760, %v1334
    %v1336 = vpop.f32.mrb[0].mxu0
    %1337 = vmatprep.mubr.f32.mxu0 0.0
    %v1338 = vand.u32 %v225, 4294901760
    %1339 = vmatmul.mubr.f32.gmra.mrb[0].mxu0 %v1338
    %v1340 = vpop.f32.mrb[0].mxu0
    %v1341 = vadd.f32 %v770, %v1340
    %v1342 = vpop.f32.mrb[0].mxu0
    %1343 = vmatprep.mubr.f32.mxu0 0.0
    %v1344 = vand.u32 %v228, 4294901760
    %1345 = vmatmul.mubr.f32.gmra.mrb[0].mxu0 %v1344
    %v1346 = vpop.f32.mrb[0].mxu0
    %v1347 = vadd.f32 %v780, %v1346
    %v1348 = vpop.f32.mrb[0].mxu0
    %1349 = vmatprep.mubr.f32.mxu0 0.0
    %v1350 = vand.u32 %v231, 4294901760
    %1351 = vmatmul.mubr.f32.gmra.mrb[0].mxu0 %v1350
    %v1352 = vpop.f32.mrb[0].mxu0
    %v1353 = vadd.f32 %v790, %v1352
    %v1354 = vpop.f32.mrb[0].mxu0
    %1355 = vmatprep.mubr.f32.mxu0 0.0
    %v1356 = vand.u32 %v234, 4294901760
    %1357 = vmatmul.mubr.f32.gmra.mrb[0].mxu0 %v1356
    %v1358 = vpop.f32.mrb[0].mxu0
    %v1359 = vadd.f32 %v800, %v1358
    %v1360 = vpop.f32.mrb[0].mxu0
    %1361 = vmatprep.mubr.f32.mxu0 0.0
    %v1362 = vand.u32 %v237, 4294901760
    %1363 = vmatmul.mubr.f32.gmra.mrb[0].mxu0 %v1362
    %v1364 = vpop.f32.mrb[0].mxu0
    %v1365 = vadd.f32 %v810, %v1364
    %v1366 = vpop.f32.mrb[0].mxu0
    %1367 = vmatprep.mubr.f32.mxu0 0.0
    %v1368 = vand.u32 %v240, 4294901760
    %1369 = vmatmul.mubr.f32.gmra.mrb[0].mxu0 %v1368
    %v1370 = vpop.f32.mrb[0].mxu0
    %v1371 = vadd.f32 %v820, %v1370
    %v1372 = vpop.f32.mrb[0].mxu0
    %1373 = vmatprep.mubr.f32.mxu0 0.0
    %v1374 = vand.u32 %v243, 4294901760
    %1375 = vmatmul.mubr.f32.gmra.mrb[0].mxu0 %v1374
    %v1376 = vpop.f32.mrb[0].mxu0
    %v1377 = vadd.f32 %v830, %v1376
    %v1378 = vpop.f32.mrb[0].mxu0
    %1379 = vmatprep.mubr.f32.mxu0 0.0
    %v1380 = vand.u32 %v246, 4294901760
    %1381 = vmatmul.mubr.f32.gmra.mrb[0].mxu0 %v1380
    %v1382 = vpop.f32.mrb[0].mxu0
    %v1383 = vadd.f32 %v840, %v1382
    %v1384 = vpop.f32.mrb[0].mxu0
    %1385 = vmatprep.mubr.f32.mxu0 0.0
    %v1386 = vand.u32 %v249, 4294901760
    %1387 = vmatmul.mubr.f32.gmra.mrb[0].mxu0 %v1386
    %v1388 = vpop.f32.mrb[0].mxu0
    %v1389 = vadd.f32 %v850, %v1388
    %v1390 = vpop.f32.mrb[0].mxu0
    %1391 = vmatprep.mubr.f32.mxu0 0.0
    %v1392 = vand.u32 %v252, 4294901760
    %1393 = vmatmul.mubr.f32.gmra.mrb[0].mxu0 %v1392
    %v1394 = vpop.f32.mrb[0].mxu0
    %v1395 = vadd.f32 %v860, %v1394
    %v1396 = vpop.f32.mrb[0].mxu0
    %1397 = vmatprep.mubr.f32.mxu0 0.0
    %v1398 = vand.u32 %v255, 4294901760
    %1399 = vmatmul.mubr.f32.gmra.mrb[0].mxu0 %v1398
    %v1400 = vpop.f32.mrb[0].mxu0
    %v1401 = vadd.f32 %v870, %v1400
    %v1402 = vpop.f32.mrb[0].mxu0
    %1403 = vmatprep.mubr.f32.mxu0 0.0
    %v1404 = vand.u32 %v258, 4294901760
    %1405 = vmatmul.mubr.f32.gmra.mrb[0].mxu0 %v1404
    %v1406 = vpop.f32.mrb[0].mxu0
    %v1407 = vadd.f32 %v880, %v1406
    %v1408 = vpop.f32.mrb[0].mxu0
    %1409 = vmatprep.mubr.f32.mxu0 0.0
    %v1410 = vand.u32 %v261, 4294901760
    %1411 = vmatmul.mubr.f32.gmra.mrb[0].mxu0 %v1410
    %v1412 = vpop.f32.mrb[0].mxu0
    %v1413 = vadd.f32 %v890, %v1412
    %v1414 = vpop.f32.mrb[0].mxu0
    %1415 = vmatprep.mubr.f32.mxu0 0.0
    %v1416 = vand.u32 %v264, 4294901760
    %1417 = vmatmul.mubr.f32.gmra.mrb[0].mxu0 %v1416
    %v1418 = vpop.f32.mrb[0].mxu0
    %v1419 = vadd.f32 %v900, %v1418
    %v1420 = vpop.f32.mrb[0].mxu0
    %1421 = vmatprep.mubr.f32.mxu0 0.0
    %v1422 = vand.u32 %v267, 4294901760
    %1423 = vmatmul.mubr.f32.gmra.mrb[0].mxu0 %v1422
    %v1424 = vpop.f32.mrb[0].mxu0
    %v1425 = vadd.f32 %v910, %v1424
    %v1426 = vpop.f32.mrb[0].mxu0
    %1427 = vmatprep.mubr.f32.mxu0 0.0
    %v1428 = vand.u32 %v270, 4294901760
    %1429 = vmatmul.mubr.f32.gmra.mrb[0].mxu0 %v1428
    %v1430 = vpop.f32.mrb[0].mxu0
    %v1431 = vadd.f32 %v920, %v1430
    %v1432 = vpop.f32.mrb[0].mxu0
    %1433 = vmatprep.mubr.f32.mxu0 0.0
    %v1434 = vand.u32 %v273, 4294901760
    %1435 = vmatmul.mubr.f32.gmra.mrb[0].mxu0 %v1434
    %v1436 = vpop.f32.mrb[0].mxu0
    %v1437 = vadd.f32 %v930, %v1436
    %v1438 = vpop.f32.mrb[0].mxu0
    %1439 = vmatprep.mubr.f32.mxu0 0.0
    %v1440 = vand.u32 %v276, 4294901760
    %1441 = vmatmul.mubr.f32.gmra.mrb[0].mxu0 %v1440
    %v1442 = vpop.f32.mrb[0].mxu0
    %v1443 = vadd.f32 %v940, %v1442
    %v1444 = vpop.f32.mrb[0].mxu0
    %1445 = vmatprep.mubr.f32.mxu0 0.0
    %v1446 = vand.u32 %v279, 4294901760
    %1447 = vmatmul.mubr.f32.gmra.mrb[0].mxu0 %v1446
    %v1448 = vpop.f32.mrb[0].mxu0
    %v1449 = vadd.f32 %v950, %v1448
    %v1450 = vpop.f32.mrb[0].mxu0
    %1451 = vmatprep.mubr.f32.mxu0 0.0
    %v1452 = vand.u32 %v282, 4294901760
    %1453 = vmatmul.mubr.f32.gmra.mrb[0].mxu0 %v1452
    %v1454 = vpop.f32.mrb[0].mxu0
    %v1455 = vadd.f32 %v960, %v1454
    %v1456 = vpop.f32.mrb[0].mxu0
    %1457 = vdwg.mxu0
    %1458 = vmatprep.subr.mxu0 0.0
    %v1459 = vand.u32 %v89, 4294901760
    %v1460 = vsub.f32 %v89, %v1459
    %1461 = vmatpush1.msra.mxu0 %v1460
    %1462 = vmatprep.subr.mxu0 0.0
    %v1463 = vand.u32 %v90, 4294901760
    %v1464 = vsub.f32 %v90, %v1463
    %1465 = vmatpush1.msra.mxu0 %v1464
    %1466 = vmatprep.subr.mxu0 0.0
    %v1467 = vand.u32 %v91, 4294901760
    %v1468 = vsub.f32 %v91, %v1467
    %1469 = vmatpush1.msra.mxu0 %v1468
    %1470 = vmatprep.subr.mxu0 0.0
    %v1471 = vand.u32 %v92, 4294901760
    %v1472 = vsub.f32 %v92, %v1471
    %1473 = vmatpush1.msra.mxu0 %v1472
    %1474 = vmatprep.subr.mxu0 0.0
    %v1475 = vand.u32 %v93, 4294901760
    %v1476 = vsub.f32 %v93, %v1475
    %1477 = vmatpush1.msra.mxu0 %v1476
    %1478 = vmatprep.subr.mxu0 0.0
    %v1479 = vand.u32 %v94, 4294901760
    %v1480 = vsub.f32 %v94, %v1479
    %1481 = vmatpush1.msra.mxu0 %v1480
    %1482 = vmatprep.subr.mxu0 0.0
    %v1483 = vand.u32 %v95, 4294901760
    %v1484 = vsub.f32 %v95, %v1483
    %1485 = vmatpush1.msra.mxu0 %v1484
    %1486 = vmatprep.subr.mxu0 0.0
    %v1487 = vand.u32 %v96, 4294901760
    %v1488 = vsub.f32 %v96, %v1487
    %1489 = vmatpush1.msra.mxu0 %v1488
    %1490 = vmatprep.subr.mxu0 0.0
    %v1491 = vand.u32 %v97, 4294901760
    %v1492 = vsub.f32 %v97, %v1491
    %1493 = vmatpush1.msra.mxu0 %v1492
    %1494 = vmatprep.subr.mxu0 0.0
    %v1495 = vand.u32 %v98, 4294901760
    %v1496 = vsub.f32 %v98, %v1495
    %1497 = vmatpush1.msra.mxu0 %v1496
    %1498 = vmatprep.subr.mxu0 0.0
    %v1499 = vand.u32 %v99, 4294901760
    %v1500 = vsub.f32 %v99, %v1499
    %1501 = vmatpush1.msra.mxu0 %v1500
    %1502 = vmatprep.subr.mxu0 0.0
    %v1503 = vand.u32 %v100, 4294901760
    %v1504 = vsub.f32 %v100, %v1503
    %1505 = vmatpush1.msra.mxu0 %v1504
    %1506 = vmatprep.subr.mxu0 0.0
    %v1507 = vand.u32 %v101, 4294901760
    %v1508 = vsub.f32 %v101, %v1507
    %1509 = vmatpush1.msra.mxu0 %v1508
    %1510 = vmatprep.subr.mxu0 0.0
    %v1511 = vand.u32 %v102, 4294901760
    %v1512 = vsub.f32 %v102, %v1511
    %1513 = vmatpush1.msra.mxu0 %v1512
    %1514 = vmatprep.subr.mxu0 0.0
    %1515 = vmatpush1.msra.mxu0 0.0
    %1516 = vmatprep.subr.mxu0 0.0
    %1517 = vmatpush1.msra.mxu0 0.0
    %1518 = vmatprep.subr.mxu0 0.0
    %1519 = vmatpush1.msra.mxu0 0.0
    %1520 = vmatprep.subr.mxu0 0.0
    %1521 = vmatpush1.msra.mxu0 0.0
    %1522 = vmatprep.subr.mxu0 0.0
    %1523 = vmatpush1.msra.mxu0 0.0
    %1524 = vmatprep.subr.mxu0 0.0
    %1525 = vmatpush1.msra.mxu0 0.0
    %1526 = vmatprep.subr.mxu0 0.0
    %1527 = vmatpush1.msra.mxu0 0.0
    %1528 = vmatprep.subr.mxu0 0.0
    %1529 = vmatpush1.msra.mxu0 0.0
    %1530 = vmatprep.subr.mxu0 0.0
    %1531 = vmatpush1.msra.mxu0 0.0
    %1532 = vmatprep.subr.mxu0 0.0
    %1533 = vmatpush1.msra.mxu0 0.0
    %1534 = vmatprep.subr.mxu0 0.0
    %1535 = vmatpush1.msra.mxu0 0.0
    %1536 = vmatprep.subr.mxu0 0.0
    %1537 = vmatpush1.msra.mxu0 0.0
    %1538 = vmatprep.subr.mxu0 0.0
    %1539 = vmatpush1.msra.mxu0 0.0
    %1540 = vmatprep.subr.mxu0 0.0
    %1541 = vmatpush1.msra.mxu0 0.0
    %1542 = vmatprep.subr.mxu0 0.0
    %1543 = vmatpush1.msra.mxu0 0.0
    %1544 = vmatprep.subr.mxu0 0.0
    %1545 = vmatpush1.msra.mxu0 0.0
    %1546 = vmatprep.subr.mxu0 0.0
    %1547 = vmatpush1.msra.mxu0 0.0
    %1548 = vmatprep.subr.mxu0 0.0
    %1549 = vmatpush1.msra.mxu0 0.0
    %1550 = vmatprep.mubr.f32.mxu0 0.0
    %v1551 = vand.u32 %v105, 4294901760
    %v1552 = vsub.f32 %v105, %v1551
    %1553 = vmatmul.mubr.f32.gmra.mrb[0].mxu0 %v1552
    %v1554 = vpop.f32.mrb[0].mxu0
    %v1555 = vadd.f32 %v1101, %v1554
    %v1556 = vpop.f32.mrb[0].mxu0
    %1557 = vmatprep.mubr.f32.mxu0 0.0
    %v1558 = vand.u32 %v108, 4294901760
    %v1559 = vsub.f32 %v108, %v1558
    %1560 = vmatmul.mubr.f32.gmra.mrb[0].mxu0 %v1559
    %v1561 = vpop.f32.mrb[0].mxu0
    %v1562 = vadd.f32 %v1107, %v1561
    %v1563 = vpop.f32.mrb[0].mxu0
    %1564 = vmatprep.mubr.f32.mxu0 0.0
    %v1565 = vand.u32 %v111, 4294901760
    %v1566 = vsub.f32 %v111, %v1565
    %1567 = vmatmul.mubr.f32.gmra.mrb[0].mxu0 %v1566
    %v1568 = vpop.f32.mrb[0].mxu0
    %v1569 = vadd.f32 %v1113, %v1568
    %v1570 = vpop.f32.mrb[0].mxu0
    %1571 = vmatprep.mubr.f32.mxu0 0.0
    %v1572 = vand.u32 %v114, 4294901760
    %v1573 = vsub.f32 %v114, %v1572
    %1574 = vmatmul.mubr.f32.gmra.mrb[0].mxu0 %v1573
    %v1575 = vpop.f32.mrb[0].mxu0
    %v1576 = vadd.f32 %v1119, %v1575
    %v1577 = vpop.f32.mrb[0].mxu0
    %1578 = vmatprep.mubr.f32.mxu0 0.0
    %v1579 = vand.u32 %v117, 4294901760
    %v1580 = vsub.f32 %v117, %v1579
    %1581 = vmatmul.mubr.f32.gmra.mrb[0].mxu0 %v1580
    %v1582 = vpop.f32.mrb[0].mxu0
    %v1583 = vadd.f32 %v1125, %v1582
    %v1584 = vpop.f32.mrb[0].mxu0
    %1585 = vmatprep.mubr.f32.mxu0 0.0
    %v1586 = vand.u32 %v120, 4294901760
    %v1587 = vsub.f32 %v120, %v1586
    %1588 = vmatmul.mubr.f32.gmra.mrb[0].mxu0 %v1587
    %v1589 = vpop.f32.mrb[0].mxu0
    %v1590 = vadd.f32 %v1131, %v1589
    %v1591 = vpop.f32.mrb[0].mxu0
    %1592 = vmatprep.mubr.f32.mxu0 0.0
    %v1593 = vand.u32 %v123, 4294901760
    %v1594 = vsub.f32 %v123, %v1593
    %1595 = vmatmul.mubr.f32.gmra.mrb[0].mxu0 %v1594
    %v1596 = vpop.f32.mrb[0].mxu0
    %v1597 = vadd.f32 %v1137, %v1596
    %v1598 = vpop.f32.mrb[0].mxu0
    %1599 = vmatprep.mubr.f32.mxu0 0.0
    %v1600 = vand.u32 %v126, 4294901760
    %v1601 = vsub.f32 %v126, %v1600
    %1602 = vmatmul.mubr.f32.gmra.mrb[0].mxu0 %v1601
    %v1603 = vpop.f32.mrb[0].mxu0
    %v1604 = vadd.f32 %v1143, %v1603
    %v1605 = vpop.f32.mrb[0].mxu0
    %1606 = vmatprep.mubr.f32.mxu0 0.0
    %v1607 = vand.u32 %v129, 4294901760
    %v1608 = vsub.f32 %v129, %v1607
    %1609 = vmatmul.mubr.f32.gmra.mrb[0].mxu0 %v1608
    %v1610 = vpop.f32.mrb[0].mxu0
    %v1611 = vadd.f32 %v1149, %v1610
    %v1612 = vpop.f32.mrb[0].mxu0
    %1613 = vmatprep.mubr.f32.mxu0 0.0
    %v1614 = vand.u32 %v132, 4294901760
    %v1615 = vsub.f32 %v132, %v1614
    %1616 = vmatmul.mubr.f32.gmra.mrb[0].mxu0 %v1615
    %v1617 = vpop.f32.mrb[0].mxu0
    %v1618 = vadd.f32 %v1155, %v1617
    %v1619 = vpop.f32.mrb[0].mxu0
    %1620 = vmatprep.mubr.f32.mxu0 0.0
    %v1621 = vand.u32 %v135, 4294901760
    %v1622 = vsub.f32 %v135, %v1621
    %1623 = vmatmul.mubr.f32.gmra.mrb[0].mxu0 %v1622
    %v1624 = vpop.f32.mrb[0].mxu0
    %v1625 = vadd.f32 %v1161, %v1624
    %v1626 = vpop.f32.mrb[0].mxu0
    %1627 = vmatprep.mubr.f32.mxu0 0.0
    %v1628 = vand.u32 %v138, 4294901760
    %v1629 = vsub.f32 %v138, %v1628
    %1630 = vmatmul.mubr.f32.gmra.mrb[0].mxu0 %v1629
    %v1631 = vpop.f32.mrb[0].mxu0
    %v1632 = vadd.f32 %v1167, %v1631
    %v1633 = vpop.f32.mrb[0].mxu0
    %1634 = vmatprep.mubr.f32.mxu0 0.0
    %v1635 = vand.u32 %v141, 4294901760
    %v1636 = vsub.f32 %v141, %v1635
    %1637 = vmatmul.mubr.f32.gmra.mrb[0].mxu0 %v1636
    %v1638 = vpop.f32.mrb[0].mxu0
    %v1639 = vadd.f32 %v1173, %v1638
    %v1640 = vpop.f32.mrb[0].mxu0
    %1641 = vmatprep.mubr.f32.mxu0 0.0
    %v1642 = vand.u32 %v144, 4294901760
    %v1643 = vsub.f32 %v144, %v1642
    %1644 = vmatmul.mubr.f32.gmra.mrb[0].mxu0 %v1643
    %v1645 = vpop.f32.mrb[0].mxu0
    %v1646 = vadd.f32 %v1179, %v1645
    %v1647 = vpop.f32.mrb[0].mxu0
    %1648 = vmatprep.mubr.f32.mxu0 0.0
    %v1649 = vand.u32 %v147, 4294901760
    %v1650 = vsub.f32 %v147, %v1649
    %1651 = vmatmul.mubr.f32.gmra.mrb[0].mxu0 %v1650
    %v1652 = vpop.f32.mrb[0].mxu0
    %v1653 = vadd.f32 %v1185, %v1652
    %v1654 = vpop.f32.mrb[0].mxu0
    %1655 = vmatprep.mubr.f32.mxu0 0.0
    %v1656 = vand.u32 %v150, 4294901760
    %v1657 = vsub.f32 %v150, %v1656
    %1658 = vmatmul.mubr.f32.gmra.mrb[0].mxu0 %v1657
    %v1659 = vpop.f32.mrb[0].mxu0
    %v1660 = vadd.f32 %v1191, %v1659
    %v1661 = vpop.f32.mrb[0].mxu0
    %1662 = vmatprep.mubr.f32.mxu0 0.0
    %v1663 = vand.u32 %v153, 4294901760
    %v1664 = vsub.f32 %v153, %v1663
    %1665 = vmatmul.mubr.f32.gmra.mrb[0].mxu0 %v1664
    %v1666 = vpop.f32.mrb[0].mxu0
    %v1667 = vadd.f32 %v1197, %v1666
    %v1668 = vpop.f32.mrb[0].mxu0
    %1669 = vmatprep.mubr.f32.mxu0 0.0
    %v1670 = vand.u32 %v156, 4294901760
    %v1671 = vsub.f32 %v156, %v1670
    %1672 = vmatmul.mubr.f32.gmra.mrb[0].mxu0 %v1671
    %v1673 = vpop.f32.mrb[0].mxu0
    %v1674 = vadd.f32 %v1203, %v1673
    %v1675 = vpop.f32.mrb[0].mxu0
    %1676 = vmatprep.mubr.f32.mxu0 0.0
    %v1677 = vand.u32 %v159, 4294901760
    %v1678 = vsub.f32 %v159, %v1677
    %1679 = vmatmul.mubr.f32.gmra.mrb[0].mxu0 %v1678
    %v1680 = vpop.f32.mrb[0].mxu0
    %v1681 = vadd.f32 %v1209, %v1680
    %v1682 = vpop.f32.mrb[0].mxu0
    %1683 = vmatprep.mubr.f32.mxu0 0.0
    %v1684 = vand.u32 %v162, 4294901760
    %v1685 = vsub.f32 %v162, %v1684
    %1686 = vmatmul.mubr.f32.gmra.mrb[0].mxu0 %v1685
    %v1687 = vpop.f32.mrb[0].mxu0
    %v1688 = vadd.f32 %v1215, %v1687
    %v1689 = vpop.f32.mrb[0].mxu0
    %1690 = vmatprep.mubr.f32.mxu0 0.0
    %v1691 = vand.u32 %v165, 4294901760
    %v1692 = vsub.f32 %v165, %v1691
    %1693 = vmatmul.mubr.f32.gmra.mrb[0].mxu0 %v1692
    %v1694 = vpop.f32.mrb[0].mxu0
    %v1695 = vadd.f32 %v1221, %v1694
    %v1696 = vpop.f32.mrb[0].mxu0
    %1697 = vmatprep.mubr.f32.mxu0 0.0
    %v1698 = vand.u32 %v168, 4294901760
    %v1699 = vsub.f32 %v168, %v1698
    %1700 = vmatmul.mubr.f32.gmra.mrb[0].mxu0 %v1699
    %v1701 = vpop.f32.mrb[0].mxu0
    %v1702 = vadd.f32 %v1227, %v1701
    %v1703 = vpop.f32.mrb[0].mxu0
    %1704 = vmatprep.mubr.f32.mxu0 0.0
    %v1705 = vand.u32 %v171, 4294901760
    %v1706 = vsub.f32 %v171, %v1705
    %1707 = vmatmul.mubr.f32.gmra.mrb[0].mxu0 %v1706
    %v1708 = vpop.f32.mrb[0].mxu0
    %v1709 = vadd.f32 %v1233, %v1708
    %v1710 = vpop.f32.mrb[0].mxu0
    %1711 = vmatprep.mubr.f32.mxu0 0.0
    %v1712 = vand.u32 %v174, 4294901760
    %v1713 = vsub.f32 %v174, %v1712
    %1714 = vmatmul.mubr.f32.gmra.mrb[0].mxu0 %v1713
    %v1715 = vpop.f32.mrb[0].mxu0
    %v1716 = vadd.f32 %v1239, %v1715
    %v1717 = vpop.f32.mrb[0].mxu0
    %1718 = vmatprep.mubr.f32.mxu0 0.0
    %v1719 = vand.u32 %v177, 4294901760
    %v1720 = vsub.f32 %v177, %v1719
    %1721 = vmatmul.mubr.f32.gmra.mrb[0].mxu0 %v1720
    %v1722 = vpop.f32.mrb[0].mxu0
    %v1723 = vadd.f32 %v1245, %v1722
    %v1724 = vpop.f32.mrb[0].mxu0
    %1725 = vmatprep.mubr.f32.mxu0 0.0
    %v1726 = vand.u32 %v180, 4294901760
    %v1727 = vsub.f32 %v180, %v1726
    %1728 = vmatmul.mubr.f32.gmra.mrb[0].mxu0 %v1727
    %v1729 = vpop.f32.mrb[0].mxu0
    %v1730 = vadd.f32 %v1251, %v1729
    %v1731 = vpop.f32.mrb[0].mxu0
    %1732 = vmatprep.mubr.f32.mxu0 0.0
    %v1733 = vand.u32 %v183, 4294901760
    %v1734 = vsub.f32 %v183, %v1733
    %1735 = vmatmul.mubr.f32.gmra.mrb[0].mxu0 %v1734
    %v1736 = vpop.f32.mrb[0].mxu0
    %v1737 = vadd.f32 %v1257, %v1736
    %v1738 = vpop.f32.mrb[0].mxu0
    %1739 = vmatprep.mubr.f32.mxu0 0.0
    %v1740 = vand.u32 %v186, 4294901760
    %v1741 = vsub.f32 %v186, %v1740
    %1742 = vmatmul.mubr.f32.gmra.mrb[0].mxu0 %v1741
    %v1743 = vpop.f32.mrb[0].mxu0
    %v1744 = vadd.f32 %v1263, %v1743
    %v1745 = vpop.f32.mrb[0].mxu0
    %1746 = vmatprep.mubr.f32.mxu0 0.0
    %v1747 = vand.u32 %v189, 4294901760
    %v1748 = vsub.f32 %v189, %v1747
    %1749 = vmatmul.mubr.f32.gmra.mrb[0].mxu0 %v1748
    %v1750 = vpop.f32.mrb[0].mxu0
    %v1751 = vadd.f32 %v1269, %v1750
    %v1752 = vpop.f32.mrb[0].mxu0
    %1753 = vmatprep.mubr.f32.mxu0 0.0
    %v1754 = vand.u32 %v192, 4294901760
    %v1755 = vsub.f32 %v192, %v1754
    %1756 = vmatmul.mubr.f32.gmra.mrb[0].mxu0 %v1755
    %v1757 = vpop.f32.mrb[0].mxu0
    %v1758 = vadd.f32 %v1275, %v1757
    %v1759 = vpop.f32.mrb[0].mxu0
    %1760 = vmatprep.mubr.f32.mxu0 0.0
    %v1761 = vand.u32 %v195, 4294901760
    %v1762 = vsub.f32 %v195, %v1761
    %1763 = vmatmul.mubr.f32.gmra.mrb[0].mxu0 %v1762
    %v1764 = vpop.f32.mrb[0].mxu0
    %v1765 = vadd.f32 %v1281, %v1764
    %v1766 = vpop.f32.mrb[0].mxu0
    %1767 = vmatprep.mubr.f32.mxu0 0.0
    %v1768 = vand.u32 %v198, 4294901760
    %v1769 = vsub.f32 %v198, %v1768
    %1770 = vmatmul.mubr.f32.gmra.mrb[0].mxu0 %v1769
    %v1771 = vpop.f32.mrb[0].mxu0
    %v1772 = vadd.f32 %v1287, %v1771
    %v1773 = vpop.f32.mrb[0].mxu0
    %1774 = vmatprep.mubr.f32.mxu0 0.0
    %v1775 = vand.u32 %v201, 4294901760
    %v1776 = vsub.f32 %v201, %v1775
    %1777 = vmatmul.mubr.f32.gmra.mrb[0].mxu0 %v1776
    %v1778 = vpop.f32.mrb[0].mxu0
    %v1779 = vadd.f32 %v1293, %v1778
    %v1780 = vpop.f32.mrb[0].mxu0
    %1781 = vmatprep.mubr.f32.mxu0 0.0
    %v1782 = vand.u32 %v204, 4294901760
    %v1783 = vsub.f32 %v204, %v1782
    %1784 = vmatmul.mubr.f32.gmra.mrb[0].mxu0 %v1783
    %v1785 = vpop.f32.mrb[0].mxu0
    %v1786 = vadd.f32 %v1299, %v1785
    %v1787 = vpop.f32.mrb[0].mxu0
    %1788 = vmatprep.mubr.f32.mxu0 0.0
    %v1789 = vand.u32 %v207, 4294901760
    %v1790 = vsub.f32 %v207, %v1789
    %1791 = vmatmul.mubr.f32.gmra.mrb[0].mxu0 %v1790
    %v1792 = vpop.f32.mrb[0].mxu0
    %v1793 = vadd.f32 %v1305, %v1792
    %v1794 = vpop.f32.mrb[0].mxu0
    %1795 = vmatprep.mubr.f32.mxu0 0.0
    %v1796 = vand.u32 %v210, 4294901760
    %v1797 = vsub.f32 %v210, %v1796
    %1798 = vmatmul.mubr.f32.gmra.mrb[0].mxu0 %v1797
    %v1799 = vpop.f32.mrb[0].mxu0
    %v1800 = vadd.f32 %v1311, %v1799
    %v1801 = vpop.f32.mrb[0].mxu0
    %1802 = vmatprep.mubr.f32.mxu0 0.0
    %v1803 = vand.u32 %v213, 4294901760
    %v1804 = vsub.f32 %v213, %v1803
    %1805 = vmatmul.mubr.f32.gmra.mrb[0].mxu0 %v1804
    %v1806 = vpop.f32.mrb[0].mxu0
    %v1807 = vadd.f32 %v1317, %v1806
    %v1808 = vpop.f32.mrb[0].mxu0
    %1809 = vmatprep.mubr.f32.mxu0 0.0
    %v1810 = vand.u32 %v216, 4294901760
    %v1811 = vsub.f32 %v216, %v1810
    %1812 = vmatmul.mubr.f32.gmra.mrb[0].mxu0 %v1811
    %v1813 = vpop.f32.mrb[0].mxu0
    %v1814 = vadd.f32 %v1323, %v1813
    %v1815 = vpop.f32.mrb[0].mxu0
    %1816 = vmatprep.mubr.f32.mxu0 0.0
    %v1817 = vand.u32 %v219, 4294901760
    %v1818 = vsub.f32 %v219, %v1817
    %1819 = vmatmul.mubr.f32.gmra.mrb[0].mxu0 %v1818
    %v1820 = vpop.f32.mrb[0].mxu0
    %v1821 = vadd.f32 %v1329, %v1820
    %v1822 = vpop.f32.mrb[0].mxu0
    %1823 = vmatprep.mubr.f32.mxu0 0.0
    %v1824 = vand.u32 %v222, 4294901760
    %v1825 = vsub.f32 %v222, %v1824
    %1826 = vmatmul.mubr.f32.gmra.mrb[0].mxu0 %v1825
    %v1827 = vpop.f32.mrb[0].mxu0
    %v1828 = vadd.f32 %v1335, %v1827
    %v1829 = vpop.f32.mrb[0].mxu0
    %1830 = vmatprep.mubr.f32.mxu0 0.0
    %v1831 = vand.u32 %v225, 4294901760
    %v1832 = vsub.f32 %v225, %v1831
    %1833 = vmatmul.mubr.f32.gmra.mrb[0].mxu0 %v1832
    %v1834 = vpop.f32.mrb[0].mxu0
    %v1835 = vadd.f32 %v1341, %v1834
    %v1836 = vpop.f32.mrb[0].mxu0
    %1837 = vmatprep.mubr.f32.mxu0 0.0
    %v1838 = vand.u32 %v228, 4294901760
    %v1839 = vsub.f32 %v228, %v1838
    %1840 = vmatmul.mubr.f32.gmra.mrb[0].mxu0 %v1839
    %v1841 = vpop.f32.mrb[0].mxu0
    %v1842 = vadd.f32 %v1347, %v1841
    %v1843 = vpop.f32.mrb[0].mxu0
    %1844 = vmatprep.mubr.f32.mxu0 0.0
    %v1845 = vand.u32 %v231, 4294901760
    %v1846 = vsub.f32 %v231, %v1845
    %1847 = vmatmul.mubr.f32.gmra.mrb[0].mxu0 %v1846
    %v1848 = vpop.f32.mrb[0].mxu0
    %v1849 = vadd.f32 %v1353, %v1848
    %v1850 = vpop.f32.mrb[0].mxu0
    %1851 = vmatprep.mubr.f32.mxu0 0.0
    %v1852 = vand.u32 %v234, 4294901760
    %v1853 = vsub.f32 %v234, %v1852
    %1854 = vmatmul.mubr.f32.gmra.mrb[0].mxu0 %v1853
    %v1855 = vpop.f32.mrb[0].mxu0
    %v1856 = vadd.f32 %v1359, %v1855
    %v1857 = vpop.f32.mrb[0].mxu0
    %1858 = vmatprep.mubr.f32.mxu0 0.0
    %v1859 = vand.u32 %v237, 4294901760
    %v1860 = vsub.f32 %v237, %v1859
    %1861 = vmatmul.mubr.f32.gmra.mrb[0].mxu0 %v1860
    %v1862 = vpop.f32.mrb[0].mxu0
    %v1863 = vadd.f32 %v1365, %v1862
    %v1864 = vpop.f32.mrb[0].mxu0
    %1865 = vmatprep.mubr.f32.mxu0 0.0
    %v1866 = vand.u32 %v240, 4294901760
    %v1867 = vsub.f32 %v240, %v1866
    %1868 = vmatmul.mubr.f32.gmra.mrb[0].mxu0 %v1867
    %v1869 = vpop.f32.mrb[0].mxu0
    %v1870 = vadd.f32 %v1371, %v1869
    %v1871 = vpop.f32.mrb[0].mxu0
    %1872 = vmatprep.mubr.f32.mxu0 0.0
    %v1873 = vand.u32 %v243, 4294901760
    %v1874 = vsub.f32 %v243, %v1873
    %1875 = vmatmul.mubr.f32.gmra.mrb[0].mxu0 %v1874
    %v1876 = vpop.f32.mrb[0].mxu0
    %v1877 = vadd.f32 %v1377, %v1876
    %v1878 = vpop.f32.mrb[0].mxu0
    %1879 = vmatprep.mubr.f32.mxu0 0.0
    %v1880 = vand.u32 %v246, 4294901760
    %v1881 = vsub.f32 %v246, %v1880
    %1882 = vmatmul.mubr.f32.gmra.mrb[0].mxu0 %v1881
    %v1883 = vpop.f32.mrb[0].mxu0
    %v1884 = vadd.f32 %v1383, %v1883
    %v1885 = vpop.f32.mrb[0].mxu0
    %1886 = vmatprep.mubr.f32.mxu0 0.0
    %v1887 = vand.u32 %v249, 4294901760
    %v1888 = vsub.f32 %v249, %v1887
    %1889 = vmatmul.mubr.f32.gmra.mrb[0].mxu0 %v1888
    %v1890 = vpop.f32.mrb[0].mxu0
    %v1891 = vadd.f32 %v1389, %v1890
    %v1892 = vpop.f32.mrb[0].mxu0
    %1893 = vmatprep.mubr.f32.mxu0 0.0
    %v1894 = vand.u32 %v252, 4294901760
    %v1895 = vsub.f32 %v252, %v1894
    %1896 = vmatmul.mubr.f32.gmra.mrb[0].mxu0 %v1895
    %v1897 = vpop.f32.mrb[0].mxu0
    %v1898 = vadd.f32 %v1395, %v1897
    %v1899 = vpop.f32.mrb[0].mxu0
    %1900 = vmatprep.mubr.f32.mxu0 0.0
    %v1901 = vand.u32 %v255, 4294901760
    %v1902 = vsub.f32 %v255, %v1901
    %1903 = vmatmul.mubr.f32.gmra.mrb[0].mxu0 %v1902
    %v1904 = vpop.f32.mrb[0].mxu0
    %v1905 = vadd.f32 %v1401, %v1904
    %v1906 = vpop.f32.mrb[0].mxu0
    %1907 = vmatprep.mubr.f32.mxu0 0.0
    %v1908 = vand.u32 %v258, 4294901760
    %v1909 = vsub.f32 %v258, %v1908
    %1910 = vmatmul.mubr.f32.gmra.mrb[0].mxu0 %v1909
    %v1911 = vpop.f32.mrb[0].mxu0
    %v1912 = vadd.f32 %v1407, %v1911
    %v1913 = vpop.f32.mrb[0].mxu0
    %1914 = vmatprep.mubr.f32.mxu0 0.0
    %v1915 = vand.u32 %v261, 4294901760
    %v1916 = vsub.f32 %v261, %v1915
    %1917 = vmatmul.mubr.f32.gmra.mrb[0].mxu0 %v1916
    %v1918 = vpop.f32.mrb[0].mxu0
    %v1919 = vadd.f32 %v1413, %v1918
    %v1920 = vpop.f32.mrb[0].mxu0
    %1921 = vmatprep.mubr.f32.mxu0 0.0
    %v1922 = vand.u32 %v264, 4294901760
    %v1923 = vsub.f32 %v264, %v1922
    %1924 = vmatmul.mubr.f32.gmra.mrb[0].mxu0 %v1923
    %v1925 = vpop.f32.mrb[0].mxu0
    %v1926 = vadd.f32 %v1419, %v1925
    %v1927 = vpop.f32.mrb[0].mxu0
    %1928 = vmatprep.mubr.f32.mxu0 0.0
    %v1929 = vand.u32 %v267, 4294901760
    %v1930 = vsub.f32 %v267, %v1929
    %1931 = vmatmul.mubr.f32.gmra.mrb[0].mxu0 %v1930
    %v1932 = vpop.f32.mrb[0].mxu0
    %v1933 = vadd.f32 %v1425, %v1932
    %v1934 = vpop.f32.mrb[0].mxu0
    %1935 = vmatprep.mubr.f32.mxu0 0.0
    %v1936 = vand.u32 %v270, 4294901760
    %v1937 = vsub.f32 %v270, %v1936
    %1938 = vmatmul.mubr.f32.gmra.mrb[0].mxu0 %v1937
    %v1939 = vpop.f32.mrb[0].mxu0
    %v1940 = vadd.f32 %v1431, %v1939
    %v1941 = vpop.f32.mrb[0].mxu0
    %1942 = vmatprep.mubr.f32.mxu0 0.0
    %v1943 = vand.u32 %v273, 4294901760
    %v1944 = vsub.f32 %v273, %v1943
    %1945 = vmatmul.mubr.f32.gmra.mrb[0].mxu0 %v1944
    %v1946 = vpop.f32.mrb[0].mxu0
    %v1947 = vadd.f32 %v1437, %v1946
    %v1948 = vpop.f32.mrb[0].mxu0
    %1949 = vmatprep.mubr.f32.mxu0 0.0
    %v1950 = vand.u32 %v276, 4294901760
    %v1951 = vsub.f32 %v276, %v1950
    %1952 = vmatmul.mubr.f32.gmra.mrb[0].mxu0 %v1951
    %v1953 = vpop.f32.mrb[0].mxu0
    %v1954 = vadd.f32 %v1443, %v1953
    %v1955 = vpop.f32.mrb[0].mxu0
    %1956 = vmatprep.mubr.f32.mxu0 0.0
    %v1957 = vand.u32 %v279, 4294901760
    %v1958 = vsub.f32 %v279, %v1957
    %1959 = vmatmul.mubr.f32.gmra.mrb[0].mxu0 %v1958
    %v1960 = vpop.f32.mrb[0].mxu0
    %v1961 = vadd.f32 %v1449, %v1960
    %v1962 = vpop.f32.mrb[0].mxu0
    %1963 = vmatprep.mubr.f32.mxu0 0.0
    %v1964 = vand.u32 %v282, 4294901760
    %v1965 = vsub.f32 %v282, %v1964
    %1966 = vmatmul.mubr.f32.gmra.mrb[0].mxu0 %v1965
    %v1967 = vpop.f32.mrb[0].mxu0
    %v1968 = vadd.f32 %v1455, %v1967
    %v1969 = vpop.f32.mrb[0].mxu0
    %1970 = vdwg.mxu0
    %1971 = vmatprep.subr.mxu0 0.0
    %v1972 = vand.u32 %v89, 4294901760
    %1973 = vmatpush1.msra.mxu0 %v1972
    %1974 = vmatprep.subr.mxu0 0.0
    %v1975 = vand.u32 %v90, 4294901760
    %1976 = vmatpush1.msra.mxu0 %v1975
    %1977 = vmatprep.subr.mxu0 0.0
    %v1978 = vand.u32 %v91, 4294901760
    %1979 = vmatpush1.msra.mxu0 %v1978
    %1980 = vmatprep.subr.mxu0 0.0
    %v1981 = vand.u32 %v92, 4294901760
    %1982 = vmatpush1.msra.mxu0 %v1981
    %1983 = vmatprep.subr.mxu0 0.0
    %v1984 = vand.u32 %v93, 4294901760
    %1985 = vmatpush1.msra.mxu0 %v1984
    %1986 = vmatprep.subr.mxu0 0.0
    %v1987 = vand.u32 %v94, 4294901760
    %1988 = vmatpush1.msra.mxu0 %v1987
    %1989 = vmatprep.subr.mxu0 0.0
    %v1990 = vand.u32 %v95, 4294901760
    %1991 = vmatpush1.msra.mxu0 %v1990
    %1992 = vmatprep.subr.mxu0 0.0
    %v1993 = vand.u32 %v96, 4294901760
    %1994 = vmatpush1.msra.mxu0 %v1993
    %1995 = vmatprep.subr.mxu0 0.0
    %v1996 = vand.u32 %v97, 4294901760
    %1997 = vmatpush1.msra.mxu0 %v1996
    %1998 = vmatprep.subr.mxu0 0.0
    %v1999 = vand.u32 %v98, 4294901760
    %2000 = vmatpush1.msra.mxu0 %v1999
    %2001 = vmatprep.subr.mxu0 0.0
    %v2002 = vand.u32 %v99, 4294901760
    %2003 = vmatpush1.msra.mxu0 %v2002
    %2004 = vmatprep.subr.mxu0 0.0
    %v2005 = vand.u32 %v100, 4294901760
    %2006 = vmatpush1.msra.mxu0 %v2005
    %2007 = vmatprep.subr.mxu0 0.0
    %v2008 = vand.u32 %v101, 4294901760
    %2009 = vmatpush1.msra.mxu0 %v2008
    %2010 = vmatprep.subr.mxu0 0.0
    %v2011 = vand.u32 %v102, 4294901760
    %2012 = vmatpush1.msra.mxu0 %v2011
    %2013 = vmatprep.subr.mxu0 0.0
    %2014 = vmatpush1.msra.mxu0 0.0
    %2015 = vmatprep.subr.mxu0 0.0
    %2016 = vmatpush1.msra.mxu0 0.0
    %2017 = vmatprep.subr.mxu0 0.0
    %2018 = vmatpush1.msra.mxu0 0.0
    %2019 = vmatprep.subr.mxu0 0.0
    %2020 = vmatpush1.msra.mxu0 0.0
    %2021 = vmatprep.subr.mxu0 0.0
    %2022 = vmatpush1.msra.mxu0 0.0
    %2023 = vmatprep.subr.mxu0 0.0
    %2024 = vmatpush1.msra.mxu0 0.0
    %2025 = vmatprep.subr.mxu0 0.0
    %2026 = vmatpush1.msra.mxu0 0.0
    %2027 = vmatprep.subr.mxu0 0.0
    %2028 = vmatpush1.msra.mxu0 0.0
    %2029 = vmatprep.subr.mxu0 0.0
    %2030 = vmatpush1.msra.mxu0 0.0
    %2031 = vmatprep.subr.mxu0 0.0
    %2032 = vmatpush1.msra.mxu0 0.0
    %2033 = vmatprep.subr.mxu0 0.0
    %2034 = vmatpush1.msra.mxu0 0.0
    %2035 = vmatprep.subr.mxu0 0.0
    %2036 = vmatpush1.msra.mxu0 0.0
    %2037 = vmatprep.subr.mxu0 0.0
    %2038 = vmatpush1.msra.mxu0 0.0
    %2039 = vmatprep.subr.mxu0 0.0
    %2040 = vmatpush1.msra.mxu0 0.0
    %2041 = vmatprep.subr.mxu0 0.0
    %2042 = vmatpush1.msra.mxu0 0.0
    %2043 = vmatprep.subr.mxu0 0.0
    %2044 = vmatpush1.msra.mxu0 0.0
    %2045 = vmatprep.subr.mxu0 0.0
    %2046 = vmatpush1.msra.mxu0 0.0
    %2047 = vmatprep.subr.mxu0 0.0
    %2048 = vmatpush1.msra.mxu0 0.0
    %2049 = vmatprep.mubr.f32.mxu0 0.0
    %v2050 = vand.u32 %v105, 4294901760
    %v2051 = vsub.f32 %v105, %v2050
    %v2052 = vand.u32 %v2051, 4294901760
    %2053 = vmatmul.mubr.f32.gmra.mrb[0].mxu0 %v2052
    %v2054 = vpop.f32.mrb[0].mxu0
    %v2055 = vadd.f32 %v1555, %v2054
    %v2056 = vpop.f32.mrb[0].mxu0
    %2057 = vmatprep.mubr.f32.mxu0 0.0
    %v2058 = vand.u32 %v108, 4294901760
    %v2059 = vsub.f32 %v108, %v2058
    %v2060 = vand.u32 %v2059, 4294901760
    %2061 = vmatmul.mubr.f32.gmra.mrb[0].mxu0 %v2060
    %v2062 = vpop.f32.mrb[0].mxu0
    %v2063 = vadd.f32 %v1562, %v2062
    %v2064 = vpop.f32.mrb[0].mxu0
    %2065 = vmatprep.mubr.f32.mxu0 0.0
    %v2066 = vand.u32 %v111, 4294901760
    %v2067 = vsub.f32 %v111, %v2066
    %v2068 = vand.u32 %v2067, 4294901760
    %2069 = vmatmul.mubr.f32.gmra.mrb[0].mxu0 %v2068
    %v2070 = vpop.f32.mrb[0].mxu0
    %v2071 = vadd.f32 %v1569, %v2070
    %v2072 = vpop.f32.mrb[0].mxu0
    %2073 = vmatprep.mubr.f32.mxu0 0.0
    %v2074 = vand.u32 %v114, 4294901760
    %v2075 = vsub.f32 %v114, %v2074
    %v2076 = vand.u32 %v2075, 4294901760
    %2077 = vmatmul.mubr.f32.gmra.mrb[0].mxu0 %v2076
    %v2078 = vpop.f32.mrb[0].mxu0
    %v2079 = vadd.f32 %v1576, %v2078
    %v2080 = vpop.f32.mrb[0].mxu0
    %2081 = vmatprep.mubr.f32.mxu0 0.0
    %v2082 = vand.u32 %v117, 4294901760
    %v2083 = vsub.f32 %v117, %v2082
    %v2084 = vand.u32 %v2083, 4294901760
    %2085 = vmatmul.mubr.f32.gmra.mrb[0].mxu0 %v2084
    %v2086 = vpop.f32.mrb[0].mxu0
    %v2087 = vadd.f32 %v1583, %v2086
    %v2088 = vpop.f32.mrb[0].mxu0
    %2089 = vmatprep.mubr.f32.mxu0 0.0
    %v2090 = vand.u32 %v120, 4294901760
    %v2091 = vsub.f32 %v120, %v2090
    %v2092 = vand.u32 %v2091, 4294901760
    %2093 = vmatmul.mubr.f32.gmra.mrb[0].mxu0 %v2092
    %v2094 = vpop.f32.mrb[0].mxu0
    %v2095 = vadd.f32 %v1590, %v2094
    %v2096 = vpop.f32.mrb[0].mxu0
    %2097 = vmatprep.mubr.f32.mxu0 0.0
    %v2098 = vand.u32 %v123, 4294901760
    %v2099 = vsub.f32 %v123, %v2098
    %v2100 = vand.u32 %v2099, 4294901760
    %2101 = vmatmul.mubr.f32.gmra.mrb[0].mxu0 %v2100
    %v2102 = vpop.f32.mrb[0].mxu0
    %v2103 = vadd.f32 %v1597, %v2102
    %v2104 = vpop.f32.mrb[0].mxu0
    %2105 = vmatprep.mubr.f32.mxu0 0.0
    %v2106 = vand.u32 %v126, 4294901760
    %v2107 = vsub.f32 %v126, %v2106
    %v2108 = vand.u32 %v2107, 4294901760
    %2109 = vmatmul.mubr.f32.gmra.mrb[0].mxu0 %v2108
    %v2110 = vpop.f32.mrb[0].mxu0
    %v2111 = vadd.f32 %v1604, %v2110
    %v2112 = vpop.f32.mrb[0].mxu0
    %2113 = vmatprep.mubr.f32.mxu0 0.0
    %v2114 = vand.u32 %v129, 4294901760
    %v2115 = vsub.f32 %v129, %v2114
    %v2116 = vand.u32 %v2115, 4294901760
    %2117 = vmatmul.mubr.f32.gmra.mrb[0].mxu0 %v2116
    %v2118 = vpop.f32.mrb[0].mxu0
    %v2119 = vadd.f32 %v1611, %v2118
    %v2120 = vpop.f32.mrb[0].mxu0
    %2121 = vmatprep.mubr.f32.mxu0 0.0
    %v2122 = vand.u32 %v132, 4294901760
    %v2123 = vsub.f32 %v132, %v2122
    %v2124 = vand.u32 %v2123, 4294901760
    %2125 = vmatmul.mubr.f32.gmra.mrb[0].mxu0 %v2124
    %v2126 = vpop.f32.mrb[0].mxu0
    %v2127 = vadd.f32 %v1618, %v2126
    %v2128 = vpop.f32.mrb[0].mxu0
    %2129 = vmatprep.mubr.f32.mxu0 0.0
    %v2130 = vand.u32 %v135, 4294901760
    %v2131 = vsub.f32 %v135, %v2130
    %v2132 = vand.u32 %v2131, 4294901760
    %2133 = vmatmul.mubr.f32.gmra.mrb[0].mxu0 %v2132
    %v2134 = vpop.f32.mrb[0].mxu0
    %v2135 = vadd.f32 %v1625, %v2134
    %v2136 = vpop.f32.mrb[0].mxu0
    %2137 = vmatprep.mubr.f32.mxu0 0.0
    %v2138 = vand.u32 %v138, 4294901760
    %v2139 = vsub.f32 %v138, %v2138
    %v2140 = vand.u32 %v2139, 4294901760
    %2141 = vmatmul.mubr.f32.gmra.mrb[0].mxu0 %v2140
    %v2142 = vpop.f32.mrb[0].mxu0
    %v2143 = vadd.f32 %v1632, %v2142
    %v2144 = vpop.f32.mrb[0].mxu0
    %2145 = vmatprep.mubr.f32.mxu0 0.0
    %v2146 = vand.u32 %v141, 4294901760
    %v2147 = vsub.f32 %v141, %v2146
    %v2148 = vand.u32 %v2147, 4294901760
    %2149 = vmatmul.mubr.f32.gmra.mrb[0].mxu0 %v2148
    %v2150 = vpop.f32.mrb[0].mxu0
    %v2151 = vadd.f32 %v1639, %v2150
    %v2152 = vpop.f32.mrb[0].mxu0
    %2153 = vmatprep.mubr.f32.mxu0 0.0
    %v2154 = vand.u32 %v144, 4294901760
    %v2155 = vsub.f32 %v144, %v2154
    %v2156 = vand.u32 %v2155, 4294901760
    %2157 = vmatmul.mubr.f32.gmra.mrb[0].mxu0 %v2156
    %v2158 = vpop.f32.mrb[0].mxu0
    %v2159 = vadd.f32 %v1646, %v2158
    %v2160 = vpop.f32.mrb[0].mxu0
    %2161 = vmatprep.mubr.f32.mxu0 0.0
    %v2162 = vand.u32 %v147, 4294901760
    %v2163 = vsub.f32 %v147, %v2162
    %v2164 = vand.u32 %v2163, 4294901760
    %2165 = vmatmul.mubr.f32.gmra.mrb[0].mxu0 %v2164
    %v2166 = vpop.f32.mrb[0].mxu0
    %v2167 = vadd.f32 %v1653, %v2166
    %v2168 = vpop.f32.mrb[0].mxu0
    %2169 = vmatprep.mubr.f32.mxu0 0.0
    %v2170 = vand.u32 %v150, 4294901760
    %v2171 = vsub.f32 %v150, %v2170
    %v2172 = vand.u32 %v2171, 4294901760
    %2173 = vmatmul.mubr.f32.gmra.mrb[0].mxu0 %v2172
    %v2174 = vpop.f32.mrb[0].mxu0
    %v2175 = vadd.f32 %v1660, %v2174
    %v2176 = vpop.f32.mrb[0].mxu0
    %2177 = vmatprep.mubr.f32.mxu0 0.0
    %v2178 = vand.u32 %v153, 4294901760
    %v2179 = vsub.f32 %v153, %v2178
    %v2180 = vand.u32 %v2179, 4294901760
    %2181 = vmatmul.mubr.f32.gmra.mrb[0].mxu0 %v2180
    %v2182 = vpop.f32.mrb[0].mxu0
    %v2183 = vadd.f32 %v1667, %v2182
    %v2184 = vpop.f32.mrb[0].mxu0
    %2185 = vmatprep.mubr.f32.mxu0 0.0
    %v2186 = vand.u32 %v156, 4294901760
    %v2187 = vsub.f32 %v156, %v2186
    %v2188 = vand.u32 %v2187, 4294901760
    %2189 = vmatmul.mubr.f32.gmra.mrb[0].mxu0 %v2188
    %v2190 = vpop.f32.mrb[0].mxu0
    %v2191 = vadd.f32 %v1674, %v2190
    %v2192 = vpop.f32.mrb[0].mxu0
    %2193 = vmatprep.mubr.f32.mxu0 0.0
    %v2194 = vand.u32 %v159, 4294901760
    %v2195 = vsub.f32 %v159, %v2194
    %v2196 = vand.u32 %v2195, 4294901760
    %2197 = vmatmul.mubr.f32.gmra.mrb[0].mxu0 %v2196
    %v2198 = vpop.f32.mrb[0].mxu0
    %v2199 = vadd.f32 %v1681, %v2198
    %v2200 = vpop.f32.mrb[0].mxu0
    %2201 = vmatprep.mubr.f32.mxu0 0.0
    %v2202 = vand.u32 %v162, 4294901760
    %v2203 = vsub.f32 %v162, %v2202
    %v2204 = vand.u32 %v2203, 4294901760
    %2205 = vmatmul.mubr.f32.gmra.mrb[0].mxu0 %v2204
    %v2206 = vpop.f32.mrb[0].mxu0
    %v2207 = vadd.f32 %v1688, %v2206
    %v2208 = vpop.f32.mrb[0].mxu0
    %2209 = vmatprep.mubr.f32.mxu0 0.0
    %v2210 = vand.u32 %v165, 4294901760
    %v2211 = vsub.f32 %v165, %v2210
    %v2212 = vand.u32 %v2211, 4294901760
    %2213 = vmatmul.mubr.f32.gmra.mrb[0].mxu0 %v2212
    %v2214 = vpop.f32.mrb[0].mxu0
    %v2215 = vadd.f32 %v1695, %v2214
    %v2216 = vpop.f32.mrb[0].mxu0
    %2217 = vmatprep.mubr.f32.mxu0 0.0
    %v2218 = vand.u32 %v168, 4294901760
    %v2219 = vsub.f32 %v168, %v2218
    %v2220 = vand.u32 %v2219, 4294901760
    %2221 = vmatmul.mubr.f32.gmra.mrb[0].mxu0 %v2220
    %v2222 = vpop.f32.mrb[0].mxu0
    %v2223 = vadd.f32 %v1702, %v2222
    %v2224 = vpop.f32.mrb[0].mxu0
    %2225 = vmatprep.mubr.f32.mxu0 0.0
    %v2226 = vand.u32 %v171, 4294901760
    %v2227 = vsub.f32 %v171, %v2226
    %v2228 = vand.u32 %v2227, 4294901760
    %2229 = vmatmul.mubr.f32.gmra.mrb[0].mxu0 %v2228
    %v2230 = vpop.f32.mrb[0].mxu0
    %v2231 = vadd.f32 %v1709, %v2230
    %v2232 = vpop.f32.mrb[0].mxu0
    %2233 = vmatprep.mubr.f32.mxu0 0.0
    %v2234 = vand.u32 %v174, 4294901760
    %v2235 = vsub.f32 %v174, %v2234
    %v2236 = vand.u32 %v2235, 4294901760
    %2237 = vmatmul.mubr.f32.gmra.mrb[0].mxu0 %v2236
    %v2238 = vpop.f32.mrb[0].mxu0
    %v2239 = vadd.f32 %v1716, %v2238
    %v2240 = vpop.f32.mrb[0].mxu0
    %2241 = vmatprep.mubr.f32.mxu0 0.0
    %v2242 = vand.u32 %v177, 4294901760
    %v2243 = vsub.f32 %v177, %v2242
    %v2244 = vand.u32 %v2243, 4294901760
    %2245 = vmatmul.mubr.f32.gmra.mrb[0].mxu0 %v2244
    %v2246 = vpop.f32.mrb[0].mxu0
    %v2247 = vadd.f32 %v1723, %v2246
    %v2248 = vpop.f32.mrb[0].mxu0
    %2249 = vmatprep.mubr.f32.mxu0 0.0
    %v2250 = vand.u32 %v180, 4294901760
    %v2251 = vsub.f32 %v180, %v2250
    %v2252 = vand.u32 %v2251, 4294901760
    %2253 = vmatmul.mubr.f32.gmra.mrb[0].mxu0 %v2252
    %v2254 = vpop.f32.mrb[0].mxu0
    %v2255 = vadd.f32 %v1730, %v2254
    %v2256 = vpop.f32.mrb[0].mxu0
    %2257 = vmatprep.mubr.f32.mxu0 0.0
    %v2258 = vand.u32 %v183, 4294901760
    %v2259 = vsub.f32 %v183, %v2258
    %v2260 = vand.u32 %v2259, 4294901760
    %2261 = vmatmul.mubr.f32.gmra.mrb[0].mxu0 %v2260
    %v2262 = vpop.f32.mrb[0].mxu0
    %v2263 = vadd.f32 %v1737, %v2262
    %v2264 = vpop.f32.mrb[0].mxu0
    %2265 = vmatprep.mubr.f32.mxu0 0.0
    %v2266 = vand.u32 %v186, 4294901760
    %v2267 = vsub.f32 %v186, %v2266
    %v2268 = vand.u32 %v2267, 4294901760
    %2269 = vmatmul.mubr.f32.gmra.mrb[0].mxu0 %v2268
    %v2270 = vpop.f32.mrb[0].mxu0
    %v2271 = vadd.f32 %v1744, %v2270
    %v2272 = vpop.f32.mrb[0].mxu0
    %2273 = vmatprep.mubr.f32.mxu0 0.0
    %v2274 = vand.u32 %v189, 4294901760
    %v2275 = vsub.f32 %v189, %v2274
    %v2276 = vand.u32 %v2275, 4294901760
    %2277 = vmatmul.mubr.f32.gmra.mrb[0].mxu0 %v2276
    %v2278 = vpop.f32.mrb[0].mxu0
    %v2279 = vadd.f32 %v1751, %v2278
    %v2280 = vpop.f32.mrb[0].mxu0
    %2281 = vmatprep.mubr.f32.mxu0 0.0
    %v2282 = vand.u32 %v192, 4294901760
    %v2283 = vsub.f32 %v192, %v2282
    %v2284 = vand.u32 %v2283, 4294901760
    %2285 = vmatmul.mubr.f32.gmra.mrb[0].mxu0 %v2284
    %v2286 = vpop.f32.mrb[0].mxu0
    %v2287 = vadd.f32 %v1758, %v2286
    %v2288 = vpop.f32.mrb[0].mxu0
    %2289 = vmatprep.mubr.f32.mxu0 0.0
    %v2290 = vand.u32 %v195, 4294901760
    %v2291 = vsub.f32 %v195, %v2290
    %v2292 = vand.u32 %v2291, 4294901760
    %2293 = vmatmul.mubr.f32.gmra.mrb[0].mxu0 %v2292
    %v2294 = vpop.f32.mrb[0].mxu0
    %v2295 = vadd.f32 %v1765, %v2294
    %v2296 = vpop.f32.mrb[0].mxu0
    %2297 = vmatprep.mubr.f32.mxu0 0.0
    %v2298 = vand.u32 %v198, 4294901760
    %v2299 = vsub.f32 %v198, %v2298
    %v2300 = vand.u32 %v2299, 4294901760
    %2301 = vmatmul.mubr.f32.gmra.mrb[0].mxu0 %v2300
    %v2302 = vpop.f32.mrb[0].mxu0
    %v2303 = vadd.f32 %v1772, %v2302
    %v2304 = vpop.f32.mrb[0].mxu0
    %2305 = vmatprep.mubr.f32.mxu0 0.0
    %v2306 = vand.u32 %v201, 4294901760
    %v2307 = vsub.f32 %v201, %v2306
    %v2308 = vand.u32 %v2307, 4294901760
    %2309 = vmatmul.mubr.f32.gmra.mrb[0].mxu0 %v2308
    %v2310 = vpop.f32.mrb[0].mxu0
    %v2311 = vadd.f32 %v1779, %v2310
    %v2312 = vpop.f32.mrb[0].mxu0
    %2313 = vmatprep.mubr.f32.mxu0 0.0
    %v2314 = vand.u32 %v204, 4294901760
    %v2315 = vsub.f32 %v204, %v2314
    %v2316 = vand.u32 %v2315, 4294901760
    %2317 = vmatmul.mubr.f32.gmra.mrb[0].mxu0 %v2316
    %v2318 = vpop.f32.mrb[0].mxu0
    %v2319 = vadd.f32 %v1786, %v2318
    %v2320 = vpop.f32.mrb[0].mxu0
    %2321 = vmatprep.mubr.f32.mxu0 0.0
    %v2322 = vand.u32 %v207, 4294901760
    %v2323 = vsub.f32 %v207, %v2322
    %v2324 = vand.u32 %v2323, 4294901760
    %2325 = vmatmul.mubr.f32.gmra.mrb[0].mxu0 %v2324
    %v2326 = vpop.f32.mrb[0].mxu0
    %v2327 = vadd.f32 %v1793, %v2326
    %v2328 = vpop.f32.mrb[0].mxu0
    %2329 = vmatprep.mubr.f32.mxu0 0.0
    %v2330 = vand.u32 %v210, 4294901760
    %v2331 = vsub.f32 %v210, %v2330
    %v2332 = vand.u32 %v2331, 4294901760
    %2333 = vmatmul.mubr.f32.gmra.mrb[0].mxu0 %v2332
    %v2334 = vpop.f32.mrb[0].mxu0
    %v2335 = vadd.f32 %v1800, %v2334
    %v2336 = vpop.f32.mrb[0].mxu0
    %2337 = vmatprep.mubr.f32.mxu0 0.0
    %v2338 = vand.u32 %v213, 4294901760
    %v2339 = vsub.f32 %v213, %v2338
    %v2340 = vand.u32 %v2339, 4294901760
    %2341 = vmatmul.mubr.f32.gmra.mrb[0].mxu0 %v2340
    %v2342 = vpop.f32.mrb[0].mxu0
    %v2343 = vadd.f32 %v1807, %v2342
    %v2344 = vpop.f32.mrb[0].mxu0
    %2345 = vmatprep.mubr.f32.mxu0 0.0
    %v2346 = vand.u32 %v216, 4294901760
    %v2347 = vsub.f32 %v216, %v2346
    %v2348 = vand.u32 %v2347, 4294901760
    %2349 = vmatmul.mubr.f32.gmra.mrb[0].mxu0 %v2348
    %v2350 = vpop.f32.mrb[0].mxu0
    %v2351 = vadd.f32 %v1814, %v2350
    %v2352 = vpop.f32.mrb[0].mxu0
    %2353 = vmatprep.mubr.f32.mxu0 0.0
    %v2354 = vand.u32 %v219, 4294901760
    %v2355 = vsub.f32 %v219, %v2354
    %v2356 = vand.u32 %v2355, 4294901760
    %2357 = vmatmul.mubr.f32.gmra.mrb[0].mxu0 %v2356
    %v2358 = vpop.f32.mrb[0].mxu0
    %v2359 = vadd.f32 %v1821, %v2358
    %v2360 = vpop.f32.mrb[0].mxu0
    %2361 = vmatprep.mubr.f32.mxu0 0.0
    %v2362 = vand.u32 %v222, 4294901760
    %v2363 = vsub.f32 %v222, %v2362
    %v2364 = vand.u32 %v2363, 4294901760
    %2365 = vmatmul.mubr.f32.gmra.mrb[0].mxu0 %v2364
    %v2366 = vpop.f32.mrb[0].mxu0
    %v2367 = vadd.f32 %v1828, %v2366
    %v2368 = vpop.f32.mrb[0].mxu0
    %2369 = vmatprep.mubr.f32.mxu0 0.0
    %v2370 = vand.u32 %v225, 4294901760
    %v2371 = vsub.f32 %v225, %v2370
    %v2372 = vand.u32 %v2371, 4294901760
    %2373 = vmatmul.mubr.f32.gmra.mrb[0].mxu0 %v2372
    %v2374 = vpop.f32.mrb[0].mxu0
    %v2375 = vadd.f32 %v1835, %v2374
    %v2376 = vpop.f32.mrb[0].mxu0
    %2377 = vmatprep.mubr.f32.mxu0 0.0
    %v2378 = vand.u32 %v228, 4294901760
    %v2379 = vsub.f32 %v228, %v2378
    %v2380 = vand.u32 %v2379, 4294901760
    %2381 = vmatmul.mubr.f32.gmra.mrb[0].mxu0 %v2380
    %v2382 = vpop.f32.mrb[0].mxu0
    %v2383 = vadd.f32 %v1842, %v2382
    %v2384 = vpop.f32.mrb[0].mxu0
    %2385 = vmatprep.mubr.f32.mxu0 0.0
    %v2386 = vand.u32 %v231, 4294901760
    %v2387 = vsub.f32 %v231, %v2386
    %v2388 = vand.u32 %v2387, 4294901760
    %2389 = vmatmul.mubr.f32.gmra.mrb[0].mxu0 %v2388
    %v2390 = vpop.f32.mrb[0].mxu0
    %v2391 = vadd.f32 %v1849, %v2390
    %v2392 = vpop.f32.mrb[0].mxu0
    %2393 = vmatprep.mubr.f32.mxu0 0.0
    %v2394 = vand.u32 %v234, 4294901760
    %v2395 = vsub.f32 %v234, %v2394
    %v2396 = vand.u32 %v2395, 4294901760
    %2397 = vmatmul.mubr.f32.gmra.mrb[0].mxu0 %v2396
    %v2398 = vpop.f32.mrb[0].mxu0
    %v2399 = vadd.f32 %v1856, %v2398
    %v2400 = vpop.f32.mrb[0].mxu0
    %2401 = vmatprep.mubr.f32.mxu0 0.0
    %v2402 = vand.u32 %v237, 4294901760
    %v2403 = vsub.f32 %v237, %v2402
    %v2404 = vand.u32 %v2403, 4294901760
    %2405 = vmatmul.mubr.f32.gmra.mrb[0].mxu0 %v2404
    %v2406 = vpop.f32.mrb[0].mxu0
    %v2407 = vadd.f32 %v1863, %v2406
    %v2408 = vpop.f32.mrb[0].mxu0
    %2409 = vmatprep.mubr.f32.mxu0 0.0
    %v2410 = vand.u32 %v240, 4294901760
    %v2411 = vsub.f32 %v240, %v2410
    %v2412 = vand.u32 %v2411, 4294901760
    %2413 = vmatmul.mubr.f32.gmra.mrb[0].mxu0 %v2412
    %v2414 = vpop.f32.mrb[0].mxu0
    %v2415 = vadd.f32 %v1870, %v2414
    %v2416 = vpop.f32.mrb[0].mxu0
    %2417 = vmatprep.mubr.f32.mxu0 0.0
    %v2418 = vand.u32 %v243, 4294901760
    %v2419 = vsub.f32 %v243, %v2418
    %v2420 = vand.u32 %v2419, 4294901760
    %2421 = vmatmul.mubr.f32.gmra.mrb[0].mxu0 %v2420
    %v2422 = vpop.f32.mrb[0].mxu0
    %v2423 = vadd.f32 %v1877, %v2422
    %v2424 = vpop.f32.mrb[0].mxu0
    %2425 = vmatprep.mubr.f32.mxu0 0.0
    %v2426 = vand.u32 %v246, 4294901760
    %v2427 = vsub.f32 %v246, %v2426
    %v2428 = vand.u32 %v2427, 4294901760
    %2429 = vmatmul.mubr.f32.gmra.mrb[0].mxu0 %v2428
    %v2430 = vpop.f32.mrb[0].mxu0
    %v2431 = vadd.f32 %v1884, %v2430
    %v2432 = vpop.f32.mrb[0].mxu0
    %2433 = vmatprep.mubr.f32.mxu0 0.0
    %v2434 = vand.u32 %v249, 4294901760
    %v2435 = vsub.f32 %v249, %v2434
    %v2436 = vand.u32 %v2435, 4294901760
    %2437 = vmatmul.mubr.f32.gmra.mrb[0].mxu0 %v2436
    %v2438 = vpop.f32.mrb[0].mxu0
    %v2439 = vadd.f32 %v1891, %v2438
    %v2440 = vpop.f32.mrb[0].mxu0
    %2441 = vmatprep.mubr.f32.mxu0 0.0
    %v2442 = vand.u32 %v252, 4294901760
    %v2443 = vsub.f32 %v252, %v2442
    %v2444 = vand.u32 %v2443, 4294901760
    %2445 = vmatmul.mubr.f32.gmra.mrb[0].mxu0 %v2444
    %v2446 = vpop.f32.mrb[0].mxu0
    %v2447 = vadd.f32 %v1898, %v2446
    %v2448 = vpop.f32.mrb[0].mxu0
    %2449 = vmatprep.mubr.f32.mxu0 0.0
    %v2450 = vand.u32 %v255, 4294901760
    %v2451 = vsub.f32 %v255, %v2450
    %v2452 = vand.u32 %v2451, 4294901760
    %2453 = vmatmul.mubr.f32.gmra.mrb[0].mxu0 %v2452
    %v2454 = vpop.f32.mrb[0].mxu0
    %v2455 = vadd.f32 %v1905, %v2454
    %v2456 = vpop.f32.mrb[0].mxu0
    %2457 = vmatprep.mubr.f32.mxu0 0.0
    %v2458 = vand.u32 %v258, 4294901760
    %v2459 = vsub.f32 %v258, %v2458
    %v2460 = vand.u32 %v2459, 4294901760
    %2461 = vmatmul.mubr.f32.gmra.mrb[0].mxu0 %v2460
    %v2462 = vpop.f32.mrb[0].mxu0
    %v2463 = vadd.f32 %v1912, %v2462
    %v2464 = vpop.f32.mrb[0].mxu0
    %2465 = vmatprep.mubr.f32.mxu0 0.0
    %v2466 = vand.u32 %v261, 4294901760
    %v2467 = vsub.f32 %v261, %v2466
    %v2468 = vand.u32 %v2467, 4294901760
    %2469 = vmatmul.mubr.f32.gmra.mrb[0].mxu0 %v2468
    %v2470 = vpop.f32.mrb[0].mxu0
    %v2471 = vadd.f32 %v1919, %v2470
    %v2472 = vpop.f32.mrb[0].mxu0
    %2473 = vmatprep.mubr.f32.mxu0 0.0
    %v2474 = vand.u32 %v264, 4294901760
    %v2475 = vsub.f32 %v264, %v2474
    %v2476 = vand.u32 %v2475, 4294901760
    %2477 = vmatmul.mubr.f32.gmra.mrb[0].mxu0 %v2476
    %v2478 = vpop.f32.mrb[0].mxu0
    %v2479 = vadd.f32 %v1926, %v2478
    %v2480 = vpop.f32.mrb[0].mxu0
    %2481 = vmatprep.mubr.f32.mxu0 0.0
    %v2482 = vand.u32 %v267, 4294901760
    %v2483 = vsub.f32 %v267, %v2482
    %v2484 = vand.u32 %v2483, 4294901760
    %2485 = vmatmul.mubr.f32.gmra.mrb[0].mxu0 %v2484
    %v2486 = vpop.f32.mrb[0].mxu0
    %v2487 = vadd.f32 %v1933, %v2486
    %v2488 = vpop.f32.mrb[0].mxu0
    %2489 = vmatprep.mubr.f32.mxu0 0.0
    %v2490 = vand.u32 %v270, 4294901760
    %v2491 = vsub.f32 %v270, %v2490
    %v2492 = vand.u32 %v2491, 4294901760
    %2493 = vmatmul.mubr.f32.gmra.mrb[0].mxu0 %v2492
    %v2494 = vpop.f32.mrb[0].mxu0
    %v2495 = vadd.f32 %v1940, %v2494
    %v2496 = vpop.f32.mrb[0].mxu0
    %2497 = vmatprep.mubr.f32.mxu0 0.0
    %v2498 = vand.u32 %v273, 4294901760
    %v2499 = vsub.f32 %v273, %v2498
    %v2500 = vand.u32 %v2499, 4294901760
    %2501 = vmatmul.mubr.f32.gmra.mrb[0].mxu0 %v2500
    %v2502 = vpop.f32.mrb[0].mxu0
    %v2503 = vadd.f32 %v1947, %v2502
    %v2504 = vpop.f32.mrb[0].mxu0
    %2505 = vmatprep.mubr.f32.mxu0 0.0
    %v2506 = vand.u32 %v276, 4294901760
    %v2507 = vsub.f32 %v276, %v2506
    %v2508 = vand.u32 %v2507, 4294901760
    %2509 = vmatmul.mubr.f32.gmra.mrb[0].mxu0 %v2508
    %v2510 = vpop.f32.mrb[0].mxu0
    %v2511 = vadd.f32 %v1954, %v2510
    %v2512 = vpop.f32.mrb[0].mxu0
    %2513 = vmatprep.mubr.f32.mxu0 0.0
    %v2514 = vand.u32 %v279, 4294901760
    %v2515 = vsub.f32 %v279, %v2514
    %v2516 = vand.u32 %v2515, 4294901760
    %2517 = vmatmul.mubr.f32.gmra.mrb[0].mxu0 %v2516
    %v2518 = vpop.f32.mrb[0].mxu0
    %v2519 = vadd.f32 %v1961, %v2518
    %v2520 = vpop.f32.mrb[0].mxu0
    %2521 = vmatprep.mubr.f32.mxu0 0.0
    %v2522 = vand.u32 %v282, 4294901760
    %v2523 = vsub.f32 %v282, %v2522
    %v2524 = vand.u32 %v2523, 4294901760
    %2525 = vmatmul.mubr.f32.gmra.mrb[0].mxu0 %v2524
    %v2526 = vpop.f32.mrb[0].mxu0
    %v2527 = vadd.f32 %v1968, %v2526
    %v2528 = vpop.f32.mrb[0].mxu0
    %2529 = vdwg.mxu0
    %2530 = vmatprep.subr.mxu0 0.0
    %v2531 = vand.u32 %v89, 4294901760
    %v2532 = vsub.f32 %v89, %v2531
    %v2533 = vand.u32 %v2532, 4294901760
    %2534 = vmatpush1.msra.mxu0 %v2533
    %2535 = vmatprep.subr.mxu0 0.0
    %v2536 = vand.u32 %v90, 4294901760
    %v2537 = vsub.f32 %v90, %v2536
    %v2538 = vand.u32 %v2537, 4294901760
    %2539 = vmatpush1.msra.mxu0 %v2538
    %2540 = vmatprep.subr.mxu0 0.0
    %v2541 = vand.u32 %v91, 4294901760
    %v2542 = vsub.f32 %v91, %v2541
    %v2543 = vand.u32 %v2542, 4294901760
    %2544 = vmatpush1.msra.mxu0 %v2543
    %2545 = vmatprep.subr.mxu0 0.0
    %v2546 = vand.u32 %v92, 4294901760
    %v2547 = vsub.f32 %v92, %v2546
    %v2548 = vand.u32 %v2547, 4294901760
    %2549 = vmatpush1.msra.mxu0 %v2548
    %2550 = vmatprep.subr.mxu0 0.0
    %v2551 = vand.u32 %v93, 4294901760
    %v2552 = vsub.f32 %v93, %v2551
    %v2553 = vand.u32 %v2552, 4294901760
    %2554 = vmatpush1.msra.mxu0 %v2553
    %2555 = vmatprep.subr.mxu0 0.0
    %v2556 = vand.u32 %v94, 4294901760
    %v2557 = vsub.f32 %v94, %v2556
    %v2558 = vand.u32 %v2557, 4294901760
    %2559 = vmatpush1.msra.mxu0 %v2558
    %2560 = vmatprep.subr.mxu0 0.0
    %v2561 = vand.u32 %v95, 4294901760
    %v2562 = vsub.f32 %v95, %v2561
    %v2563 = vand.u32 %v2562, 4294901760
    %2564 = vmatpush1.msra.mxu0 %v2563
    %2565 = vmatprep.subr.mxu0 0.0
    %v2566 = vand.u32 %v96, 4294901760
    %v2567 = vsub.f32 %v96, %v2566
    %v2568 = vand.u32 %v2567, 4294901760
    %2569 = vmatpush1.msra.mxu0 %v2568
    %2570 = vmatprep.subr.mxu0 0.0
    %v2571 = vand.u32 %v97, 4294901760
    %v2572 = vsub.f32 %v97, %v2571
    %v2573 = vand.u32 %v2572, 4294901760
    %2574 = vmatpush1.msra.mxu0 %v2573
    %2575 = vmatprep.subr.mxu0 0.0
    %v2576 = vand.u32 %v98, 4294901760
    %v2577 = vsub.f32 %v98, %v2576
    %v2578 = vand.u32 %v2577, 4294901760
    %2579 = vmatpush1.msra.mxu0 %v2578
    %2580 = vmatprep.subr.mxu0 0.0
    %v2581 = vand.u32 %v99, 4294901760
    %v2582 = vsub.f32 %v99, %v2581
    %v2583 = vand.u32 %v2582, 4294901760
    %2584 = vmatpush1.msra.mxu0 %v2583
    %2585 = vmatprep.subr.mxu0 0.0
    %v2586 = vand.u32 %v100, 4294901760
    %v2587 = vsub.f32 %v100, %v2586
    %v2588 = vand.u32 %v2587, 4294901760
    %2589 = vmatpush1.msra.mxu0 %v2588
    %2590 = vmatprep.subr.mxu0 0.0
    %v2591 = vand.u32 %v101, 4294901760
    %v2592 = vsub.f32 %v101, %v2591
    %v2593 = vand.u32 %v2592, 4294901760
    %2594 = vmatpush1.msra.mxu0 %v2593
    %2595 = vmatprep.subr.mxu0 0.0
    %v2596 = vand.u32 %v102, 4294901760
    %v2597 = vsub.f32 %v102, %v2596
    %v2598 = vand.u32 %v2597, 4294901760
    %2599 = vmatpush1.msra.mxu0 %v2598
    %2600 = vmatprep.subr.mxu0 0.0
    %2601 = vmatpush1.msra.mxu0 0.0
    %2602 = vmatprep.subr.mxu0 0.0
    %2603 = vmatpush1.msra.mxu0 0.0
    %2604 = vmatprep.subr.mxu0 0.0
    %2605 = vmatpush1.msra.mxu0 0.0
    %2606 = vmatprep.subr.mxu0 0.0
    %2607 = vmatpush1.msra.mxu0 0.0
    %2608 = vmatprep.subr.mxu0 0.0
    %2609 = vmatpush1.msra.mxu0 0.0
    %2610 = vmatprep.subr.mxu0 0.0
    %2611 = vmatpush1.msra.mxu0 0.0
    %2612 = vmatprep.subr.mxu0 0.0
    %2613 = vmatpush1.msra.mxu0 0.0
    %2614 = vmatprep.subr.mxu0 0.0
    %2615 = vmatpush1.msra.mxu0 0.0
    %2616 = vmatprep.subr.mxu0 0.0
    %2617 = vmatpush1.msra.mxu0 0.0
    %2618 = vmatprep.subr.mxu0 0.0
    %2619 = vmatpush1.msra.mxu0 0.0
    %2620 = vmatprep.subr.mxu0 0.0
    %2621 = vmatpush1.msra.mxu0 0.0
    %2622 = vmatprep.subr.mxu0 0.0
    %2623 = vmatpush1.msra.mxu0 0.0
    %2624 = vmatprep.subr.mxu0 0.0
    %2625 = vmatpush1.msra.mxu0 0.0
    %2626 = vmatprep.subr.mxu0 0.0
    %2627 = vmatpush1.msra.mxu0 0.0
    %2628 = vmatprep.subr.mxu0 0.0
    %2629 = vmatpush1.msra.mxu0 0.0
    %2630 = vmatprep.subr.mxu0 0.0
    %2631 = vmatpush1.msra.mxu0 0.0
    %2632 = vmatprep.subr.mxu0 0.0
    %2633 = vmatpush1.msra.mxu0 0.0
    %2634 = vmatprep.subr.mxu0 0.0
    %2635 = vmatpush1.msra.mxu0 0.0
    %2636 = vmatprep.mubr.f32.mxu0 0.0
    %v2637 = vand.u32 %v105, 4294901760
    %2638 = vmatmul.mubr.f32.gmra.mrb[0].mxu0 %v2637
    %v2639 = vpop.f32.mrb[0].mxu0
    %v2640 = vadd.f32 %v2055, %v2639
    %v2641 = vpop.f32.mrb[0].mxu0
    %2642 = vmatprep.mubr.f32.mxu0 0.0
    %v2643 = vand.u32 %v108, 4294901760
    %2644 = vmatmul.mubr.f32.gmra.mrb[0].mxu0 %v2643
    %v2645 = vpop.f32.mrb[0].mxu0
    %v2646 = vadd.f32 %v2063, %v2645
    %v2647 = vpop.f32.mrb[0].mxu0
    %2648 = vmatprep.mubr.f32.mxu0 0.0
    %v2649 = vand.u32 %v111, 4294901760
    %2650 = vmatmul.mubr.f32.gmra.mrb[0].mxu0 %v2649
    %v2651 = vpop.f32.mrb[0].mxu0
    %v2652 = vadd.f32 %v2071, %v2651
    %v2653 = vpop.f32.mrb[0].mxu0
    %2654 = vmatprep.mubr.f32.mxu0 0.0
    %v2655 = vand.u32 %v114, 4294901760
    %2656 = vmatmul.mubr.f32.gmra.mrb[0].mxu0 %v2655
    %v2657 = vpop.f32.mrb[0].mxu0
    %v2658 = vadd.f32 %v2079, %v2657
    %v2659 = vpop.f32.mrb[0].mxu0
    %2660 = vmatprep.mubr.f32.mxu0 0.0
    %v2661 = vand.u32 %v117, 4294901760
    %2662 = vmatmul.mubr.f32.gmra.mrb[0].mxu0 %v2661
    %v2663 = vpop.f32.mrb[0].mxu0
    %v2664 = vadd.f32 %v2087, %v2663
    %v2665 = vpop.f32.mrb[0].mxu0
    %2666 = vmatprep.mubr.f32.mxu0 0.0
    %v2667 = vand.u32 %v120, 4294901760
    %2668 = vmatmul.mubr.f32.gmra.mrb[0].mxu0 %v2667
    %v2669 = vpop.f32.mrb[0].mxu0
    %v2670 = vadd.f32 %v2095, %v2669
    %v2671 = vpop.f32.mrb[0].mxu0
    %2672 = vmatprep.mubr.f32.mxu0 0.0
    %v2673 = vand.u32 %v123, 4294901760
    %2674 = vmatmul.mubr.f32.gmra.mrb[0].mxu0 %v2673
    %v2675 = vpop.f32.mrb[0].mxu0
    %v2676 = vadd.f32 %v2103, %v2675
    %v2677 = vpop.f32.mrb[0].mxu0
    %2678 = vmatprep.mubr.f32.mxu0 0.0
    %v2679 = vand.u32 %v126, 4294901760
    %2680 = vmatmul.mubr.f32.gmra.mrb[0].mxu0 %v2679
    %v2681 = vpop.f32.mrb[0].mxu0
    %v2682 = vadd.f32 %v2111, %v2681
    %v2683 = vpop.f32.mrb[0].mxu0
    %2684 = vmatprep.mubr.f32.mxu0 0.0
    %v2685 = vand.u32 %v129, 4294901760
    %2686 = vmatmul.mubr.f32.gmra.mrb[0].mxu0 %v2685
    %v2687 = vpop.f32.mrb[0].mxu0
    %v2688 = vadd.f32 %v2119, %v2687
    %v2689 = vpop.f32.mrb[0].mxu0
    %2690 = vmatprep.mubr.f32.mxu0 0.0
    %v2691 = vand.u32 %v132, 4294901760
    %2692 = vmatmul.mubr.f32.gmra.mrb[0].mxu0 %v2691
    %v2693 = vpop.f32.mrb[0].mxu0
    %v2694 = vadd.f32 %v2127, %v2693
    %v2695 = vpop.f32.mrb[0].mxu0
    %2696 = vmatprep.mubr.f32.mxu0 0.0
    %v2697 = vand.u32 %v135, 4294901760
    %2698 = vmatmul.mubr.f32.gmra.mrb[0].mxu0 %v2697
    %v2699 = vpop.f32.mrb[0].mxu0
    %v2700 = vadd.f32 %v2135, %v2699
    %v2701 = vpop.f32.mrb[0].mxu0
    %2702 = vmatprep.mubr.f32.mxu0 0.0
    %v2703 = vand.u32 %v138, 4294901760
    %2704 = vmatmul.mubr.f32.gmra.mrb[0].mxu0 %v2703
    %v2705 = vpop.f32.mrb[0].mxu0
    %v2706 = vadd.f32 %v2143, %v2705
    %v2707 = vpop.f32.mrb[0].mxu0
    %2708 = vmatprep.mubr.f32.mxu0 0.0
    %v2709 = vand.u32 %v141, 4294901760
    %2710 = vmatmul.mubr.f32.gmra.mrb[0].mxu0 %v2709
    %v2711 = vpop.f32.mrb[0].mxu0
    %v2712 = vadd.f32 %v2151, %v2711
    %v2713 = vpop.f32.mrb[0].mxu0
    %2714 = vmatprep.mubr.f32.mxu0 0.0
    %v2715 = vand.u32 %v144, 4294901760
    %2716 = vmatmul.mubr.f32.gmra.mrb[0].mxu0 %v2715
    %v2717 = vpop.f32.mrb[0].mxu0
    %v2718 = vadd.f32 %v2159, %v2717
    %v2719 = vpop.f32.mrb[0].mxu0
    %2720 = vmatprep.mubr.f32.mxu0 0.0
    %v2721 = vand.u32 %v147, 4294901760
    %2722 = vmatmul.mubr.f32.gmra.mrb[0].mxu0 %v2721
    %v2723 = vpop.f32.mrb[0].mxu0
    %v2724 = vadd.f32 %v2167, %v2723
    %v2725 = vpop.f32.mrb[0].mxu0
    %2726 = vmatprep.mubr.f32.mxu0 0.0
    %v2727 = vand.u32 %v150, 4294901760
    %2728 = vmatmul.mubr.f32.gmra.mrb[0].mxu0 %v2727
    %v2729 = vpop.f32.mrb[0].mxu0
    %v2730 = vadd.f32 %v2175, %v2729
    %v2731 = vpop.f32.mrb[0].mxu0
    %2732 = vmatprep.mubr.f32.mxu0 0.0
    %v2733 = vand.u32 %v153, 4294901760
    %2734 = vmatmul.mubr.f32.gmra.mrb[0].mxu0 %v2733
    %v2735 = vpop.f32.mrb[0].mxu0
    %v2736 = vadd.f32 %v2183, %v2735
    %v2737 = vpop.f32.mrb[0].mxu0
    %2738 = vmatprep.mubr.f32.mxu0 0.0
    %v2739 = vand.u32 %v156, 4294901760
    %2740 = vmatmul.mubr.f32.gmra.mrb[0].mxu0 %v2739
    %v2741 = vpop.f32.mrb[0].mxu0
    %v2742 = vadd.f32 %v2191, %v2741
    %v2743 = vpop.f32.mrb[0].mxu0
    %2744 = vmatprep.mubr.f32.mxu0 0.0
    %v2745 = vand.u32 %v159, 4294901760
    %2746 = vmatmul.mubr.f32.gmra.mrb[0].mxu0 %v2745
    %v2747 = vpop.f32.mrb[0].mxu0
    %v2748 = vadd.f32 %v2199, %v2747
    %v2749 = vpop.f32.mrb[0].mxu0
    %2750 = vmatprep.mubr.f32.mxu0 0.0
    %v2751 = vand.u32 %v162, 4294901760
    %2752 = vmatmul.mubr.f32.gmra.mrb[0].mxu0 %v2751
    %v2753 = vpop.f32.mrb[0].mxu0
    %v2754 = vadd.f32 %v2207, %v2753
    %v2755 = vpop.f32.mrb[0].mxu0
    %2756 = vmatprep.mubr.f32.mxu0 0.0
    %v2757 = vand.u32 %v165, 4294901760
    %2758 = vmatmul.mubr.f32.gmra.mrb[0].mxu0 %v2757
    %v2759 = vpop.f32.mrb[0].mxu0
    %v2760 = vadd.f32 %v2215, %v2759
    %v2761 = vpop.f32.mrb[0].mxu0
    %2762 = vmatprep.mubr.f32.mxu0 0.0
    %v2763 = vand.u32 %v168, 4294901760
    %2764 = vmatmul.mubr.f32.gmra.mrb[0].mxu0 %v2763
    %v2765 = vpop.f32.mrb[0].mxu0
    %v2766 = vadd.f32 %v2223, %v2765
    %v2767 = vpop.f32.mrb[0].mxu0
    %2768 = vmatprep.mubr.f32.mxu0 0.0
    %v2769 = vand.u32 %v171, 4294901760
    %2770 = vmatmul.mubr.f32.gmra.mrb[0].mxu0 %v2769
    %v2771 = vpop.f32.mrb[0].mxu0
    %v2772 = vadd.f32 %v2231, %v2771
    %v2773 = vpop.f32.mrb[0].mxu0
    %2774 = vmatprep.mubr.f32.mxu0 0.0
    %v2775 = vand.u32 %v174, 4294901760
    %2776 = vmatmul.mubr.f32.gmra.mrb[0].mxu0 %v2775
    %v2777 = vpop.f32.mrb[0].mxu0
    %v2778 = vadd.f32 %v2239, %v2777
    %v2779 = vpop.f32.mrb[0].mxu0
    %2780 = vmatprep.mubr.f32.mxu0 0.0
    %v2781 = vand.u32 %v177, 4294901760
    %2782 = vmatmul.mubr.f32.gmra.mrb[0].mxu0 %v2781
    %v2783 = vpop.f32.mrb[0].mxu0
    %v2784 = vadd.f32 %v2247, %v2783
    %v2785 = vpop.f32.mrb[0].mxu0
    %2786 = vmatprep.mubr.f32.mxu0 0.0
    %v2787 = vand.u32 %v180, 4294901760
    %2788 = vmatmul.mubr.f32.gmra.mrb[0].mxu0 %v2787
    %v2789 = vpop.f32.mrb[0].mxu0
    %v2790 = vadd.f32 %v2255, %v2789
    %v2791 = vpop.f32.mrb[0].mxu0
    %2792 = vmatprep.mubr.f32.mxu0 0.0
    %v2793 = vand.u32 %v183, 4294901760
    %2794 = vmatmul.mubr.f32.gmra.mrb[0].mxu0 %v2793
    %v2795 = vpop.f32.mrb[0].mxu0
    %v2796 = vadd.f32 %v2263, %v2795
    %v2797 = vpop.f32.mrb[0].mxu0
    %2798 = vmatprep.mubr.f32.mxu0 0.0
    %v2799 = vand.u32 %v186, 4294901760
    %2800 = vmatmul.mubr.f32.gmra.mrb[0].mxu0 %v2799
    %v2801 = vpop.f32.mrb[0].mxu0
    %v2802 = vadd.f32 %v2271, %v2801
    %v2803 = vpop.f32.mrb[0].mxu0
    %2804 = vmatprep.mubr.f32.mxu0 0.0
    %v2805 = vand.u32 %v189, 4294901760
    %2806 = vmatmul.mubr.f32.gmra.mrb[0].mxu0 %v2805
    %v2807 = vpop.f32.mrb[0].mxu0
    %v2808 = vadd.f32 %v2279, %v2807
    %v2809 = vpop.f32.mrb[0].mxu0
    %2810 = vmatprep.mubr.f32.mxu0 0.0
    %v2811 = vand.u32 %v192, 4294901760
    %2812 = vmatmul.mubr.f32.gmra.mrb[0].mxu0 %v2811
    %v2813 = vpop.f32.mrb[0].mxu0
    %v2814 = vadd.f32 %v2287, %v2813
    %v2815 = vpop.f32.mrb[0].mxu0
    %2816 = vmatprep.mubr.f32.mxu0 0.0
    %v2817 = vand.u32 %v195, 4294901760
    %2818 = vmatmul.mubr.f32.gmra.mrb[0].mxu0 %v2817
    %v2819 = vpop.f32.mrb[0].mxu0
    %v2820 = vadd.f32 %v2295, %v2819
    %v2821 = vpop.f32.mrb[0].mxu0
    %2822 = vmatprep.mubr.f32.mxu0 0.0
    %v2823 = vand.u32 %v198, 4294901760
    %2824 = vmatmul.mubr.f32.gmra.mrb[0].mxu0 %v2823
    %v2825 = vpop.f32.mrb[0].mxu0
    %v2826 = vadd.f32 %v2303, %v2825
    %v2827 = vpop.f32.mrb[0].mxu0
    %2828 = vmatprep.mubr.f32.mxu0 0.0
    %v2829 = vand.u32 %v201, 4294901760
    %2830 = vmatmul.mubr.f32.gmra.mrb[0].mxu0 %v2829
    %v2831 = vpop.f32.mrb[0].mxu0
    %v2832 = vadd.f32 %v2311, %v2831
    %v2833 = vpop.f32.mrb[0].mxu0
    %2834 = vmatprep.mubr.f32.mxu0 0.0
    %v2835 = vand.u32 %v204, 4294901760
    %2836 = vmatmul.mubr.f32.gmra.mrb[0].mxu0 %v2835
    %v2837 = vpop.f32.mrb[0].mxu0
    %v2838 = vadd.f32 %v2319, %v2837
    %v2839 = vpop.f32.mrb[0].mxu0
    %2840 = vmatprep.mubr.f32.mxu0 0.0
    %v2841 = vand.u32 %v207, 4294901760
    %2842 = vmatmul.mubr.f32.gmra.mrb[0].mxu0 %v2841
    %v2843 = vpop.f32.mrb[0].mxu0
    %v2844 = vadd.f32 %v2327, %v2843
    %v2845 = vpop.f32.mrb[0].mxu0
    %2846 = vmatprep.mubr.f32.mxu0 0.0
    %v2847 = vand.u32 %v210, 4294901760
    %2848 = vmatmul.mubr.f32.gmra.mrb[0].mxu0 %v2847
    %v2849 = vpop.f32.mrb[0].mxu0
    %v2850 = vadd.f32 %v2335, %v2849
    %v2851 = vpop.f32.mrb[0].mxu0
    %2852 = vmatprep.mubr.f32.mxu0 0.0
    %v2853 = vand.u32 %v213, 4294901760
    %2854 = vmatmul.mubr.f32.gmra.mrb[0].mxu0 %v2853
    %v2855 = vpop.f32.mrb[0].mxu0
    %v2856 = vadd.f32 %v2343, %v2855
    %v2857 = vpop.f32.mrb[0].mxu0
    %2858 = vmatprep.mubr.f32.mxu0 0.0
    %v2859 = vand.u32 %v216, 4294901760
    %2860 = vmatmul.mubr.f32.gmra.mrb[0].mxu0 %v2859
    %v2861 = vpop.f32.mrb[0].mxu0
    %v2862 = vadd.f32 %v2351, %v2861
    %v2863 = vpop.f32.mrb[0].mxu0
    %2864 = vmatprep.mubr.f32.mxu0 0.0
    %v2865 = vand.u32 %v219, 4294901760
    %2866 = vmatmul.mubr.f32.gmra.mrb[0].mxu0 %v2865
    %v2867 = vpop.f32.mrb[0].mxu0
    %v2868 = vadd.f32 %v2359, %v2867
    %v2869 = vpop.f32.mrb[0].mxu0
    %2870 = vmatprep.mubr.f32.mxu0 0.0
    %v2871 = vand.u32 %v222, 4294901760
    %2872 = vmatmul.mubr.f32.gmra.mrb[0].mxu0 %v2871
    %v2873 = vpop.f32.mrb[0].mxu0
    %v2874 = vadd.f32 %v2367, %v2873
    %v2875 = vpop.f32.mrb[0].mxu0
    %2876 = vmatprep.mubr.f32.mxu0 0.0
    %v2877 = vand.u32 %v225, 4294901760
    %2878 = vmatmul.mubr.f32.gmra.mrb[0].mxu0 %v2877
    %v2879 = vpop.f32.mrb[0].mxu0
    %v2880 = vadd.f32 %v2375, %v2879
    %v2881 = vpop.f32.mrb[0].mxu0
    %2882 = vmatprep.mubr.f32.mxu0 0.0
    %v2883 = vand.u32 %v228, 4294901760
    %2884 = vmatmul.mubr.f32.gmra.mrb[0].mxu0 %v2883
    %v2885 = vpop.f32.mrb[0].mxu0
    %v2886 = vadd.f32 %v2383, %v2885
    %v2887 = vpop.f32.mrb[0].mxu0
    %2888 = vmatprep.mubr.f32.mxu0 0.0
    %v2889 = vand.u32 %v231, 4294901760
    %2890 = vmatmul.mubr.f32.gmra.mrb[0].mxu0 %v2889
    %v2891 = vpop.f32.mrb[0].mxu0
    %v2892 = vadd.f32 %v2391, %v2891
    %v2893 = vpop.f32.mrb[0].mxu0
    %2894 = vmatprep.mubr.f32.mxu0 0.0
    %v2895 = vand.u32 %v234, 4294901760
    %2896 = vmatmul.mubr.f32.gmra.mrb[0].mxu0 %v2895
    %v2897 = vpop.f32.mrb[0].mxu0
    %v2898 = vadd.f32 %v2399, %v2897
    %v2899 = vpop.f32.mrb[0].mxu0
    %2900 = vmatprep.mubr.f32.mxu0 0.0
    %v2901 = vand.u32 %v237, 4294901760
    %2902 = vmatmul.mubr.f32.gmra.mrb[0].mxu0 %v2901
    %v2903 = vpop.f32.mrb[0].mxu0
    %v2904 = vadd.f32 %v2407, %v2903
    %v2905 = vpop.f32.mrb[0].mxu0
    %2906 = vmatprep.mubr.f32.mxu0 0.0
    %v2907 = vand.u32 %v240, 4294901760
    %2908 = vmatmul.mubr.f32.gmra.mrb[0].mxu0 %v2907
    %v2909 = vpop.f32.mrb[0].mxu0
    %v2910 = vadd.f32 %v2415, %v2909
    %v2911 = vpop.f32.mrb[0].mxu0
    %2912 = vmatprep.mubr.f32.mxu0 0.0
    %v2913 = vand.u32 %v243, 4294901760
    %2914 = vmatmul.mubr.f32.gmra.mrb[0].mxu0 %v2913
    %v2915 = vpop.f32.mrb[0].mxu0
    %v2916 = vadd.f32 %v2423, %v2915
    %v2917 = vpop.f32.mrb[0].mxu0
    %2918 = vmatprep.mubr.f32.mxu0 0.0
    %v2919 = vand.u32 %v246, 4294901760
    %2920 = vmatmul.mubr.f32.gmra.mrb[0].mxu0 %v2919
    %v2921 = vpop.f32.mrb[0].mxu0
    %v2922 = vadd.f32 %v2431, %v2921
    %v2923 = vpop.f32.mrb[0].mxu0
    %2924 = vmatprep.mubr.f32.mxu0 0.0
    %v2925 = vand.u32 %v249, 4294901760
    %2926 = vmatmul.mubr.f32.gmra.mrb[0].mxu0 %v2925
    %v2927 = vpop.f32.mrb[0].mxu0
    %v2928 = vadd.f32 %v2439, %v2927
    %v2929 = vpop.f32.mrb[0].mxu0
    %2930 = vmatprep.mubr.f32.mxu0 0.0
    %v2931 = vand.u32 %v252, 4294901760
    %2932 = vmatmul.mubr.f32.gmra.mrb[0].mxu0 %v2931
    %v2933 = vpop.f32.mrb[0].mxu0
    %v2934 = vadd.f32 %v2447, %v2933
    %v2935 = vpop.f32.mrb[0].mxu0
    %2936 = vmatprep.mubr.f32.mxu0 0.0
    %v2937 = vand.u32 %v255, 4294901760
    %2938 = vmatmul.mubr.f32.gmra.mrb[0].mxu0 %v2937
    %v2939 = vpop.f32.mrb[0].mxu0
    %v2940 = vadd.f32 %v2455, %v2939
    %v2941 = vpop.f32.mrb[0].mxu0
    %2942 = vmatprep.mubr.f32.mxu0 0.0
    %v2943 = vand.u32 %v258, 4294901760
    %2944 = vmatmul.mubr.f32.gmra.mrb[0].mxu0 %v2943
    %v2945 = vpop.f32.mrb[0].mxu0
    %v2946 = vadd.f32 %v2463, %v2945
    %v2947 = vpop.f32.mrb[0].mxu0
    %2948 = vmatprep.mubr.f32.mxu0 0.0
    %v2949 = vand.u32 %v261, 4294901760
    %2950 = vmatmul.mubr.f32.gmra.mrb[0].mxu0 %v2949
    %v2951 = vpop.f32.mrb[0].mxu0
    %v2952 = vadd.f32 %v2471, %v2951
    %v2953 = vpop.f32.mrb[0].mxu0
    %2954 = vmatprep.mubr.f32.mxu0 0.0
    %v2955 = vand.u32 %v264, 4294901760
    %2956 = vmatmul.mubr.f32.gmra.mrb[0].mxu0 %v2955
    %v2957 = vpop.f32.mrb[0].mxu0
    %v2958 = vadd.f32 %v2479, %v2957
    %v2959 = vpop.f32.mrb[0].mxu0
    %2960 = vmatprep.mubr.f32.mxu0 0.0
    %v2961 = vand.u32 %v267, 4294901760
    %2962 = vmatmul.mubr.f32.gmra.mrb[0].mxu0 %v2961
    %v2963 = vpop.f32.mrb[0].mxu0
    %v2964 = vadd.f32 %v2487, %v2963
    %v2965 = vpop.f32.mrb[0].mxu0
    %2966 = vmatprep.mubr.f32.mxu0 0.0
    %v2967 = vand.u32 %v270, 4294901760
    %2968 = vmatmul.mubr.f32.gmra.mrb[0].mxu0 %v2967
    %v2969 = vpop.f32.mrb[0].mxu0
    %v2970 = vadd.f32 %v2495, %v2969
    %v2971 = vpop.f32.mrb[0].mxu0
    %2972 = vmatprep.mubr.f32.mxu0 0.0
    %v2973 = vand.u32 %v273, 4294901760
    %2974 = vmatmul.mubr.f32.gmra.mrb[0].mxu0 %v2973
    %v2975 = vpop.f32.mrb[0].mxu0
    %v2976 = vadd.f32 %v2503, %v2975
    %v2977 = vpop.f32.mrb[0].mxu0
    %2978 = vmatprep.mubr.f32.mxu0 0.0
    %v2979 = vand.u32 %v276, 4294901760
    %2980 = vmatmul.mubr.f32.gmra.mrb[0].mxu0 %v2979
    %v2981 = vpop.f32.mrb[0].mxu0
    %v2982 = vadd.f32 %v2511, %v2981
    %v2983 = vpop.f32.mrb[0].mxu0
    %2984 = vmatprep.mubr.f32.mxu0 0.0
    %v2985 = vand.u32 %v279, 4294901760
    %2986 = vmatmul.mubr.f32.gmra.mrb[0].mxu0 %v2985
    %v2987 = vpop.f32.mrb[0].mxu0
    %v2988 = vadd.f32 %v2519, %v2987
    %v2989 = vpop.f32.mrb[0].mxu0
    %2990 = vmatprep.mubr.f32.mxu0 0.0
    %v2991 = vand.u32 %v282, 4294901760
    %2992 = vmatmul.mubr.f32.gmra.mrb[0].mxu0 %v2991
    %v2993 = vpop.f32.mrb[0].mxu0
    %v2994 = vadd.f32 %v2527, %v2993
    %v2995 = vpop.f32.mrb[0].mxu0
    %2996 = vdwg.mxu0
    %2997 = vmatprep.subr.mxu0 0.0
    %v2998 = vand.u32 %v89, 4294901760
    %2999 = vmatpush1.msra.mxu0 %v2998
    %3000 = vmatprep.subr.mxu0 0.0
    %v3001 = vand.u32 %v90, 4294901760
    %3002 = vmatpush1.msra.mxu0 %v3001
    %3003 = vmatprep.subr.mxu0 0.0
    %v3004 = vand.u32 %v91, 4294901760
    %3005 = vmatpush1.msra.mxu0 %v3004
    %3006 = vmatprep.subr.mxu0 0.0
    %v3007 = vand.u32 %v92, 4294901760
    %3008 = vmatpush1.msra.mxu0 %v3007
    %3009 = vmatprep.subr.mxu0 0.0
    %v3010 = vand.u32 %v93, 4294901760
    %3011 = vmatpush1.msra.mxu0 %v3010
    %3012 = vmatprep.subr.mxu0 0.0
    %v3013 = vand.u32 %v94, 4294901760
    %3014 = vmatpush1.msra.mxu0 %v3013
    %3015 = vmatprep.subr.mxu0 0.0
    %v3016 = vand.u32 %v95, 4294901760
    %3017 = vmatpush1.msra.mxu0 %v3016
    %3018 = vmatprep.subr.mxu0 0.0
    %v3019 = vand.u32 %v96, 4294901760
    %3020 = vmatpush1.msra.mxu0 %v3019
    %3021 = vmatprep.subr.mxu0 0.0
    %v3022 = vand.u32 %v97, 4294901760
    %3023 = vmatpush1.msra.mxu0 %v3022
    %3024 = vmatprep.subr.mxu0 0.0
    %v3025 = vand.u32 %v98, 4294901760
    %3026 = vmatpush1.msra.mxu0 %v3025
    %3027 = vmatprep.subr.mxu0 0.0
    %v3028 = vand.u32 %v99, 4294901760
    %3029 = vmatpush1.msra.mxu0 %v3028
    %3030 = vmatprep.subr.mxu0 0.0
    %v3031 = vand.u32 %v100, 4294901760
    %3032 = vmatpush1.msra.mxu0 %v3031
    %3033 = vmatprep.subr.mxu0 0.0
    %v3034 = vand.u32 %v101, 4294901760
    %3035 = vmatpush1.msra.mxu0 %v3034
    %3036 = vmatprep.subr.mxu0 0.0
    %v3037 = vand.u32 %v102, 4294901760
    %3038 = vmatpush1.msra.mxu0 %v3037
    %3039 = vmatprep.subr.mxu0 0.0
    %3040 = vmatpush1.msra.mxu0 0.0
    %3041 = vmatprep.subr.mxu0 0.0
    %3042 = vmatpush1.msra.mxu0 0.0
    %3043 = vmatprep.subr.mxu0 0.0
    %3044 = vmatpush1.msra.mxu0 0.0
    %3045 = vmatprep.subr.mxu0 0.0
    %3046 = vmatpush1.msra.mxu0 0.0
    %3047 = vmatprep.subr.mxu0 0.0
    %3048 = vmatpush1.msra.mxu0 0.0
    %3049 = vmatprep.subr.mxu0 0.0
    %3050 = vmatpush1.msra.mxu0 0.0
    %3051 = vmatprep.subr.mxu0 0.0
    %3052 = vmatpush1.msra.mxu0 0.0
    %3053 = vmatprep.subr.mxu0 0.0
    %3054 = vmatpush1.msra.mxu0 0.0
    %3055 = vmatprep.subr.mxu0 0.0
    %3056 = vmatpush1.msra.mxu0 0.0
    %3057 = vmatprep.subr.mxu0 0.0
    %3058 = vmatpush1.msra.mxu0 0.0
    %3059 = vmatprep.subr.mxu0 0.0
    %3060 = vmatpush1.msra.mxu0 0.0
    %3061 = vmatprep.subr.mxu0 0.0
    %3062 = vmatpush1.msra.mxu0 0.0
    %3063 = vmatprep.subr.mxu0 0.0
    %3064 = vmatpush1.msra.mxu0 0.0
    %3065 = vmatprep.subr.mxu0 0.0
    %3066 = vmatpush1.msra.mxu0 0.0
    %3067 = vmatprep.subr.mxu0 0.0
    %3068 = vmatpush1.msra.mxu0 0.0
    %3069 = vmatprep.subr.mxu0 0.0
    %3070 = vmatpush1.msra.mxu0 0.0
    %3071 = vmatprep.subr.mxu0 0.0
    %3072 = vmatpush1.msra.mxu0 0.0
    %3073 = vmatprep.subr.mxu0 0.0
    %3074 = vmatpush1.msra.mxu0 0.0
    %3075 = vmatprep.mubr.f32.mxu0 0.0
    %v3076 = vand.u32 %v105, 4294901760
    %3077 = vmatmul.mubr.f32.gmra.mrb[0].mxu0 %v3076
    %v3078 = vpop.f32.mrb[0].mxu0
    %v3079 = vadd.f32 %v2640, %v3078
    %v3080 = vpop.f32.mrb[0].mxu0
    %3081 = vmatprep.mubr.f32.mxu0 0.0
    %v3082 = vand.u32 %v108, 4294901760
    %3083 = vmatmul.mubr.f32.gmra.mrb[0].mxu0 %v3082
    %v3084 = vpop.f32.mrb[0].mxu0
    %v3085 = vadd.f32 %v2646, %v3084
    %v3086 = vpop.f32.mrb[0].mxu0
    %3087 = vmatprep.mubr.f32.mxu0 0.0
    %v3088 = vand.u32 %v111, 4294901760
    %3089 = vmatmul.mubr.f32.gmra.mrb[0].mxu0 %v3088
    %v3090 = vpop.f32.mrb[0].mxu0
    %v3091 = vadd.f32 %v2652, %v3090
    %v3092 = vpop.f32.mrb[0].mxu0
    %3093 = vmatprep.mubr.f32.mxu0 0.0
    %v3094 = vand.u32 %v114, 4294901760
    %3095 = vmatmul.mubr.f32.gmra.mrb[0].mxu0 %v3094
    %v3096 = vpop.f32.mrb[0].mxu0
    %v3097 = vadd.f32 %v2658, %v3096
    %v3098 = vpop.f32.mrb[0].mxu0
    %3099 = vmatprep.mubr.f32.mxu0 0.0
    %v3100 = vand.u32 %v117, 4294901760
    %3101 = vmatmul.mubr.f32.gmra.mrb[0].mxu0 %v3100
    %v3102 = vpop.f32.mrb[0].mxu0
    %v3103 = vadd.f32 %v2664, %v3102
    %v3104 = vpop.f32.mrb[0].mxu0
    %3105 = vmatprep.mubr.f32.mxu0 0.0
    %v3106 = vand.u32 %v120, 4294901760
    %3107 = vmatmul.mubr.f32.gmra.mrb[0].mxu0 %v3106
    %v3108 = vpop.f32.mrb[0].mxu0
    %v3109 = vadd.f32 %v2670, %v3108
    %v3110 = vpop.f32.mrb[0].mxu0
    %3111 = vmatprep.mubr.f32.mxu0 0.0
    %v3112 = vand.u32 %v123, 4294901760
    %3113 = vmatmul.mubr.f32.gmra.mrb[0].mxu0 %v3112
    %v3114 = vpop.f32.mrb[0].mxu0
    %v3115 = vadd.f32 %v2676, %v3114
    %v3116 = vpop.f32.mrb[0].mxu0
    %3117 = vmatprep.mubr.f32.mxu0 0.0
    %v3118 = vand.u32 %v126, 4294901760
    %3119 = vmatmul.mubr.f32.gmra.mrb[0].mxu0 %v3118
    %v3120 = vpop.f32.mrb[0].mxu0
    %v3121 = vadd.f32 %v2682, %v3120
    %v3122 = vpop.f32.mrb[0].mxu0
    %3123 = vmatprep.mubr.f32.mxu0 0.0
    %v3124 = vand.u32 %v129, 4294901760
    %3125 = vmatmul.mubr.f32.gmra.mrb[0].mxu0 %v3124
    %v3126 = vpop.f32.mrb[0].mxu0
    %v3127 = vadd.f32 %v2688, %v3126
    %v3128 = vpop.f32.mrb[0].mxu0
    %3129 = vmatprep.mubr.f32.mxu0 0.0
    %v3130 = vand.u32 %v132, 4294901760
    %3131 = vmatmul.mubr.f32.gmra.mrb[0].mxu0 %v3130
    %v3132 = vpop.f32.mrb[0].mxu0
    %v3133 = vadd.f32 %v2694, %v3132
    %v3134 = vpop.f32.mrb[0].mxu0
    %3135 = vmatprep.mubr.f32.mxu0 0.0
    %v3136 = vand.u32 %v135, 4294901760
    %3137 = vmatmul.mubr.f32.gmra.mrb[0].mxu0 %v3136
    %v3138 = vpop.f32.mrb[0].mxu0
    %v3139 = vadd.f32 %v2700, %v3138
    %v3140 = vpop.f32.mrb[0].mxu0
    %3141 = vmatprep.mubr.f32.mxu0 0.0
    %v3142 = vand.u32 %v138, 4294901760
    %3143 = vmatmul.mubr.f32.gmra.mrb[0].mxu0 %v3142
    %v3144 = vpop.f32.mrb[0].mxu0
    %v3145 = vadd.f32 %v2706, %v3144
    %v3146 = vpop.f32.mrb[0].mxu0
    %3147 = vmatprep.mubr.f32.mxu0 0.0
    %v3148 = vand.u32 %v141, 4294901760
    %3149 = vmatmul.mubr.f32.gmra.mrb[0].mxu0 %v3148
    %v3150 = vpop.f32.mrb[0].mxu0
    %v3151 = vadd.f32 %v2712, %v3150
    %v3152 = vpop.f32.mrb[0].mxu0
    %3153 = vmatprep.mubr.f32.mxu0 0.0
    %v3154 = vand.u32 %v144, 4294901760
    %3155 = vmatmul.mubr.f32.gmra.mrb[0].mxu0 %v3154
    %v3156 = vpop.f32.mrb[0].mxu0
    %v3157 = vadd.f32 %v2718, %v3156
    %v3158 = vpop.f32.mrb[0].mxu0
    %3159 = vmatprep.mubr.f32.mxu0 0.0
    %v3160 = vand.u32 %v147, 4294901760
    %3161 = vmatmul.mubr.f32.gmra.mrb[0].mxu0 %v3160
    %v3162 = vpop.f32.mrb[0].mxu0
    %v3163 = vadd.f32 %v2724, %v3162
    %v3164 = vpop.f32.mrb[0].mxu0
    %3165 = vmatprep.mubr.f32.mxu0 0.0
    %v3166 = vand.u32 %v150, 4294901760
    %3167 = vmatmul.mubr.f32.gmra.mrb[0].mxu0 %v3166
    %v3168 = vpop.f32.mrb[0].mxu0
    %v3169 = vadd.f32 %v2730, %v3168
    %v3170 = vpop.f32.mrb[0].mxu0
    %3171 = vmatprep.mubr.f32.mxu0 0.0
    %v3172 = vand.u32 %v153, 4294901760
    %3173 = vmatmul.mubr.f32.gmra.mrb[0].mxu0 %v3172
    %v3174 = vpop.f32.mrb[0].mxu0
    %v3175 = vadd.f32 %v2736, %v3174
    %v3176 = vpop.f32.mrb[0].mxu0
    %3177 = vmatprep.mubr.f32.mxu0 0.0
    %v3178 = vand.u32 %v156, 4294901760
    %3179 = vmatmul.mubr.f32.gmra.mrb[0].mxu0 %v3178
    %v3180 = vpop.f32.mrb[0].mxu0
    %v3181 = vadd.f32 %v2742, %v3180
    %v3182 = vpop.f32.mrb[0].mxu0
    %3183 = vmatprep.mubr.f32.mxu0 0.0
    %v3184 = vand.u32 %v159, 4294901760
    %3185 = vmatmul.mubr.f32.gmra.mrb[0].mxu0 %v3184
    %v3186 = vpop.f32.mrb[0].mxu0
    %v3187 = vadd.f32 %v2748, %v3186
    %v3188 = vpop.f32.mrb[0].mxu0
    %3189 = vmatprep.mubr.f32.mxu0 0.0
    %v3190 = vand.u32 %v162, 4294901760
    %3191 = vmatmul.mubr.f32.gmra.mrb[0].mxu0 %v3190
    %v3192 = vpop.f32.mrb[0].mxu0
    %v3193 = vadd.f32 %v2754, %v3192
    %v3194 = vpop.f32.mrb[0].mxu0
    %3195 = vmatprep.mubr.f32.mxu0 0.0
    %v3196 = vand.u32 %v165, 4294901760
    %3197 = vmatmul.mubr.f32.gmra.mrb[0].mxu0 %v3196
    %v3198 = vpop.f32.mrb[0].mxu0
    %v3199 = vadd.f32 %v2760, %v3198
    %v3200 = vpop.f32.mrb[0].mxu0
    %3201 = vmatprep.mubr.f32.mxu0 0.0
    %v3202 = vand.u32 %v168, 4294901760
    %3203 = vmatmul.mubr.f32.gmra.mrb[0].mxu0 %v3202
    %v3204 = vpop.f32.mrb[0].mxu0
    %v3205 = vadd.f32 %v2766, %v3204
    %v3206 = vpop.f32.mrb[0].mxu0
    %3207 = vmatprep.mubr.f32.mxu0 0.0
    %v3208 = vand.u32 %v171, 4294901760
    %3209 = vmatmul.mubr.f32.gmra.mrb[0].mxu0 %v3208
    %v3210 = vpop.f32.mrb[0].mxu0
    %v3211 = vadd.f32 %v2772, %v3210
    %v3212 = vpop.f32.mrb[0].mxu0
    %3213 = vmatprep.mubr.f32.mxu0 0.0
    %v3214 = vand.u32 %v174, 4294901760
    %3215 = vmatmul.mubr.f32.gmra.mrb[0].mxu0 %v3214
    %v3216 = vpop.f32.mrb[0].mxu0
    %v3217 = vadd.f32 %v2778, %v3216
    %v3218 = vpop.f32.mrb[0].mxu0
    %3219 = vmatprep.mubr.f32.mxu0 0.0
    %v3220 = vand.u32 %v177, 4294901760
    %3221 = vmatmul.mubr.f32.gmra.mrb[0].mxu0 %v3220
    %v3222 = vpop.f32.mrb[0].mxu0
    %v3223 = vadd.f32 %v2784, %v3222
    %v3224 = vpop.f32.mrb[0].mxu0
    %3225 = vmatprep.mubr.f32.mxu0 0.0
    %v3226 = vand.u32 %v180, 4294901760
    %3227 = vmatmul.mubr.f32.gmra.mrb[0].mxu0 %v3226
    %v3228 = vpop.f32.mrb[0].mxu0
    %v3229 = vadd.f32 %v2790, %v3228
    %v3230 = vpop.f32.mrb[0].mxu0
    %3231 = vmatprep.mubr.f32.mxu0 0.0
    %v3232 = vand.u32 %v183, 4294901760
    %3233 = vmatmul.mubr.f32.gmra.mrb[0].mxu0 %v3232
    %v3234 = vpop.f32.mrb[0].mxu0
    %v3235 = vadd.f32 %v2796, %v3234
    %v3236 = vpop.f32.mrb[0].mxu0
    %3237 = vmatprep.mubr.f32.mxu0 0.0
    %v3238 = vand.u32 %v186, 4294901760
    %3239 = vmatmul.mubr.f32.gmra.mrb[0].mxu0 %v3238
    %v3240 = vpop.f32.mrb[0].mxu0
    %v3241 = vadd.f32 %v2802, %v3240
    %v3242 = vpop.f32.mrb[0].mxu0
    %3243 = vmatprep.mubr.f32.mxu0 0.0
    %v3244 = vand.u32 %v189, 4294901760
    %3245 = vmatmul.mubr.f32.gmra.mrb[0].mxu0 %v3244
    %v3246 = vpop.f32.mrb[0].mxu0
    %v3247 = vadd.f32 %v2808, %v3246
    %v3248 = vpop.f32.mrb[0].mxu0
    %3249 = vmatprep.mubr.f32.mxu0 0.0
    %v3250 = vand.u32 %v192, 4294901760
    %3251 = vmatmul.mubr.f32.gmra.mrb[0].mxu0 %v3250
    %v3252 = vpop.f32.mrb[0].mxu0
    %v3253 = vadd.f32 %v2814, %v3252
    %v3254 = vpop.f32.mrb[0].mxu0
    %3255 = vmatprep.mubr.f32.mxu0 0.0
    %v3256 = vand.u32 %v195, 4294901760
    %3257 = vmatmul.mubr.f32.gmra.mrb[0].mxu0 %v3256
    %v3258 = vpop.f32.mrb[0].mxu0
    %v3259 = vadd.f32 %v2820, %v3258
    %v3260 = vpop.f32.mrb[0].mxu0
    %3261 = vmatprep.mubr.f32.mxu0 0.0
    %v3262 = vand.u32 %v198, 4294901760
    %3263 = vmatmul.mubr.f32.gmra.mrb[0].mxu0 %v3262
    %v3264 = vpop.f32.mrb[0].mxu0
    %v3265 = vadd.f32 %v2826, %v3264
    %v3266 = vpop.f32.mrb[0].mxu0
    %3267 = vmatprep.mubr.f32.mxu0 0.0
    %v3268 = vand.u32 %v201, 4294901760
    %3269 = vmatmul.mubr.f32.gmra.mrb[0].mxu0 %v3268
    %v3270 = vpop.f32.mrb[0].mxu0
    %v3271 = vadd.f32 %v2832, %v3270
    %v3272 = vpop.f32.mrb[0].mxu0
    %3273 = vmatprep.mubr.f32.mxu0 0.0
    %v3274 = vand.u32 %v204, 4294901760
    %3275 = vmatmul.mubr.f32.gmra.mrb[0].mxu0 %v3274
    %v3276 = vpop.f32.mrb[0].mxu0
    %v3277 = vadd.f32 %v2838, %v3276
    %v3278 = vpop.f32.mrb[0].mxu0
    %3279 = vmatprep.mubr.f32.mxu0 0.0
    %v3280 = vand.u32 %v207, 4294901760
    %3281 = vmatmul.mubr.f32.gmra.mrb[0].mxu0 %v3280
    %v3282 = vpop.f32.mrb[0].mxu0
    %v3283 = vadd.f32 %v2844, %v3282
    %v3284 = vpop.f32.mrb[0].mxu0
    %3285 = vmatprep.mubr.f32.mxu0 0.0
    %v3286 = vand.u32 %v210, 4294901760
    %3287 = vmatmul.mubr.f32.gmra.mrb[0].mxu0 %v3286
    %v3288 = vpop.f32.mrb[0].mxu0
    %v3289 = vadd.f32 %v2850, %v3288
    %v3290 = vpop.f32.mrb[0].mxu0
    %3291 = vmatprep.mubr.f32.mxu0 0.0
    %v3292 = vand.u32 %v213, 4294901760
    %3293 = vmatmul.mubr.f32.gmra.mrb[0].mxu0 %v3292
    %v3294 = vpop.f32.mrb[0].mxu0
    %v3295 = vadd.f32 %v2856, %v3294
    %v3296 = vpop.f32.mrb[0].mxu0
    %3297 = vmatprep.mubr.f32.mxu0 0.0
    %v3298 = vand.u32 %v216, 4294901760
    %3299 = vmatmul.mubr.f32.gmra.mrb[0].mxu0 %v3298
    %v3300 = vpop.f32.mrb[0].mxu0
    %v3301 = vadd.f32 %v2862, %v3300
    %v3302 = vpop.f32.mrb[0].mxu0
    %3303 = vmatprep.mubr.f32.mxu0 0.0
    %v3304 = vand.u32 %v219, 4294901760
    %3305 = vmatmul.mubr.f32.gmra.mrb[0].mxu0 %v3304
    %v3306 = vpop.f32.mrb[0].mxu0
    %v3307 = vadd.f32 %v2868, %v3306
    %v3308 = vpop.f32.mrb[0].mxu0
    %3309 = vmatprep.mubr.f32.mxu0 0.0
    %v3310 = vand.u32 %v222, 4294901760
    %3311 = vmatmul.mubr.f32.gmra.mrb[0].mxu0 %v3310
    %v3312 = vpop.f32.mrb[0].mxu0
    %v3313 = vadd.f32 %v2874, %v3312
    %v3314 = vpop.f32.mrb[0].mxu0
    %3315 = vmatprep.mubr.f32.mxu0 0.0
    %v3316 = vand.u32 %v225, 4294901760
    %3317 = vmatmul.mubr.f32.gmra.mrb[0].mxu0 %v3316
    %v3318 = vpop.f32.mrb[0].mxu0
    %v3319 = vadd.f32 %v2880, %v3318
    %v3320 = vpop.f32.mrb[0].mxu0
    %3321 = vmatprep.mubr.f32.mxu0 0.0
    %v3322 = vand.u32 %v228, 4294901760
    %3323 = vmatmul.mubr.f32.gmra.mrb[0].mxu0 %v3322
    %v3324 = vpop.f32.mrb[0].mxu0
    %v3325 = vadd.f32 %v2886, %v3324
    %v3326 = vpop.f32.mrb[0].mxu0
    %3327 = vmatprep.mubr.f32.mxu0 0.0
    %v3328 = vand.u32 %v231, 4294901760
    %3329 = vmatmul.mubr.f32.gmra.mrb[0].mxu0 %v3328
    %v3330 = vpop.f32.mrb[0].mxu0
    %v3331 = vadd.f32 %v2892, %v3330
    %v3332 = vpop.f32.mrb[0].mxu0
    %3333 = vmatprep.mubr.f32.mxu0 0.0
    %v3334 = vand.u32 %v234, 4294901760
    %3335 = vmatmul.mubr.f32.gmra.mrb[0].mxu0 %v3334
    %v3336 = vpop.f32.mrb[0].mxu0
    %v3337 = vadd.f32 %v2898, %v3336
    %v3338 = vpop.f32.mrb[0].mxu0
    %3339 = vmatprep.mubr.f32.mxu0 0.0
    %v3340 = vand.u32 %v237, 4294901760
    %3341 = vmatmul.mubr.f32.gmra.mrb[0].mxu0 %v3340
    %v3342 = vpop.f32.mrb[0].mxu0
    %v3343 = vadd.f32 %v2904, %v3342
    %v3344 = vpop.f32.mrb[0].mxu0
    %3345 = vmatprep.mubr.f32.mxu0 0.0
    %v3346 = vand.u32 %v240, 4294901760
    %3347 = vmatmul.mubr.f32.gmra.mrb[0].mxu0 %v3346
    %v3348 = vpop.f32.mrb[0].mxu0
    %v3349 = vadd.f32 %v2910, %v3348
    %v3350 = vpop.f32.mrb[0].mxu0
    %3351 = vmatprep.mubr.f32.mxu0 0.0
    %v3352 = vand.u32 %v243, 4294901760
    %3353 = vmatmul.mubr.f32.gmra.mrb[0].mxu0 %v3352
    %v3354 = vpop.f32.mrb[0].mxu0
    %v3355 = vadd.f32 %v2916, %v3354
    %v3356 = vpop.f32.mrb[0].mxu0
    %3357 = vmatprep.mubr.f32.mxu0 0.0
    %v3358 = vand.u32 %v246, 4294901760
    %3359 = vmatmul.mubr.f32.gmra.mrb[0].mxu0 %v3358
    %v3360 = vpop.f32.mrb[0].mxu0
    %v3361 = vadd.f32 %v2922, %v3360
    %v3362 = vpop.f32.mrb[0].mxu0
    %3363 = vmatprep.mubr.f32.mxu0 0.0
    %v3364 = vand.u32 %v249, 4294901760
    %3365 = vmatmul.mubr.f32.gmra.mrb[0].mxu0 %v3364
    %v3366 = vpop.f32.mrb[0].mxu0
    %v3367 = vadd.f32 %v2928, %v3366
    %v3368 = vpop.f32.mrb[0].mxu0
    %3369 = vmatprep.mubr.f32.mxu0 0.0
    %v3370 = vand.u32 %v252, 4294901760
    %3371 = vmatmul.mubr.f32.gmra.mrb[0].mxu0 %v3370
    %v3372 = vpop.f32.mrb[0].mxu0
    %v3373 = vadd.f32 %v2934, %v3372
    %v3374 = vpop.f32.mrb[0].mxu0
    %3375 = vmatprep.mubr.f32.mxu0 0.0
    %v3376 = vand.u32 %v255, 4294901760
    %3377 = vmatmul.mubr.f32.gmra.mrb[0].mxu0 %v3376
    %v3378 = vpop.f32.mrb[0].mxu0
    %v3379 = vadd.f32 %v2940, %v3378
    %v3380 = vpop.f32.mrb[0].mxu0
    %3381 = vmatprep.mubr.f32.mxu0 0.0
    %v3382 = vand.u32 %v258, 4294901760
    %3383 = vmatmul.mubr.f32.gmra.mrb[0].mxu0 %v3382
    %v3384 = vpop.f32.mrb[0].mxu0
    %v3385 = vadd.f32 %v2946, %v3384
    %v3386 = vpop.f32.mrb[0].mxu0
    %3387 = vmatprep.mubr.f32.mxu0 0.0
    %v3388 = vand.u32 %v261, 4294901760
    %3389 = vmatmul.mubr.f32.gmra.mrb[0].mxu0 %v3388
    %v3390 = vpop.f32.mrb[0].mxu0
    %v3391 = vadd.f32 %v2952, %v3390
    %v3392 = vpop.f32.mrb[0].mxu0
    %3393 = vmatprep.mubr.f32.mxu0 0.0
    %v3394 = vand.u32 %v264, 4294901760
    %3395 = vmatmul.mubr.f32.gmra.mrb[0].mxu0 %v3394
    %v3396 = vpop.f32.mrb[0].mxu0
    %v3397 = vadd.f32 %v2958, %v3396
    %v3398 = vpop.f32.mrb[0].mxu0
    %3399 = vmatprep.mubr.f32.mxu0 0.0
    %v3400 = vand.u32 %v267, 4294901760
    %3401 = vmatmul.mubr.f32.gmra.mrb[0].mxu0 %v3400
    %v3402 = vpop.f32.mrb[0].mxu0
    %v3403 = vadd.f32 %v2964, %v3402
    %v3404 = vpop.f32.mrb[0].mxu0
    %3405 = vmatprep.mubr.f32.mxu0 0.0
    %v3406 = vand.u32 %v270, 4294901760
    %3407 = vmatmul.mubr.f32.gmra.mrb[0].mxu0 %v3406
    %v3408 = vpop.f32.mrb[0].mxu0
    %v3409 = vadd.f32 %v2970, %v3408
    %v3410 = vpop.f32.mrb[0].mxu0
    %3411 = vmatprep.mubr.f32.mxu0 0.0
    %v3412 = vand.u32 %v273, 4294901760
    %3413 = vmatmul.mubr.f32.gmra.mrb[0].mxu0 %v3412
    %v3414 = vpop.f32.mrb[0].mxu0
    %v3415 = vadd.f32 %v2976, %v3414
    %v3416 = vpop.f32.mrb[0].mxu0
    %3417 = vmatprep.mubr.f32.mxu0 0.0
    %v3418 = vand.u32 %v276, 4294901760
    %3419 = vmatmul.mubr.f32.gmra.mrb[0].mxu0 %v3418
    %v3420 = vpop.f32.mrb[0].mxu0
    %v3421 = vadd.f32 %v2982, %v3420
    %v3422 = vpop.f32.mrb[0].mxu0
    %3423 = vmatprep.mubr.f32.mxu0 0.0
    %v3424 = vand.u32 %v279, 4294901760
    %3425 = vmatmul.mubr.f32.gmra.mrb[0].mxu0 %v3424
    %v3426 = vpop.f32.mrb[0].mxu0
    %v3427 = vadd.f32 %v2988, %v3426
    %v3428 = vpop.f32.mrb[0].mxu0
    %3429 = vmatprep.mubr.f32.mxu0 0.0
    %v3430 = vand.u32 %v282, 4294901760
    %3431 = vmatmul.mubr.f32.gmra.mrb[0].mxu0 %v3430
    %v3432 = vpop.f32.mrb[0].mxu0
    %v3433 = vadd.f32 %v2994, %v3432
    %v3434 = vpop.f32.mrb[0].mxu0
    %3435 = vdwg.mxu0
    %v3436 = vld [vmem:[%s2] sm:$0xff]
    %v3437 = vld [vmem:[%s2 + $0x8] sm:$0xff]
    %v3438 = vld [vmem:[%s3] sm:$0xff]
    %v3439 = vld [vmem:[%s3 + $0x8] sm:$0xff]
    %vm3440 = vcmask 130048
    %v3442 = vsel %vm3440, %v3259, 0
    %v3445 = vsel %vm3440, %v3265, 0
    %v3448 = vsel %vm3440, %v3271, 0
    %v3451 = vsel %vm3440, %v3277, 0
    %v3454 = vsel %vm3440, %v3283, 0
    %v3457 = vsel %vm3440, %v3289, 0
    %v3460 = vsel %vm3440, %v3295, 0
    %v3463 = vsel %vm3440, %v3301, 0
    %v3466 = vsel %vm3440, %v3307, 0
    %v3469 = vsel %vm3440, %v3313, 0
    %v3472 = vsel %vm3440, %v3319, 0
    %v3475 = vsel %vm3440, %v3325, 0
    %v3478 = vsel %vm3440, %v3331, 0
    %v3481 = vsel %vm3440, %v3337, 0
    %v3484 = vsel %vm3440, %v3343, 0
    %v3487 = vsel %vm3440, %v3349, 0
    %v3490 = vsel %vm3440, %v3355, 0
    %v3493 = vsel %vm3440, %v3361, 0
    %v3496 = vsel %vm3440, %v3367, 0
    %v3499 = vsel %vm3440, %v3373, 0
    %v3502 = vsel %vm3440, %v3379, 0
    %v3505 = vsel %vm3440, %v3385, 0
    %v3508 = vsel %vm3440, %v3391, 0
    %v3511 = vsel %vm3440, %v3397, 0
    %v3514 = vsel %vm3440, %v3403, 0
    %v3517 = vsel %vm3440, %v3409, 0
    %v3520 = vsel %vm3440, %v3415, 0
    %v3523 = vsel %vm3440, %v3421, 0
    %v3526 = vsel %vm3440, %v3427, 0
    %v3529 = vsel %vm3440, %v3433, 0
    %3531 = vmatprep.subr.mxu0 0.0
    %v3532 = vand.u32 %v3438, 4294901760
    %3533 = vmatpush1.msra.mxu0 %v3532
    %3534 = vmatprep.subr.mxu0 0.0
    %v3535 = vand.u32 %v3439, 4294901760
    %3536 = vmatpush1.msra.mxu0 %v3535
    %3537 = vmatprep.subr.mxu0 0.0
    %3538 = vmatpush1.msra.mxu0 0.0
    %3539 = vmatprep.subr.mxu0 0.0
    %3540 = vmatpush1.msra.mxu0 0.0
    %3541 = vmatprep.subr.mxu0 0.0
    %3542 = vmatpush1.msra.mxu0 0.0
    %3543 = vmatprep.subr.mxu0 0.0
    %3544 = vmatpush1.msra.mxu0 0.0
    %3545 = vmatprep.subr.mxu0 0.0
    %3546 = vmatpush1.msra.mxu0 0.0
    %3547 = vmatprep.subr.mxu0 0.0
    %3548 = vmatpush1.msra.mxu0 0.0
    %3549 = vmatprep.subr.mxu0 0.0
    %3550 = vmatpush1.msra.mxu0 0.0
    %3551 = vmatprep.subr.mxu0 0.0
    %3552 = vmatpush1.msra.mxu0 0.0
    %3553 = vmatprep.subr.mxu0 0.0
    %3554 = vmatpush1.msra.mxu0 0.0
    %3555 = vmatprep.subr.mxu0 0.0
    %3556 = vmatpush1.msra.mxu0 0.0
    %3557 = vmatprep.subr.mxu0 0.0
    %3558 = vmatpush1.msra.mxu0 0.0
    %3559 = vmatprep.subr.mxu0 0.0
    %3560 = vmatpush1.msra.mxu0 0.0
    %3561 = vmatprep.subr.mxu0 0.0
    %3562 = vmatpush1.msra.mxu0 0.0
    %3563 = vmatprep.subr.mxu0 0.0
    %3564 = vmatpush1.msra.mxu0 0.0
    %3565 = vmatprep.subr.mxu0 0.0
    %3566 = vmatpush1.msra.mxu0 0.0
    %3567 = vmatprep.subr.mxu0 0.0
    %3568 = vmatpush1.msra.mxu0 0.0
    %3569 = vmatprep.subr.mxu0 0.0
    %3570 = vmatpush1.msra.mxu0 0.0
    %3571 = vmatprep.subr.mxu0 0.0
    %3572 = vmatpush1.msra.mxu0 0.0
    %3573 = vmatprep.subr.mxu0 0.0
    %3574 = vmatpush1.msra.mxu0 0.0
    %3575 = vmatprep.subr.mxu0 0.0
    %3576 = vmatpush1.msra.mxu0 0.0
    %3577 = vmatprep.subr.mxu0 0.0
    %3578 = vmatpush1.msra.mxu0 0.0
    %3579 = vmatprep.subr.mxu0 0.0
    %3580 = vmatpush1.msra.mxu0 0.0
    %3581 = vmatprep.subr.mxu0 0.0
    %3582 = vmatpush1.msra.mxu0 0.0
    %3583 = vmatprep.subr.mxu0 0.0
    %3584 = vmatpush1.msra.mxu0 0.0
    %3585 = vmatprep.subr.mxu0 0.0
    %3586 = vmatpush1.msra.mxu0 0.0
    %3587 = vmatprep.subr.mxu0 0.0
    %3588 = vmatpush1.msra.mxu0 0.0
    %3589 = vmatprep.subr.mxu0 0.0
    %3590 = vmatpush1.msra.mxu0 0.0
    %3591 = vmatprep.subr.mxu0 0.0
    %3592 = vmatpush1.msra.mxu0 0.0
    %3593 = vmatprep.subr.mxu0 0.0
    %3594 = vmatpush1.msra.mxu0 0.0
    %3595 = vmatprep.subr.mxu0 0.0
    %3596 = vmatpush1.msra.mxu0 0.0
    %3597 = vmatprep.mubr.f32.mxu0 0.0
    %v3598 = vand.u32 %v3442, 4294901760
    %v3599 = vsub.f32 %v3442, %v3598
    %v3600 = vand.u32 %v3599, 4294901760
    %v3601 = vsub.f32 %v3599, %v3600
    %v3602 = vand.u32 %v3601, 4294901760
    %3603 = vmatmul.mubr.f32.gmra.mrb[0].mxu0 %v3602
    %v3604 = vpop.f32.mrb[0].mxu0
    %v3605 = vadd.f32 0.0, %v3604
    %v3606 = vpop.f32.mrb[0].mxu0
    %3607 = vmatprep.mubr.f32.mxu0 0.0
    %v3608 = vand.u32 %v3445, 4294901760
    %v3609 = vsub.f32 %v3445, %v3608
    %v3610 = vand.u32 %v3609, 4294901760
    %v3611 = vsub.f32 %v3609, %v3610
    %v3612 = vand.u32 %v3611, 4294901760
    %3613 = vmatmul.mubr.f32.gmra.mrb[0].mxu0 %v3612
    %v3614 = vpop.f32.mrb[0].mxu0
    %v3615 = vadd.f32 0.0, %v3614
    %v3616 = vpop.f32.mrb[0].mxu0
    %3617 = vmatprep.mubr.f32.mxu0 0.0
    %v3618 = vand.u32 %v3448, 4294901760
    %v3619 = vsub.f32 %v3448, %v3618
    %v3620 = vand.u32 %v3619, 4294901760
    %v3621 = vsub.f32 %v3619, %v3620
    %v3622 = vand.u32 %v3621, 4294901760
    %3623 = vmatmul.mubr.f32.gmra.mrb[0].mxu0 %v3622
    %v3624 = vpop.f32.mrb[0].mxu0
    %v3625 = vadd.f32 0.0, %v3624
    %v3626 = vpop.f32.mrb[0].mxu0
    %3627 = vmatprep.mubr.f32.mxu0 0.0
    %v3628 = vand.u32 %v3451, 4294901760
    %v3629 = vsub.f32 %v3451, %v3628
    %v3630 = vand.u32 %v3629, 4294901760
    %v3631 = vsub.f32 %v3629, %v3630
    %v3632 = vand.u32 %v3631, 4294901760
    %3633 = vmatmul.mubr.f32.gmra.mrb[0].mxu0 %v3632
    %v3634 = vpop.f32.mrb[0].mxu0
    %v3635 = vadd.f32 0.0, %v3634
    %v3636 = vpop.f32.mrb[0].mxu0
    %3637 = vmatprep.mubr.f32.mxu0 0.0
    %v3638 = vand.u32 %v3454, 4294901760
    %v3639 = vsub.f32 %v3454, %v3638
    %v3640 = vand.u32 %v3639, 4294901760
    %v3641 = vsub.f32 %v3639, %v3640
    %v3642 = vand.u32 %v3641, 4294901760
    %3643 = vmatmul.mubr.f32.gmra.mrb[0].mxu0 %v3642
    %v3644 = vpop.f32.mrb[0].mxu0
    %v3645 = vadd.f32 0.0, %v3644
    %v3646 = vpop.f32.mrb[0].mxu0
    %3647 = vmatprep.mubr.f32.mxu0 0.0
    %v3648 = vand.u32 %v3457, 4294901760
    %v3649 = vsub.f32 %v3457, %v3648
    %v3650 = vand.u32 %v3649, 4294901760
    %v3651 = vsub.f32 %v3649, %v3650
    %v3652 = vand.u32 %v3651, 4294901760
    %3653 = vmatmul.mubr.f32.gmra.mrb[0].mxu0 %v3652
    %v3654 = vpop.f32.mrb[0].mxu0
    %v3655 = vadd.f32 0.0, %v3654
    %v3656 = vpop.f32.mrb[0].mxu0
    %3657 = vmatprep.mubr.f32.mxu0 0.0
    %v3658 = vand.u32 %v3460, 4294901760
    %v3659 = vsub.f32 %v3460, %v3658
    %v3660 = vand.u32 %v3659, 4294901760
    %v3661 = vsub.f32 %v3659, %v3660
    %v3662 = vand.u32 %v3661, 4294901760
    %3663 = vmatmul.mubr.f32.gmra.mrb[0].mxu0 %v3662
    %v3664 = vpop.f32.mrb[0].mxu0
    %v3665 = vadd.f32 0.0, %v3664
    %v3666 = vpop.f32.mrb[0].mxu0
    %3667 = vmatprep.mubr.f32.mxu0 0.0
    %v3668 = vand.u32 %v3463, 4294901760
    %v3669 = vsub.f32 %v3463, %v3668
    %v3670 = vand.u32 %v3669, 4294901760
    %v3671 = vsub.f32 %v3669, %v3670
    %v3672 = vand.u32 %v3671, 4294901760
    %3673 = vmatmul.mubr.f32.gmra.mrb[0].mxu0 %v3672
    %v3674 = vpop.f32.mrb[0].mxu0
    %v3675 = vadd.f32 0.0, %v3674
    %v3676 = vpop.f32.mrb[0].mxu0
    %3677 = vmatprep.mubr.f32.mxu0 0.0
    %v3678 = vand.u32 %v3466, 4294901760
    %v3679 = vsub.f32 %v3466, %v3678
    %v3680 = vand.u32 %v3679, 4294901760
    %v3681 = vsub.f32 %v3679, %v3680
    %v3682 = vand.u32 %v3681, 4294901760
    %3683 = vmatmul.mubr.f32.gmra.mrb[0].mxu0 %v3682
    %v3684 = vpop.f32.mrb[0].mxu0
    %v3685 = vadd.f32 0.0, %v3684
    %v3686 = vpop.f32.mrb[0].mxu0
    %3687 = vmatprep.mubr.f32.mxu0 0.0
    %v3688 = vand.u32 %v3469, 4294901760
    %v3689 = vsub.f32 %v3469, %v3688
    %v3690 = vand.u32 %v3689, 4294901760
    %v3691 = vsub.f32 %v3689, %v3690
    %v3692 = vand.u32 %v3691, 4294901760
    %3693 = vmatmul.mubr.f32.gmra.mrb[0].mxu0 %v3692
    %v3694 = vpop.f32.mrb[0].mxu0
    %v3695 = vadd.f32 0.0, %v3694
    %v3696 = vpop.f32.mrb[0].mxu0
    %3697 = vmatprep.mubr.f32.mxu0 0.0
    %v3698 = vand.u32 %v3472, 4294901760
    %v3699 = vsub.f32 %v3472, %v3698
    %v3700 = vand.u32 %v3699, 4294901760
    %v3701 = vsub.f32 %v3699, %v3700
    %v3702 = vand.u32 %v3701, 4294901760
    %3703 = vmatmul.mubr.f32.gmra.mrb[0].mxu0 %v3702
    %v3704 = vpop.f32.mrb[0].mxu0
    %v3705 = vadd.f32 0.0, %v3704
    %v3706 = vpop.f32.mrb[0].mxu0
    %3707 = vmatprep.mubr.f32.mxu0 0.0
    %v3708 = vand.u32 %v3475, 4294901760
    %v3709 = vsub.f32 %v3475, %v3708
    %v3710 = vand.u32 %v3709, 4294901760
    %v3711 = vsub.f32 %v3709, %v3710
    %v3712 = vand.u32 %v3711, 4294901760
    %3713 = vmatmul.mubr.f32.gmra.mrb[0].mxu0 %v3712
    %v3714 = vpop.f32.mrb[0].mxu0
    %v3715 = vadd.f32 0.0, %v3714
    %v3716 = vpop.f32.mrb[0].mxu0
    %3717 = vmatprep.mubr.f32.mxu0 0.0
    %v3718 = vand.u32 %v3478, 4294901760
    %v3719 = vsub.f32 %v3478, %v3718
    %v3720 = vand.u32 %v3719, 4294901760
    %v3721 = vsub.f32 %v3719, %v3720
    %v3722 = vand.u32 %v3721, 4294901760
    %3723 = vmatmul.mubr.f32.gmra.mrb[0].mxu0 %v3722
    %v3724 = vpop.f32.mrb[0].mxu0
    %v3725 = vadd.f32 0.0, %v3724
    %v3726 = vpop.f32.mrb[0].mxu0
    %3727 = vmatprep.mubr.f32.mxu0 0.0
    %v3728 = vand.u32 %v3481, 4294901760
    %v3729 = vsub.f32 %v3481, %v3728
    %v3730 = vand.u32 %v3729, 4294901760
    %v3731 = vsub.f32 %v3729, %v3730
    %v3732 = vand.u32 %v3731, 4294901760
    %3733 = vmatmul.mubr.f32.gmra.mrb[0].mxu0 %v3732
    %v3734 = vpop.f32.mrb[0].mxu0
    %v3735 = vadd.f32 0.0, %v3734
    %v3736 = vpop.f32.mrb[0].mxu0
    %3737 = vmatprep.mubr.f32.mxu0 0.0
    %v3738 = vand.u32 %v3484, 4294901760
    %v3739 = vsub.f32 %v3484, %v3738
    %v3740 = vand.u32 %v3739, 4294901760
    %v3741 = vsub.f32 %v3739, %v3740
    %v3742 = vand.u32 %v3741, 4294901760
    %3743 = vmatmul.mubr.f32.gmra.mrb[0].mxu0 %v3742
    %v3744 = vpop.f32.mrb[0].mxu0
    %v3745 = vadd.f32 0.0, %v3744
    %v3746 = vpop.f32.mrb[0].mxu0
    %3747 = vmatprep.mubr.f32.mxu0 0.0
    %v3748 = vand.u32 %v3487, 4294901760
    %v3749 = vsub.f32 %v3487, %v3748
    %v3750 = vand.u32 %v3749, 4294901760
    %v3751 = vsub.f32 %v3749, %v3750
    %v3752 = vand.u32 %v3751, 4294901760
    %3753 = vmatmul.mubr.f32.gmra.mrb[0].mxu0 %v3752
    %v3754 = vpop.f32.mrb[0].mxu0
    %v3755 = vadd.f32 0.0, %v3754
    %v3756 = vpop.f32.mrb[0].mxu0
    %3757 = vmatprep.mubr.f32.mxu0 0.0
    %v3758 = vand.u32 %v3490, 4294901760
    %v3759 = vsub.f32 %v3490, %v3758
    %v3760 = vand.u32 %v3759, 4294901760
    %v3761 = vsub.f32 %v3759, %v3760
    %v3762 = vand.u32 %v3761, 4294901760
    %3763 = vmatmul.mubr.f32.gmra.mrb[0].mxu0 %v3762
    %v3764 = vpop.f32.mrb[0].mxu0
    %v3765 = vadd.f32 0.0, %v3764
    %v3766 = vpop.f32.mrb[0].mxu0
    %3767 = vmatprep.mubr.f32.mxu0 0.0
    %v3768 = vand.u32 %v3493, 4294901760
    %v3769 = vsub.f32 %v3493, %v3768
    %v3770 = vand.u32 %v3769, 4294901760
    %v3771 = vsub.f32 %v3769, %v3770
    %v3772 = vand.u32 %v3771, 4294901760
    %3773 = vmatmul.mubr.f32.gmra.mrb[0].mxu0 %v3772
    %v3774 = vpop.f32.mrb[0].mxu0
    %v3775 = vadd.f32 0.0, %v3774
    %v3776 = vpop.f32.mrb[0].mxu0
    %3777 = vmatprep.mubr.f32.mxu0 0.0
    %v3778 = vand.u32 %v3496, 4294901760
    %v3779 = vsub.f32 %v3496, %v3778
    %v3780 = vand.u32 %v3779, 4294901760
    %v3781 = vsub.f32 %v3779, %v3780
    %v3782 = vand.u32 %v3781, 4294901760
    %3783 = vmatmul.mubr.f32.gmra.mrb[0].mxu0 %v3782
    %v3784 = vpop.f32.mrb[0].mxu0
    %v3785 = vadd.f32 0.0, %v3784
    %v3786 = vpop.f32.mrb[0].mxu0
    %3787 = vmatprep.mubr.f32.mxu0 0.0
    %v3788 = vand.u32 %v3499, 4294901760
    %v3789 = vsub.f32 %v3499, %v3788
    %v3790 = vand.u32 %v3789, 4294901760
    %v3791 = vsub.f32 %v3789, %v3790
    %v3792 = vand.u32 %v3791, 4294901760
    %3793 = vmatmul.mubr.f32.gmra.mrb[0].mxu0 %v3792
    %v3794 = vpop.f32.mrb[0].mxu0
    %v3795 = vadd.f32 0.0, %v3794
    %v3796 = vpop.f32.mrb[0].mxu0
    %3797 = vmatprep.mubr.f32.mxu0 0.0
    %v3798 = vand.u32 %v3502, 4294901760
    %v3799 = vsub.f32 %v3502, %v3798
    %v3800 = vand.u32 %v3799, 4294901760
    %v3801 = vsub.f32 %v3799, %v3800
    %v3802 = vand.u32 %v3801, 4294901760
    %3803 = vmatmul.mubr.f32.gmra.mrb[0].mxu0 %v3802
    %v3804 = vpop.f32.mrb[0].mxu0
    %v3805 = vadd.f32 0.0, %v3804
    %v3806 = vpop.f32.mrb[0].mxu0
    %3807 = vmatprep.mubr.f32.mxu0 0.0
    %v3808 = vand.u32 %v3505, 4294901760
    %v3809 = vsub.f32 %v3505, %v3808
    %v3810 = vand.u32 %v3809, 4294901760
    %v3811 = vsub.f32 %v3809, %v3810
    %v3812 = vand.u32 %v3811, 4294901760
    %3813 = vmatmul.mubr.f32.gmra.mrb[0].mxu0 %v3812
    %v3814 = vpop.f32.mrb[0].mxu0
    %v3815 = vadd.f32 0.0, %v3814
    %v3816 = vpop.f32.mrb[0].mxu0
    %3817 = vmatprep.mubr.f32.mxu0 0.0
    %v3818 = vand.u32 %v3508, 4294901760
    %v3819 = vsub.f32 %v3508, %v3818
    %v3820 = vand.u32 %v3819, 4294901760
    %v3821 = vsub.f32 %v3819, %v3820
    %v3822 = vand.u32 %v3821, 4294901760
    %3823 = vmatmul.mubr.f32.gmra.mrb[0].mxu0 %v3822
    %v3824 = vpop.f32.mrb[0].mxu0
    %v3825 = vadd.f32 0.0, %v3824
    %v3826 = vpop.f32.mrb[0].mxu0
    %3827 = vmatprep.mubr.f32.mxu0 0.0
    %v3828 = vand.u32 %v3511, 4294901760
    %v3829 = vsub.f32 %v3511, %v3828
    %v3830 = vand.u32 %v3829, 4294901760
    %v3831 = vsub.f32 %v3829, %v3830
    %v3832 = vand.u32 %v3831, 4294901760
    %3833 = vmatmul.mubr.f32.gmra.mrb[0].mxu0 %v3832
    %v3834 = vpop.f32.mrb[0].mxu0
    %v3835 = vadd.f32 0.0, %v3834
    %v3836 = vpop.f32.mrb[0].mxu0
    %3837 = vmatprep.mubr.f32.mxu0 0.0
    %v3838 = vand.u32 %v3514, 4294901760
    %v3839 = vsub.f32 %v3514, %v3838
    %v3840 = vand.u32 %v3839, 4294901760
    %v3841 = vsub.f32 %v3839, %v3840
    %v3842 = vand.u32 %v3841, 4294901760
    %3843 = vmatmul.mubr.f32.gmra.mrb[0].mxu0 %v3842
    %v3844 = vpop.f32.mrb[0].mxu0
    %v3845 = vadd.f32 0.0, %v3844
    %v3846 = vpop.f32.mrb[0].mxu0
    %3847 = vmatprep.mubr.f32.mxu0 0.0
    %v3848 = vand.u32 %v3517, 4294901760
    %v3849 = vsub.f32 %v3517, %v3848
    %v3850 = vand.u32 %v3849, 4294901760
    %v3851 = vsub.f32 %v3849, %v3850
    %v3852 = vand.u32 %v3851, 4294901760
    %3853 = vmatmul.mubr.f32.gmra.mrb[0].mxu0 %v3852
    %v3854 = vpop.f32.mrb[0].mxu0
    %v3855 = vadd.f32 0.0, %v3854
    %v3856 = vpop.f32.mrb[0].mxu0
    %3857 = vmatprep.mubr.f32.mxu0 0.0
    %v3858 = vand.u32 %v3520, 4294901760
    %v3859 = vsub.f32 %v3520, %v3858
    %v3860 = vand.u32 %v3859, 4294901760
    %v3861 = vsub.f32 %v3859, %v3860
    %v3862 = vand.u32 %v3861, 4294901760
    %3863 = vmatmul.mubr.f32.gmra.mrb[0].mxu0 %v3862
    %v3864 = vpop.f32.mrb[0].mxu0
    %v3865 = vadd.f32 0.0, %v3864
    %v3866 = vpop.f32.mrb[0].mxu0
    %3867 = vmatprep.mubr.f32.mxu0 0.0
    %v3868 = vand.u32 %v3523, 4294901760
    %v3869 = vsub.f32 %v3523, %v3868
    %v3870 = vand.u32 %v3869, 4294901760
    %v3871 = vsub.f32 %v3869, %v3870
    %v3872 = vand.u32 %v3871, 4294901760
    %3873 = vmatmul.mubr.f32.gmra.mrb[0].mxu0 %v3872
    %v3874 = vpop.f32.mrb[0].mxu0
    %v3875 = vadd.f32 0.0, %v3874
    %v3876 = vpop.f32.mrb[0].mxu0
    %3877 = vmatprep.mubr.f32.mxu0 0.0
    %v3878 = vand.u32 %v3526, 4294901760
    %v3879 = vsub.f32 %v3526, %v3878
    %v3880 = vand.u32 %v3879, 4294901760
    %v3881 = vsub.f32 %v3879, %v3880
    %v3882 = vand.u32 %v3881, 4294901760
    %3883 = vmatmul.mubr.f32.gmra.mrb[0].mxu0 %v3882
    %v3884 = vpop.f32.mrb[0].mxu0
    %v3885 = vadd.f32 0.0, %v3884
    %v3886 = vpop.f32.mrb[0].mxu0
    %3887 = vmatprep.mubr.f32.mxu0 0.0
    %v3888 = vand.u32 %v3529, 4294901760
    %v3889 = vsub.f32 %v3529, %v3888
    %v3890 = vand.u32 %v3889, 4294901760
    %v3891 = vsub.f32 %v3889, %v3890
    %v3892 = vand.u32 %v3891, 4294901760
    %3893 = vmatmul.mubr.f32.gmra.mrb[0].mxu0 %v3892
    %v3894 = vpop.f32.mrb[0].mxu0
    %v3895 = vadd.f32 0.0, %v3894
    %v3896 = vpop.f32.mrb[0].mxu0
    %3897 = vdwg.mxu0
    %3898 = vmatprep.subr.mxu0 0.0
    %v3899 = vand.u32 %v3438, 4294901760
    %v3900 = vsub.f32 %v3438, %v3899
    %v3901 = vand.u32 %v3900, 4294901760
    %v3902 = vsub.f32 %v3900, %v3901
    %v3903 = vand.u32 %v3902, 4294901760
    %3904 = vmatpush1.msra.mxu0 %v3903
    %3905 = vmatprep.subr.mxu0 0.0
    %v3906 = vand.u32 %v3439, 4294901760
    %v3907 = vsub.f32 %v3439, %v3906
    %v3908 = vand.u32 %v3907, 4294901760
    %v3909 = vsub.f32 %v3907, %v3908
    %v3910 = vand.u32 %v3909, 4294901760
    %3911 = vmatpush1.msra.mxu0 %v3910
    %3912 = vmatprep.subr.mxu0 0.0
    %3913 = vmatpush1.msra.mxu0 0.0
    %3914 = vmatprep.subr.mxu0 0.0
    %3915 = vmatpush1.msra.mxu0 0.0
    %3916 = vmatprep.subr.mxu0 0.0
    %3917 = vmatpush1.msra.mxu0 0.0
    %3918 = vmatprep.subr.mxu0 0.0
    %3919 = vmatpush1.msra.mxu0 0.0
    %3920 = vmatprep.subr.mxu0 0.0
    %3921 = vmatpush1.msra.mxu0 0.0
    %3922 = vmatprep.subr.mxu0 0.0
    %3923 = vmatpush1.msra.mxu0 0.0
    %3924 = vmatprep.subr.mxu0 0.0
    %3925 = vmatpush1.msra.mxu0 0.0
    %3926 = vmatprep.subr.mxu0 0.0
    %3927 = vmatpush1.msra.mxu0 0.0
    %3928 = vmatprep.subr.mxu0 0.0
    %3929 = vmatpush1.msra.mxu0 0.0
    %3930 = vmatprep.subr.mxu0 0.0
    %3931 = vmatpush1.msra.mxu0 0.0
    %3932 = vmatprep.subr.mxu0 0.0
    %3933 = vmatpush1.msra.mxu0 0.0
    %3934 = vmatprep.subr.mxu0 0.0
    %3935 = vmatpush1.msra.mxu0 0.0
    %3936 = vmatprep.subr.mxu0 0.0
    %3937 = vmatpush1.msra.mxu0 0.0
    %3938 = vmatprep.subr.mxu0 0.0
    %3939 = vmatpush1.msra.mxu0 0.0
    %3940 = vmatprep.subr.mxu0 0.0
    %3941 = vmatpush1.msra.mxu0 0.0
    %3942 = vmatprep.subr.mxu0 0.0
    %3943 = vmatpush1.msra.mxu0 0.0
    %3944 = vmatprep.subr.mxu0 0.0
    %3945 = vmatpush1.msra.mxu0 0.0
    %3946 = vmatprep.subr.mxu0 0.0
    %3947 = vmatpush1.msra.mxu0 0.0
    %3948 = vmatprep.subr.mxu0 0.0
    %3949 = vmatpush1.msra.mxu0 0.0
    %3950 = vmatprep.subr.mxu0 0.0
    %3951 = vmatpush1.msra.mxu0 0.0
    %3952 = vmatprep.subr.mxu0 0.0
    %3953 = vmatpush1.msra.mxu0 0.0
    %3954 = vmatprep.subr.mxu0 0.0
    %3955 = vmatpush1.msra.mxu0 0.0
    %3956 = vmatprep.subr.mxu0 0.0
    %3957 = vmatpush1.msra.mxu0 0.0
    %3958 = vmatprep.subr.mxu0 0.0
    %3959 = vmatpush1.msra.mxu0 0.0
    %3960 = vmatprep.subr.mxu0 0.0
    %3961 = vmatpush1.msra.mxu0 0.0
    %3962 = vmatprep.subr.mxu0 0.0
    %3963 = vmatpush1.msra.mxu0 0.0
    %3964 = vmatprep.subr.mxu0 0.0
    %3965 = vmatpush1.msra.mxu0 0.0
    %3966 = vmatprep.subr.mxu0 0.0
    %3967 = vmatpush1.msra.mxu0 0.0
    %3968 = vmatprep.subr.mxu0 0.0
    %3969 = vmatpush1.msra.mxu0 0.0
    %3970 = vmatprep.subr.mxu0 0.0
    %3971 = vmatpush1.msra.mxu0 0.0
    %3972 = vmatprep.mubr.f32.mxu0 0.0
    %v3973 = vand.u32 %v3442, 4294901760
    %3974 = vmatmul.mubr.f32.gmra.mrb[0].mxu0 %v3973
    %v3975 = vpop.f32.mrb[0].mxu0
    %v3976 = vadd.f32 %v3605, %v3975
    %v3977 = vpop.f32.mrb[0].mxu0
    %3978 = vmatprep.mubr.f32.mxu0 0.0
    %v3979 = vand.u32 %v3445, 4294901760
    %3980 = vmatmul.mubr.f32.gmra.mrb[0].mxu0 %v3979
    %v3981 = vpop.f32.mrb[0].mxu0
    %v3982 = vadd.f32 %v3615, %v3981
    %v3983 = vpop.f32.mrb[0].mxu0
    %3984 = vmatprep.mubr.f32.mxu0 0.0
    %v3985 = vand.u32 %v3448, 4294901760
    %3986 = vmatmul.mubr.f32.gmra.mrb[0].mxu0 %v3985
    %v3987 = vpop.f32.mrb[0].mxu0
    %v3988 = vadd.f32 %v3625, %v3987
    %v3989 = vpop.f32.mrb[0].mxu0
    %3990 = vmatprep.mubr.f32.mxu0 0.0
    %v3991 = vand.u32 %v3451, 4294901760
    %3992 = vmatmul.mubr.f32.gmra.mrb[0].mxu0 %v3991
    %v3993 = vpop.f32.mrb[0].mxu0
    %v3994 = vadd.f32 %v3635, %v3993
    %v3995 = vpop.f32.mrb[0].mxu0
    %3996 = vmatprep.mubr.f32.mxu0 0.0
    %v3997 = vand.u32 %v3454, 4294901760
    %3998 = vmatmul.mubr.f32.gmra.mrb[0].mxu0 %v3997
    %v3999 = vpop.f32.mrb[0].mxu0
    %v4000 = vadd.f32 %v3645, %v3999
    %v4001 = vpop.f32.mrb[0].mxu0
    %4002 = vmatprep.mubr.f32.mxu0 0.0
    %v4003 = vand.u32 %v3457, 4294901760
    %4004 = vmatmul.mubr.f32.gmra.mrb[0].mxu0 %v4003
    %v4005 = vpop.f32.mrb[0].mxu0
    %v4006 = vadd.f32 %v3655, %v4005
    %v4007 = vpop.f32.mrb[0].mxu0
    %4008 = vmatprep.mubr.f32.mxu0 0.0
    %v4009 = vand.u32 %v3460, 4294901760
    %4010 = vmatmul.mubr.f32.gmra.mrb[0].mxu0 %v4009
    %v4011 = vpop.f32.mrb[0].mxu0
    %v4012 = vadd.f32 %v3665, %v4011
    %v4013 = vpop.f32.mrb[0].mxu0
    %4014 = vmatprep.mubr.f32.mxu0 0.0
    %v4015 = vand.u32 %v3463, 4294901760
    %4016 = vmatmul.mubr.f32.gmra.mrb[0].mxu0 %v4015
    %v4017 = vpop.f32.mrb[0].mxu0
    %v4018 = vadd.f32 %v3675, %v4017
    %v4019 = vpop.f32.mrb[0].mxu0
    %4020 = vmatprep.mubr.f32.mxu0 0.0
    %v4021 = vand.u32 %v3466, 4294901760
    %4022 = vmatmul.mubr.f32.gmra.mrb[0].mxu0 %v4021
    %v4023 = vpop.f32.mrb[0].mxu0
    %v4024 = vadd.f32 %v3685, %v4023
    %v4025 = vpop.f32.mrb[0].mxu0
    %4026 = vmatprep.mubr.f32.mxu0 0.0
    %v4027 = vand.u32 %v3469, 4294901760
    %4028 = vmatmul.mubr.f32.gmra.mrb[0].mxu0 %v4027
    %v4029 = vpop.f32.mrb[0].mxu0
    %v4030 = vadd.f32 %v3695, %v4029
    %v4031 = vpop.f32.mrb[0].mxu0
    %4032 = vmatprep.mubr.f32.mxu0 0.0
    %v4033 = vand.u32 %v3472, 4294901760
    %4034 = vmatmul.mubr.f32.gmra.mrb[0].mxu0 %v4033
    %v4035 = vpop.f32.mrb[0].mxu0
    %v4036 = vadd.f32 %v3705, %v4035
    %v4037 = vpop.f32.mrb[0].mxu0
    %4038 = vmatprep.mubr.f32.mxu0 0.0
    %v4039 = vand.u32 %v3475, 4294901760
    %4040 = vmatmul.mubr.f32.gmra.mrb[0].mxu0 %v4039
    %v4041 = vpop.f32.mrb[0].mxu0
    %v4042 = vadd.f32 %v3715, %v4041
    %v4043 = vpop.f32.mrb[0].mxu0
    %4044 = vmatprep.mubr.f32.mxu0 0.0
    %v4045 = vand.u32 %v3478, 4294901760
    %4046 = vmatmul.mubr.f32.gmra.mrb[0].mxu0 %v4045
    %v4047 = vpop.f32.mrb[0].mxu0
    %v4048 = vadd.f32 %v3725, %v4047
    %v4049 = vpop.f32.mrb[0].mxu0
    %4050 = vmatprep.mubr.f32.mxu0 0.0
    %v4051 = vand.u32 %v3481, 4294901760
    %4052 = vmatmul.mubr.f32.gmra.mrb[0].mxu0 %v4051
    %v4053 = vpop.f32.mrb[0].mxu0
    %v4054 = vadd.f32 %v3735, %v4053
    %v4055 = vpop.f32.mrb[0].mxu0
    %4056 = vmatprep.mubr.f32.mxu0 0.0
    %v4057 = vand.u32 %v3484, 4294901760
    %4058 = vmatmul.mubr.f32.gmra.mrb[0].mxu0 %v4057
    %v4059 = vpop.f32.mrb[0].mxu0
    %v4060 = vadd.f32 %v3745, %v4059
    %v4061 = vpop.f32.mrb[0].mxu0
    %4062 = vmatprep.mubr.f32.mxu0 0.0
    %v4063 = vand.u32 %v3487, 4294901760
    %4064 = vmatmul.mubr.f32.gmra.mrb[0].mxu0 %v4063
    %v4065 = vpop.f32.mrb[0].mxu0
    %v4066 = vadd.f32 %v3755, %v4065
    %v4067 = vpop.f32.mrb[0].mxu0
    %4068 = vmatprep.mubr.f32.mxu0 0.0
    %v4069 = vand.u32 %v3490, 4294901760
    %4070 = vmatmul.mubr.f32.gmra.mrb[0].mxu0 %v4069
    %v4071 = vpop.f32.mrb[0].mxu0
    %v4072 = vadd.f32 %v3765, %v4071
    %v4073 = vpop.f32.mrb[0].mxu0
    %4074 = vmatprep.mubr.f32.mxu0 0.0
    %v4075 = vand.u32 %v3493, 4294901760
    %4076 = vmatmul.mubr.f32.gmra.mrb[0].mxu0 %v4075
    %v4077 = vpop.f32.mrb[0].mxu0
    %v4078 = vadd.f32 %v3775, %v4077
    %v4079 = vpop.f32.mrb[0].mxu0
    %4080 = vmatprep.mubr.f32.mxu0 0.0
    %v4081 = vand.u32 %v3496, 4294901760
    %4082 = vmatmul.mubr.f32.gmra.mrb[0].mxu0 %v4081
    %v4083 = vpop.f32.mrb[0].mxu0
    %v4084 = vadd.f32 %v3785, %v4083
    %v4085 = vpop.f32.mrb[0].mxu0
    %4086 = vmatprep.mubr.f32.mxu0 0.0
    %v4087 = vand.u32 %v3499, 4294901760
    %4088 = vmatmul.mubr.f32.gmra.mrb[0].mxu0 %v4087
    %v4089 = vpop.f32.mrb[0].mxu0
    %v4090 = vadd.f32 %v3795, %v4089
    %v4091 = vpop.f32.mrb[0].mxu0
    %4092 = vmatprep.mubr.f32.mxu0 0.0
    %v4093 = vand.u32 %v3502, 4294901760
    %4094 = vmatmul.mubr.f32.gmra.mrb[0].mxu0 %v4093
    %v4095 = vpop.f32.mrb[0].mxu0
    %v4096 = vadd.f32 %v3805, %v4095
    %v4097 = vpop.f32.mrb[0].mxu0
    %4098 = vmatprep.mubr.f32.mxu0 0.0
    %v4099 = vand.u32 %v3505, 4294901760
    %4100 = vmatmul.mubr.f32.gmra.mrb[0].mxu0 %v4099
    %v4101 = vpop.f32.mrb[0].mxu0
    %v4102 = vadd.f32 %v3815, %v4101
    %v4103 = vpop.f32.mrb[0].mxu0
    %4104 = vmatprep.mubr.f32.mxu0 0.0
    %v4105 = vand.u32 %v3508, 4294901760
    %4106 = vmatmul.mubr.f32.gmra.mrb[0].mxu0 %v4105
    %v4107 = vpop.f32.mrb[0].mxu0
    %v4108 = vadd.f32 %v3825, %v4107
    %v4109 = vpop.f32.mrb[0].mxu0
    %4110 = vmatprep.mubr.f32.mxu0 0.0
    %v4111 = vand.u32 %v3511, 4294901760
    %4112 = vmatmul.mubr.f32.gmra.mrb[0].mxu0 %v4111
    %v4113 = vpop.f32.mrb[0].mxu0
    %v4114 = vadd.f32 %v3835, %v4113
    %v4115 = vpop.f32.mrb[0].mxu0
    %4116 = vmatprep.mubr.f32.mxu0 0.0
    %v4117 = vand.u32 %v3514, 4294901760
    %4118 = vmatmul.mubr.f32.gmra.mrb[0].mxu0 %v4117
    %v4119 = vpop.f32.mrb[0].mxu0
    %v4120 = vadd.f32 %v3845, %v4119
    %v4121 = vpop.f32.mrb[0].mxu0
    %4122 = vmatprep.mubr.f32.mxu0 0.0
    %v4123 = vand.u32 %v3517, 4294901760
    %4124 = vmatmul.mubr.f32.gmra.mrb[0].mxu0 %v4123
    %v4125 = vpop.f32.mrb[0].mxu0
    %v4126 = vadd.f32 %v3855, %v4125
    %v4127 = vpop.f32.mrb[0].mxu0
    %4128 = vmatprep.mubr.f32.mxu0 0.0
    %v4129 = vand.u32 %v3520, 4294901760
    %4130 = vmatmul.mubr.f32.gmra.mrb[0].mxu0 %v4129
    %v4131 = vpop.f32.mrb[0].mxu0
    %v4132 = vadd.f32 %v3865, %v4131
    %v4133 = vpop.f32.mrb[0].mxu0
    %4134 = vmatprep.mubr.f32.mxu0 0.0
    %v4135 = vand.u32 %v3523, 4294901760
    %4136 = vmatmul.mubr.f32.gmra.mrb[0].mxu0 %v4135
    %v4137 = vpop.f32.mrb[0].mxu0
    %v4138 = vadd.f32 %v3875, %v4137
    %v4139 = vpop.f32.mrb[0].mxu0
    %4140 = vmatprep.mubr.f32.mxu0 0.0
    %v4141 = vand.u32 %v3526, 4294901760
    %4142 = vmatmul.mubr.f32.gmra.mrb[0].mxu0 %v4141
    %v4143 = vpop.f32.mrb[0].mxu0
    %v4144 = vadd.f32 %v3885, %v4143
    %v4145 = vpop.f32.mrb[0].mxu0
    %4146 = vmatprep.mubr.f32.mxu0 0.0
    %v4147 = vand.u32 %v3529, 4294901760
    %4148 = vmatmul.mubr.f32.gmra.mrb[0].mxu0 %v4147
    %v4149 = vpop.f32.mrb[0].mxu0
    %v4150 = vadd.f32 %v3895, %v4149
    %v4151 = vpop.f32.mrb[0].mxu0
    %4152 = vdwg.mxu0
    %4153 = vmatprep.subr.mxu0 0.0
    %v4154 = vand.u32 %v3438, 4294901760
    %v4155 = vsub.f32 %v3438, %v4154
    %4156 = vmatpush1.msra.mxu0 %v4155
    %4157 = vmatprep.subr.mxu0 0.0
    %v4158 = vand.u32 %v3439, 4294901760
    %v4159 = vsub.f32 %v3439, %v4158
    %4160 = vmatpush1.msra.mxu0 %v4159
    %4161 = vmatprep.subr.mxu0 0.0
    %4162 = vmatpush1.msra.mxu0 0.0
    %4163 = vmatprep.subr.mxu0 0.0
    %4164 = vmatpush1.msra.mxu0 0.0
    %4165 = vmatprep.subr.mxu0 0.0
    %4166 = vmatpush1.msra.mxu0 0.0
    %4167 = vmatprep.subr.mxu0 0.0
    %4168 = vmatpush1.msra.mxu0 0.0
    %4169 = vmatprep.subr.mxu0 0.0
    %4170 = vmatpush1.msra.mxu0 0.0
    %4171 = vmatprep.subr.mxu0 0.0
    %4172 = vmatpush1.msra.mxu0 0.0
    %4173 = vmatprep.subr.mxu0 0.0
    %4174 = vmatpush1.msra.mxu0 0.0
    %4175 = vmatprep.subr.mxu0 0.0
    %4176 = vmatpush1.msra.mxu0 0.0
    %4177 = vmatprep.subr.mxu0 0.0
    %4178 = vmatpush1.msra.mxu0 0.0
    %4179 = vmatprep.subr.mxu0 0.0
    %4180 = vmatpush1.msra.mxu0 0.0
    %4181 = vmatprep.subr.mxu0 0.0
    %4182 = vmatpush1.msra.mxu0 0.0
    %4183 = vmatprep.subr.mxu0 0.0
    %4184 = vmatpush1.msra.mxu0 0.0
    %4185 = vmatprep.subr.mxu0 0.0
    %4186 = vmatpush1.msra.mxu0 0.0
    %4187 = vmatprep.subr.mxu0 0.0
    %4188 = vmatpush1.msra.mxu0 0.0
    %4189 = vmatprep.subr.mxu0 0.0
    %4190 = vmatpush1.msra.mxu0 0.0
    %4191 = vmatprep.subr.mxu0 0.0
    %4192 = vmatpush1.msra.mxu0 0.0
    %4193 = vmatprep.subr.mxu0 0.0
    %4194 = vmatpush1.msra.mxu0 0.0
    %4195 = vmatprep.subr.mxu0 0.0
    %4196 = vmatpush1.msra.mxu0 0.0
    %4197 = vmatprep.subr.mxu0 0.0
    %4198 = vmatpush1.msra.mxu0 0.0
    %4199 = vmatprep.subr.mxu0 0.0
    %4200 = vmatpush1.msra.mxu0 0.0
    %4201 = vmatprep.subr.mxu0 0.0
    %4202 = vmatpush1.msra.mxu0 0.0
    %4203 = vmatprep.subr.mxu0 0.0
    %4204 = vmatpush1.msra.mxu0 0.0
    %4205 = vmatprep.subr.mxu0 0.0
    %4206 = vmatpush1.msra.mxu0 0.0
    %4207 = vmatprep.subr.mxu0 0.0
    %4208 = vmatpush1.msra.mxu0 0.0
    %4209 = vmatprep.subr.mxu0 0.0
    %4210 = vmatpush1.msra.mxu0 0.0
    %4211 = vmatprep.subr.mxu0 0.0
    %4212 = vmatpush1.msra.mxu0 0.0
    %4213 = vmatprep.subr.mxu0 0.0
    %4214 = vmatpush1.msra.mxu0 0.0
    %4215 = vmatprep.subr.mxu0 0.0
    %4216 = vmatpush1.msra.mxu0 0.0
    %4217 = vmatprep.subr.mxu0 0.0
    %4218 = vmatpush1.msra.mxu0 0.0
    %4219 = vmatprep.subr.mxu0 0.0
    %4220 = vmatpush1.msra.mxu0 0.0
    %4221 = vmatprep.mubr.f32.mxu0 0.0
    %v4222 = vand.u32 %v3442, 4294901760
    %v4223 = vsub.f32 %v3442, %v4222
    %4224 = vmatmul.mubr.f32.gmra.mrb[0].mxu0 %v4223
    %v4225 = vpop.f32.mrb[0].mxu0
    %v4226 = vadd.f32 %v3976, %v4225
    %v4227 = vpop.f32.mrb[0].mxu0
    %4228 = vmatprep.mubr.f32.mxu0 0.0
    %v4229 = vand.u32 %v3445, 4294901760
    %v4230 = vsub.f32 %v3445, %v4229
    %4231 = vmatmul.mubr.f32.gmra.mrb[0].mxu0 %v4230
    %v4232 = vpop.f32.mrb[0].mxu0
    %v4233 = vadd.f32 %v3982, %v4232
    %v4234 = vpop.f32.mrb[0].mxu0
    %4235 = vmatprep.mubr.f32.mxu0 0.0
    %v4236 = vand.u32 %v3448, 4294901760
    %v4237 = vsub.f32 %v3448, %v4236
    %4238 = vmatmul.mubr.f32.gmra.mrb[0].mxu0 %v4237
    %v4239 = vpop.f32.mrb[0].mxu0
    %v4240 = vadd.f32 %v3988, %v4239
    %v4241 = vpop.f32.mrb[0].mxu0
    %4242 = vmatprep.mubr.f32.mxu0 0.0
    %v4243 = vand.u32 %v3451, 4294901760
    %v4244 = vsub.f32 %v3451, %v4243
    %4245 = vmatmul.mubr.f32.gmra.mrb[0].mxu0 %v4244
    %v4246 = vpop.f32.mrb[0].mxu0
    %v4247 = vadd.f32 %v3994, %v4246
    %v4248 = vpop.f32.mrb[0].mxu0
    %4249 = vmatprep.mubr.f32.mxu0 0.0
    %v4250 = vand.u32 %v3454, 4294901760
    %v4251 = vsub.f32 %v3454, %v4250
    %4252 = vmatmul.mubr.f32.gmra.mrb[0].mxu0 %v4251
    %v4253 = vpop.f32.mrb[0].mxu0
    %v4254 = vadd.f32 %v4000, %v4253
    %v4255 = vpop.f32.mrb[0].mxu0
    %4256 = vmatprep.mubr.f32.mxu0 0.0
    %v4257 = vand.u32 %v3457, 4294901760
    %v4258 = vsub.f32 %v3457, %v4257
    %4259 = vmatmul.mubr.f32.gmra.mrb[0].mxu0 %v4258
    %v4260 = vpop.f32.mrb[0].mxu0
    %v4261 = vadd.f32 %v4006, %v4260
    %v4262 = vpop.f32.mrb[0].mxu0
    %4263 = vmatprep.mubr.f32.mxu0 0.0
    %v4264 = vand.u32 %v3460, 4294901760
    %v4265 = vsub.f32 %v3460, %v4264
    %4266 = vmatmul.mubr.f32.gmra.mrb[0].mxu0 %v4265
    %v4267 = vpop.f32.mrb[0].mxu0
    %v4268 = vadd.f32 %v4012, %v4267
    %v4269 = vpop.f32.mrb[0].mxu0
    %4270 = vmatprep.mubr.f32.mxu0 0.0
    %v4271 = vand.u32 %v3463, 4294901760
    %v4272 = vsub.f32 %v3463, %v4271
    %4273 = vmatmul.mubr.f32.gmra.mrb[0].mxu0 %v4272
    %v4274 = vpop.f32.mrb[0].mxu0
    %v4275 = vadd.f32 %v4018, %v4274
    %v4276 = vpop.f32.mrb[0].mxu0
    %4277 = vmatprep.mubr.f32.mxu0 0.0
    %v4278 = vand.u32 %v3466, 4294901760
    %v4279 = vsub.f32 %v3466, %v4278
    %4280 = vmatmul.mubr.f32.gmra.mrb[0].mxu0 %v4279
    %v4281 = vpop.f32.mrb[0].mxu0
    %v4282 = vadd.f32 %v4024, %v4281
    %v4283 = vpop.f32.mrb[0].mxu0
    %4284 = vmatprep.mubr.f32.mxu0 0.0
    %v4285 = vand.u32 %v3469, 4294901760
    %v4286 = vsub.f32 %v3469, %v4285
    %4287 = vmatmul.mubr.f32.gmra.mrb[0].mxu0 %v4286
    %v4288 = vpop.f32.mrb[0].mxu0
    %v4289 = vadd.f32 %v4030, %v4288
    %v4290 = vpop.f32.mrb[0].mxu0
    %4291 = vmatprep.mubr.f32.mxu0 0.0
    %v4292 = vand.u32 %v3472, 4294901760
    %v4293 = vsub.f32 %v3472, %v4292
    %4294 = vmatmul.mubr.f32.gmra.mrb[0].mxu0 %v4293
    %v4295 = vpop.f32.mrb[0].mxu0
    %v4296 = vadd.f32 %v4036, %v4295
    %v4297 = vpop.f32.mrb[0].mxu0
    %4298 = vmatprep.mubr.f32.mxu0 0.0
    %v4299 = vand.u32 %v3475, 4294901760
    %v4300 = vsub.f32 %v3475, %v4299
    %4301 = vmatmul.mubr.f32.gmra.mrb[0].mxu0 %v4300
    %v4302 = vpop.f32.mrb[0].mxu0
    %v4303 = vadd.f32 %v4042, %v4302
    %v4304 = vpop.f32.mrb[0].mxu0
    %4305 = vmatprep.mubr.f32.mxu0 0.0
    %v4306 = vand.u32 %v3478, 4294901760
    %v4307 = vsub.f32 %v3478, %v4306
    %4308 = vmatmul.mubr.f32.gmra.mrb[0].mxu0 %v4307
    %v4309 = vpop.f32.mrb[0].mxu0
    %v4310 = vadd.f32 %v4048, %v4309
    %v4311 = vpop.f32.mrb[0].mxu0
    %4312 = vmatprep.mubr.f32.mxu0 0.0
    %v4313 = vand.u32 %v3481, 4294901760
    %v4314 = vsub.f32 %v3481, %v4313
    %4315 = vmatmul.mubr.f32.gmra.mrb[0].mxu0 %v4314
    %v4316 = vpop.f32.mrb[0].mxu0
    %v4317 = vadd.f32 %v4054, %v4316
    %v4318 = vpop.f32.mrb[0].mxu0
    %4319 = vmatprep.mubr.f32.mxu0 0.0
    %v4320 = vand.u32 %v3484, 4294901760
    %v4321 = vsub.f32 %v3484, %v4320
    %4322 = vmatmul.mubr.f32.gmra.mrb[0].mxu0 %v4321
    %v4323 = vpop.f32.mrb[0].mxu0
    %v4324 = vadd.f32 %v4060, %v4323
    %v4325 = vpop.f32.mrb[0].mxu0
    %4326 = vmatprep.mubr.f32.mxu0 0.0
    %v4327 = vand.u32 %v3487, 4294901760
    %v4328 = vsub.f32 %v3487, %v4327
    %4329 = vmatmul.mubr.f32.gmra.mrb[0].mxu0 %v4328
    %v4330 = vpop.f32.mrb[0].mxu0
    %v4331 = vadd.f32 %v4066, %v4330
    %v4332 = vpop.f32.mrb[0].mxu0
    %4333 = vmatprep.mubr.f32.mxu0 0.0
    %v4334 = vand.u32 %v3490, 4294901760
    %v4335 = vsub.f32 %v3490, %v4334
    %4336 = vmatmul.mubr.f32.gmra.mrb[0].mxu0 %v4335
    %v4337 = vpop.f32.mrb[0].mxu0
    %v4338 = vadd.f32 %v4072, %v4337
    %v4339 = vpop.f32.mrb[0].mxu0
    %4340 = vmatprep.mubr.f32.mxu0 0.0
    %v4341 = vand.u32 %v3493, 4294901760
    %v4342 = vsub.f32 %v3493, %v4341
    %4343 = vmatmul.mubr.f32.gmra.mrb[0].mxu0 %v4342
    %v4344 = vpop.f32.mrb[0].mxu0
    %v4345 = vadd.f32 %v4078, %v4344
    %v4346 = vpop.f32.mrb[0].mxu0
    %4347 = vmatprep.mubr.f32.mxu0 0.0
    %v4348 = vand.u32 %v3496, 4294901760
    %v4349 = vsub.f32 %v3496, %v4348
    %4350 = vmatmul.mubr.f32.gmra.mrb[0].mxu0 %v4349
    %v4351 = vpop.f32.mrb[0].mxu0
    %v4352 = vadd.f32 %v4084, %v4351
    %v4353 = vpop.f32.mrb[0].mxu0
    %4354 = vmatprep.mubr.f32.mxu0 0.0
    %v4355 = vand.u32 %v3499, 4294901760
    %v4356 = vsub.f32 %v3499, %v4355
    %4357 = vmatmul.mubr.f32.gmra.mrb[0].mxu0 %v4356
    %v4358 = vpop.f32.mrb[0].mxu0
    %v4359 = vadd.f32 %v4090, %v4358
    %v4360 = vpop.f32.mrb[0].mxu0
    %4361 = vmatprep.mubr.f32.mxu0 0.0
    %v4362 = vand.u32 %v3502, 4294901760
    %v4363 = vsub.f32 %v3502, %v4362
    %4364 = vmatmul.mubr.f32.gmra.mrb[0].mxu0 %v4363
    %v4365 = vpop.f32.mrb[0].mxu0
    %v4366 = vadd.f32 %v4096, %v4365
    %v4367 = vpop.f32.mrb[0].mxu0
    %4368 = vmatprep.mubr.f32.mxu0 0.0
    %v4369 = vand.u32 %v3505, 4294901760
    %v4370 = vsub.f32 %v3505, %v4369
    %4371 = vmatmul.mubr.f32.gmra.mrb[0].mxu0 %v4370
    %v4372 = vpop.f32.mrb[0].mxu0
    %v4373 = vadd.f32 %v4102, %v4372
    %v4374 = vpop.f32.mrb[0].mxu0
    %4375 = vmatprep.mubr.f32.mxu0 0.0
    %v4376 = vand.u32 %v3508, 4294901760
    %v4377 = vsub.f32 %v3508, %v4376
    %4378 = vmatmul.mubr.f32.gmra.mrb[0].mxu0 %v4377
    %v4379 = vpop.f32.mrb[0].mxu0
    %v4380 = vadd.f32 %v4108, %v4379
    %v4381 = vpop.f32.mrb[0].mxu0
    %4382 = vmatprep.mubr.f32.mxu0 0.0
    %v4383 = vand.u32 %v3511, 4294901760
    %v4384 = vsub.f32 %v3511, %v4383
    %4385 = vmatmul.mubr.f32.gmra.mrb[0].mxu0 %v4384
    %v4386 = vpop.f32.mrb[0].mxu0
    %v4387 = vadd.f32 %v4114, %v4386
    %v4388 = vpop.f32.mrb[0].mxu0
    %4389 = vmatprep.mubr.f32.mxu0 0.0
    %v4390 = vand.u32 %v3514, 4294901760
    %v4391 = vsub.f32 %v3514, %v4390
    %4392 = vmatmul.mubr.f32.gmra.mrb[0].mxu0 %v4391
    %v4393 = vpop.f32.mrb[0].mxu0
    %v4394 = vadd.f32 %v4120, %v4393
    %v4395 = vpop.f32.mrb[0].mxu0
    %4396 = vmatprep.mubr.f32.mxu0 0.0
    %v4397 = vand.u32 %v3517, 4294901760
    %v4398 = vsub.f32 %v3517, %v4397
    %4399 = vmatmul.mubr.f32.gmra.mrb[0].mxu0 %v4398
    %v4400 = vpop.f32.mrb[0].mxu0
    %v4401 = vadd.f32 %v4126, %v4400
    %v4402 = vpop.f32.mrb[0].mxu0
    %4403 = vmatprep.mubr.f32.mxu0 0.0
    %v4404 = vand.u32 %v3520, 4294901760
    %v4405 = vsub.f32 %v3520, %v4404
    %4406 = vmatmul.mubr.f32.gmra.mrb[0].mxu0 %v4405
    %v4407 = vpop.f32.mrb[0].mxu0
    %v4408 = vadd.f32 %v4132, %v4407
    %v4409 = vpop.f32.mrb[0].mxu0
    %4410 = vmatprep.mubr.f32.mxu0 0.0
    %v4411 = vand.u32 %v3523, 4294901760
    %v4412 = vsub.f32 %v3523, %v4411
    %4413 = vmatmul.mubr.f32.gmra.mrb[0].mxu0 %v4412
    %v4414 = vpop.f32.mrb[0].mxu0
    %v4415 = vadd.f32 %v4138, %v4414
    %v4416 = vpop.f32.mrb[0].mxu0
    %4417 = vmatprep.mubr.f32.mxu0 0.0
    %v4418 = vand.u32 %v3526, 4294901760
    %v4419 = vsub.f32 %v3526, %v4418
    %4420 = vmatmul.mubr.f32.gmra.mrb[0].mxu0 %v4419
    %v4421 = vpop.f32.mrb[0].mxu0
    %v4422 = vadd.f32 %v4144, %v4421
    %v4423 = vpop.f32.mrb[0].mxu0
    %4424 = vmatprep.mubr.f32.mxu0 0.0
    %v4425 = vand.u32 %v3529, 4294901760
    %v4426 = vsub.f32 %v3529, %v4425
    %4427 = vmatmul.mubr.f32.gmra.mrb[0].mxu0 %v4426
    %v4428 = vpop.f32.mrb[0].mxu0
    %v4429 = vadd.f32 %v4150, %v4428
    %v4430 = vpop.f32.mrb[0].mxu0
    %4431 = vdwg.mxu0
    %4432 = vmatprep.subr.mxu0 0.0
    %v4433 = vand.u32 %v3438, 4294901760
    %4434 = vmatpush1.msra.mxu0 %v4433
    %4435 = vmatprep.subr.mxu0 0.0
    %v4436 = vand.u32 %v3439, 4294901760
    %4437 = vmatpush1.msra.mxu0 %v4436
    %4438 = vmatprep.subr.mxu0 0.0
    %4439 = vmatpush1.msra.mxu0 0.0
    %4440 = vmatprep.subr.mxu0 0.0
    %4441 = vmatpush1.msra.mxu0 0.0
    %4442 = vmatprep.subr.mxu0 0.0
    %4443 = vmatpush1.msra.mxu0 0.0
    %4444 = vmatprep.subr.mxu0 0.0
    %4445 = vmatpush1.msra.mxu0 0.0
    %4446 = vmatprep.subr.mxu0 0.0
    %4447 = vmatpush1.msra.mxu0 0.0
    %4448 = vmatprep.subr.mxu0 0.0
    %4449 = vmatpush1.msra.mxu0 0.0
    %4450 = vmatprep.subr.mxu0 0.0
    %4451 = vmatpush1.msra.mxu0 0.0
    %4452 = vmatprep.subr.mxu0 0.0
    %4453 = vmatpush1.msra.mxu0 0.0
    %4454 = vmatprep.subr.mxu0 0.0
    %4455 = vmatpush1.msra.mxu0 0.0
    %4456 = vmatprep.subr.mxu0 0.0
    %4457 = vmatpush1.msra.mxu0 0.0
    %4458 = vmatprep.subr.mxu0 0.0
    %4459 = vmatpush1.msra.mxu0 0.0
    %4460 = vmatprep.subr.mxu0 0.0
    %4461 = vmatpush1.msra.mxu0 0.0
    %4462 = vmatprep.subr.mxu0 0.0
    %4463 = vmatpush1.msra.mxu0 0.0
    %4464 = vmatprep.subr.mxu0 0.0
    %4465 = vmatpush1.msra.mxu0 0.0
    %4466 = vmatprep.subr.mxu0 0.0
    %4467 = vmatpush1.msra.mxu0 0.0
    %4468 = vmatprep.subr.mxu0 0.0
    %4469 = vmatpush1.msra.mxu0 0.0
    %4470 = vmatprep.subr.mxu0 0.0
    %4471 = vmatpush1.msra.mxu0 0.0
    %4472 = vmatprep.subr.mxu0 0.0
    %4473 = vmatpush1.msra.mxu0 0.0
    %4474 = vmatprep.subr.mxu0 0.0
    %4475 = vmatpush1.msra.mxu0 0.0
    %4476 = vmatprep.subr.mxu0 0.0
    %4477 = vmatpush1.msra.mxu0 0.0
    %4478 = vmatprep.subr.mxu0 0.0
    %4479 = vmatpush1.msra.mxu0 0.0
    %4480 = vmatprep.subr.mxu0 0.0
    %4481 = vmatpush1.msra.mxu0 0.0
    %4482 = vmatprep.subr.mxu0 0.0
    %4483 = vmatpush1.msra.mxu0 0.0
    %4484 = vmatprep.subr.mxu0 0.0
    %4485 = vmatpush1.msra.mxu0 0.0
    %4486 = vmatprep.subr.mxu0 0.0
    %4487 = vmatpush1.msra.mxu0 0.0
    %4488 = vmatprep.subr.mxu0 0.0
    %4489 = vmatpush1.msra.mxu0 0.0
    %4490 = vmatprep.subr.mxu0 0.0
    %4491 = vmatpush1.msra.mxu0 0.0
    %4492 = vmatprep.subr.mxu0 0.0
    %4493 = vmatpush1.msra.mxu0 0.0
    %4494 = vmatprep.subr.mxu0 0.0
    %4495 = vmatpush1.msra.mxu0 0.0
    %4496 = vmatprep.subr.mxu0 0.0
    %4497 = vmatpush1.msra.mxu0 0.0
    %4498 = vmatprep.mubr.f32.mxu0 0.0
    %v4499 = vand.u32 %v3442, 4294901760
    %v4500 = vsub.f32 %v3442, %v4499
    %v4501 = vand.u32 %v4500, 4294901760
    %4502 = vmatmul.mubr.f32.gmra.mrb[0].mxu0 %v4501
    %v4503 = vpop.f32.mrb[0].mxu0
    %v4504 = vadd.f32 %v4226, %v4503
    %v4505 = vpop.f32.mrb[0].mxu0
    %4506 = vmatprep.mubr.f32.mxu0 0.0
    %v4507 = vand.u32 %v3445, 4294901760
    %v4508 = vsub.f32 %v3445, %v4507
    %v4509 = vand.u32 %v4508, 4294901760
    %4510 = vmatmul.mubr.f32.gmra.mrb[0].mxu0 %v4509
    %v4511 = vpop.f32.mrb[0].mxu0
    %v4512 = vadd.f32 %v4233, %v4511
    %v4513 = vpop.f32.mrb[0].mxu0
    %4514 = vmatprep.mubr.f32.mxu0 0.0
    %v4515 = vand.u32 %v3448, 4294901760
    %v4516 = vsub.f32 %v3448, %v4515
    %v4517 = vand.u32 %v4516, 4294901760
    %4518 = vmatmul.mubr.f32.gmra.mrb[0].mxu0 %v4517
    %v4519 = vpop.f32.mrb[0].mxu0
    %v4520 = vadd.f32 %v4240, %v4519
    %v4521 = vpop.f32.mrb[0].mxu0
    %4522 = vmatprep.mubr.f32.mxu0 0.0
    %v4523 = vand.u32 %v3451, 4294901760
    %v4524 = vsub.f32 %v3451, %v4523
    %v4525 = vand.u32 %v4524, 4294901760
    %4526 = vmatmul.mubr.f32.gmra.mrb[0].mxu0 %v4525
    %v4527 = vpop.f32.mrb[0].mxu0
    %v4528 = vadd.f32 %v4247, %v4527
    %v4529 = vpop.f32.mrb[0].mxu0
    %4530 = vmatprep.mubr.f32.mxu0 0.0
    %v4531 = vand.u32 %v3454, 4294901760
    %v4532 = vsub.f32 %v3454, %v4531
    %v4533 = vand.u32 %v4532, 4294901760
    %4534 = vmatmul.mubr.f32.gmra.mrb[0].mxu0 %v4533
    %v4535 = vpop.f32.mrb[0].mxu0
    %v4536 = vadd.f32 %v4254, %v4535
    %v4537 = vpop.f32.mrb[0].mxu0
    %4538 = vmatprep.mubr.f32.mxu0 0.0
    %v4539 = vand.u32 %v3457, 4294901760
    %v4540 = vsub.f32 %v3457, %v4539
    %v4541 = vand.u32 %v4540, 4294901760
    %4542 = vmatmul.mubr.f32.gmra.mrb[0].mxu0 %v4541
    %v4543 = vpop.f32.mrb[0].mxu0
    %v4544 = vadd.f32 %v4261, %v4543
    %v4545 = vpop.f32.mrb[0].mxu0
    %4546 = vmatprep.mubr.f32.mxu0 0.0
    %v4547 = vand.u32 %v3460, 4294901760
    %v4548 = vsub.f32 %v3460, %v4547
    %v4549 = vand.u32 %v4548, 4294901760
    %4550 = vmatmul.mubr.f32.gmra.mrb[0].mxu0 %v4549
    %v4551 = vpop.f32.mrb[0].mxu0
    %v4552 = vadd.f32 %v4268, %v4551
    %v4553 = vpop.f32.mrb[0].mxu0
    %4554 = vmatprep.mubr.f32.mxu0 0.0
    %v4555 = vand.u32 %v3463, 4294901760
    %v4556 = vsub.f32 %v3463, %v4555
    %v4557 = vand.u32 %v4556, 4294901760
    %4558 = vmatmul.mubr.f32.gmra.mrb[0].mxu0 %v4557
    %v4559 = vpop.f32.mrb[0].mxu0
    %v4560 = vadd.f32 %v4275, %v4559
    %v4561 = vpop.f32.mrb[0].mxu0
    %4562 = vmatprep.mubr.f32.mxu0 0.0
    %v4563 = vand.u32 %v3466, 4294901760
    %v4564 = vsub.f32 %v3466, %v4563
    %v4565 = vand.u32 %v4564, 4294901760
    %4566 = vmatmul.mubr.f32.gmra.mrb[0].mxu0 %v4565
    %v4567 = vpop.f32.mrb[0].mxu0
    %v4568 = vadd.f32 %v4282, %v4567
    %v4569 = vpop.f32.mrb[0].mxu0
    %4570 = vmatprep.mubr.f32.mxu0 0.0
    %v4571 = vand.u32 %v3469, 4294901760
    %v4572 = vsub.f32 %v3469, %v4571
    %v4573 = vand.u32 %v4572, 4294901760
    %4574 = vmatmul.mubr.f32.gmra.mrb[0].mxu0 %v4573
    %v4575 = vpop.f32.mrb[0].mxu0
    %v4576 = vadd.f32 %v4289, %v4575
    %v4577 = vpop.f32.mrb[0].mxu0
    %4578 = vmatprep.mubr.f32.mxu0 0.0
    %v4579 = vand.u32 %v3472, 4294901760
    %v4580 = vsub.f32 %v3472, %v4579
    %v4581 = vand.u32 %v4580, 4294901760
    %4582 = vmatmul.mubr.f32.gmra.mrb[0].mxu0 %v4581
    %v4583 = vpop.f32.mrb[0].mxu0
    %v4584 = vadd.f32 %v4296, %v4583
    %v4585 = vpop.f32.mrb[0].mxu0
    %4586 = vmatprep.mubr.f32.mxu0 0.0
    %v4587 = vand.u32 %v3475, 4294901760
    %v4588 = vsub.f32 %v3475, %v4587
    %v4589 = vand.u32 %v4588, 4294901760
    %4590 = vmatmul.mubr.f32.gmra.mrb[0].mxu0 %v4589
    %v4591 = vpop.f32.mrb[0].mxu0
    %v4592 = vadd.f32 %v4303, %v4591
    %v4593 = vpop.f32.mrb[0].mxu0
    %4594 = vmatprep.mubr.f32.mxu0 0.0
    %v4595 = vand.u32 %v3478, 4294901760
    %v4596 = vsub.f32 %v3478, %v4595
    %v4597 = vand.u32 %v4596, 4294901760
    %4598 = vmatmul.mubr.f32.gmra.mrb[0].mxu0 %v4597
    %v4599 = vpop.f32.mrb[0].mxu0
    %v4600 = vadd.f32 %v4310, %v4599
    %v4601 = vpop.f32.mrb[0].mxu0
    %4602 = vmatprep.mubr.f32.mxu0 0.0
    %v4603 = vand.u32 %v3481, 4294901760
    %v4604 = vsub.f32 %v3481, %v4603
    %v4605 = vand.u32 %v4604, 4294901760
    %4606 = vmatmul.mubr.f32.gmra.mrb[0].mxu0 %v4605
    %v4607 = vpop.f32.mrb[0].mxu0
    %v4608 = vadd.f32 %v4317, %v4607
    %v4609 = vpop.f32.mrb[0].mxu0
    %4610 = vmatprep.mubr.f32.mxu0 0.0
    %v4611 = vand.u32 %v3484, 4294901760
    %v4612 = vsub.f32 %v3484, %v4611
    %v4613 = vand.u32 %v4612, 4294901760
    %4614 = vmatmul.mubr.f32.gmra.mrb[0].mxu0 %v4613
    %v4615 = vpop.f32.mrb[0].mxu0
    %v4616 = vadd.f32 %v4324, %v4615
    %v4617 = vpop.f32.mrb[0].mxu0
    %4618 = vmatprep.mubr.f32.mxu0 0.0
    %v4619 = vand.u32 %v3487, 4294901760
    %v4620 = vsub.f32 %v3487, %v4619
    %v4621 = vand.u32 %v4620, 4294901760
    %4622 = vmatmul.mubr.f32.gmra.mrb[0].mxu0 %v4621
    %v4623 = vpop.f32.mrb[0].mxu0
    %v4624 = vadd.f32 %v4331, %v4623
    %v4625 = vpop.f32.mrb[0].mxu0
    %4626 = vmatprep.mubr.f32.mxu0 0.0
    %v4627 = vand.u32 %v3490, 4294901760
    %v4628 = vsub.f32 %v3490, %v4627
    %v4629 = vand.u32 %v4628, 4294901760
    %4630 = vmatmul.mubr.f32.gmra.mrb[0].mxu0 %v4629
    %v4631 = vpop.f32.mrb[0].mxu0
    %v4632 = vadd.f32 %v4338, %v4631
    %v4633 = vpop.f32.mrb[0].mxu0
    %4634 = vmatprep.mubr.f32.mxu0 0.0
    %v4635 = vand.u32 %v3493, 4294901760
    %v4636 = vsub.f32 %v3493, %v4635
    %v4637 = vand.u32 %v4636, 4294901760
    %4638 = vmatmul.mubr.f32.gmra.mrb[0].mxu0 %v4637
    %v4639 = vpop.f32.mrb[0].mxu0
    %v4640 = vadd.f32 %v4345, %v4639
    %v4641 = vpop.f32.mrb[0].mxu0
    %4642 = vmatprep.mubr.f32.mxu0 0.0
    %v4643 = vand.u32 %v3496, 4294901760
    %v4644 = vsub.f32 %v3496, %v4643
    %v4645 = vand.u32 %v4644, 4294901760
    %4646 = vmatmul.mubr.f32.gmra.mrb[0].mxu0 %v4645
    %v4647 = vpop.f32.mrb[0].mxu0
    %v4648 = vadd.f32 %v4352, %v4647
    %v4649 = vpop.f32.mrb[0].mxu0
    %4650 = vmatprep.mubr.f32.mxu0 0.0
    %v4651 = vand.u32 %v3499, 4294901760
    %v4652 = vsub.f32 %v3499, %v4651
    %v4653 = vand.u32 %v4652, 4294901760
    %4654 = vmatmul.mubr.f32.gmra.mrb[0].mxu0 %v4653
    %v4655 = vpop.f32.mrb[0].mxu0
    %v4656 = vadd.f32 %v4359, %v4655
    %v4657 = vpop.f32.mrb[0].mxu0
    %4658 = vmatprep.mubr.f32.mxu0 0.0
    %v4659 = vand.u32 %v3502, 4294901760
    %v4660 = vsub.f32 %v3502, %v4659
    %v4661 = vand.u32 %v4660, 4294901760
    %4662 = vmatmul.mubr.f32.gmra.mrb[0].mxu0 %v4661
    %v4663 = vpop.f32.mrb[0].mxu0
    %v4664 = vadd.f32 %v4366, %v4663
    %v4665 = vpop.f32.mrb[0].mxu0
    %4666 = vmatprep.mubr.f32.mxu0 0.0
    %v4667 = vand.u32 %v3505, 4294901760
    %v4668 = vsub.f32 %v3505, %v4667
    %v4669 = vand.u32 %v4668, 4294901760
    %4670 = vmatmul.mubr.f32.gmra.mrb[0].mxu0 %v4669
    %v4671 = vpop.f32.mrb[0].mxu0
    %v4672 = vadd.f32 %v4373, %v4671
    %v4673 = vpop.f32.mrb[0].mxu0
    %4674 = vmatprep.mubr.f32.mxu0 0.0
    %v4675 = vand.u32 %v3508, 4294901760
    %v4676 = vsub.f32 %v3508, %v4675
    %v4677 = vand.u32 %v4676, 4294901760
    %4678 = vmatmul.mubr.f32.gmra.mrb[0].mxu0 %v4677
    %v4679 = vpop.f32.mrb[0].mxu0
    %v4680 = vadd.f32 %v4380, %v4679
    %v4681 = vpop.f32.mrb[0].mxu0
    %4682 = vmatprep.mubr.f32.mxu0 0.0
    %v4683 = vand.u32 %v3511, 4294901760
    %v4684 = vsub.f32 %v3511, %v4683
    %v4685 = vand.u32 %v4684, 4294901760
    %4686 = vmatmul.mubr.f32.gmra.mrb[0].mxu0 %v4685
    %v4687 = vpop.f32.mrb[0].mxu0
    %v4688 = vadd.f32 %v4387, %v4687
    %v4689 = vpop.f32.mrb[0].mxu0
    %4690 = vmatprep.mubr.f32.mxu0 0.0
    %v4691 = vand.u32 %v3514, 4294901760
    %v4692 = vsub.f32 %v3514, %v4691
    %v4693 = vand.u32 %v4692, 4294901760
    %4694 = vmatmul.mubr.f32.gmra.mrb[0].mxu0 %v4693
    %v4695 = vpop.f32.mrb[0].mxu0
    %v4696 = vadd.f32 %v4394, %v4695
    %v4697 = vpop.f32.mrb[0].mxu0
    %4698 = vmatprep.mubr.f32.mxu0 0.0
    %v4699 = vand.u32 %v3517, 4294901760
    %v4700 = vsub.f32 %v3517, %v4699
    %v4701 = vand.u32 %v4700, 4294901760
    %4702 = vmatmul.mubr.f32.gmra.mrb[0].mxu0 %v4701
    %v4703 = vpop.f32.mrb[0].mxu0
    %v4704 = vadd.f32 %v4401, %v4703
    %v4705 = vpop.f32.mrb[0].mxu0
    %4706 = vmatprep.mubr.f32.mxu0 0.0
    %v4707 = vand.u32 %v3520, 4294901760
    %v4708 = vsub.f32 %v3520, %v4707
    %v4709 = vand.u32 %v4708, 4294901760
    %4710 = vmatmul.mubr.f32.gmra.mrb[0].mxu0 %v4709
    %v4711 = vpop.f32.mrb[0].mxu0
    %v4712 = vadd.f32 %v4408, %v4711
    %v4713 = vpop.f32.mrb[0].mxu0
    %4714 = vmatprep.mubr.f32.mxu0 0.0
    %v4715 = vand.u32 %v3523, 4294901760
    %v4716 = vsub.f32 %v3523, %v4715
    %v4717 = vand.u32 %v4716, 4294901760
    %4718 = vmatmul.mubr.f32.gmra.mrb[0].mxu0 %v4717
    %v4719 = vpop.f32.mrb[0].mxu0
    %v4720 = vadd.f32 %v4415, %v4719
    %v4721 = vpop.f32.mrb[0].mxu0
    %4722 = vmatprep.mubr.f32.mxu0 0.0
    %v4723 = vand.u32 %v3526, 4294901760
    %v4724 = vsub.f32 %v3526, %v4723
    %v4725 = vand.u32 %v4724, 4294901760
    %4726 = vmatmul.mubr.f32.gmra.mrb[0].mxu0 %v4725
    %v4727 = vpop.f32.mrb[0].mxu0
    %v4728 = vadd.f32 %v4422, %v4727
    %v4729 = vpop.f32.mrb[0].mxu0
    %4730 = vmatprep.mubr.f32.mxu0 0.0
    %v4731 = vand.u32 %v3529, 4294901760
    %v4732 = vsub.f32 %v3529, %v4731
    %v4733 = vand.u32 %v4732, 4294901760
    %4734 = vmatmul.mubr.f32.gmra.mrb[0].mxu0 %v4733
    %v4735 = vpop.f32.mrb[0].mxu0
    %v4736 = vadd.f32 %v4429, %v4735
    %v4737 = vpop.f32.mrb[0].mxu0
    %4738 = vdwg.mxu0
    %4739 = vmatprep.subr.mxu0 0.0
    %v4740 = vand.u32 %v3438, 4294901760
    %v4741 = vsub.f32 %v3438, %v4740
    %v4742 = vand.u32 %v4741, 4294901760
    %4743 = vmatpush1.msra.mxu0 %v4742
    %4744 = vmatprep.subr.mxu0 0.0
    %v4745 = vand.u32 %v3439, 4294901760
    %v4746 = vsub.f32 %v3439, %v4745
    %v4747 = vand.u32 %v4746, 4294901760
    %4748 = vmatpush1.msra.mxu0 %v4747
    %4749 = vmatprep.subr.mxu0 0.0
    %4750 = vmatpush1.msra.mxu0 0.0
    %4751 = vmatprep.subr.mxu0 0.0
    %4752 = vmatpush1.msra.mxu0 0.0
    %4753 = vmatprep.subr.mxu0 0.0
    %4754 = vmatpush1.msra.mxu0 0.0
    %4755 = vmatprep.subr.mxu0 0.0
    %4756 = vmatpush1.msra.mxu0 0.0
    %4757 = vmatprep.subr.mxu0 0.0
    %4758 = vmatpush1.msra.mxu0 0.0
    %4759 = vmatprep.subr.mxu0 0.0
    %4760 = vmatpush1.msra.mxu0 0.0
    %4761 = vmatprep.subr.mxu0 0.0
    %4762 = vmatpush1.msra.mxu0 0.0
    %4763 = vmatprep.subr.mxu0 0.0
    %4764 = vmatpush1.msra.mxu0 0.0
    %4765 = vmatprep.subr.mxu0 0.0
    %4766 = vmatpush1.msra.mxu0 0.0
    %4767 = vmatprep.subr.mxu0 0.0
    %4768 = vmatpush1.msra.mxu0 0.0
    %4769 = vmatprep.subr.mxu0 0.0
    %4770 = vmatpush1.msra.mxu0 0.0
    %4771 = vmatprep.subr.mxu0 0.0
    %4772 = vmatpush1.msra.mxu0 0.0
    %4773 = vmatprep.subr.mxu0 0.0
    %4774 = vmatpush1.msra.mxu0 0.0
    %4775 = vmatprep.subr.mxu0 0.0
    %4776 = vmatpush1.msra.mxu0 0.0
    %4777 = vmatprep.subr.mxu0 0.0
    %4778 = vmatpush1.msra.mxu0 0.0
    %4779 = vmatprep.subr.mxu0 0.0
    %4780 = vmatpush1.msra.mxu0 0.0
    %4781 = vmatprep.subr.mxu0 0.0
    %4782 = vmatpush1.msra.mxu0 0.0
    %4783 = vmatprep.subr.mxu0 0.0
    %4784 = vmatpush1.msra.mxu0 0.0
    %4785 = vmatprep.subr.mxu0 0.0
    %4786 = vmatpush1.msra.mxu0 0.0
    %4787 = vmatprep.subr.mxu0 0.0
    %4788 = vmatpush1.msra.mxu0 0.0
    %4789 = vmatprep.subr.mxu0 0.0
    %4790 = vmatpush1.msra.mxu0 0.0
    %4791 = vmatprep.subr.mxu0 0.0
    %4792 = vmatpush1.msra.mxu0 0.0
    %4793 = vmatprep.subr.mxu0 0.0
    %4794 = vmatpush1.msra.mxu0 0.0
    %4795 = vmatprep.subr.mxu0 0.0
    %4796 = vmatpush1.msra.mxu0 0.0
    %4797 = vmatprep.subr.mxu0 0.0
    %4798 = vmatpush1.msra.mxu0 0.0
    %4799 = vmatprep.subr.mxu0 0.0
    %4800 = vmatpush1.msra.mxu0 0.0
    %4801 = vmatprep.subr.mxu0 0.0
    %4802 = vmatpush1.msra.mxu0 0.0
    %4803 = vmatprep.subr.mxu0 0.0
    %4804 = vmatpush1.msra.mxu0 0.0
    %4805 = vmatprep.subr.mxu0 0.0
    %4806 = vmatpush1.msra.mxu0 0.0
    %4807 = vmatprep.subr.mxu0 0.0
    %4808 = vmatpush1.msra.mxu0 0.0
    %4809 = vmatprep.mubr.f32.mxu0 0.0
    %v4810 = vand.u32 %v3442, 4294901760
    %4811 = vmatmul.mubr.f32.gmra.mrb[0].mxu0 %v4810
    %v4812 = vpop.f32.mrb[0].mxu0
    %v4813 = vadd.f32 %v4504, %v4812
    %v4814 = vpop.f32.mrb[0].mxu0
    %4815 = vmatprep.mubr.f32.mxu0 0.0
    %v4816 = vand.u32 %v3445, 4294901760
    %4817 = vmatmul.mubr.f32.gmra.mrb[0].mxu0 %v4816
    %v4818 = vpop.f32.mrb[0].mxu0
    %v4819 = vadd.f32 %v4512, %v4818
    %v4820 = vpop.f32.mrb[0].mxu0
    %4821 = vmatprep.mubr.f32.mxu0 0.0
    %v4822 = vand.u32 %v3448, 4294901760
    %4823 = vmatmul.mubr.f32.gmra.mrb[0].mxu0 %v4822
    %v4824 = vpop.f32.mrb[0].mxu0
    %v4825 = vadd.f32 %v4520, %v4824
    %v4826 = vpop.f32.mrb[0].mxu0
    %4827 = vmatprep.mubr.f32.mxu0 0.0
    %v4828 = vand.u32 %v3451, 4294901760
    %4829 = vmatmul.mubr.f32.gmra.mrb[0].mxu0 %v4828
    %v4830 = vpop.f32.mrb[0].mxu0
    %v4831 = vadd.f32 %v4528, %v4830
    %v4832 = vpop.f32.mrb[0].mxu0
    %4833 = vmatprep.mubr.f32.mxu0 0.0
    %v4834 = vand.u32 %v3454, 4294901760
    %4835 = vmatmul.mubr.f32.gmra.mrb[0].mxu0 %v4834
    %v4836 = vpop.f32.mrb[0].mxu0
    %v4837 = vadd.f32 %v4536, %v4836
    %v4838 = vpop.f32.mrb[0].mxu0
    %4839 = vmatprep.mubr.f32.mxu0 0.0
    %v4840 = vand.u32 %v3457, 4294901760
    %4841 = vmatmul.mubr.f32.gmra.mrb[0].mxu0 %v4840
    %v4842 = vpop.f32.mrb[0].mxu0
    %v4843 = vadd.f32 %v4544, %v4842
    %v4844 = vpop.f32.mrb[0].mxu0
    %4845 = vmatprep.mubr.f32.mxu0 0.0
    %v4846 = vand.u32 %v3460, 4294901760
    %4847 = vmatmul.mubr.f32.gmra.mrb[0].mxu0 %v4846
    %v4848 = vpop.f32.mrb[0].mxu0
    %v4849 = vadd.f32 %v4552, %v4848
    %v4850 = vpop.f32.mrb[0].mxu0
    %4851 = vmatprep.mubr.f32.mxu0 0.0
    %v4852 = vand.u32 %v3463, 4294901760
    %4853 = vmatmul.mubr.f32.gmra.mrb[0].mxu0 %v4852
    %v4854 = vpop.f32.mrb[0].mxu0
    %v4855 = vadd.f32 %v4560, %v4854
    %v4856 = vpop.f32.mrb[0].mxu0
    %4857 = vmatprep.mubr.f32.mxu0 0.0
    %v4858 = vand.u32 %v3466, 4294901760
    %4859 = vmatmul.mubr.f32.gmra.mrb[0].mxu0 %v4858
    %v4860 = vpop.f32.mrb[0].mxu0
    %v4861 = vadd.f32 %v4568, %v4860
    %v4862 = vpop.f32.mrb[0].mxu0
    %4863 = vmatprep.mubr.f32.mxu0 0.0
    %v4864 = vand.u32 %v3469, 4294901760
    %4865 = vmatmul.mubr.f32.gmra.mrb[0].mxu0 %v4864
    %v4866 = vpop.f32.mrb[0].mxu0
    %v4867 = vadd.f32 %v4576, %v4866
    %v4868 = vpop.f32.mrb[0].mxu0
    %4869 = vmatprep.mubr.f32.mxu0 0.0
    %v4870 = vand.u32 %v3472, 4294901760
    %4871 = vmatmul.mubr.f32.gmra.mrb[0].mxu0 %v4870
    %v4872 = vpop.f32.mrb[0].mxu0
    %v4873 = vadd.f32 %v4584, %v4872
    %v4874 = vpop.f32.mrb[0].mxu0
    %4875 = vmatprep.mubr.f32.mxu0 0.0
    %v4876 = vand.u32 %v3475, 4294901760
    %4877 = vmatmul.mubr.f32.gmra.mrb[0].mxu0 %v4876
    %v4878 = vpop.f32.mrb[0].mxu0
    %v4879 = vadd.f32 %v4592, %v4878
    %v4880 = vpop.f32.mrb[0].mxu0
    %4881 = vmatprep.mubr.f32.mxu0 0.0
    %v4882 = vand.u32 %v3478, 4294901760
    %4883 = vmatmul.mubr.f32.gmra.mrb[0].mxu0 %v4882
    %v4884 = vpop.f32.mrb[0].mxu0
    %v4885 = vadd.f32 %v4600, %v4884
    %v4886 = vpop.f32.mrb[0].mxu0
    %4887 = vmatprep.mubr.f32.mxu0 0.0
    %v4888 = vand.u32 %v3481, 4294901760
    %4889 = vmatmul.mubr.f32.gmra.mrb[0].mxu0 %v4888
    %v4890 = vpop.f32.mrb[0].mxu0
    %v4891 = vadd.f32 %v4608, %v4890
    %v4892 = vpop.f32.mrb[0].mxu0
    %4893 = vmatprep.mubr.f32.mxu0 0.0
    %v4894 = vand.u32 %v3484, 4294901760
    %4895 = vmatmul.mubr.f32.gmra.mrb[0].mxu0 %v4894
    %v4896 = vpop.f32.mrb[0].mxu0
    %v4897 = vadd.f32 %v4616, %v4896
    %v4898 = vpop.f32.mrb[0].mxu0
    %4899 = vmatprep.mubr.f32.mxu0 0.0
    %v4900 = vand.u32 %v3487, 4294901760
    %4901 = vmatmul.mubr.f32.gmra.mrb[0].mxu0 %v4900
    %v4902 = vpop.f32.mrb[0].mxu0
    %v4903 = vadd.f32 %v4624, %v4902
    %v4904 = vpop.f32.mrb[0].mxu0
    %4905 = vmatprep.mubr.f32.mxu0 0.0
    %v4906 = vand.u32 %v3490, 4294901760
    %4907 = vmatmul.mubr.f32.gmra.mrb[0].mxu0 %v4906
    %v4908 = vpop.f32.mrb[0].mxu0
    %v4909 = vadd.f32 %v4632, %v4908
    %v4910 = vpop.f32.mrb[0].mxu0
    %4911 = vmatprep.mubr.f32.mxu0 0.0
    %v4912 = vand.u32 %v3493, 4294901760
    %4913 = vmatmul.mubr.f32.gmra.mrb[0].mxu0 %v4912
    %v4914 = vpop.f32.mrb[0].mxu0
    %v4915 = vadd.f32 %v4640, %v4914
    %v4916 = vpop.f32.mrb[0].mxu0
    %4917 = vmatprep.mubr.f32.mxu0 0.0
    %v4918 = vand.u32 %v3496, 4294901760
    %4919 = vmatmul.mubr.f32.gmra.mrb[0].mxu0 %v4918
    %v4920 = vpop.f32.mrb[0].mxu0
    %v4921 = vadd.f32 %v4648, %v4920
    %v4922 = vpop.f32.mrb[0].mxu0
    %4923 = vmatprep.mubr.f32.mxu0 0.0
    %v4924 = vand.u32 %v3499, 4294901760
    %4925 = vmatmul.mubr.f32.gmra.mrb[0].mxu0 %v4924
    %v4926 = vpop.f32.mrb[0].mxu0
    %v4927 = vadd.f32 %v4656, %v4926
    %v4928 = vpop.f32.mrb[0].mxu0
    %4929 = vmatprep.mubr.f32.mxu0 0.0
    %v4930 = vand.u32 %v3502, 4294901760
    %4931 = vmatmul.mubr.f32.gmra.mrb[0].mxu0 %v4930
    %v4932 = vpop.f32.mrb[0].mxu0
    %v4933 = vadd.f32 %v4664, %v4932
    %v4934 = vpop.f32.mrb[0].mxu0
    %4935 = vmatprep.mubr.f32.mxu0 0.0
    %v4936 = vand.u32 %v3505, 4294901760
    %4937 = vmatmul.mubr.f32.gmra.mrb[0].mxu0 %v4936
    %v4938 = vpop.f32.mrb[0].mxu0
    %v4939 = vadd.f32 %v4672, %v4938
    %v4940 = vpop.f32.mrb[0].mxu0
    %4941 = vmatprep.mubr.f32.mxu0 0.0
    %v4942 = vand.u32 %v3508, 4294901760
    %4943 = vmatmul.mubr.f32.gmra.mrb[0].mxu0 %v4942
    %v4944 = vpop.f32.mrb[0].mxu0
    %v4945 = vadd.f32 %v4680, %v4944
    %v4946 = vpop.f32.mrb[0].mxu0
    %4947 = vmatprep.mubr.f32.mxu0 0.0
    %v4948 = vand.u32 %v3511, 4294901760
    %4949 = vmatmul.mubr.f32.gmra.mrb[0].mxu0 %v4948
    %v4950 = vpop.f32.mrb[0].mxu0
    %v4951 = vadd.f32 %v4688, %v4950
    %v4952 = vpop.f32.mrb[0].mxu0
    %4953 = vmatprep.mubr.f32.mxu0 0.0
    %v4954 = vand.u32 %v3514, 4294901760
    %4955 = vmatmul.mubr.f32.gmra.mrb[0].mxu0 %v4954
    %v4956 = vpop.f32.mrb[0].mxu0
    %v4957 = vadd.f32 %v4696, %v4956
    %v4958 = vpop.f32.mrb[0].mxu0
    %4959 = vmatprep.mubr.f32.mxu0 0.0
    %v4960 = vand.u32 %v3517, 4294901760
    %4961 = vmatmul.mubr.f32.gmra.mrb[0].mxu0 %v4960
    %v4962 = vpop.f32.mrb[0].mxu0
    %v4963 = vadd.f32 %v4704, %v4962
    %v4964 = vpop.f32.mrb[0].mxu0
    %4965 = vmatprep.mubr.f32.mxu0 0.0
    %v4966 = vand.u32 %v3520, 4294901760
    %4967 = vmatmul.mubr.f32.gmra.mrb[0].mxu0 %v4966
    %v4968 = vpop.f32.mrb[0].mxu0
    %v4969 = vadd.f32 %v4712, %v4968
    %v4970 = vpop.f32.mrb[0].mxu0
    %4971 = vmatprep.mubr.f32.mxu0 0.0
    %v4972 = vand.u32 %v3523, 4294901760
    %4973 = vmatmul.mubr.f32.gmra.mrb[0].mxu0 %v4972
    %v4974 = vpop.f32.mrb[0].mxu0
    %v4975 = vadd.f32 %v4720, %v4974
    %v4976 = vpop.f32.mrb[0].mxu0
    %4977 = vmatprep.mubr.f32.mxu0 0.0
    %v4978 = vand.u32 %v3526, 4294901760
    %4979 = vmatmul.mubr.f32.gmra.mrb[0].mxu0 %v4978
    %v4980 = vpop.f32.mrb[0].mxu0
    %v4981 = vadd.f32 %v4728, %v4980
    %v4982 = vpop.f32.mrb[0].mxu0
    %4983 = vmatprep.mubr.f32.mxu0 0.0
    %v4984 = vand.u32 %v3529, 4294901760
    %4985 = vmatmul.mubr.f32.gmra.mrb[0].mxu0 %v4984
    %v4986 = vpop.f32.mrb[0].mxu0
    %v4987 = vadd.f32 %v4736, %v4986
    %v4988 = vpop.f32.mrb[0].mxu0
    %4989 = vdwg.mxu0
    %4990 = vmatprep.subr.mxu0 0.0
    %v4991 = vand.u32 %v3438, 4294901760
    %4992 = vmatpush1.msra.mxu0 %v4991
    %4993 = vmatprep.subr.mxu0 0.0
    %v4994 = vand.u32 %v3439, 4294901760
    %4995 = vmatpush1.msra.mxu0 %v4994
    %4996 = vmatprep.subr.mxu0 0.0
    %4997 = vmatpush1.msra.mxu0 0.0
    %4998 = vmatprep.subr.mxu0 0.0
    %4999 = vmatpush1.msra.mxu0 0.0
    %5000 = vmatprep.subr.mxu0 0.0
    %5001 = vmatpush1.msra.mxu0 0.0
    %5002 = vmatprep.subr.mxu0 0.0
    %5003 = vmatpush1.msra.mxu0 0.0
    %5004 = vmatprep.subr.mxu0 0.0
    %5005 = vmatpush1.msra.mxu0 0.0
    %5006 = vmatprep.subr.mxu0 0.0
    %5007 = vmatpush1.msra.mxu0 0.0
    %5008 = vmatprep.subr.mxu0 0.0
    %5009 = vmatpush1.msra.mxu0 0.0
    %5010 = vmatprep.subr.mxu0 0.0
    %5011 = vmatpush1.msra.mxu0 0.0
    %5012 = vmatprep.subr.mxu0 0.0
    %5013 = vmatpush1.msra.mxu0 0.0
    %5014 = vmatprep.subr.mxu0 0.0
    %5015 = vmatpush1.msra.mxu0 0.0
    %5016 = vmatprep.subr.mxu0 0.0
    %5017 = vmatpush1.msra.mxu0 0.0
    %5018 = vmatprep.subr.mxu0 0.0
    %5019 = vmatpush1.msra.mxu0 0.0
    %5020 = vmatprep.subr.mxu0 0.0
    %5021 = vmatpush1.msra.mxu0 0.0
    %5022 = vmatprep.subr.mxu0 0.0
    %5023 = vmatpush1.msra.mxu0 0.0
    %5024 = vmatprep.subr.mxu0 0.0
    %5025 = vmatpush1.msra.mxu0 0.0
    %5026 = vmatprep.subr.mxu0 0.0
    %5027 = vmatpush1.msra.mxu0 0.0
    %5028 = vmatprep.subr.mxu0 0.0
    %5029 = vmatpush1.msra.mxu0 0.0
    %5030 = vmatprep.subr.mxu0 0.0
    %5031 = vmatpush1.msra.mxu0 0.0
    %5032 = vmatprep.subr.mxu0 0.0
    %5033 = vmatpush1.msra.mxu0 0.0
    %5034 = vmatprep.subr.mxu0 0.0
    %5035 = vmatpush1.msra.mxu0 0.0
    %5036 = vmatprep.subr.mxu0 0.0
    %5037 = vmatpush1.msra.mxu0 0.0
    %5038 = vmatprep.subr.mxu0 0.0
    %5039 = vmatpush1.msra.mxu0 0.0
    %5040 = vmatprep.subr.mxu0 0.0
    %5041 = vmatpush1.msra.mxu0 0.0
    %5042 = vmatprep.subr.mxu0 0.0
    %5043 = vmatpush1.msra.mxu0 0.0
    %5044 = vmatprep.subr.mxu0 0.0
    %5045 = vmatpush1.msra.mxu0 0.0
    %5046 = vmatprep.subr.mxu0 0.0
    %5047 = vmatpush1.msra.mxu0 0.0
    %5048 = vmatprep.subr.mxu0 0.0
    %5049 = vmatpush1.msra.mxu0 0.0
    %5050 = vmatprep.subr.mxu0 0.0
    %5051 = vmatpush1.msra.mxu0 0.0
    %5052 = vmatprep.subr.mxu0 0.0
    %5053 = vmatpush1.msra.mxu0 0.0
    %5054 = vmatprep.subr.mxu0 0.0
    %5055 = vmatpush1.msra.mxu0 0.0
    %5056 = vmatprep.mubr.f32.mxu0 0.0
    %v5057 = vand.u32 %v3442, 4294901760
    %5058 = vmatmul.mubr.f32.gmra.mrb[0].mxu0 %v5057
    %v5059 = vpop.f32.mrb[0].mxu0
    %v5060 = vadd.f32 %v4813, %v5059
    %v5061 = vpop.f32.mrb[0].mxu0
    %5062 = vmatprep.mubr.f32.mxu0 0.0
    %v5063 = vand.u32 %v3445, 4294901760
    %5064 = vmatmul.mubr.f32.gmra.mrb[0].mxu0 %v5063
    %v5065 = vpop.f32.mrb[0].mxu0
    %v5066 = vadd.f32 %v4819, %v5065
    %v5067 = vpop.f32.mrb[0].mxu0
    %5068 = vmatprep.mubr.f32.mxu0 0.0
    %v5069 = vand.u32 %v3448, 4294901760
    %5070 = vmatmul.mubr.f32.gmra.mrb[0].mxu0 %v5069
    %v5071 = vpop.f32.mrb[0].mxu0
    %v5072 = vadd.f32 %v4825, %v5071
    %v5073 = vpop.f32.mrb[0].mxu0
    %5074 = vmatprep.mubr.f32.mxu0 0.0
    %v5075 = vand.u32 %v3451, 4294901760
    %5076 = vmatmul.mubr.f32.gmra.mrb[0].mxu0 %v5075
    %v5077 = vpop.f32.mrb[0].mxu0
    %v5078 = vadd.f32 %v4831, %v5077
    %v5079 = vpop.f32.mrb[0].mxu0
    %5080 = vmatprep.mubr.f32.mxu0 0.0
    %v5081 = vand.u32 %v3454, 4294901760
    %5082 = vmatmul.mubr.f32.gmra.mrb[0].mxu0 %v5081
    %v5083 = vpop.f32.mrb[0].mxu0
    %v5084 = vadd.f32 %v4837, %v5083
    %v5085 = vpop.f32.mrb[0].mxu0
    %5086 = vmatprep.mubr.f32.mxu0 0.0
    %v5087 = vand.u32 %v3457, 4294901760
    %5088 = vmatmul.mubr.f32.gmra.mrb[0].mxu0 %v5087
    %v5089 = vpop.f32.mrb[0].mxu0
    %v5090 = vadd.f32 %v4843, %v5089
    %v5091 = vpop.f32.mrb[0].mxu0
    %5092 = vmatprep.mubr.f32.mxu0 0.0
    %v5093 = vand.u32 %v3460, 4294901760
    %5094 = vmatmul.mubr.f32.gmra.mrb[0].mxu0 %v5093
    %v5095 = vpop.f32.mrb[0].mxu0
    %v5096 = vadd.f32 %v4849, %v5095
    %v5097 = vpop.f32.mrb[0].mxu0
    %5098 = vmatprep.mubr.f32.mxu0 0.0
    %v5099 = vand.u32 %v3463, 4294901760
    %5100 = vmatmul.mubr.f32.gmra.mrb[0].mxu0 %v5099
    %v5101 = vpop.f32.mrb[0].mxu0
    %v5102 = vadd.f32 %v4855, %v5101
    %v5103 = vpop.f32.mrb[0].mxu0
    %5104 = vmatprep.mubr.f32.mxu0 0.0
    %v5105 = vand.u32 %v3466, 4294901760
    %5106 = vmatmul.mubr.f32.gmra.mrb[0].mxu0 %v5105
    %v5107 = vpop.f32.mrb[0].mxu0
    %v5108 = vadd.f32 %v4861, %v5107
    %v5109 = vpop.f32.mrb[0].mxu0
    %5110 = vmatprep.mubr.f32.mxu0 0.0
    %v5111 = vand.u32 %v3469, 4294901760
    %5112 = vmatmul.mubr.f32.gmra.mrb[0].mxu0 %v5111
    %v5113 = vpop.f32.mrb[0].mxu0
    %v5114 = vadd.f32 %v4867, %v5113
    %v5115 = vpop.f32.mrb[0].mxu0
    %5116 = vmatprep.mubr.f32.mxu0 0.0
    %v5117 = vand.u32 %v3472, 4294901760
    %5118 = vmatmul.mubr.f32.gmra.mrb[0].mxu0 %v5117
    %v5119 = vpop.f32.mrb[0].mxu0
    %v5120 = vadd.f32 %v4873, %v5119
    %v5121 = vpop.f32.mrb[0].mxu0
    %5122 = vmatprep.mubr.f32.mxu0 0.0
    %v5123 = vand.u32 %v3475, 4294901760
    %5124 = vmatmul.mubr.f32.gmra.mrb[0].mxu0 %v5123
    %v5125 = vpop.f32.mrb[0].mxu0
    %v5126 = vadd.f32 %v4879, %v5125
    %v5127 = vpop.f32.mrb[0].mxu0
    %5128 = vmatprep.mubr.f32.mxu0 0.0
    %v5129 = vand.u32 %v3478, 4294901760
    %5130 = vmatmul.mubr.f32.gmra.mrb[0].mxu0 %v5129
    %v5131 = vpop.f32.mrb[0].mxu0
    %v5132 = vadd.f32 %v4885, %v5131
    %v5133 = vpop.f32.mrb[0].mxu0
    %5134 = vmatprep.mubr.f32.mxu0 0.0
    %v5135 = vand.u32 %v3481, 4294901760
    %5136 = vmatmul.mubr.f32.gmra.mrb[0].mxu0 %v5135
    %v5137 = vpop.f32.mrb[0].mxu0
    %v5138 = vadd.f32 %v4891, %v5137
    %v5139 = vpop.f32.mrb[0].mxu0
    %5140 = vmatprep.mubr.f32.mxu0 0.0
    %v5141 = vand.u32 %v3484, 4294901760
    %5142 = vmatmul.mubr.f32.gmra.mrb[0].mxu0 %v5141
    %v5143 = vpop.f32.mrb[0].mxu0
    %v5144 = vadd.f32 %v4897, %v5143
    %v5145 = vpop.f32.mrb[0].mxu0
    %5146 = vmatprep.mubr.f32.mxu0 0.0
    %v5147 = vand.u32 %v3487, 4294901760
    %5148 = vmatmul.mubr.f32.gmra.mrb[0].mxu0 %v5147
    %v5149 = vpop.f32.mrb[0].mxu0
    %v5150 = vadd.f32 %v4903, %v5149
    %v5151 = vpop.f32.mrb[0].mxu0
    %5152 = vmatprep.mubr.f32.mxu0 0.0
    %v5153 = vand.u32 %v3490, 4294901760
    %5154 = vmatmul.mubr.f32.gmra.mrb[0].mxu0 %v5153
    %v5155 = vpop.f32.mrb[0].mxu0
    %v5156 = vadd.f32 %v4909, %v5155
    %v5157 = vpop.f32.mrb[0].mxu0
    %5158 = vmatprep.mubr.f32.mxu0 0.0
    %v5159 = vand.u32 %v3493, 4294901760
    %5160 = vmatmul.mubr.f32.gmra.mrb[0].mxu0 %v5159
    %v5161 = vpop.f32.mrb[0].mxu0
    %v5162 = vadd.f32 %v4915, %v5161
    %v5163 = vpop.f32.mrb[0].mxu0
    %5164 = vmatprep.mubr.f32.mxu0 0.0
    %v5165 = vand.u32 %v3496, 4294901760
    %5166 = vmatmul.mubr.f32.gmra.mrb[0].mxu0 %v5165
    %v5167 = vpop.f32.mrb[0].mxu0
    %v5168 = vadd.f32 %v4921, %v5167
    %v5169 = vpop.f32.mrb[0].mxu0
    %5170 = vmatprep.mubr.f32.mxu0 0.0
    %v5171 = vand.u32 %v3499, 4294901760
    %5172 = vmatmul.mubr.f32.gmra.mrb[0].mxu0 %v5171
    %v5173 = vpop.f32.mrb[0].mxu0
    %v5174 = vadd.f32 %v4927, %v5173
    %v5175 = vpop.f32.mrb[0].mxu0
    %5176 = vmatprep.mubr.f32.mxu0 0.0
    %v5177 = vand.u32 %v3502, 4294901760
    %5178 = vmatmul.mubr.f32.gmra.mrb[0].mxu0 %v5177
    %v5179 = vpop.f32.mrb[0].mxu0
    %v5180 = vadd.f32 %v4933, %v5179
    %v5181 = vpop.f32.mrb[0].mxu0
    %5182 = vmatprep.mubr.f32.mxu0 0.0
    %v5183 = vand.u32 %v3505, 4294901760
    %5184 = vmatmul.mubr.f32.gmra.mrb[0].mxu0 %v5183
    %v5185 = vpop.f32.mrb[0].mxu0
    %v5186 = vadd.f32 %v4939, %v5185
    %v5187 = vpop.f32.mrb[0].mxu0
    %5188 = vmatprep.mubr.f32.mxu0 0.0
    %v5189 = vand.u32 %v3508, 4294901760
    %5190 = vmatmul.mubr.f32.gmra.mrb[0].mxu0 %v5189
    %v5191 = vpop.f32.mrb[0].mxu0
    %v5192 = vadd.f32 %v4945, %v5191
    %v5193 = vpop.f32.mrb[0].mxu0
    %5194 = vmatprep.mubr.f32.mxu0 0.0
    %v5195 = vand.u32 %v3511, 4294901760
    %5196 = vmatmul.mubr.f32.gmra.mrb[0].mxu0 %v5195
    %v5197 = vpop.f32.mrb[0].mxu0
    %v5198 = vadd.f32 %v4951, %v5197
    %v5199 = vpop.f32.mrb[0].mxu0
    %5200 = vmatprep.mubr.f32.mxu0 0.0
    %v5201 = vand.u32 %v3514, 4294901760
    %5202 = vmatmul.mubr.f32.gmra.mrb[0].mxu0 %v5201
    %v5203 = vpop.f32.mrb[0].mxu0
    %v5204 = vadd.f32 %v4957, %v5203
    %v5205 = vpop.f32.mrb[0].mxu0
    %5206 = vmatprep.mubr.f32.mxu0 0.0
    %v5207 = vand.u32 %v3517, 4294901760
    %5208 = vmatmul.mubr.f32.gmra.mrb[0].mxu0 %v5207
    %v5209 = vpop.f32.mrb[0].mxu0
    %v5210 = vadd.f32 %v4963, %v5209
    %v5211 = vpop.f32.mrb[0].mxu0
    %5212 = vmatprep.mubr.f32.mxu0 0.0
    %v5213 = vand.u32 %v3520, 4294901760
    %5214 = vmatmul.mubr.f32.gmra.mrb[0].mxu0 %v5213
    %v5215 = vpop.f32.mrb[0].mxu0
    %v5216 = vadd.f32 %v4969, %v5215
    %v5217 = vpop.f32.mrb[0].mxu0
    %5218 = vmatprep.mubr.f32.mxu0 0.0
    %v5219 = vand.u32 %v3523, 4294901760
    %5220 = vmatmul.mubr.f32.gmra.mrb[0].mxu0 %v5219
    %v5221 = vpop.f32.mrb[0].mxu0
    %v5222 = vadd.f32 %v4975, %v5221
    %v5223 = vpop.f32.mrb[0].mxu0
    %5224 = vmatprep.mubr.f32.mxu0 0.0
    %v5225 = vand.u32 %v3526, 4294901760
    %5226 = vmatmul.mubr.f32.gmra.mrb[0].mxu0 %v5225
    %v5227 = vpop.f32.mrb[0].mxu0
    %v5228 = vadd.f32 %v4981, %v5227
    %v5229 = vpop.f32.mrb[0].mxu0
    %5230 = vmatprep.mubr.f32.mxu0 0.0
    %v5231 = vand.u32 %v3529, 4294901760
    %5232 = vmatmul.mubr.f32.gmra.mrb[0].mxu0 %v5231
    %v5233 = vpop.f32.mrb[0].mxu0
    %v5234 = vadd.f32 %v4987, %v5233
    %v5235 = vpop.f32.mrb[0].mxu0
    %5236 = vdwg.mxu0
    %v5238 = vsel %vm3440, %v3079, 0
    %v5241 = vsel %vm3440, %v3085, 0
    %v5244 = vsel %vm3440, %v3091, 0
    %v5247 = vsel %vm3440, %v3097, 0
    %v5250 = vsel %vm3440, %v3103, 0
    %v5253 = vsel %vm3440, %v3109, 0
    %v5256 = vsel %vm3440, %v3115, 0
    %v5259 = vsel %vm3440, %v3121, 0
    %v5262 = vsel %vm3440, %v3127, 0
    %v5265 = vsel %vm3440, %v3133, 0
    %v5268 = vsel %vm3440, %v3139, 0
    %v5271 = vsel %vm3440, %v3145, 0
    %v5274 = vsel %vm3440, %v3151, 0
    %v5277 = vsel %vm3440, %v3157, 0
    %v5280 = vsel %vm3440, %v3163, 0
    %v5283 = vsel %vm3440, %v3169, 0
    %v5286 = vsel %vm3440, %v3175, 0
    %v5289 = vsel %vm3440, %v3181, 0
    %v5292 = vsel %vm3440, %v3187, 0
    %v5295 = vsel %vm3440, %v3193, 0
    %v5298 = vsel %vm3440, %v3199, 0
    %v5301 = vsel %vm3440, %v3205, 0
    %v5304 = vsel %vm3440, %v3211, 0
    %v5307 = vsel %vm3440, %v3217, 0
    %v5310 = vsel %vm3440, %v3223, 0
    %v5313 = vsel %vm3440, %v3229, 0
    %v5316 = vsel %vm3440, %v3235, 0
    %v5319 = vsel %vm3440, %v3241, 0
    %v5322 = vsel %vm3440, %v3247, 0
    %v5325 = vsel %vm3440, %v3253, 0
    %5327 = vmatprep.subr.mxu0 0.0
    %v5328 = vand.u32 %v3436, 4294901760
    %5329 = vmatpush1.msra.mxu0 %v5328
    %5330 = vmatprep.subr.mxu0 0.0
    %v5331 = vand.u32 %v3437, 4294901760
    %5332 = vmatpush1.msra.mxu0 %v5331
    %5333 = vmatprep.subr.mxu0 0.0
    %5334 = vmatpush1.msra.mxu0 0.0
    %5335 = vmatprep.subr.mxu0 0.0
    %5336 = vmatpush1.msra.mxu0 0.0
    %5337 = vmatprep.subr.mxu0 0.0
    %5338 = vmatpush1.msra.mxu0 0.0
    %5339 = vmatprep.subr.mxu0 0.0
    %5340 = vmatpush1.msra.mxu0 0.0
    %5341 = vmatprep.subr.mxu0 0.0
    %5342 = vmatpush1.msra.mxu0 0.0
    %5343 = vmatprep.subr.mxu0 0.0
    %5344 = vmatpush1.msra.mxu0 0.0
    %5345 = vmatprep.subr.mxu0 0.0
    %5346 = vmatpush1.msra.mxu0 0.0
    %5347 = vmatprep.subr.mxu0 0.0
    %5348 = vmatpush1.msra.mxu0 0.0
    %5349 = vmatprep.subr.mxu0 0.0
    %5350 = vmatpush1.msra.mxu0 0.0
    %5351 = vmatprep.subr.mxu0 0.0
    %5352 = vmatpush1.msra.mxu0 0.0
    %5353 = vmatprep.subr.mxu0 0.0
    %5354 = vmatpush1.msra.mxu0 0.0
    %5355 = vmatprep.subr.mxu0 0.0
    %5356 = vmatpush1.msra.mxu0 0.0
    %5357 = vmatprep.subr.mxu0 0.0
    %5358 = vmatpush1.msra.mxu0 0.0
    %5359 = vmatprep.subr.mxu0 0.0
    %5360 = vmatpush1.msra.mxu0 0.0
    %5361 = vmatprep.subr.mxu0 0.0
    %5362 = vmatpush1.msra.mxu0 0.0
    %5363 = vmatprep.subr.mxu0 0.0
    %5364 = vmatpush1.msra.mxu0 0.0
    %5365 = vmatprep.subr.mxu0 0.0
    %5366 = vmatpush1.msra.mxu0 0.0
    %5367 = vmatprep.subr.mxu0 0.0
    %5368 = vmatpush1.msra.mxu0 0.0
    %5369 = vmatprep.subr.mxu0 0.0
    %5370 = vmatpush1.msra.mxu0 0.0
    %5371 = vmatprep.subr.mxu0 0.0
    %5372 = vmatpush1.msra.mxu0 0.0
    %5373 = vmatprep.subr.mxu0 0.0
    %5374 = vmatpush1.msra.mxu0 0.0
    %5375 = vmatprep.subr.mxu0 0.0
    %5376 = vmatpush1.msra.mxu0 0.0
    %5377 = vmatprep.subr.mxu0 0.0
    %5378 = vmatpush1.msra.mxu0 0.0
    %5379 = vmatprep.subr.mxu0 0.0
    %5380 = vmatpush1.msra.mxu0 0.0
    %5381 = vmatprep.subr.mxu0 0.0
    %5382 = vmatpush1.msra.mxu0 0.0
    %5383 = vmatprep.subr.mxu0 0.0
    %5384 = vmatpush1.msra.mxu0 0.0
    %5385 = vmatprep.subr.mxu0 0.0
    %5386 = vmatpush1.msra.mxu0 0.0
    %5387 = vmatprep.subr.mxu0 0.0
    %5388 = vmatpush1.msra.mxu0 0.0
    %5389 = vmatprep.subr.mxu0 0.0
    %5390 = vmatpush1.msra.mxu0 0.0
    %5391 = vmatprep.subr.mxu0 0.0
    %5392 = vmatpush1.msra.mxu0 0.0
    %5393 = vmatprep.mubr.f32.mxu0 0.0
    %v5394 = vand.u32 %v5238, 4294901760
    %v5395 = vsub.f32 %v5238, %v5394
    %v5396 = vand.u32 %v5395, 4294901760
    %v5397 = vsub.f32 %v5395, %v5396
    %v5398 = vand.u32 %v5397, 4294901760
    %5399 = vmatmul.mubr.f32.gmra.mrb[0].mxu0 %v5398
    %v5400 = vpop.f32.mrb[0].mxu0
    %v5401 = vadd.f32 %v5060, %v5400
    %v5402 = vpop.f32.mrb[0].mxu0
    %5403 = vmatprep.mubr.f32.mxu0 0.0
    %v5404 = vand.u32 %v5241, 4294901760
    %v5405 = vsub.f32 %v5241, %v5404
    %v5406 = vand.u32 %v5405, 4294901760
    %v5407 = vsub.f32 %v5405, %v5406
    %v5408 = vand.u32 %v5407, 4294901760
    %5409 = vmatmul.mubr.f32.gmra.mrb[0].mxu0 %v5408
    %v5410 = vpop.f32.mrb[0].mxu0
    %v5411 = vadd.f32 %v5066, %v5410
    %v5412 = vpop.f32.mrb[0].mxu0
    %5413 = vmatprep.mubr.f32.mxu0 0.0
    %v5414 = vand.u32 %v5244, 4294901760
    %v5415 = vsub.f32 %v5244, %v5414
    %v5416 = vand.u32 %v5415, 4294901760
    %v5417 = vsub.f32 %v5415, %v5416
    %v5418 = vand.u32 %v5417, 4294901760
    %5419 = vmatmul.mubr.f32.gmra.mrb[0].mxu0 %v5418
    %v5420 = vpop.f32.mrb[0].mxu0
    %v5421 = vadd.f32 %v5072, %v5420
    %v5422 = vpop.f32.mrb[0].mxu0
    %5423 = vmatprep.mubr.f32.mxu0 0.0
    %v5424 = vand.u32 %v5247, 4294901760
    %v5425 = vsub.f32 %v5247, %v5424
    %v5426 = vand.u32 %v5425, 4294901760
    %v5427 = vsub.f32 %v5425, %v5426
    %v5428 = vand.u32 %v5427, 4294901760
    %5429 = vmatmul.mubr.f32.gmra.mrb[0].mxu0 %v5428
    %v5430 = vpop.f32.mrb[0].mxu0
    %v5431 = vadd.f32 %v5078, %v5430
    %v5432 = vpop.f32.mrb[0].mxu0
    %5433 = vmatprep.mubr.f32.mxu0 0.0
    %v5434 = vand.u32 %v5250, 4294901760
    %v5435 = vsub.f32 %v5250, %v5434
    %v5436 = vand.u32 %v5435, 4294901760
    %v5437 = vsub.f32 %v5435, %v5436
    %v5438 = vand.u32 %v5437, 4294901760
    %5439 = vmatmul.mubr.f32.gmra.mrb[0].mxu0 %v5438
    %v5440 = vpop.f32.mrb[0].mxu0
    %v5441 = vadd.f32 %v5084, %v5440
    %v5442 = vpop.f32.mrb[0].mxu0
    %5443 = vmatprep.mubr.f32.mxu0 0.0
    %v5444 = vand.u32 %v5253, 4294901760
    %v5445 = vsub.f32 %v5253, %v5444
    %v5446 = vand.u32 %v5445, 4294901760
    %v5447 = vsub.f32 %v5445, %v5446
    %v5448 = vand.u32 %v5447, 4294901760
    %5449 = vmatmul.mubr.f32.gmra.mrb[0].mxu0 %v5448
    %v5450 = vpop.f32.mrb[0].mxu0
    %v5451 = vadd.f32 %v5090, %v5450
    %v5452 = vpop.f32.mrb[0].mxu0
    %5453 = vmatprep.mubr.f32.mxu0 0.0
    %v5454 = vand.u32 %v5256, 4294901760
    %v5455 = vsub.f32 %v5256, %v5454
    %v5456 = vand.u32 %v5455, 4294901760
    %v5457 = vsub.f32 %v5455, %v5456
    %v5458 = vand.u32 %v5457, 4294901760
    %5459 = vmatmul.mubr.f32.gmra.mrb[0].mxu0 %v5458
    %v5460 = vpop.f32.mrb[0].mxu0
    %v5461 = vadd.f32 %v5096, %v5460
    %v5462 = vpop.f32.mrb[0].mxu0
    %5463 = vmatprep.mubr.f32.mxu0 0.0
    %v5464 = vand.u32 %v5259, 4294901760
    %v5465 = vsub.f32 %v5259, %v5464
    %v5466 = vand.u32 %v5465, 4294901760
    %v5467 = vsub.f32 %v5465, %v5466
    %v5468 = vand.u32 %v5467, 4294901760
    %5469 = vmatmul.mubr.f32.gmra.mrb[0].mxu0 %v5468
    %v5470 = vpop.f32.mrb[0].mxu0
    %v5471 = vadd.f32 %v5102, %v5470
    %v5472 = vpop.f32.mrb[0].mxu0
    %5473 = vmatprep.mubr.f32.mxu0 0.0
    %v5474 = vand.u32 %v5262, 4294901760
    %v5475 = vsub.f32 %v5262, %v5474
    %v5476 = vand.u32 %v5475, 4294901760
    %v5477 = vsub.f32 %v5475, %v5476
    %v5478 = vand.u32 %v5477, 4294901760
    %5479 = vmatmul.mubr.f32.gmra.mrb[0].mxu0 %v5478
    %v5480 = vpop.f32.mrb[0].mxu0
    %v5481 = vadd.f32 %v5108, %v5480
    %v5482 = vpop.f32.mrb[0].mxu0
    %5483 = vmatprep.mubr.f32.mxu0 0.0
    %v5484 = vand.u32 %v5265, 4294901760
    %v5485 = vsub.f32 %v5265, %v5484
    %v5486 = vand.u32 %v5485, 4294901760
    %v5487 = vsub.f32 %v5485, %v5486
    %v5488 = vand.u32 %v5487, 4294901760
    %5489 = vmatmul.mubr.f32.gmra.mrb[0].mxu0 %v5488
    %v5490 = vpop.f32.mrb[0].mxu0
    %v5491 = vadd.f32 %v5114, %v5490
    %v5492 = vpop.f32.mrb[0].mxu0
    %5493 = vmatprep.mubr.f32.mxu0 0.0
    %v5494 = vand.u32 %v5268, 4294901760
    %v5495 = vsub.f32 %v5268, %v5494
    %v5496 = vand.u32 %v5495, 4294901760
    %v5497 = vsub.f32 %v5495, %v5496
    %v5498 = vand.u32 %v5497, 4294901760
    %5499 = vmatmul.mubr.f32.gmra.mrb[0].mxu0 %v5498
    %v5500 = vpop.f32.mrb[0].mxu0
    %v5501 = vadd.f32 %v5120, %v5500
    %v5502 = vpop.f32.mrb[0].mxu0
    %5503 = vmatprep.mubr.f32.mxu0 0.0
    %v5504 = vand.u32 %v5271, 4294901760
    %v5505 = vsub.f32 %v5271, %v5504
    %v5506 = vand.u32 %v5505, 4294901760
    %v5507 = vsub.f32 %v5505, %v5506
    %v5508 = vand.u32 %v5507, 4294901760
    %5509 = vmatmul.mubr.f32.gmra.mrb[0].mxu0 %v5508
    %v5510 = vpop.f32.mrb[0].mxu0
    %v5511 = vadd.f32 %v5126, %v5510
    %v5512 = vpop.f32.mrb[0].mxu0
    %5513 = vmatprep.mubr.f32.mxu0 0.0
    %v5514 = vand.u32 %v5274, 4294901760
    %v5515 = vsub.f32 %v5274, %v5514
    %v5516 = vand.u32 %v5515, 4294901760
    %v5517 = vsub.f32 %v5515, %v5516
    %v5518 = vand.u32 %v5517, 4294901760
    %5519 = vmatmul.mubr.f32.gmra.mrb[0].mxu0 %v5518
    %v5520 = vpop.f32.mrb[0].mxu0
    %v5521 = vadd.f32 %v5132, %v5520
    %v5522 = vpop.f32.mrb[0].mxu0
    %5523 = vmatprep.mubr.f32.mxu0 0.0
    %v5524 = vand.u32 %v5277, 4294901760
    %v5525 = vsub.f32 %v5277, %v5524
    %v5526 = vand.u32 %v5525, 4294901760
    %v5527 = vsub.f32 %v5525, %v5526
    %v5528 = vand.u32 %v5527, 4294901760
    %5529 = vmatmul.mubr.f32.gmra.mrb[0].mxu0 %v5528
    %v5530 = vpop.f32.mrb[0].mxu0
    %v5531 = vadd.f32 %v5138, %v5530
    %v5532 = vpop.f32.mrb[0].mxu0
    %5533 = vmatprep.mubr.f32.mxu0 0.0
    %v5534 = vand.u32 %v5280, 4294901760
    %v5535 = vsub.f32 %v5280, %v5534
    %v5536 = vand.u32 %v5535, 4294901760
    %v5537 = vsub.f32 %v5535, %v5536
    %v5538 = vand.u32 %v5537, 4294901760
    %5539 = vmatmul.mubr.f32.gmra.mrb[0].mxu0 %v5538
    %v5540 = vpop.f32.mrb[0].mxu0
    %v5541 = vadd.f32 %v5144, %v5540
    %v5542 = vpop.f32.mrb[0].mxu0
    %5543 = vmatprep.mubr.f32.mxu0 0.0
    %v5544 = vand.u32 %v5283, 4294901760
    %v5545 = vsub.f32 %v5283, %v5544
    %v5546 = vand.u32 %v5545, 4294901760
    %v5547 = vsub.f32 %v5545, %v5546
    %v5548 = vand.u32 %v5547, 4294901760
    %5549 = vmatmul.mubr.f32.gmra.mrb[0].mxu0 %v5548
    %v5550 = vpop.f32.mrb[0].mxu0
    %v5551 = vadd.f32 %v5150, %v5550
    %v5552 = vpop.f32.mrb[0].mxu0
    %5553 = vmatprep.mubr.f32.mxu0 0.0
    %v5554 = vand.u32 %v5286, 4294901760
    %v5555 = vsub.f32 %v5286, %v5554
    %v5556 = vand.u32 %v5555, 4294901760
    %v5557 = vsub.f32 %v5555, %v5556
    %v5558 = vand.u32 %v5557, 4294901760
    %5559 = vmatmul.mubr.f32.gmra.mrb[0].mxu0 %v5558
    %v5560 = vpop.f32.mrb[0].mxu0
    %v5561 = vadd.f32 %v5156, %v5560
    %v5562 = vpop.f32.mrb[0].mxu0
    %5563 = vmatprep.mubr.f32.mxu0 0.0
    %v5564 = vand.u32 %v5289, 4294901760
    %v5565 = vsub.f32 %v5289, %v5564
    %v5566 = vand.u32 %v5565, 4294901760
    %v5567 = vsub.f32 %v5565, %v5566
    %v5568 = vand.u32 %v5567, 4294901760
    %5569 = vmatmul.mubr.f32.gmra.mrb[0].mxu0 %v5568
    %v5570 = vpop.f32.mrb[0].mxu0
    %v5571 = vadd.f32 %v5162, %v5570
    %v5572 = vpop.f32.mrb[0].mxu0
    %5573 = vmatprep.mubr.f32.mxu0 0.0
    %v5574 = vand.u32 %v5292, 4294901760
    %v5575 = vsub.f32 %v5292, %v5574
    %v5576 = vand.u32 %v5575, 4294901760
    %v5577 = vsub.f32 %v5575, %v5576
    %v5578 = vand.u32 %v5577, 4294901760
    %5579 = vmatmul.mubr.f32.gmra.mrb[0].mxu0 %v5578
    %v5580 = vpop.f32.mrb[0].mxu0
    %v5581 = vadd.f32 %v5168, %v5580
    %v5582 = vpop.f32.mrb[0].mxu0
    %5583 = vmatprep.mubr.f32.mxu0 0.0
    %v5584 = vand.u32 %v5295, 4294901760
    %v5585 = vsub.f32 %v5295, %v5584
    %v5586 = vand.u32 %v5585, 4294901760
    %v5587 = vsub.f32 %v5585, %v5586
    %v5588 = vand.u32 %v5587, 4294901760
    %5589 = vmatmul.mubr.f32.gmra.mrb[0].mxu0 %v5588
    %v5590 = vpop.f32.mrb[0].mxu0
    %v5591 = vadd.f32 %v5174, %v5590
    %v5592 = vpop.f32.mrb[0].mxu0
    %5593 = vmatprep.mubr.f32.mxu0 0.0
    %v5594 = vand.u32 %v5298, 4294901760
    %v5595 = vsub.f32 %v5298, %v5594
    %v5596 = vand.u32 %v5595, 4294901760
    %v5597 = vsub.f32 %v5595, %v5596
    %v5598 = vand.u32 %v5597, 4294901760
    %5599 = vmatmul.mubr.f32.gmra.mrb[0].mxu0 %v5598
    %v5600 = vpop.f32.mrb[0].mxu0
    %v5601 = vadd.f32 %v5180, %v5600
    %v5602 = vpop.f32.mrb[0].mxu0
    %5603 = vmatprep.mubr.f32.mxu0 0.0
    %v5604 = vand.u32 %v5301, 4294901760
    %v5605 = vsub.f32 %v5301, %v5604
    %v5606 = vand.u32 %v5605, 4294901760
    %v5607 = vsub.f32 %v5605, %v5606
    %v5608 = vand.u32 %v5607, 4294901760
    %5609 = vmatmul.mubr.f32.gmra.mrb[0].mxu0 %v5608
    %v5610 = vpop.f32.mrb[0].mxu0
    %v5611 = vadd.f32 %v5186, %v5610
    %v5612 = vpop.f32.mrb[0].mxu0
    %5613 = vmatprep.mubr.f32.mxu0 0.0
    %v5614 = vand.u32 %v5304, 4294901760
    %v5615 = vsub.f32 %v5304, %v5614
    %v5616 = vand.u32 %v5615, 4294901760
    %v5617 = vsub.f32 %v5615, %v5616
    %v5618 = vand.u32 %v5617, 4294901760
    %5619 = vmatmul.mubr.f32.gmra.mrb[0].mxu0 %v5618
    %v5620 = vpop.f32.mrb[0].mxu0
    %v5621 = vadd.f32 %v5192, %v5620
    %v5622 = vpop.f32.mrb[0].mxu0
    %5623 = vmatprep.mubr.f32.mxu0 0.0
    %v5624 = vand.u32 %v5307, 4294901760
    %v5625 = vsub.f32 %v5307, %v5624
    %v5626 = vand.u32 %v5625, 4294901760
    %v5627 = vsub.f32 %v5625, %v5626
    %v5628 = vand.u32 %v5627, 4294901760
    %5629 = vmatmul.mubr.f32.gmra.mrb[0].mxu0 %v5628
    %v5630 = vpop.f32.mrb[0].mxu0
    %v5631 = vadd.f32 %v5198, %v5630
    %v5632 = vpop.f32.mrb[0].mxu0
    %5633 = vmatprep.mubr.f32.mxu0 0.0
    %v5634 = vand.u32 %v5310, 4294901760
    %v5635 = vsub.f32 %v5310, %v5634
    %v5636 = vand.u32 %v5635, 4294901760
    %v5637 = vsub.f32 %v5635, %v5636
    %v5638 = vand.u32 %v5637, 4294901760
    %5639 = vmatmul.mubr.f32.gmra.mrb[0].mxu0 %v5638
    %v5640 = vpop.f32.mrb[0].mxu0
    %v5641 = vadd.f32 %v5204, %v5640
    %v5642 = vpop.f32.mrb[0].mxu0
    %5643 = vmatprep.mubr.f32.mxu0 0.0
    %v5644 = vand.u32 %v5313, 4294901760
    %v5645 = vsub.f32 %v5313, %v5644
    %v5646 = vand.u32 %v5645, 4294901760
    %v5647 = vsub.f32 %v5645, %v5646
    %v5648 = vand.u32 %v5647, 4294901760
    %5649 = vmatmul.mubr.f32.gmra.mrb[0].mxu0 %v5648
    %v5650 = vpop.f32.mrb[0].mxu0
    %v5651 = vadd.f32 %v5210, %v5650
    %v5652 = vpop.f32.mrb[0].mxu0
    %5653 = vmatprep.mubr.f32.mxu0 0.0
    %v5654 = vand.u32 %v5316, 4294901760
    %v5655 = vsub.f32 %v5316, %v5654
    %v5656 = vand.u32 %v5655, 4294901760
    %v5657 = vsub.f32 %v5655, %v5656
    %v5658 = vand.u32 %v5657, 4294901760
    %5659 = vmatmul.mubr.f32.gmra.mrb[0].mxu0 %v5658
    %v5660 = vpop.f32.mrb[0].mxu0
    %v5661 = vadd.f32 %v5216, %v5660
    %v5662 = vpop.f32.mrb[0].mxu0
    %5663 = vmatprep.mubr.f32.mxu0 0.0
    %v5664 = vand.u32 %v5319, 4294901760
    %v5665 = vsub.f32 %v5319, %v5664
    %v5666 = vand.u32 %v5665, 4294901760
    %v5667 = vsub.f32 %v5665, %v5666
    %v5668 = vand.u32 %v5667, 4294901760
    %5669 = vmatmul.mubr.f32.gmra.mrb[0].mxu0 %v5668
    %v5670 = vpop.f32.mrb[0].mxu0
    %v5671 = vadd.f32 %v5222, %v5670
    %v5672 = vpop.f32.mrb[0].mxu0
    %5673 = vmatprep.mubr.f32.mxu0 0.0
    %v5674 = vand.u32 %v5322, 4294901760
    %v5675 = vsub.f32 %v5322, %v5674
    %v5676 = vand.u32 %v5675, 4294901760
    %v5677 = vsub.f32 %v5675, %v5676
    %v5678 = vand.u32 %v5677, 4294901760
    %5679 = vmatmul.mubr.f32.gmra.mrb[0].mxu0 %v5678
    %v5680 = vpop.f32.mrb[0].mxu0
    %v5681 = vadd.f32 %v5228, %v5680
    %v5682 = vpop.f32.mrb[0].mxu0
    %5683 = vmatprep.mubr.f32.mxu0 0.0
    %v5684 = vand.u32 %v5325, 4294901760
    %v5685 = vsub.f32 %v5325, %v5684
    %v5686 = vand.u32 %v5685, 4294901760
    %v5687 = vsub.f32 %v5685, %v5686
    %v5688 = vand.u32 %v5687, 4294901760
    %5689 = vmatmul.mubr.f32.gmra.mrb[0].mxu0 %v5688
    %v5690 = vpop.f32.mrb[0].mxu0
    %v5691 = vadd.f32 %v5234, %v5690
    %v5692 = vpop.f32.mrb[0].mxu0
    %5693 = vdwg.mxu0
    %5694 = vmatprep.subr.mxu0 0.0
    %v5695 = vand.u32 %v3436, 4294901760
    %v5696 = vsub.f32 %v3436, %v5695
    %v5697 = vand.u32 %v5696, 4294901760
    %v5698 = vsub.f32 %v5696, %v5697
    %v5699 = vand.u32 %v5698, 4294901760
    %5700 = vmatpush1.msra.mxu0 %v5699
    %5701 = vmatprep.subr.mxu0 0.0
    %v5702 = vand.u32 %v3437, 4294901760
    %v5703 = vsub.f32 %v3437, %v5702
    %v5704 = vand.u32 %v5703, 4294901760
    %v5705 = vsub.f32 %v5703, %v5704
    %v5706 = vand.u32 %v5705, 4294901760
    %5707 = vmatpush1.msra.mxu0 %v5706
    %5708 = vmatprep.subr.mxu0 0.0
    %5709 = vmatpush1.msra.mxu0 0.0
    %5710 = vmatprep.subr.mxu0 0.0
    %5711 = vmatpush1.msra.mxu0 0.0
    %5712 = vmatprep.subr.mxu0 0.0
    %5713 = vmatpush1.msra.mxu0 0.0
    %5714 = vmatprep.subr.mxu0 0.0
    %5715 = vmatpush1.msra.mxu0 0.0
    %5716 = vmatprep.subr.mxu0 0.0
    %5717 = vmatpush1.msra.mxu0 0.0
    %5718 = vmatprep.subr.mxu0 0.0
    %5719 = vmatpush1.msra.mxu0 0.0
    %5720 = vmatprep.subr.mxu0 0.0
    %5721 = vmatpush1.msra.mxu0 0.0
    %5722 = vmatprep.subr.mxu0 0.0
    %5723 = vmatpush1.msra.mxu0 0.0
    %5724 = vmatprep.subr.mxu0 0.0
    %5725 = vmatpush1.msra.mxu0 0.0
    %5726 = vmatprep.subr.mxu0 0.0
    %5727 = vmatpush1.msra.mxu0 0.0
    %5728 = vmatprep.subr.mxu0 0.0
    %5729 = vmatpush1.msra.mxu0 0.0
    %5730 = vmatprep.subr.mxu0 0.0
    %5731 = vmatpush1.msra.mxu0 0.0
    %5732 = vmatprep.subr.mxu0 0.0
    %5733 = vmatpush1.msra.mxu0 0.0
    %5734 = vmatprep.subr.mxu0 0.0
    %5735 = vmatpush1.msra.mxu0 0.0
    %5736 = vmatprep.subr.mxu0 0.0
    %5737 = vmatpush1.msra.mxu0 0.0
    %5738 = vmatprep.subr.mxu0 0.0
    %5739 = vmatpush1.msra.mxu0 0.0
    %5740 = vmatprep.subr.mxu0 0.0
    %5741 = vmatpush1.msra.mxu0 0.0
    %5742 = vmatprep.subr.mxu0 0.0
    %5743 = vmatpush1.msra.mxu0 0.0
    %5744 = vmatprep.subr.mxu0 0.0
    %5745 = vmatpush1.msra.mxu0 0.0
    %5746 = vmatprep.subr.mxu0 0.0
    %5747 = vmatpush1.msra.mxu0 0.0
    %5748 = vmatprep.subr.mxu0 0.0
    %5749 = vmatpush1.msra.mxu0 0.0
    %5750 = vmatprep.subr.mxu0 0.0
    %5751 = vmatpush1.msra.mxu0 0.0
    %5752 = vmatprep.subr.mxu0 0.0
    %5753 = vmatpush1.msra.mxu0 0.0
    %5754 = vmatprep.subr.mxu0 0.0
    %5755 = vmatpush1.msra.mxu0 0.0
    %5756 = vmatprep.subr.mxu0 0.0
    %5757 = vmatpush1.msra.mxu0 0.0
    %5758 = vmatprep.subr.mxu0 0.0
    %5759 = vmatpush1.msra.mxu0 0.0
    %5760 = vmatprep.subr.mxu0 0.0
    %5761 = vmatpush1.msra.mxu0 0.0
    %5762 = vmatprep.subr.mxu0 0.0
    %5763 = vmatpush1.msra.mxu0 0.0
    %5764 = vmatprep.subr.mxu0 0.0
    %5765 = vmatpush1.msra.mxu0 0.0
    %5766 = vmatprep.subr.mxu0 0.0
    %5767 = vmatpush1.msra.mxu0 0.0
    %5768 = vmatprep.mubr.f32.mxu0 0.0
    %v5769 = vand.u32 %v5238, 4294901760
    %5770 = vmatmul.mubr.f32.gmra.mrb[0].mxu0 %v5769
    %v5771 = vpop.f32.mrb[0].mxu0
    %v5772 = vadd.f32 %v5401, %v5771
    %v5773 = vpop.f32.mrb[0].mxu0
    %5774 = vmatprep.mubr.f32.mxu0 0.0
    %v5775 = vand.u32 %v5241, 4294901760
    %5776 = vmatmul.mubr.f32.gmra.mrb[0].mxu0 %v5775
    %v5777 = vpop.f32.mrb[0].mxu0
    %v5778 = vadd.f32 %v5411, %v5777
    %v5779 = vpop.f32.mrb[0].mxu0
    %5780 = vmatprep.mubr.f32.mxu0 0.0
    %v5781 = vand.u32 %v5244, 4294901760
    %5782 = vmatmul.mubr.f32.gmra.mrb[0].mxu0 %v5781
    %v5783 = vpop.f32.mrb[0].mxu0
    %v5784 = vadd.f32 %v5421, %v5783
    %v5785 = vpop.f32.mrb[0].mxu0
    %5786 = vmatprep.mubr.f32.mxu0 0.0
    %v5787 = vand.u32 %v5247, 4294901760
    %5788 = vmatmul.mubr.f32.gmra.mrb[0].mxu0 %v5787
    %v5789 = vpop.f32.mrb[0].mxu0
    %v5790 = vadd.f32 %v5431, %v5789
    %v5791 = vpop.f32.mrb[0].mxu0
    %5792 = vmatprep.mubr.f32.mxu0 0.0
    %v5793 = vand.u32 %v5250, 4294901760
    %5794 = vmatmul.mubr.f32.gmra.mrb[0].mxu0 %v5793
    %v5795 = vpop.f32.mrb[0].mxu0
    %v5796 = vadd.f32 %v5441, %v5795
    %v5797 = vpop.f32.mrb[0].mxu0
    %5798 = vmatprep.mubr.f32.mxu0 0.0
    %v5799 = vand.u32 %v5253, 4294901760
    %5800 = vmatmul.mubr.f32.gmra.mrb[0].mxu0 %v5799
    %v5801 = vpop.f32.mrb[0].mxu0
    %v5802 = vadd.f32 %v5451, %v5801
    %v5803 = vpop.f32.mrb[0].mxu0
    %5804 = vmatprep.mubr.f32.mxu0 0.0
    %v5805 = vand.u32 %v5256, 4294901760
    %5806 = vmatmul.mubr.f32.gmra.mrb[0].mxu0 %v5805
    %v5807 = vpop.f32.mrb[0].mxu0
    %v5808 = vadd.f32 %v5461, %v5807
    %v5809 = vpop.f32.mrb[0].mxu0
    %5810 = vmatprep.mubr.f32.mxu0 0.0
    %v5811 = vand.u32 %v5259, 4294901760
    %5812 = vmatmul.mubr.f32.gmra.mrb[0].mxu0 %v5811
    %v5813 = vpop.f32.mrb[0].mxu0
    %v5814 = vadd.f32 %v5471, %v5813
    %v5815 = vpop.f32.mrb[0].mxu0
    %5816 = vmatprep.mubr.f32.mxu0 0.0
    %v5817 = vand.u32 %v5262, 4294901760
    %5818 = vmatmul.mubr.f32.gmra.mrb[0].mxu0 %v5817
    %v5819 = vpop.f32.mrb[0].mxu0
    %v5820 = vadd.f32 %v5481, %v5819
    %v5821 = vpop.f32.mrb[0].mxu0
    %5822 = vmatprep.mubr.f32.mxu0 0.0
    %v5823 = vand.u32 %v5265, 4294901760
    %5824 = vmatmul.mubr.f32.gmra.mrb[0].mxu0 %v5823
    %v5825 = vpop.f32.mrb[0].mxu0
    %v5826 = vadd.f32 %v5491, %v5825
    %v5827 = vpop.f32.mrb[0].mxu0
    %5828 = vmatprep.mubr.f32.mxu0 0.0
    %v5829 = vand.u32 %v5268, 4294901760
    %5830 = vmatmul.mubr.f32.gmra.mrb[0].mxu0 %v5829
    %v5831 = vpop.f32.mrb[0].mxu0
    %v5832 = vadd.f32 %v5501, %v5831
    %v5833 = vpop.f32.mrb[0].mxu0
    %5834 = vmatprep.mubr.f32.mxu0 0.0
    %v5835 = vand.u32 %v5271, 4294901760
    %5836 = vmatmul.mubr.f32.gmra.mrb[0].mxu0 %v5835
    %v5837 = vpop.f32.mrb[0].mxu0
    %v5838 = vadd.f32 %v5511, %v5837
    %v5839 = vpop.f32.mrb[0].mxu0
    %5840 = vmatprep.mubr.f32.mxu0 0.0
    %v5841 = vand.u32 %v5274, 4294901760
    %5842 = vmatmul.mubr.f32.gmra.mrb[0].mxu0 %v5841
    %v5843 = vpop.f32.mrb[0].mxu0
    %v5844 = vadd.f32 %v5521, %v5843
    %v5845 = vpop.f32.mrb[0].mxu0
    %5846 = vmatprep.mubr.f32.mxu0 0.0
    %v5847 = vand.u32 %v5277, 4294901760
    %5848 = vmatmul.mubr.f32.gmra.mrb[0].mxu0 %v5847
    %v5849 = vpop.f32.mrb[0].mxu0
    %v5850 = vadd.f32 %v5531, %v5849
    %v5851 = vpop.f32.mrb[0].mxu0
    %5852 = vmatprep.mubr.f32.mxu0 0.0
    %v5853 = vand.u32 %v5280, 4294901760
    %5854 = vmatmul.mubr.f32.gmra.mrb[0].mxu0 %v5853
    %v5855 = vpop.f32.mrb[0].mxu0
    %v5856 = vadd.f32 %v5541, %v5855
    %v5857 = vpop.f32.mrb[0].mxu0
    %5858 = vmatprep.mubr.f32.mxu0 0.0
    %v5859 = vand.u32 %v5283, 4294901760
    %5860 = vmatmul.mubr.f32.gmra.mrb[0].mxu0 %v5859
    %v5861 = vpop.f32.mrb[0].mxu0
    %v5862 = vadd.f32 %v5551, %v5861
    %v5863 = vpop.f32.mrb[0].mxu0
    %5864 = vmatprep.mubr.f32.mxu0 0.0
    %v5865 = vand.u32 %v5286, 4294901760
    %5866 = vmatmul.mubr.f32.gmra.mrb[0].mxu0 %v5865
    %v5867 = vpop.f32.mrb[0].mxu0
    %v5868 = vadd.f32 %v5561, %v5867
    %v5869 = vpop.f32.mrb[0].mxu0
    %5870 = vmatprep.mubr.f32.mxu0 0.0
    %v5871 = vand.u32 %v5289, 4294901760
    %5872 = vmatmul.mubr.f32.gmra.mrb[0].mxu0 %v5871
    %v5873 = vpop.f32.mrb[0].mxu0
    %v5874 = vadd.f32 %v5571, %v5873
    %v5875 = vpop.f32.mrb[0].mxu0
    %5876 = vmatprep.mubr.f32.mxu0 0.0
    %v5877 = vand.u32 %v5292, 4294901760
    %5878 = vmatmul.mubr.f32.gmra.mrb[0].mxu0 %v5877
    %v5879 = vpop.f32.mrb[0].mxu0
    %v5880 = vadd.f32 %v5581, %v5879
    %v5881 = vpop.f32.mrb[0].mxu0
    %5882 = vmatprep.mubr.f32.mxu0 0.0
    %v5883 = vand.u32 %v5295, 4294901760
    %5884 = vmatmul.mubr.f32.gmra.mrb[0].mxu0 %v5883
    %v5885 = vpop.f32.mrb[0].mxu0
    %v5886 = vadd.f32 %v5591, %v5885
    %v5887 = vpop.f32.mrb[0].mxu0
    %5888 = vmatprep.mubr.f32.mxu0 0.0
    %v5889 = vand.u32 %v5298, 4294901760
    %5890 = vmatmul.mubr.f32.gmra.mrb[0].mxu0 %v5889
    %v5891 = vpop.f32.mrb[0].mxu0
    %v5892 = vadd.f32 %v5601, %v5891
    %v5893 = vpop.f32.mrb[0].mxu0
    %5894 = vmatprep.mubr.f32.mxu0 0.0
    %v5895 = vand.u32 %v5301, 4294901760
    %5896 = vmatmul.mubr.f32.gmra.mrb[0].mxu0 %v5895
    %v5897 = vpop.f32.mrb[0].mxu0
    %v5898 = vadd.f32 %v5611, %v5897
    %v5899 = vpop.f32.mrb[0].mxu0
    %5900 = vmatprep.mubr.f32.mxu0 0.0
    %v5901 = vand.u32 %v5304, 4294901760
    %5902 = vmatmul.mubr.f32.gmra.mrb[0].mxu0 %v5901
    %v5903 = vpop.f32.mrb[0].mxu0
    %v5904 = vadd.f32 %v5621, %v5903
    %v5905 = vpop.f32.mrb[0].mxu0
    %5906 = vmatprep.mubr.f32.mxu0 0.0
    %v5907 = vand.u32 %v5307, 4294901760
    %5908 = vmatmul.mubr.f32.gmra.mrb[0].mxu0 %v5907
    %v5909 = vpop.f32.mrb[0].mxu0
    %v5910 = vadd.f32 %v5631, %v5909
    %v5911 = vpop.f32.mrb[0].mxu0
    %5912 = vmatprep.mubr.f32.mxu0 0.0
    %v5913 = vand.u32 %v5310, 4294901760
    %5914 = vmatmul.mubr.f32.gmra.mrb[0].mxu0 %v5913
    %v5915 = vpop.f32.mrb[0].mxu0
    %v5916 = vadd.f32 %v5641, %v5915
    %v5917 = vpop.f32.mrb[0].mxu0
    %5918 = vmatprep.mubr.f32.mxu0 0.0
    %v5919 = vand.u32 %v5313, 4294901760
    %5920 = vmatmul.mubr.f32.gmra.mrb[0].mxu0 %v5919
    %v5921 = vpop.f32.mrb[0].mxu0
    %v5922 = vadd.f32 %v5651, %v5921
    %v5923 = vpop.f32.mrb[0].mxu0
    %5924 = vmatprep.mubr.f32.mxu0 0.0
    %v5925 = vand.u32 %v5316, 4294901760
    %5926 = vmatmul.mubr.f32.gmra.mrb[0].mxu0 %v5925
    %v5927 = vpop.f32.mrb[0].mxu0
    %v5928 = vadd.f32 %v5661, %v5927
    %v5929 = vpop.f32.mrb[0].mxu0
    %5930 = vmatprep.mubr.f32.mxu0 0.0
    %v5931 = vand.u32 %v5319, 4294901760
    %5932 = vmatmul.mubr.f32.gmra.mrb[0].mxu0 %v5931
    %v5933 = vpop.f32.mrb[0].mxu0
    %v5934 = vadd.f32 %v5671, %v5933
    %v5935 = vpop.f32.mrb[0].mxu0
    %5936 = vmatprep.mubr.f32.mxu0 0.0
    %v5937 = vand.u32 %v5322, 4294901760
    %5938 = vmatmul.mubr.f32.gmra.mrb[0].mxu0 %v5937
    %v5939 = vpop.f32.mrb[0].mxu0
    %v5940 = vadd.f32 %v5681, %v5939
    %v5941 = vpop.f32.mrb[0].mxu0
    %5942 = vmatprep.mubr.f32.mxu0 0.0
    %v5943 = vand.u32 %v5325, 4294901760
    %5944 = vmatmul.mubr.f32.gmra.mrb[0].mxu0 %v5943
    %v5945 = vpop.f32.mrb[0].mxu0
    %v5946 = vadd.f32 %v5691, %v5945
    %v5947 = vpop.f32.mrb[0].mxu0
    %5948 = vdwg.mxu0
    %5949 = vmatprep.subr.mxu0 0.0
    %v5950 = vand.u32 %v3436, 4294901760
    %v5951 = vsub.f32 %v3436, %v5950
    %5952 = vmatpush1.msra.mxu0 %v5951
    %5953 = vmatprep.subr.mxu0 0.0
    %v5954 = vand.u32 %v3437, 4294901760
    %v5955 = vsub.f32 %v3437, %v5954
    %5956 = vmatpush1.msra.mxu0 %v5955
    %5957 = vmatprep.subr.mxu0 0.0
    %5958 = vmatpush1.msra.mxu0 0.0
    %5959 = vmatprep.subr.mxu0 0.0
    %5960 = vmatpush1.msra.mxu0 0.0
    %5961 = vmatprep.subr.mxu0 0.0
    %5962 = vmatpush1.msra.mxu0 0.0
    %5963 = vmatprep.subr.mxu0 0.0
    %5964 = vmatpush1.msra.mxu0 0.0
    %5965 = vmatprep.subr.mxu0 0.0
    %5966 = vmatpush1.msra.mxu0 0.0
    %5967 = vmatprep.subr.mxu0 0.0
    %5968 = vmatpush1.msra.mxu0 0.0
    %5969 = vmatprep.subr.mxu0 0.0
    %5970 = vmatpush1.msra.mxu0 0.0
    %5971 = vmatprep.subr.mxu0 0.0
    %5972 = vmatpush1.msra.mxu0 0.0
    %5973 = vmatprep.subr.mxu0 0.0
    %5974 = vmatpush1.msra.mxu0 0.0
    %5975 = vmatprep.subr.mxu0 0.0
    %5976 = vmatpush1.msra.mxu0 0.0
    %5977 = vmatprep.subr.mxu0 0.0
    %5978 = vmatpush1.msra.mxu0 0.0
    %5979 = vmatprep.subr.mxu0 0.0
    %5980 = vmatpush1.msra.mxu0 0.0
    %5981 = vmatprep.subr.mxu0 0.0
    %5982 = vmatpush1.msra.mxu0 0.0
    %5983 = vmatprep.subr.mxu0 0.0
    %5984 = vmatpush1.msra.mxu0 0.0
    %5985 = vmatprep.subr.mxu0 0.0
    %5986 = vmatpush1.msra.mxu0 0.0
    %5987 = vmatprep.subr.mxu0 0.0
    %5988 = vmatpush1.msra.mxu0 0.0
    %5989 = vmatprep.subr.mxu0 0.0
    %5990 = vmatpush1.msra.mxu0 0.0
    %5991 = vmatprep.subr.mxu0 0.0
    %5992 = vmatpush1.msra.mxu0 0.0
    %5993 = vmatprep.subr.mxu0 0.0
    %5994 = vmatpush1.msra.mxu0 0.0
    %5995 = vmatprep.subr.mxu0 0.0
    %5996 = vmatpush1.msra.mxu0 0.0
    %5997 = vmatprep.subr.mxu0 0.0
    %5998 = vmatpush1.msra.mxu0 0.0
    %5999 = vmatprep.subr.mxu0 0.0
    %6000 = vmatpush1.msra.mxu0 0.0
    %6001 = vmatprep.subr.mxu0 0.0
    %6002 = vmatpush1.msra.mxu0 0.0
    %6003 = vmatprep.subr.mxu0 0.0
    %6004 = vmatpush1.msra.mxu0 0.0
    %6005 = vmatprep.subr.mxu0 0.0
    %6006 = vmatpush1.msra.mxu0 0.0
    %6007 = vmatprep.subr.mxu0 0.0
    %6008 = vmatpush1.msra.mxu0 0.0
    %6009 = vmatprep.subr.mxu0 0.0
    %6010 = vmatpush1.msra.mxu0 0.0
    %6011 = vmatprep.subr.mxu0 0.0
    %6012 = vmatpush1.msra.mxu0 0.0
    %6013 = vmatprep.subr.mxu0 0.0
    %6014 = vmatpush1.msra.mxu0 0.0
    %6015 = vmatprep.subr.mxu0 0.0
    %6016 = vmatpush1.msra.mxu0 0.0
    %6017 = vmatprep.mubr.f32.mxu0 0.0
    %v6018 = vand.u32 %v5238, 4294901760
    %v6019 = vsub.f32 %v5238, %v6018
    %6020 = vmatmul.mubr.f32.gmra.mrb[0].mxu0 %v6019
    %v6021 = vpop.f32.mrb[0].mxu0
    %v6022 = vadd.f32 %v5772, %v6021
    %v6023 = vpop.f32.mrb[0].mxu0
    %6024 = vmatprep.mubr.f32.mxu0 0.0
    %v6025 = vand.u32 %v5241, 4294901760
    %v6026 = vsub.f32 %v5241, %v6025
    %6027 = vmatmul.mubr.f32.gmra.mrb[0].mxu0 %v6026
    %v6028 = vpop.f32.mrb[0].mxu0
    %v6029 = vadd.f32 %v5778, %v6028
    %v6030 = vpop.f32.mrb[0].mxu0
    %6031 = vmatprep.mubr.f32.mxu0 0.0
    %v6032 = vand.u32 %v5244, 4294901760
    %v6033 = vsub.f32 %v5244, %v6032
    %6034 = vmatmul.mubr.f32.gmra.mrb[0].mxu0 %v6033
    %v6035 = vpop.f32.mrb[0].mxu0
    %v6036 = vadd.f32 %v5784, %v6035
    %v6037 = vpop.f32.mrb[0].mxu0
    %6038 = vmatprep.mubr.f32.mxu0 0.0
    %v6039 = vand.u32 %v5247, 4294901760
    %v6040 = vsub.f32 %v5247, %v6039
    %6041 = vmatmul.mubr.f32.gmra.mrb[0].mxu0 %v6040
    %v6042 = vpop.f32.mrb[0].mxu0
    %v6043 = vadd.f32 %v5790, %v6042
    %v6044 = vpop.f32.mrb[0].mxu0
    %6045 = vmatprep.mubr.f32.mxu0 0.0
    %v6046 = vand.u32 %v5250, 4294901760
    %v6047 = vsub.f32 %v5250, %v6046
    %6048 = vmatmul.mubr.f32.gmra.mrb[0].mxu0 %v6047
    %v6049 = vpop.f32.mrb[0].mxu0
    %v6050 = vadd.f32 %v5796, %v6049
    %v6051 = vpop.f32.mrb[0].mxu0
    %6052 = vmatprep.mubr.f32.mxu0 0.0
    %v6053 = vand.u32 %v5253, 4294901760
    %v6054 = vsub.f32 %v5253, %v6053
    %6055 = vmatmul.mubr.f32.gmra.mrb[0].mxu0 %v6054
    %v6056 = vpop.f32.mrb[0].mxu0
    %v6057 = vadd.f32 %v5802, %v6056
    %v6058 = vpop.f32.mrb[0].mxu0
    %6059 = vmatprep.mubr.f32.mxu0 0.0
    %v6060 = vand.u32 %v5256, 4294901760
    %v6061 = vsub.f32 %v5256, %v6060
    %6062 = vmatmul.mubr.f32.gmra.mrb[0].mxu0 %v6061
    %v6063 = vpop.f32.mrb[0].mxu0
    %v6064 = vadd.f32 %v5808, %v6063
    %v6065 = vpop.f32.mrb[0].mxu0
    %6066 = vmatprep.mubr.f32.mxu0 0.0
    %v6067 = vand.u32 %v5259, 4294901760
    %v6068 = vsub.f32 %v5259, %v6067
    %6069 = vmatmul.mubr.f32.gmra.mrb[0].mxu0 %v6068
    %v6070 = vpop.f32.mrb[0].mxu0
    %v6071 = vadd.f32 %v5814, %v6070
    %v6072 = vpop.f32.mrb[0].mxu0
    %6073 = vmatprep.mubr.f32.mxu0 0.0
    %v6074 = vand.u32 %v5262, 4294901760
    %v6075 = vsub.f32 %v5262, %v6074
    %6076 = vmatmul.mubr.f32.gmra.mrb[0].mxu0 %v6075
    %v6077 = vpop.f32.mrb[0].mxu0
    %v6078 = vadd.f32 %v5820, %v6077
    %v6079 = vpop.f32.mrb[0].mxu0
    %6080 = vmatprep.mubr.f32.mxu0 0.0
    %v6081 = vand.u32 %v5265, 4294901760
    %v6082 = vsub.f32 %v5265, %v6081
    %6083 = vmatmul.mubr.f32.gmra.mrb[0].mxu0 %v6082
    %v6084 = vpop.f32.mrb[0].mxu0
    %v6085 = vadd.f32 %v5826, %v6084
    %v6086 = vpop.f32.mrb[0].mxu0
    %6087 = vmatprep.mubr.f32.mxu0 0.0
    %v6088 = vand.u32 %v5268, 4294901760
    %v6089 = vsub.f32 %v5268, %v6088
    %6090 = vmatmul.mubr.f32.gmra.mrb[0].mxu0 %v6089
    %v6091 = vpop.f32.mrb[0].mxu0
    %v6092 = vadd.f32 %v5832, %v6091
    %v6093 = vpop.f32.mrb[0].mxu0
    %6094 = vmatprep.mubr.f32.mxu0 0.0
    %v6095 = vand.u32 %v5271, 4294901760
    %v6096 = vsub.f32 %v5271, %v6095
    %6097 = vmatmul.mubr.f32.gmra.mrb[0].mxu0 %v6096
    %v6098 = vpop.f32.mrb[0].mxu0
    %v6099 = vadd.f32 %v5838, %v6098
    %v6100 = vpop.f32.mrb[0].mxu0
    %6101 = vmatprep.mubr.f32.mxu0 0.0
    %v6102 = vand.u32 %v5274, 4294901760
    %v6103 = vsub.f32 %v5274, %v6102
    %6104 = vmatmul.mubr.f32.gmra.mrb[0].mxu0 %v6103
    %v6105 = vpop.f32.mrb[0].mxu0
    %v6106 = vadd.f32 %v5844, %v6105
    %v6107 = vpop.f32.mrb[0].mxu0
    %6108 = vmatprep.mubr.f32.mxu0 0.0
    %v6109 = vand.u32 %v5277, 4294901760
    %v6110 = vsub.f32 %v5277, %v6109
    %6111 = vmatmul.mubr.f32.gmra.mrb[0].mxu0 %v6110
    %v6112 = vpop.f32.mrb[0].mxu0
    %v6113 = vadd.f32 %v5850, %v6112
    %v6114 = vpop.f32.mrb[0].mxu0
    %6115 = vmatprep.mubr.f32.mxu0 0.0
    %v6116 = vand.u32 %v5280, 4294901760
    %v6117 = vsub.f32 %v5280, %v6116
    %6118 = vmatmul.mubr.f32.gmra.mrb[0].mxu0 %v6117
    %v6119 = vpop.f32.mrb[0].mxu0
    %v6120 = vadd.f32 %v5856, %v6119
    %v6121 = vpop.f32.mrb[0].mxu0
    %6122 = vmatprep.mubr.f32.mxu0 0.0
    %v6123 = vand.u32 %v5283, 4294901760
    %v6124 = vsub.f32 %v5283, %v6123
    %6125 = vmatmul.mubr.f32.gmra.mrb[0].mxu0 %v6124
    %v6126 = vpop.f32.mrb[0].mxu0
    %v6127 = vadd.f32 %v5862, %v6126
    %v6128 = vpop.f32.mrb[0].mxu0
    %6129 = vmatprep.mubr.f32.mxu0 0.0
    %v6130 = vand.u32 %v5286, 4294901760
    %v6131 = vsub.f32 %v5286, %v6130
    %6132 = vmatmul.mubr.f32.gmra.mrb[0].mxu0 %v6131
    %v6133 = vpop.f32.mrb[0].mxu0
    %v6134 = vadd.f32 %v5868, %v6133
    %v6135 = vpop.f32.mrb[0].mxu0
    %6136 = vmatprep.mubr.f32.mxu0 0.0
    %v6137 = vand.u32 %v5289, 4294901760
    %v6138 = vsub.f32 %v5289, %v6137
    %6139 = vmatmul.mubr.f32.gmra.mrb[0].mxu0 %v6138
    %v6140 = vpop.f32.mrb[0].mxu0
    %v6141 = vadd.f32 %v5874, %v6140
    %v6142 = vpop.f32.mrb[0].mxu0
    %6143 = vmatprep.mubr.f32.mxu0 0.0
    %v6144 = vand.u32 %v5292, 4294901760
    %v6145 = vsub.f32 %v5292, %v6144
    %6146 = vmatmul.mubr.f32.gmra.mrb[0].mxu0 %v6145
    %v6147 = vpop.f32.mrb[0].mxu0
    %v6148 = vadd.f32 %v5880, %v6147
    %v6149 = vpop.f32.mrb[0].mxu0
    %6150 = vmatprep.mubr.f32.mxu0 0.0
    %v6151 = vand.u32 %v5295, 4294901760
    %v6152 = vsub.f32 %v5295, %v6151
    %6153 = vmatmul.mubr.f32.gmra.mrb[0].mxu0 %v6152
    %v6154 = vpop.f32.mrb[0].mxu0
    %v6155 = vadd.f32 %v5886, %v6154
    %v6156 = vpop.f32.mrb[0].mxu0
    %6157 = vmatprep.mubr.f32.mxu0 0.0
    %v6158 = vand.u32 %v5298, 4294901760
    %v6159 = vsub.f32 %v5298, %v6158
    %6160 = vmatmul.mubr.f32.gmra.mrb[0].mxu0 %v6159
    %v6161 = vpop.f32.mrb[0].mxu0
    %v6162 = vadd.f32 %v5892, %v6161
    %v6163 = vpop.f32.mrb[0].mxu0
    %6164 = vmatprep.mubr.f32.mxu0 0.0
    %v6165 = vand.u32 %v5301, 4294901760
    %v6166 = vsub.f32 %v5301, %v6165
    %6167 = vmatmul.mubr.f32.gmra.mrb[0].mxu0 %v6166
    %v6168 = vpop.f32.mrb[0].mxu0
    %v6169 = vadd.f32 %v5898, %v6168
    %v6170 = vpop.f32.mrb[0].mxu0
    %6171 = vmatprep.mubr.f32.mxu0 0.0
    %v6172 = vand.u32 %v5304, 4294901760
    %v6173 = vsub.f32 %v5304, %v6172
    %6174 = vmatmul.mubr.f32.gmra.mrb[0].mxu0 %v6173
    %v6175 = vpop.f32.mrb[0].mxu0
    %v6176 = vadd.f32 %v5904, %v6175
    %v6177 = vpop.f32.mrb[0].mxu0
    %6178 = vmatprep.mubr.f32.mxu0 0.0
    %v6179 = vand.u32 %v5307, 4294901760
    %v6180 = vsub.f32 %v5307, %v6179
    %6181 = vmatmul.mubr.f32.gmra.mrb[0].mxu0 %v6180
    %v6182 = vpop.f32.mrb[0].mxu0
    %v6183 = vadd.f32 %v5910, %v6182
    %v6184 = vpop.f32.mrb[0].mxu0
    %6185 = vmatprep.mubr.f32.mxu0 0.0
    %v6186 = vand.u32 %v5310, 4294901760
    %v6187 = vsub.f32 %v5310, %v6186
    %6188 = vmatmul.mubr.f32.gmra.mrb[0].mxu0 %v6187
    %v6189 = vpop.f32.mrb[0].mxu0
    %v6190 = vadd.f32 %v5916, %v6189
    %v6191 = vpop.f32.mrb[0].mxu0
    %6192 = vmatprep.mubr.f32.mxu0 0.0
    %v6193 = vand.u32 %v5313, 4294901760
    %v6194 = vsub.f32 %v5313, %v6193
    %6195 = vmatmul.mubr.f32.gmra.mrb[0].mxu0 %v6194
    %v6196 = vpop.f32.mrb[0].mxu0
    %v6197 = vadd.f32 %v5922, %v6196
    %v6198 = vpop.f32.mrb[0].mxu0
    %6199 = vmatprep.mubr.f32.mxu0 0.0
    %v6200 = vand.u32 %v5316, 4294901760
    %v6201 = vsub.f32 %v5316, %v6200
    %6202 = vmatmul.mubr.f32.gmra.mrb[0].mxu0 %v6201
    %v6203 = vpop.f32.mrb[0].mxu0
    %v6204 = vadd.f32 %v5928, %v6203
    %v6205 = vpop.f32.mrb[0].mxu0
    %6206 = vmatprep.mubr.f32.mxu0 0.0
    %v6207 = vand.u32 %v5319, 4294901760
    %v6208 = vsub.f32 %v5319, %v6207
    %6209 = vmatmul.mubr.f32.gmra.mrb[0].mxu0 %v6208
    %v6210 = vpop.f32.mrb[0].mxu0
    %v6211 = vadd.f32 %v5934, %v6210
    %v6212 = vpop.f32.mrb[0].mxu0
    %6213 = vmatprep.mubr.f32.mxu0 0.0
    %v6214 = vand.u32 %v5322, 4294901760
    %v6215 = vsub.f32 %v5322, %v6214
    %6216 = vmatmul.mubr.f32.gmra.mrb[0].mxu0 %v6215
    %v6217 = vpop.f32.mrb[0].mxu0
    %v6218 = vadd.f32 %v5940, %v6217
    %v6219 = vpop.f32.mrb[0].mxu0
    %6220 = vmatprep.mubr.f32.mxu0 0.0
    %v6221 = vand.u32 %v5325, 4294901760
    %v6222 = vsub.f32 %v5325, %v6221
    %6223 = vmatmul.mubr.f32.gmra.mrb[0].mxu0 %v6222
    %v6224 = vpop.f32.mrb[0].mxu0
    %v6225 = vadd.f32 %v5946, %v6224
    %v6226 = vpop.f32.mrb[0].mxu0
    %6227 = vdwg.mxu0
    %6228 = vmatprep.subr.mxu0 0.0
    %v6229 = vand.u32 %v3436, 4294901760
    %6230 = vmatpush1.msra.mxu0 %v6229
    %6231 = vmatprep.subr.mxu0 0.0
    %v6232 = vand.u32 %v3437, 4294901760
    %6233 = vmatpush1.msra.mxu0 %v6232
    %6234 = vmatprep.subr.mxu0 0.0
    %6235 = vmatpush1.msra.mxu0 0.0
    %6236 = vmatprep.subr.mxu0 0.0
    %6237 = vmatpush1.msra.mxu0 0.0
    %6238 = vmatprep.subr.mxu0 0.0
    %6239 = vmatpush1.msra.mxu0 0.0
    %6240 = vmatprep.subr.mxu0 0.0
    %6241 = vmatpush1.msra.mxu0 0.0
    %6242 = vmatprep.subr.mxu0 0.0
    %6243 = vmatpush1.msra.mxu0 0.0
    %6244 = vmatprep.subr.mxu0 0.0
    %6245 = vmatpush1.msra.mxu0 0.0
    %6246 = vmatprep.subr.mxu0 0.0
    %6247 = vmatpush1.msra.mxu0 0.0
    %6248 = vmatprep.subr.mxu0 0.0
    %6249 = vmatpush1.msra.mxu0 0.0
    %6250 = vmatprep.subr.mxu0 0.0
    %6251 = vmatpush1.msra.mxu0 0.0
    %6252 = vmatprep.subr.mxu0 0.0
    %6253 = vmatpush1.msra.mxu0 0.0
    %6254 = vmatprep.subr.mxu0 0.0
    %6255 = vmatpush1.msra.mxu0 0.0
    %6256 = vmatprep.subr.mxu0 0.0
    %6257 = vmatpush1.msra.mxu0 0.0
    %6258 = vmatprep.subr.mxu0 0.0
    %6259 = vmatpush1.msra.mxu0 0.0
    %6260 = vmatprep.subr.mxu0 0.0
    %6261 = vmatpush1.msra.mxu0 0.0
    %6262 = vmatprep.subr.mxu0 0.0
    %6263 = vmatpush1.msra.mxu0 0.0
    %6264 = vmatprep.subr.mxu0 0.0
    %6265 = vmatpush1.msra.mxu0 0.0
    %6266 = vmatprep.subr.mxu0 0.0
    %6267 = vmatpush1.msra.mxu0 0.0
    %6268 = vmatprep.subr.mxu0 0.0
    %6269 = vmatpush1.msra.mxu0 0.0
    %6270 = vmatprep.subr.mxu0 0.0
    %6271 = vmatpush1.msra.mxu0 0.0
    %6272 = vmatprep.subr.mxu0 0.0
    %6273 = vmatpush1.msra.mxu0 0.0
    %6274 = vmatprep.subr.mxu0 0.0
    %6275 = vmatpush1.msra.mxu0 0.0
    %6276 = vmatprep.subr.mxu0 0.0
    %6277 = vmatpush1.msra.mxu0 0.0
    %6278 = vmatprep.subr.mxu0 0.0
    %6279 = vmatpush1.msra.mxu0 0.0
    %6280 = vmatprep.subr.mxu0 0.0
    %6281 = vmatpush1.msra.mxu0 0.0
    %6282 = vmatprep.subr.mxu0 0.0
    %6283 = vmatpush1.msra.mxu0 0.0
    %6284 = vmatprep.subr.mxu0 0.0
    %6285 = vmatpush1.msra.mxu0 0.0
    %6286 = vmatprep.subr.mxu0 0.0
    %6287 = vmatpush1.msra.mxu0 0.0
    %6288 = vmatprep.subr.mxu0 0.0
    %6289 = vmatpush1.msra.mxu0 0.0
    %6290 = vmatprep.subr.mxu0 0.0
    %6291 = vmatpush1.msra.mxu0 0.0
    %6292 = vmatprep.subr.mxu0 0.0
    %6293 = vmatpush1.msra.mxu0 0.0
    %6294 = vmatprep.mubr.f32.mxu0 0.0
    %v6295 = vand.u32 %v5238, 4294901760
    %v6296 = vsub.f32 %v5238, %v6295
    %v6297 = vand.u32 %v6296, 4294901760
    %6298 = vmatmul.mubr.f32.gmra.mrb[0].mxu0 %v6297
    %v6299 = vpop.f32.mrb[0].mxu0
    %v6300 = vadd.f32 %v6022, %v6299
    %v6301 = vpop.f32.mrb[0].mxu0
    %6302 = vmatprep.mubr.f32.mxu0 0.0
    %v6303 = vand.u32 %v5241, 4294901760
    %v6304 = vsub.f32 %v5241, %v6303
    %v6305 = vand.u32 %v6304, 4294901760
    %6306 = vmatmul.mubr.f32.gmra.mrb[0].mxu0 %v6305
    %v6307 = vpop.f32.mrb[0].mxu0
    %v6308 = vadd.f32 %v6029, %v6307
    %v6309 = vpop.f32.mrb[0].mxu0
    %6310 = vmatprep.mubr.f32.mxu0 0.0
    %v6311 = vand.u32 %v5244, 4294901760
    %v6312 = vsub.f32 %v5244, %v6311
    %v6313 = vand.u32 %v6312, 4294901760
    %6314 = vmatmul.mubr.f32.gmra.mrb[0].mxu0 %v6313
    %v6315 = vpop.f32.mrb[0].mxu0
    %v6316 = vadd.f32 %v6036, %v6315
    %v6317 = vpop.f32.mrb[0].mxu0
    %6318 = vmatprep.mubr.f32.mxu0 0.0
    %v6319 = vand.u32 %v5247, 4294901760
    %v6320 = vsub.f32 %v5247, %v6319
    %v6321 = vand.u32 %v6320, 4294901760
    %6322 = vmatmul.mubr.f32.gmra.mrb[0].mxu0 %v6321
    %v6323 = vpop.f32.mrb[0].mxu0
    %v6324 = vadd.f32 %v6043, %v6323
    %v6325 = vpop.f32.mrb[0].mxu0
    %6326 = vmatprep.mubr.f32.mxu0 0.0
    %v6327 = vand.u32 %v5250, 4294901760
    %v6328 = vsub.f32 %v5250, %v6327
    %v6329 = vand.u32 %v6328, 4294901760
    %6330 = vmatmul.mubr.f32.gmra.mrb[0].mxu0 %v6329
    %v6331 = vpop.f32.mrb[0].mxu0
    %v6332 = vadd.f32 %v6050, %v6331
    %v6333 = vpop.f32.mrb[0].mxu0
    %6334 = vmatprep.mubr.f32.mxu0 0.0
    %v6335 = vand.u32 %v5253, 4294901760
    %v6336 = vsub.f32 %v5253, %v6335
    %v6337 = vand.u32 %v6336, 4294901760
    %6338 = vmatmul.mubr.f32.gmra.mrb[0].mxu0 %v6337
    %v6339 = vpop.f32.mrb[0].mxu0
    %v6340 = vadd.f32 %v6057, %v6339
    %v6341 = vpop.f32.mrb[0].mxu0
    %6342 = vmatprep.mubr.f32.mxu0 0.0
    %v6343 = vand.u32 %v5256, 4294901760
    %v6344 = vsub.f32 %v5256, %v6343
    %v6345 = vand.u32 %v6344, 4294901760
    %6346 = vmatmul.mubr.f32.gmra.mrb[0].mxu0 %v6345
    %v6347 = vpop.f32.mrb[0].mxu0
    %v6348 = vadd.f32 %v6064, %v6347
    %v6349 = vpop.f32.mrb[0].mxu0
    %6350 = vmatprep.mubr.f32.mxu0 0.0
    %v6351 = vand.u32 %v5259, 4294901760
    %v6352 = vsub.f32 %v5259, %v6351
    %v6353 = vand.u32 %v6352, 4294901760
    %6354 = vmatmul.mubr.f32.gmra.mrb[0].mxu0 %v6353
    %v6355 = vpop.f32.mrb[0].mxu0
    %v6356 = vadd.f32 %v6071, %v6355
    %v6357 = vpop.f32.mrb[0].mxu0
    %6358 = vmatprep.mubr.f32.mxu0 0.0
    %v6359 = vand.u32 %v5262, 4294901760
    %v6360 = vsub.f32 %v5262, %v6359
    %v6361 = vand.u32 %v6360, 4294901760
    %6362 = vmatmul.mubr.f32.gmra.mrb[0].mxu0 %v6361
    %v6363 = vpop.f32.mrb[0].mxu0
    %v6364 = vadd.f32 %v6078, %v6363
    %v6365 = vpop.f32.mrb[0].mxu0
    %6366 = vmatprep.mubr.f32.mxu0 0.0
    %v6367 = vand.u32 %v5265, 4294901760
    %v6368 = vsub.f32 %v5265, %v6367
    %v6369 = vand.u32 %v6368, 4294901760
    %6370 = vmatmul.mubr.f32.gmra.mrb[0].mxu0 %v6369
    %v6371 = vpop.f32.mrb[0].mxu0
    %v6372 = vadd.f32 %v6085, %v6371
    %v6373 = vpop.f32.mrb[0].mxu0
    %6374 = vmatprep.mubr.f32.mxu0 0.0
    %v6375 = vand.u32 %v5268, 4294901760
    %v6376 = vsub.f32 %v5268, %v6375
    %v6377 = vand.u32 %v6376, 4294901760
    %6378 = vmatmul.mubr.f32.gmra.mrb[0].mxu0 %v6377
    %v6379 = vpop.f32.mrb[0].mxu0
    %v6380 = vadd.f32 %v6092, %v6379
    %v6381 = vpop.f32.mrb[0].mxu0
    %6382 = vmatprep.mubr.f32.mxu0 0.0
    %v6383 = vand.u32 %v5271, 4294901760
    %v6384 = vsub.f32 %v5271, %v6383
    %v6385 = vand.u32 %v6384, 4294901760
    %6386 = vmatmul.mubr.f32.gmra.mrb[0].mxu0 %v6385
    %v6387 = vpop.f32.mrb[0].mxu0
    %v6388 = vadd.f32 %v6099, %v6387
    %v6389 = vpop.f32.mrb[0].mxu0
    %6390 = vmatprep.mubr.f32.mxu0 0.0
    %v6391 = vand.u32 %v5274, 4294901760
    %v6392 = vsub.f32 %v5274, %v6391
    %v6393 = vand.u32 %v6392, 4294901760
    %6394 = vmatmul.mubr.f32.gmra.mrb[0].mxu0 %v6393
    %v6395 = vpop.f32.mrb[0].mxu0
    %v6396 = vadd.f32 %v6106, %v6395
    %v6397 = vpop.f32.mrb[0].mxu0
    %6398 = vmatprep.mubr.f32.mxu0 0.0
    %v6399 = vand.u32 %v5277, 4294901760
    %v6400 = vsub.f32 %v5277, %v6399
    %v6401 = vand.u32 %v6400, 4294901760
    %6402 = vmatmul.mubr.f32.gmra.mrb[0].mxu0 %v6401
    %v6403 = vpop.f32.mrb[0].mxu0
    %v6404 = vadd.f32 %v6113, %v6403
    %v6405 = vpop.f32.mrb[0].mxu0
    %6406 = vmatprep.mubr.f32.mxu0 0.0
    %v6407 = vand.u32 %v5280, 4294901760
    %v6408 = vsub.f32 %v5280, %v6407
    %v6409 = vand.u32 %v6408, 4294901760
    %6410 = vmatmul.mubr.f32.gmra.mrb[0].mxu0 %v6409
    %v6411 = vpop.f32.mrb[0].mxu0
    %v6412 = vadd.f32 %v6120, %v6411
    %v6413 = vpop.f32.mrb[0].mxu0
    %6414 = vmatprep.mubr.f32.mxu0 0.0
    %v6415 = vand.u32 %v5283, 4294901760
    %v6416 = vsub.f32 %v5283, %v6415
    %v6417 = vand.u32 %v6416, 4294901760
    %6418 = vmatmul.mubr.f32.gmra.mrb[0].mxu0 %v6417
    %v6419 = vpop.f32.mrb[0].mxu0
    %v6420 = vadd.f32 %v6127, %v6419
    %v6421 = vpop.f32.mrb[0].mxu0
    %6422 = vmatprep.mubr.f32.mxu0 0.0
    %v6423 = vand.u32 %v5286, 4294901760
    %v6424 = vsub.f32 %v5286, %v6423
    %v6425 = vand.u32 %v6424, 4294901760
    %6426 = vmatmul.mubr.f32.gmra.mrb[0].mxu0 %v6425
    %v6427 = vpop.f32.mrb[0].mxu0
    %v6428 = vadd.f32 %v6134, %v6427
    %v6429 = vpop.f32.mrb[0].mxu0
    %6430 = vmatprep.mubr.f32.mxu0 0.0
    %v6431 = vand.u32 %v5289, 4294901760
    %v6432 = vsub.f32 %v5289, %v6431
    %v6433 = vand.u32 %v6432, 4294901760
    %6434 = vmatmul.mubr.f32.gmra.mrb[0].mxu0 %v6433
    %v6435 = vpop.f32.mrb[0].mxu0
    %v6436 = vadd.f32 %v6141, %v6435
    %v6437 = vpop.f32.mrb[0].mxu0
    %6438 = vmatprep.mubr.f32.mxu0 0.0
    %v6439 = vand.u32 %v5292, 4294901760
    %v6440 = vsub.f32 %v5292, %v6439
    %v6441 = vand.u32 %v6440, 4294901760
    %6442 = vmatmul.mubr.f32.gmra.mrb[0].mxu0 %v6441
    %v6443 = vpop.f32.mrb[0].mxu0
    %v6444 = vadd.f32 %v6148, %v6443
    %v6445 = vpop.f32.mrb[0].mxu0
    %6446 = vmatprep.mubr.f32.mxu0 0.0
    %v6447 = vand.u32 %v5295, 4294901760
    %v6448 = vsub.f32 %v5295, %v6447
    %v6449 = vand.u32 %v6448, 4294901760
    %6450 = vmatmul.mubr.f32.gmra.mrb[0].mxu0 %v6449
    %v6451 = vpop.f32.mrb[0].mxu0
    %v6452 = vadd.f32 %v6155, %v6451
    %v6453 = vpop.f32.mrb[0].mxu0
    %6454 = vmatprep.mubr.f32.mxu0 0.0
    %v6455 = vand.u32 %v5298, 4294901760
    %v6456 = vsub.f32 %v5298, %v6455
    %v6457 = vand.u32 %v6456, 4294901760
    %6458 = vmatmul.mubr.f32.gmra.mrb[0].mxu0 %v6457
    %v6459 = vpop.f32.mrb[0].mxu0
    %v6460 = vadd.f32 %v6162, %v6459
    %v6461 = vpop.f32.mrb[0].mxu0
    %6462 = vmatprep.mubr.f32.mxu0 0.0
    %v6463 = vand.u32 %v5301, 4294901760
    %v6464 = vsub.f32 %v5301, %v6463
    %v6465 = vand.u32 %v6464, 4294901760
    %6466 = vmatmul.mubr.f32.gmra.mrb[0].mxu0 %v6465
    %v6467 = vpop.f32.mrb[0].mxu0
    %v6468 = vadd.f32 %v6169, %v6467
    %v6469 = vpop.f32.mrb[0].mxu0
    %6470 = vmatprep.mubr.f32.mxu0 0.0
    %v6471 = vand.u32 %v5304, 4294901760
    %v6472 = vsub.f32 %v5304, %v6471
    %v6473 = vand.u32 %v6472, 4294901760
    %6474 = vmatmul.mubr.f32.gmra.mrb[0].mxu0 %v6473
    %v6475 = vpop.f32.mrb[0].mxu0
    %v6476 = vadd.f32 %v6176, %v6475
    %v6477 = vpop.f32.mrb[0].mxu0
    %6478 = vmatprep.mubr.f32.mxu0 0.0
    %v6479 = vand.u32 %v5307, 4294901760
    %v6480 = vsub.f32 %v5307, %v6479
    %v6481 = vand.u32 %v6480, 4294901760
    %6482 = vmatmul.mubr.f32.gmra.mrb[0].mxu0 %v6481
    %v6483 = vpop.f32.mrb[0].mxu0
    %v6484 = vadd.f32 %v6183, %v6483
    %v6485 = vpop.f32.mrb[0].mxu0
    %6486 = vmatprep.mubr.f32.mxu0 0.0
    %v6487 = vand.u32 %v5310, 4294901760
    %v6488 = vsub.f32 %v5310, %v6487
    %v6489 = vand.u32 %v6488, 4294901760
    %6490 = vmatmul.mubr.f32.gmra.mrb[0].mxu0 %v6489
    %v6491 = vpop.f32.mrb[0].mxu0
    %v6492 = vadd.f32 %v6190, %v6491
    %v6493 = vpop.f32.mrb[0].mxu0
    %6494 = vmatprep.mubr.f32.mxu0 0.0
    %v6495 = vand.u32 %v5313, 4294901760
    %v6496 = vsub.f32 %v5313, %v6495
    %v6497 = vand.u32 %v6496, 4294901760
    %6498 = vmatmul.mubr.f32.gmra.mrb[0].mxu0 %v6497
    %v6499 = vpop.f32.mrb[0].mxu0
    %v6500 = vadd.f32 %v6197, %v6499
    %v6501 = vpop.f32.mrb[0].mxu0
    %6502 = vmatprep.mubr.f32.mxu0 0.0
    %v6503 = vand.u32 %v5316, 4294901760
    %v6504 = vsub.f32 %v5316, %v6503
    %v6505 = vand.u32 %v6504, 4294901760
    %6506 = vmatmul.mubr.f32.gmra.mrb[0].mxu0 %v6505
    %v6507 = vpop.f32.mrb[0].mxu0
    %v6508 = vadd.f32 %v6204, %v6507
    %v6509 = vpop.f32.mrb[0].mxu0
    %6510 = vmatprep.mubr.f32.mxu0 0.0
    %v6511 = vand.u32 %v5319, 4294901760
    %v6512 = vsub.f32 %v5319, %v6511
    %v6513 = vand.u32 %v6512, 4294901760
    %6514 = vmatmul.mubr.f32.gmra.mrb[0].mxu0 %v6513
    %v6515 = vpop.f32.mrb[0].mxu0
    %v6516 = vadd.f32 %v6211, %v6515
    %v6517 = vpop.f32.mrb[0].mxu0
    %6518 = vmatprep.mubr.f32.mxu0 0.0
    %v6519 = vand.u32 %v5322, 4294901760
    %v6520 = vsub.f32 %v5322, %v6519
    %v6521 = vand.u32 %v6520, 4294901760
    %6522 = vmatmul.mubr.f32.gmra.mrb[0].mxu0 %v6521
    %v6523 = vpop.f32.mrb[0].mxu0
    %v6524 = vadd.f32 %v6218, %v6523
    %v6525 = vpop.f32.mrb[0].mxu0
    %6526 = vmatprep.mubr.f32.mxu0 0.0
    %v6527 = vand.u32 %v5325, 4294901760
    %v6528 = vsub.f32 %v5325, %v6527
    %v6529 = vand.u32 %v6528, 4294901760
    %6530 = vmatmul.mubr.f32.gmra.mrb[0].mxu0 %v6529
    %v6531 = vpop.f32.mrb[0].mxu0
    %v6532 = vadd.f32 %v6225, %v6531
    %v6533 = vpop.f32.mrb[0].mxu0
    %6534 = vdwg.mxu0
    %6535 = vmatprep.subr.mxu0 0.0
    %v6536 = vand.u32 %v3436, 4294901760
    %v6537 = vsub.f32 %v3436, %v6536
    %v6538 = vand.u32 %v6537, 4294901760
    %6539 = vmatpush1.msra.mxu0 %v6538
    %6540 = vmatprep.subr.mxu0 0.0
    %v6541 = vand.u32 %v3437, 4294901760
    %v6542 = vsub.f32 %v3437, %v6541
    %v6543 = vand.u32 %v6542, 4294901760
    %6544 = vmatpush1.msra.mxu0 %v6543
    %6545 = vmatprep.subr.mxu0 0.0
    %6546 = vmatpush1.msra.mxu0 0.0
    %6547 = vmatprep.subr.mxu0 0.0
    %6548 = vmatpush1.msra.mxu0 0.0
    %6549 = vmatprep.subr.mxu0 0.0
    %6550 = vmatpush1.msra.mxu0 0.0
    %6551 = vmatprep.subr.mxu0 0.0
    %6552 = vmatpush1.msra.mxu0 0.0
    %6553 = vmatprep.subr.mxu0 0.0
    %6554 = vmatpush1.msra.mxu0 0.0
    %6555 = vmatprep.subr.mxu0 0.0
    %6556 = vmatpush1.msra.mxu0 0.0
    %6557 = vmatprep.subr.mxu0 0.0
    %6558 = vmatpush1.msra.mxu0 0.0
    %6559 = vmatprep.subr.mxu0 0.0
    %6560 = vmatpush1.msra.mxu0 0.0
    %6561 = vmatprep.subr.mxu0 0.0
    %6562 = vmatpush1.msra.mxu0 0.0
    %6563 = vmatprep.subr.mxu0 0.0
    %6564 = vmatpush1.msra.mxu0 0.0
    %6565 = vmatprep.subr.mxu0 0.0
    %6566 = vmatpush1.msra.mxu0 0.0
    %6567 = vmatprep.subr.mxu0 0.0
    %6568 = vmatpush1.msra.mxu0 0.0
    %6569 = vmatprep.subr.mxu0 0.0
    %6570 = vmatpush1.msra.mxu0 0.0
    %6571 = vmatprep.subr.mxu0 0.0
    %6572 = vmatpush1.msra.mxu0 0.0
    %6573 = vmatprep.subr.mxu0 0.0
    %6574 = vmatpush1.msra.mxu0 0.0
    %6575 = vmatprep.subr.mxu0 0.0
    %6576 = vmatpush1.msra.mxu0 0.0
    %6577 = vmatprep.subr.mxu0 0.0
    %6578 = vmatpush1.msra.mxu0 0.0
    %6579 = vmatprep.subr.mxu0 0.0
    %6580 = vmatpush1.msra.mxu0 0.0
    %6581 = vmatprep.subr.mxu0 0.0
    %6582 = vmatpush1.msra.mxu0 0.0
    %6583 = vmatprep.subr.mxu0 0.0
    %6584 = vmatpush1.msra.mxu0 0.0
    %6585 = vmatprep.subr.mxu0 0.0
    %6586 = vmatpush1.msra.mxu0 0.0
    %6587 = vmatprep.subr.mxu0 0.0
    %6588 = vmatpush1.msra.mxu0 0.0
    %6589 = vmatprep.subr.mxu0 0.0
    %6590 = vmatpush1.msra.mxu0 0.0
    %6591 = vmatprep.subr.mxu0 0.0
    %6592 = vmatpush1.msra.mxu0 0.0
    %6593 = vmatprep.subr.mxu0 0.0
    %6594 = vmatpush1.msra.mxu0 0.0
    %6595 = vmatprep.subr.mxu0 0.0
    %6596 = vmatpush1.msra.mxu0 0.0
    %6597 = vmatprep.subr.mxu0 0.0
    %6598 = vmatpush1.msra.mxu0 0.0
    %6599 = vmatprep.subr.mxu0 0.0
    %6600 = vmatpush1.msra.mxu0 0.0
    %6601 = vmatprep.subr.mxu0 0.0
    %6602 = vmatpush1.msra.mxu0 0.0
    %6603 = vmatprep.subr.mxu0 0.0
    %6604 = vmatpush1.msra.mxu0 0.0
    %6605 = vmatprep.mubr.f32.mxu0 0.0
    %v6606 = vand.u32 %v5238, 4294901760
    %6607 = vmatmul.mubr.f32.gmra.mrb[0].mxu0 %v6606
    %v6608 = vpop.f32.mrb[0].mxu0
    %v6609 = vadd.f32 %v6300, %v6608
    %v6610 = vpop.f32.mrb[0].mxu0
    %6611 = vmatprep.mubr.f32.mxu0 0.0
    %v6612 = vand.u32 %v5241, 4294901760
    %6613 = vmatmul.mubr.f32.gmra.mrb[0].mxu0 %v6612
    %v6614 = vpop.f32.mrb[0].mxu0
    %v6615 = vadd.f32 %v6308, %v6614
    %v6616 = vpop.f32.mrb[0].mxu0
    %6617 = vmatprep.mubr.f32.mxu0 0.0
    %v6618 = vand.u32 %v5244, 4294901760
    %6619 = vmatmul.mubr.f32.gmra.mrb[0].mxu0 %v6618
    %v6620 = vpop.f32.mrb[0].mxu0
    %v6621 = vadd.f32 %v6316, %v6620
    %v6622 = vpop.f32.mrb[0].mxu0
    %6623 = vmatprep.mubr.f32.mxu0 0.0
    %v6624 = vand.u32 %v5247, 4294901760
    %6625 = vmatmul.mubr.f32.gmra.mrb[0].mxu0 %v6624
    %v6626 = vpop.f32.mrb[0].mxu0
    %v6627 = vadd.f32 %v6324, %v6626
    %v6628 = vpop.f32.mrb[0].mxu0
    %6629 = vmatprep.mubr.f32.mxu0 0.0
    %v6630 = vand.u32 %v5250, 4294901760
    %6631 = vmatmul.mubr.f32.gmra.mrb[0].mxu0 %v6630
    %v6632 = vpop.f32.mrb[0].mxu0
    %v6633 = vadd.f32 %v6332, %v6632
    %v6634 = vpop.f32.mrb[0].mxu0
    %6635 = vmatprep.mubr.f32.mxu0 0.0
    %v6636 = vand.u32 %v5253, 4294901760
    %6637 = vmatmul.mubr.f32.gmra.mrb[0].mxu0 %v6636
    %v6638 = vpop.f32.mrb[0].mxu0
    %v6639 = vadd.f32 %v6340, %v6638
    %v6640 = vpop.f32.mrb[0].mxu0
    %6641 = vmatprep.mubr.f32.mxu0 0.0
    %v6642 = vand.u32 %v5256, 4294901760
    %6643 = vmatmul.mubr.f32.gmra.mrb[0].mxu0 %v6642
    %v6644 = vpop.f32.mrb[0].mxu0
    %v6645 = vadd.f32 %v6348, %v6644
    %v6646 = vpop.f32.mrb[0].mxu0
    %6647 = vmatprep.mubr.f32.mxu0 0.0
    %v6648 = vand.u32 %v5259, 4294901760
    %6649 = vmatmul.mubr.f32.gmra.mrb[0].mxu0 %v6648
    %v6650 = vpop.f32.mrb[0].mxu0
    %v6651 = vadd.f32 %v6356, %v6650
    %v6652 = vpop.f32.mrb[0].mxu0
    %6653 = vmatprep.mubr.f32.mxu0 0.0
    %v6654 = vand.u32 %v5262, 4294901760
    %6655 = vmatmul.mubr.f32.gmra.mrb[0].mxu0 %v6654
    %v6656 = vpop.f32.mrb[0].mxu0
    %v6657 = vadd.f32 %v6364, %v6656
    %v6658 = vpop.f32.mrb[0].mxu0
    %6659 = vmatprep.mubr.f32.mxu0 0.0
    %v6660 = vand.u32 %v5265, 4294901760
    %6661 = vmatmul.mubr.f32.gmra.mrb[0].mxu0 %v6660
    %v6662 = vpop.f32.mrb[0].mxu0
    %v6663 = vadd.f32 %v6372, %v6662
    %v6664 = vpop.f32.mrb[0].mxu0
    %6665 = vmatprep.mubr.f32.mxu0 0.0
    %v6666 = vand.u32 %v5268, 4294901760
    %6667 = vmatmul.mubr.f32.gmra.mrb[0].mxu0 %v6666
    %v6668 = vpop.f32.mrb[0].mxu0
    %v6669 = vadd.f32 %v6380, %v6668
    %v6670 = vpop.f32.mrb[0].mxu0
    %6671 = vmatprep.mubr.f32.mxu0 0.0
    %v6672 = vand.u32 %v5271, 4294901760
    %6673 = vmatmul.mubr.f32.gmra.mrb[0].mxu0 %v6672
    %v6674 = vpop.f32.mrb[0].mxu0
    %v6675 = vadd.f32 %v6388, %v6674
    %v6676 = vpop.f32.mrb[0].mxu0
    %6677 = vmatprep.mubr.f32.mxu0 0.0
    %v6678 = vand.u32 %v5274, 4294901760
    %6679 = vmatmul.mubr.f32.gmra.mrb[0].mxu0 %v6678
    %v6680 = vpop.f32.mrb[0].mxu0
    %v6681 = vadd.f32 %v6396, %v6680
    %v6682 = vpop.f32.mrb[0].mxu0
    %6683 = vmatprep.mubr.f32.mxu0 0.0
    %v6684 = vand.u32 %v5277, 4294901760
    %6685 = vmatmul.mubr.f32.gmra.mrb[0].mxu0 %v6684
    %v6686 = vpop.f32.mrb[0].mxu0
    %v6687 = vadd.f32 %v6404, %v6686
    %v6688 = vpop.f32.mrb[0].mxu0
    %6689 = vmatprep.mubr.f32.mxu0 0.0
    %v6690 = vand.u32 %v5280, 4294901760
    %6691 = vmatmul.mubr.f32.gmra.mrb[0].mxu0 %v6690
    %v6692 = vpop.f32.mrb[0].mxu0
    %v6693 = vadd.f32 %v6412, %v6692
    %v6694 = vpop.f32.mrb[0].mxu0
    %6695 = vmatprep.mubr.f32.mxu0 0.0
    %v6696 = vand.u32 %v5283, 4294901760
    %6697 = vmatmul.mubr.f32.gmra.mrb[0].mxu0 %v6696
    %v6698 = vpop.f32.mrb[0].mxu0
    %v6699 = vadd.f32 %v6420, %v6698
    %v6700 = vpop.f32.mrb[0].mxu0
    %6701 = vmatprep.mubr.f32.mxu0 0.0
    %v6702 = vand.u32 %v5286, 4294901760
    %6703 = vmatmul.mubr.f32.gmra.mrb[0].mxu0 %v6702
    %v6704 = vpop.f32.mrb[0].mxu0
    %v6705 = vadd.f32 %v6428, %v6704
    %v6706 = vpop.f32.mrb[0].mxu0
    %6707 = vmatprep.mubr.f32.mxu0 0.0
    %v6708 = vand.u32 %v5289, 4294901760
    %6709 = vmatmul.mubr.f32.gmra.mrb[0].mxu0 %v6708
    %v6710 = vpop.f32.mrb[0].mxu0
    %v6711 = vadd.f32 %v6436, %v6710
    %v6712 = vpop.f32.mrb[0].mxu0
    %6713 = vmatprep.mubr.f32.mxu0 0.0
    %v6714 = vand.u32 %v5292, 4294901760
    %6715 = vmatmul.mubr.f32.gmra.mrb[0].mxu0 %v6714
    %v6716 = vpop.f32.mrb[0].mxu0
    %v6717 = vadd.f32 %v6444, %v6716
    %v6718 = vpop.f32.mrb[0].mxu0
    %6719 = vmatprep.mubr.f32.mxu0 0.0
    %v6720 = vand.u32 %v5295, 4294901760
    %6721 = vmatmul.mubr.f32.gmra.mrb[0].mxu0 %v6720
    %v6722 = vpop.f32.mrb[0].mxu0
    %v6723 = vadd.f32 %v6452, %v6722
    %v6724 = vpop.f32.mrb[0].mxu0
    %6725 = vmatprep.mubr.f32.mxu0 0.0
    %v6726 = vand.u32 %v5298, 4294901760
    %6727 = vmatmul.mubr.f32.gmra.mrb[0].mxu0 %v6726
    %v6728 = vpop.f32.mrb[0].mxu0
    %v6729 = vadd.f32 %v6460, %v6728
    %v6730 = vpop.f32.mrb[0].mxu0
    %6731 = vmatprep.mubr.f32.mxu0 0.0
    %v6732 = vand.u32 %v5301, 4294901760
    %6733 = vmatmul.mubr.f32.gmra.mrb[0].mxu0 %v6732
    %v6734 = vpop.f32.mrb[0].mxu0
    %v6735 = vadd.f32 %v6468, %v6734
    %v6736 = vpop.f32.mrb[0].mxu0
    %6737 = vmatprep.mubr.f32.mxu0 0.0
    %v6738 = vand.u32 %v5304, 4294901760
    %6739 = vmatmul.mubr.f32.gmra.mrb[0].mxu0 %v6738
    %v6740 = vpop.f32.mrb[0].mxu0
    %v6741 = vadd.f32 %v6476, %v6740
    %v6742 = vpop.f32.mrb[0].mxu0
    %6743 = vmatprep.mubr.f32.mxu0 0.0
    %v6744 = vand.u32 %v5307, 4294901760
    %6745 = vmatmul.mubr.f32.gmra.mrb[0].mxu0 %v6744
    %v6746 = vpop.f32.mrb[0].mxu0
    %v6747 = vadd.f32 %v6484, %v6746
    %v6748 = vpop.f32.mrb[0].mxu0
    %6749 = vmatprep.mubr.f32.mxu0 0.0
    %v6750 = vand.u32 %v5310, 4294901760
    %6751 = vmatmul.mubr.f32.gmra.mrb[0].mxu0 %v6750
    %v6752 = vpop.f32.mrb[0].mxu0
    %v6753 = vadd.f32 %v6492, %v6752
    %v6754 = vpop.f32.mrb[0].mxu0
    %6755 = vmatprep.mubr.f32.mxu0 0.0
    %v6756 = vand.u32 %v5313, 4294901760
    %6757 = vmatmul.mubr.f32.gmra.mrb[0].mxu0 %v6756
    %v6758 = vpop.f32.mrb[0].mxu0
    %v6759 = vadd.f32 %v6500, %v6758
    %v6760 = vpop.f32.mrb[0].mxu0
    %6761 = vmatprep.mubr.f32.mxu0 0.0
    %v6762 = vand.u32 %v5316, 4294901760
    %6763 = vmatmul.mubr.f32.gmra.mrb[0].mxu0 %v6762
    %v6764 = vpop.f32.mrb[0].mxu0
    %v6765 = vadd.f32 %v6508, %v6764
    %v6766 = vpop.f32.mrb[0].mxu0
    %6767 = vmatprep.mubr.f32.mxu0 0.0
    %v6768 = vand.u32 %v5319, 4294901760
    %6769 = vmatmul.mubr.f32.gmra.mrb[0].mxu0 %v6768
    %v6770 = vpop.f32.mrb[0].mxu0
    %v6771 = vadd.f32 %v6516, %v6770
    %v6772 = vpop.f32.mrb[0].mxu0
    %6773 = vmatprep.mubr.f32.mxu0 0.0
    %v6774 = vand.u32 %v5322, 4294901760
    %6775 = vmatmul.mubr.f32.gmra.mrb[0].mxu0 %v6774
    %v6776 = vpop.f32.mrb[0].mxu0
    %v6777 = vadd.f32 %v6524, %v6776
    %v6778 = vpop.f32.mrb[0].mxu0
    %6779 = vmatprep.mubr.f32.mxu0 0.0
    %v6780 = vand.u32 %v5325, 4294901760
    %6781 = vmatmul.mubr.f32.gmra.mrb[0].mxu0 %v6780
    %v6782 = vpop.f32.mrb[0].mxu0
    %v6783 = vadd.f32 %v6532, %v6782
    %v6784 = vpop.f32.mrb[0].mxu0
    %6785 = vdwg.mxu0
    %6786 = vmatprep.subr.mxu0 0.0
    %v6787 = vand.u32 %v3436, 4294901760
    %6788 = vmatpush1.msra.mxu0 %v6787
    %6789 = vmatprep.subr.mxu0 0.0
    %v6790 = vand.u32 %v3437, 4294901760
    %6791 = vmatpush1.msra.mxu0 %v6790
    %6792 = vmatprep.subr.mxu0 0.0
    %6793 = vmatpush1.msra.mxu0 0.0
    %6794 = vmatprep.subr.mxu0 0.0
    %6795 = vmatpush1.msra.mxu0 0.0
    %6796 = vmatprep.subr.mxu0 0.0
    %6797 = vmatpush1.msra.mxu0 0.0
    %6798 = vmatprep.subr.mxu0 0.0
    %6799 = vmatpush1.msra.mxu0 0.0
    %6800 = vmatprep.subr.mxu0 0.0
    %6801 = vmatpush1.msra.mxu0 0.0
    %6802 = vmatprep.subr.mxu0 0.0
    %6803 = vmatpush1.msra.mxu0 0.0
    %6804 = vmatprep.subr.mxu0 0.0
    %6805 = vmatpush1.msra.mxu0 0.0
    %6806 = vmatprep.subr.mxu0 0.0
    %6807 = vmatpush1.msra.mxu0 0.0
    %6808 = vmatprep.subr.mxu0 0.0
    %6809 = vmatpush1.msra.mxu0 0.0
    %6810 = vmatprep.subr.mxu0 0.0
    %6811 = vmatpush1.msra.mxu0 0.0
    %6812 = vmatprep.subr.mxu0 0.0
    %6813 = vmatpush1.msra.mxu0 0.0
    %6814 = vmatprep.subr.mxu0 0.0
    %6815 = vmatpush1.msra.mxu0 0.0
    %6816 = vmatprep.subr.mxu0 0.0
    %6817 = vmatpush1.msra.mxu0 0.0
    %6818 = vmatprep.subr.mxu0 0.0
    %6819 = vmatpush1.msra.mxu0 0.0
    %6820 = vmatprep.subr.mxu0 0.0
    %6821 = vmatpush1.msra.mxu0 0.0
    %6822 = vmatprep.subr.mxu0 0.0
    %6823 = vmatpush1.msra.mxu0 0.0
    %6824 = vmatprep.subr.mxu0 0.0
    %6825 = vmatpush1.msra.mxu0 0.0
    %6826 = vmatprep.subr.mxu0 0.0
    %6827 = vmatpush1.msra.mxu0 0.0
    %6828 = vmatprep.subr.mxu0 0.0
    %6829 = vmatpush1.msra.mxu0 0.0
    %6830 = vmatprep.subr.mxu0 0.0
    %6831 = vmatpush1.msra.mxu0 0.0
    %6832 = vmatprep.subr.mxu0 0.0
    %6833 = vmatpush1.msra.mxu0 0.0
    %6834 = vmatprep.subr.mxu0 0.0
    %6835 = vmatpush1.msra.mxu0 0.0
    %6836 = vmatprep.subr.mxu0 0.0
    %6837 = vmatpush1.msra.mxu0 0.0
    %6838 = vmatprep.subr.mxu0 0.0
    %6839 = vmatpush1.msra.mxu0 0.0
    %6840 = vmatprep.subr.mxu0 0.0
    %6841 = vmatpush1.msra.mxu0 0.0
    %6842 = vmatprep.subr.mxu0 0.0
    %6843 = vmatpush1.msra.mxu0 0.0
    %6844 = vmatprep.subr.mxu0 0.0
    %6845 = vmatpush1.msra.mxu0 0.0
    %6846 = vmatprep.subr.mxu0 0.0
    %6847 = vmatpush1.msra.mxu0 0.0
    %6848 = vmatprep.subr.mxu0 0.0
    %6849 = vmatpush1.msra.mxu0 0.0
    %6850 = vmatprep.subr.mxu0 0.0
    %6851 = vmatpush1.msra.mxu0 0.0
    %6852 = vmatprep.mubr.f32.mxu0 0.0
    %v6853 = vand.u32 %v5238, 4294901760
    %6854 = vmatmul.mubr.f32.gmra.mrb[0].mxu0 %v6853
    %v6855 = vpop.f32.mrb[0].mxu0
    %v6856 = vadd.f32 %v6609, %v6855
    %v6857 = vpop.f32.mrb[0].mxu0
    %6858 = vmatprep.mubr.f32.mxu0 0.0
    %v6859 = vand.u32 %v5241, 4294901760
    %6860 = vmatmul.mubr.f32.gmra.mrb[0].mxu0 %v6859
    %v6861 = vpop.f32.mrb[0].mxu0
    %v6862 = vadd.f32 %v6615, %v6861
    %v6863 = vpop.f32.mrb[0].mxu0
    %6864 = vmatprep.mubr.f32.mxu0 0.0
    %v6865 = vand.u32 %v5244, 4294901760
    %6866 = vmatmul.mubr.f32.gmra.mrb[0].mxu0 %v6865
    %v6867 = vpop.f32.mrb[0].mxu0
    %v6868 = vadd.f32 %v6621, %v6867
    %v6869 = vpop.f32.mrb[0].mxu0
    %6870 = vmatprep.mubr.f32.mxu0 0.0
    %v6871 = vand.u32 %v5247, 4294901760
    %6872 = vmatmul.mubr.f32.gmra.mrb[0].mxu0 %v6871
    %v6873 = vpop.f32.mrb[0].mxu0
    %v6874 = vadd.f32 %v6627, %v6873
    %v6875 = vpop.f32.mrb[0].mxu0
    %6876 = vmatprep.mubr.f32.mxu0 0.0
    %v6877 = vand.u32 %v5250, 4294901760
    %6878 = vmatmul.mubr.f32.gmra.mrb[0].mxu0 %v6877
    %v6879 = vpop.f32.mrb[0].mxu0
    %v6880 = vadd.f32 %v6633, %v6879
    %v6881 = vpop.f32.mrb[0].mxu0
    %6882 = vmatprep.mubr.f32.mxu0 0.0
    %v6883 = vand.u32 %v5253, 4294901760
    %6884 = vmatmul.mubr.f32.gmra.mrb[0].mxu0 %v6883
    %v6885 = vpop.f32.mrb[0].mxu0
    %v6886 = vadd.f32 %v6639, %v6885
    %v6887 = vpop.f32.mrb[0].mxu0
    %6888 = vmatprep.mubr.f32.mxu0 0.0
    %v6889 = vand.u32 %v5256, 4294901760
    %6890 = vmatmul.mubr.f32.gmra.mrb[0].mxu0 %v6889
    %v6891 = vpop.f32.mrb[0].mxu0
    %v6892 = vadd.f32 %v6645, %v6891
    %v6893 = vpop.f32.mrb[0].mxu0
    %6894 = vmatprep.mubr.f32.mxu0 0.0
    %v6895 = vand.u32 %v5259, 4294901760
    %6896 = vmatmul.mubr.f32.gmra.mrb[0].mxu0 %v6895
    %v6897 = vpop.f32.mrb[0].mxu0
    %v6898 = vadd.f32 %v6651, %v6897
    %v6899 = vpop.f32.mrb[0].mxu0
    %6900 = vmatprep.mubr.f32.mxu0 0.0
    %v6901 = vand.u32 %v5262, 4294901760
    %6902 = vmatmul.mubr.f32.gmra.mrb[0].mxu0 %v6901
    %v6903 = vpop.f32.mrb[0].mxu0
    %v6904 = vadd.f32 %v6657, %v6903
    %v6905 = vpop.f32.mrb[0].mxu0
    %6906 = vmatprep.mubr.f32.mxu0 0.0
    %v6907 = vand.u32 %v5265, 4294901760
    %6908 = vmatmul.mubr.f32.gmra.mrb[0].mxu0 %v6907
    %v6909 = vpop.f32.mrb[0].mxu0
    %v6910 = vadd.f32 %v6663, %v6909
    %v6911 = vpop.f32.mrb[0].mxu0
    %6912 = vmatprep.mubr.f32.mxu0 0.0
    %v6913 = vand.u32 %v5268, 4294901760
    %6914 = vmatmul.mubr.f32.gmra.mrb[0].mxu0 %v6913
    %v6915 = vpop.f32.mrb[0].mxu0
    %v6916 = vadd.f32 %v6669, %v6915
    %v6917 = vpop.f32.mrb[0].mxu0
    %6918 = vmatprep.mubr.f32.mxu0 0.0
    %v6919 = vand.u32 %v5271, 4294901760
    %6920 = vmatmul.mubr.f32.gmra.mrb[0].mxu0 %v6919
    %v6921 = vpop.f32.mrb[0].mxu0
    %v6922 = vadd.f32 %v6675, %v6921
    %v6923 = vpop.f32.mrb[0].mxu0
    %6924 = vmatprep.mubr.f32.mxu0 0.0
    %v6925 = vand.u32 %v5274, 4294901760
    %6926 = vmatmul.mubr.f32.gmra.mrb[0].mxu0 %v6925
    %v6927 = vpop.f32.mrb[0].mxu0
    %v6928 = vadd.f32 %v6681, %v6927
    %v6929 = vpop.f32.mrb[0].mxu0
    %6930 = vmatprep.mubr.f32.mxu0 0.0
    %v6931 = vand.u32 %v5277, 4294901760
    %6932 = vmatmul.mubr.f32.gmra.mrb[0].mxu0 %v6931
    %v6933 = vpop.f32.mrb[0].mxu0
    %v6934 = vadd.f32 %v6687, %v6933
    %v6935 = vpop.f32.mrb[0].mxu0
    %6936 = vmatprep.mubr.f32.mxu0 0.0
    %v6937 = vand.u32 %v5280, 4294901760
    %6938 = vmatmul.mubr.f32.gmra.mrb[0].mxu0 %v6937
    %v6939 = vpop.f32.mrb[0].mxu0
    %v6940 = vadd.f32 %v6693, %v6939
    %v6941 = vpop.f32.mrb[0].mxu0
    %6942 = vmatprep.mubr.f32.mxu0 0.0
    %v6943 = vand.u32 %v5283, 4294901760
    %6944 = vmatmul.mubr.f32.gmra.mrb[0].mxu0 %v6943
    %v6945 = vpop.f32.mrb[0].mxu0
    %v6946 = vadd.f32 %v6699, %v6945
    %v6947 = vpop.f32.mrb[0].mxu0
    %6948 = vmatprep.mubr.f32.mxu0 0.0
    %v6949 = vand.u32 %v5286, 4294901760
    %6950 = vmatmul.mubr.f32.gmra.mrb[0].mxu0 %v6949
    %v6951 = vpop.f32.mrb[0].mxu0
    %v6952 = vadd.f32 %v6705, %v6951
    %v6953 = vpop.f32.mrb[0].mxu0
    %6954 = vmatprep.mubr.f32.mxu0 0.0
    %v6955 = vand.u32 %v5289, 4294901760
    %6956 = vmatmul.mubr.f32.gmra.mrb[0].mxu0 %v6955
    %v6957 = vpop.f32.mrb[0].mxu0
    %v6958 = vadd.f32 %v6711, %v6957
    %v6959 = vpop.f32.mrb[0].mxu0
    %6960 = vmatprep.mubr.f32.mxu0 0.0
    %v6961 = vand.u32 %v5292, 4294901760
    %6962 = vmatmul.mubr.f32.gmra.mrb[0].mxu0 %v6961
    %v6963 = vpop.f32.mrb[0].mxu0
    %v6964 = vadd.f32 %v6717, %v6963
    %v6965 = vpop.f32.mrb[0].mxu0
    %6966 = vmatprep.mubr.f32.mxu0 0.0
    %v6967 = vand.u32 %v5295, 4294901760
    %6968 = vmatmul.mubr.f32.gmra.mrb[0].mxu0 %v6967
    %v6969 = vpop.f32.mrb[0].mxu0
    %v6970 = vadd.f32 %v6723, %v6969
    %v6971 = vpop.f32.mrb[0].mxu0
    %6972 = vmatprep.mubr.f32.mxu0 0.0
    %v6973 = vand.u32 %v5298, 4294901760
    %6974 = vmatmul.mubr.f32.gmra.mrb[0].mxu0 %v6973
    %v6975 = vpop.f32.mrb[0].mxu0
    %v6976 = vadd.f32 %v6729, %v6975
    %v6977 = vpop.f32.mrb[0].mxu0
    %6978 = vmatprep.mubr.f32.mxu0 0.0
    %v6979 = vand.u32 %v5301, 4294901760
    %6980 = vmatmul.mubr.f32.gmra.mrb[0].mxu0 %v6979
    %v6981 = vpop.f32.mrb[0].mxu0
    %v6982 = vadd.f32 %v6735, %v6981
    %v6983 = vpop.f32.mrb[0].mxu0
    %6984 = vmatprep.mubr.f32.mxu0 0.0
    %v6985 = vand.u32 %v5304, 4294901760
    %6986 = vmatmul.mubr.f32.gmra.mrb[0].mxu0 %v6985
    %v6987 = vpop.f32.mrb[0].mxu0
    %v6988 = vadd.f32 %v6741, %v6987
    %v6989 = vpop.f32.mrb[0].mxu0
    %6990 = vmatprep.mubr.f32.mxu0 0.0
    %v6991 = vand.u32 %v5307, 4294901760
    %6992 = vmatmul.mubr.f32.gmra.mrb[0].mxu0 %v6991
    %v6993 = vpop.f32.mrb[0].mxu0
    %v6994 = vadd.f32 %v6747, %v6993
    %v6995 = vpop.f32.mrb[0].mxu0
    %6996 = vmatprep.mubr.f32.mxu0 0.0
    %v6997 = vand.u32 %v5310, 4294901760
    %6998 = vmatmul.mubr.f32.gmra.mrb[0].mxu0 %v6997
    %v6999 = vpop.f32.mrb[0].mxu0
    %v7000 = vadd.f32 %v6753, %v6999
    %v7001 = vpop.f32.mrb[0].mxu0
    %7002 = vmatprep.mubr.f32.mxu0 0.0
    %v7003 = vand.u32 %v5313, 4294901760
    %7004 = vmatmul.mubr.f32.gmra.mrb[0].mxu0 %v7003
    %v7005 = vpop.f32.mrb[0].mxu0
    %v7006 = vadd.f32 %v6759, %v7005
    %v7007 = vpop.f32.mrb[0].mxu0
    %7008 = vmatprep.mubr.f32.mxu0 0.0
    %v7009 = vand.u32 %v5316, 4294901760
    %7010 = vmatmul.mubr.f32.gmra.mrb[0].mxu0 %v7009
    %v7011 = vpop.f32.mrb[0].mxu0
    %v7012 = vadd.f32 %v6765, %v7011
    %v7013 = vpop.f32.mrb[0].mxu0
    %7014 = vmatprep.mubr.f32.mxu0 0.0
    %v7015 = vand.u32 %v5319, 4294901760
    %7016 = vmatmul.mubr.f32.gmra.mrb[0].mxu0 %v7015
    %v7017 = vpop.f32.mrb[0].mxu0
    %v7018 = vadd.f32 %v6771, %v7017
    %v7019 = vpop.f32.mrb[0].mxu0
    %7020 = vmatprep.mubr.f32.mxu0 0.0
    %v7021 = vand.u32 %v5322, 4294901760
    %7022 = vmatmul.mubr.f32.gmra.mrb[0].mxu0 %v7021
    %v7023 = vpop.f32.mrb[0].mxu0
    %v7024 = vadd.f32 %v6777, %v7023
    %v7025 = vpop.f32.mrb[0].mxu0
    %7026 = vmatprep.mubr.f32.mxu0 0.0
    %v7027 = vand.u32 %v5325, 4294901760
    %7028 = vmatmul.mubr.f32.gmra.mrb[0].mxu0 %v7027
    %v7029 = vpop.f32.mrb[0].mxu0
    %v7030 = vadd.f32 %v6783, %v7029
    %v7031 = vpop.f32.mrb[0].mxu0
    %7032 = vdwg.mxu0
    %v7033 = vld [vmem:[%s4] sm:$0xff]
    %v7034 = vld [vmem:[%s4 + $0x8] sm:$0xff]
    %v7035 = vld [vmem:[%s4 + $0x10] sm:$0xff]
    %v7036 = vld [vmem:[%s4 + $0x18] sm:$0xff]
    %v7037 = vld [vmem:[%s4 + $0x20] sm:$0xff]
    %v7038 = vld [vmem:[%s4 + $0x28] sm:$0xff]
    %v7039 = vld [vmem:[%s4 + $0x30] sm:$0xff]
    %v7040 = vld [vmem:[%s4 + $0x38] sm:$0xff]
    %v7041 = vld [vmem:[%s4 + $0x40] sm:$0xff]
    %v7042 = vld [vmem:[%s4 + $0x48] sm:$0xff]
    %v7043 = vld [vmem:[%s4 + $0x50] sm:$0xff]
    %v7044 = vld [vmem:[%s4 + $0x58] sm:$0xff]
    %v7045 = vld [vmem:[%s4 + $0x60] sm:$0xff]
    %v7046 = vld [vmem:[%s4 + $0x68] sm:$0xff]
    %v7047 = vld [vmem:[%s4 + $0x70] sm:$0xff]
    %v7048 = vld [vmem:[%s4 + $0x78] sm:$0xff]
    %v7049 = vld [vmem:[%s4 + $0x80] sm:$0xff]
    %v7050 = vld [vmem:[%s4 + $0x88] sm:$0xff]
    %v7051 = vld [vmem:[%s4 + $0x90] sm:$0xff]
    %v7052 = vld [vmem:[%s4 + $0x98] sm:$0xff]
    %v7053 = vld [vmem:[%s4 + $0xa0] sm:$0xff]
    %v7054 = vld [vmem:[%s4 + $0xa8] sm:$0xff]
    %v7055 = vld [vmem:[%s4 + $0xb0] sm:$0xff]
    %v7056 = vld [vmem:[%s4 + $0xb8] sm:$0xff]
    %v7057 = vld [vmem:[%s4 + $0xc0] sm:$0xff]
    %v7058 = vld [vmem:[%s4 + $0xc8] sm:$0xff]
    %v7059 = vld [vmem:[%s4 + $0xd0] sm:$0xff]
    %v7060 = vld [vmem:[%s4 + $0xd8] sm:$0xff]
    %v7061 = vld [vmem:[%s4 + $0xe0] sm:$0xff]
    %v7062 = vld [vmem:[%s4 + $0xe8] sm:$0xff]
    %7064 = vset.pattern.permute.xlu0 0
    %7065 = vperm.xlu0 %7064, %v7033
    %v7066 = vpop.permute.xlu0 %7065
    %7069 = vset.pattern.permute.xlu0 0
    %7070 = vperm.xlu0 %7069, %v7034
    %v7071 = vpop.permute.xlu0 %7070
    %7074 = vset.pattern.permute.xlu0 0
    %7075 = vperm.xlu0 %7074, %v7035
    %v7076 = vpop.permute.xlu0 %7075
    %7079 = vset.pattern.permute.xlu0 0
    %7080 = vperm.xlu0 %7079, %v7036
    %v7081 = vpop.permute.xlu0 %7080
    %7084 = vset.pattern.permute.xlu0 0
    %7085 = vperm.xlu0 %7084, %v7037
    %v7086 = vpop.permute.xlu0 %7085
    %7089 = vset.pattern.permute.xlu0 0
    %7090 = vperm.xlu0 %7089, %v7038
    %v7091 = vpop.permute.xlu0 %7090
    %7094 = vset.pattern.permute.xlu0 0
    %7095 = vperm.xlu0 %7094, %v7039
    %v7096 = vpop.permute.xlu0 %7095
    %7099 = vset.pattern.permute.xlu0 0
    %7100 = vperm.xlu0 %7099, %v7040
    %v7101 = vpop.permute.xlu0 %7100
    %7104 = vset.pattern.permute.xlu0 0
    %7105 = vperm.xlu0 %7104, %v7041
    %v7106 = vpop.permute.xlu0 %7105
    %7109 = vset.pattern.permute.xlu0 0
    %7110 = vperm.xlu0 %7109, %v7042
    %v7111 = vpop.permute.xlu0 %7110
    %7114 = vset.pattern.permute.xlu0 0
    %7115 = vperm.xlu0 %7114, %v7043
    %v7116 = vpop.permute.xlu0 %7115
    %7119 = vset.pattern.permute.xlu0 0
    %7120 = vperm.xlu0 %7119, %v7044
    %v7121 = vpop.permute.xlu0 %7120
    %7124 = vset.pattern.permute.xlu0 0
    %7125 = vperm.xlu0 %7124, %v7045
    %v7126 = vpop.permute.xlu0 %7125
    %7129 = vset.pattern.permute.xlu0 0
    %7130 = vperm.xlu0 %7129, %v7046
    %v7131 = vpop.permute.xlu0 %7130
    %7134 = vset.pattern.permute.xlu0 0
    %7135 = vperm.xlu0 %7134, %v7047
    %v7136 = vpop.permute.xlu0 %7135
    %7139 = vset.pattern.permute.xlu0 0
    %7140 = vperm.xlu0 %7139, %v7048
    %v7141 = vpop.permute.xlu0 %7140
    %7144 = vset.pattern.permute.xlu0 0
    %7145 = vperm.xlu0 %7144, %v7049
    %v7146 = vpop.permute.xlu0 %7145
    %7149 = vset.pattern.permute.xlu0 0
    %7150 = vperm.xlu0 %7149, %v7050
    %v7151 = vpop.permute.xlu0 %7150
    %7154 = vset.pattern.permute.xlu0 0
    %7155 = vperm.xlu0 %7154, %v7051
    %v7156 = vpop.permute.xlu0 %7155
    %7159 = vset.pattern.permute.xlu0 0
    %7160 = vperm.xlu0 %7159, %v7052
    %v7161 = vpop.permute.xlu0 %7160
    %7164 = vset.pattern.permute.xlu0 0
    %7165 = vperm.xlu0 %7164, %v7053
    %v7166 = vpop.permute.xlu0 %7165
    %7169 = vset.pattern.permute.xlu0 0
    %7170 = vperm.xlu0 %7169, %v7054
    %v7171 = vpop.permute.xlu0 %7170
    %7174 = vset.pattern.permute.xlu0 0
    %7175 = vperm.xlu0 %7174, %v7055
    %v7176 = vpop.permute.xlu0 %7175
    %7179 = vset.pattern.permute.xlu0 0
    %7180 = vperm.xlu0 %7179, %v7056
    %v7181 = vpop.permute.xlu0 %7180
    %7184 = vset.pattern.permute.xlu0 0
    %7185 = vperm.xlu0 %7184, %v7057
    %v7186 = vpop.permute.xlu0 %7185
    %7189 = vset.pattern.permute.xlu0 0
    %7190 = vperm.xlu0 %7189, %v7058
    %v7191 = vpop.permute.xlu0 %7190
    %7194 = vset.pattern.permute.xlu0 0
    %7195 = vperm.xlu0 %7194, %v7059
    %v7196 = vpop.permute.xlu0 %7195
    %7199 = vset.pattern.permute.xlu0 0
    %7200 = vperm.xlu0 %7199, %v7060
    %v7201 = vpop.permute.xlu0 %7200
    %7204 = vset.pattern.permute.xlu0 0
    %7205 = vperm.xlu0 %7204, %v7061
    %v7206 = vpop.permute.xlu0 %7205
    %7209 = vset.pattern.permute.xlu0 0
    %7210 = vperm.xlu0 %7209, %v7062
    %v7211 = vpop.permute.xlu0 %7210
    %v7213 = vadd.f32 %v6856, %v7066
    %v7214 = vadd.f32 %v6862, %v7071
    %v7215 = vadd.f32 %v6868, %v7076
    %v7216 = vadd.f32 %v6874, %v7081
    %v7217 = vadd.f32 %v6880, %v7086
    %v7218 = vadd.f32 %v6886, %v7091
    %v7219 = vadd.f32 %v6892, %v7096
    %v7220 = vadd.f32 %v6898, %v7101
    %v7221 = vadd.f32 %v6904, %v7106
    %v7222 = vadd.f32 %v6910, %v7111
    %v7223 = vadd.f32 %v6916, %v7116
    %v7224 = vadd.f32 %v6922, %v7121
    %v7225 = vadd.f32 %v6928, %v7126
    %v7226 = vadd.f32 %v6934, %v7131
    %v7227 = vadd.f32 %v6940, %v7136
    %v7228 = vadd.f32 %v6946, %v7141
    %v7229 = vadd.f32 %v6952, %v7146
    %v7230 = vadd.f32 %v6958, %v7151
    %v7231 = vadd.f32 %v6964, %v7156
    %v7232 = vadd.f32 %v6970, %v7161
    %v7233 = vadd.f32 %v6976, %v7166
    %v7234 = vadd.f32 %v6982, %v7171
    %v7235 = vadd.f32 %v6988, %v7176
    %v7236 = vadd.f32 %v6994, %v7181
    %v7237 = vadd.f32 %v7000, %v7186
    %v7238 = vadd.f32 %v7006, %v7191
    %v7239 = vadd.f32 %v7012, %v7196
    %v7240 = vadd.f32 %v7018, %v7201
    %v7241 = vadd.f32 %v7024, %v7206
    %v7242 = vadd.f32 %v7030, %v7211
    %v7243 = vxor.u32 %v7213, 2147483648
    %v7244 = vxor.u32 %v7214, 2147483648
    %v7245 = vxor.u32 %v7215, 2147483648
    %v7246 = vxor.u32 %v7216, 2147483648
    %v7247 = vxor.u32 %v7217, 2147483648
    %v7248 = vxor.u32 %v7218, 2147483648
    %v7249 = vxor.u32 %v7219, 2147483648
    %v7250 = vxor.u32 %v7220, 2147483648
    %v7251 = vxor.u32 %v7221, 2147483648
    %v7252 = vxor.u32 %v7222, 2147483648
    %v7253 = vxor.u32 %v7223, 2147483648
    %v7254 = vxor.u32 %v7224, 2147483648
    %v7255 = vxor.u32 %v7225, 2147483648
    %v7256 = vxor.u32 %v7226, 2147483648
    %v7257 = vxor.u32 %v7227, 2147483648
    %v7258 = vxor.u32 %v7228, 2147483648
    %v7259 = vxor.u32 %v7229, 2147483648
    %v7260 = vxor.u32 %v7230, 2147483648
    %v7261 = vxor.u32 %v7231, 2147483648
    %v7262 = vxor.u32 %v7232, 2147483648
    %v7263 = vxor.u32 %v7233, 2147483648
    %v7264 = vxor.u32 %v7234, 2147483648
    %v7265 = vxor.u32 %v7235, 2147483648
    %v7266 = vxor.u32 %v7236, 2147483648
    %v7267 = vxor.u32 %v7237, 2147483648
    %v7268 = vxor.u32 %v7238, 2147483648
    %v7269 = vxor.u32 %v7239, 2147483648
    %v7270 = vxor.u32 %v7240, 2147483648
    %v7271 = vxor.u32 %v7241, 2147483648
    %v7272 = vxor.u32 %v7242, 2147483648
    %v7273 = vmul.f32 %v7243, 1.442695
    %v7274 = vpow.pop %v7273
    %v7275 = vmul.f32 %v7244, 1.442695
    %v7276 = vpow.pop %v7275
    %v7277 = vmul.f32 %v7245, 1.442695
    %v7278 = vpow.pop %v7277
    %v7279 = vmul.f32 %v7246, 1.442695
    %v7280 = vpow.pop %v7279
    %v7281 = vmul.f32 %v7247, 1.442695
    %v7282 = vpow.pop %v7281
    %v7283 = vmul.f32 %v7248, 1.442695
    %v7284 = vpow.pop %v7283
    %v7285 = vmul.f32 %v7249, 1.442695
    %v7286 = vpow.pop %v7285
    %v7287 = vmul.f32 %v7250, 1.442695
    %v7288 = vpow.pop %v7287
    %v7289 = vmul.f32 %v7251, 1.442695
    %v7290 = vpow.pop %v7289
    %v7291 = vmul.f32 %v7252, 1.442695
    %v7292 = vpow.pop %v7291
    %v7293 = vmul.f32 %v7253, 1.442695
    %v7294 = vpow.pop %v7293
    %v7295 = vmul.f32 %v7254, 1.442695
    %v7296 = vpow.pop %v7295
    %v7297 = vmul.f32 %v7255, 1.442695
    %v7298 = vpow.pop %v7297
    %v7299 = vmul.f32 %v7256, 1.442695
    %v7300 = vpow.pop %v7299
    %v7301 = vmul.f32 %v7257, 1.442695
    %v7302 = vpow.pop %v7301
    %v7303 = vmul.f32 %v7258, 1.442695
    %v7304 = vpow.pop %v7303
    %v7305 = vmul.f32 %v7259, 1.442695
    %v7306 = vpow.pop %v7305
    %v7307 = vmul.f32 %v7260, 1.442695
    %v7308 = vpow.pop %v7307
    %v7309 = vmul.f32 %v7261, 1.442695
    %v7310 = vpow.pop %v7309
    %v7311 = vmul.f32 %v7262, 1.442695
    %v7312 = vpow.pop %v7311
    %v7313 = vmul.f32 %v7263, 1.442695
    %v7314 = vpow.pop %v7313
    %v7315 = vmul.f32 %v7264, 1.442695
    %v7316 = vpow.pop %v7315
    %v7317 = vmul.f32 %v7265, 1.442695
    %v7318 = vpow.pop %v7317
    %v7319 = vmul.f32 %v7266, 1.442695
    %v7320 = vpow.pop %v7319
    %v7321 = vmul.f32 %v7267, 1.442695
    %v7322 = vpow.pop %v7321
    %v7323 = vmul.f32 %v7268, 1.442695
    %v7324 = vpow.pop %v7323
    %v7325 = vmul.f32 %v7269, 1.442695
    %v7326 = vpow.pop %v7325
    %v7327 = vmul.f32 %v7270, 1.442695
    %v7328 = vpow.pop %v7327
    %v7329 = vmul.f32 %v7271, 1.442695
    %v7330 = vpow.pop %v7329
    %v7331 = vmul.f32 %v7272, 1.442695
    %v7332 = vpow.pop %v7331
    %v7333 = vadd.f32 %v7274, 1.0
    %v7334 = vadd.f32 %v7276, 1.0
    %v7335 = vadd.f32 %v7278, 1.0
    %v7336 = vadd.f32 %v7280, 1.0
    %v7337 = vadd.f32 %v7282, 1.0
    %v7338 = vadd.f32 %v7284, 1.0
    %v7339 = vadd.f32 %v7286, 1.0
    %v7340 = vadd.f32 %v7288, 1.0
    %v7341 = vadd.f32 %v7290, 1.0
    %v7342 = vadd.f32 %v7292, 1.0
    %v7343 = vadd.f32 %v7294, 1.0
    %v7344 = vadd.f32 %v7296, 1.0
    %v7345 = vadd.f32 %v7298, 1.0
    %v7346 = vadd.f32 %v7300, 1.0
    %v7347 = vadd.f32 %v7302, 1.0
    %v7348 = vadd.f32 %v7304, 1.0
    %v7349 = vadd.f32 %v7306, 1.0
    %v7350 = vadd.f32 %v7308, 1.0
    %v7351 = vadd.f32 %v7310, 1.0
    %v7352 = vadd.f32 %v7312, 1.0
    %v7353 = vadd.f32 %v7314, 1.0
    %v7354 = vadd.f32 %v7316, 1.0
    %v7355 = vadd.f32 %v7318, 1.0
    %v7356 = vadd.f32 %v7320, 1.0
    %v7357 = vadd.f32 %v7322, 1.0
    %v7358 = vadd.f32 %v7324, 1.0
    %v7359 = vadd.f32 %v7326, 1.0
    %v7360 = vadd.f32 %v7328, 1.0
    %v7361 = vadd.f32 %v7330, 1.0
    %v7362 = vadd.f32 %v7332, 1.0
    %v7363 = vrcp.pop %v7333
    %v7364 = vmul.f32 1.0, %v7363
    %v7365 = vrcp.pop %v7334
    %v7366 = vmul.f32 1.0, %v7365
    %v7367 = vrcp.pop %v7335
    %v7368 = vmul.f32 1.0, %v7367
    %v7369 = vrcp.pop %v7336
    %v7370 = vmul.f32 1.0, %v7369
    %v7371 = vrcp.pop %v7337
    %v7372 = vmul.f32 1.0, %v7371
    %v7373 = vrcp.pop %v7338
    %v7374 = vmul.f32 1.0, %v7373
    %v7375 = vrcp.pop %v7339
    %v7376 = vmul.f32 1.0, %v7375
    %v7377 = vrcp.pop %v7340
    %v7378 = vmul.f32 1.0, %v7377
    %v7379 = vrcp.pop %v7341
    %v7380 = vmul.f32 1.0, %v7379
    %v7381 = vrcp.pop %v7342
    %v7382 = vmul.f32 1.0, %v7381
    %v7383 = vrcp.pop %v7343
    %v7384 = vmul.f32 1.0, %v7383
    %v7385 = vrcp.pop %v7344
    %v7386 = vmul.f32 1.0, %v7385
    %v7387 = vrcp.pop %v7345
    %v7388 = vmul.f32 1.0, %v7387
    %v7389 = vrcp.pop %v7346
    %v7390 = vmul.f32 1.0, %v7389
    %v7391 = vrcp.pop %v7347
    %v7392 = vmul.f32 1.0, %v7391
    %v7393 = vrcp.pop %v7348
    %v7394 = vmul.f32 1.0, %v7393
    %v7395 = vrcp.pop %v7349
    %v7396 = vmul.f32 1.0, %v7395
    %v7397 = vrcp.pop %v7350
    %v7398 = vmul.f32 1.0, %v7397
    %v7399 = vrcp.pop %v7351
    %v7400 = vmul.f32 1.0, %v7399
    %v7401 = vrcp.pop %v7352
    %v7402 = vmul.f32 1.0, %v7401
    %v7403 = vrcp.pop %v7353
    %v7404 = vmul.f32 1.0, %v7403
    %v7405 = vrcp.pop %v7354
    %v7406 = vmul.f32 1.0, %v7405
    %v7407 = vrcp.pop %v7355
    %v7408 = vmul.f32 1.0, %v7407
    %v7409 = vrcp.pop %v7356
    %v7410 = vmul.f32 1.0, %v7409
    %v7411 = vrcp.pop %v7357
    %v7412 = vmul.f32 1.0, %v7411
    %v7413 = vrcp.pop %v7358
    %v7414 = vmul.f32 1.0, %v7413
    %v7415 = vrcp.pop %v7359
    %v7416 = vmul.f32 1.0, %v7415
    %v7417 = vrcp.pop %v7360
    %v7418 = vmul.f32 1.0, %v7417
    %v7419 = vrcp.pop %v7361
    %v7420 = vmul.f32 1.0, %v7419
    %v7421 = vrcp.pop %v7362
    %v7422 = vmul.f32 1.0, %v7421
    %vm7423 = vcmask 244736
    %7424 = vst.msk [vmem:[%s7] sm:$0xff] %vm7423, %v7364
    %7425 = vst.msk [vmem:[%s7 + $0x8] sm:$0xff] %vm7423, %v7366
    %7426 = vst.msk [vmem:[%s7 + $0x10] sm:$0xff] %vm7423, %v7368
    %7427 = vst.msk [vmem:[%s7 + $0x18] sm:$0xff] %vm7423, %v7370
    %7428 = vst.msk [vmem:[%s7 + $0x20] sm:$0xff] %vm7423, %v7372
    %7429 = vst.msk [vmem:[%s7 + $0x28] sm:$0xff] %vm7423, %v7374
    %7430 = vst.msk [vmem:[%s7 + $0x30] sm:$0xff] %vm7423, %v7376
    %7431 = vst.msk [vmem:[%s7 + $0x38] sm:$0xff] %vm7423, %v7378
    %7432 = vst.msk [vmem:[%s7 + $0x40] sm:$0xff] %vm7423, %v7380
    %7433 = vst.msk [vmem:[%s7 + $0x48] sm:$0xff] %vm7423, %v7382
    %7434 = vst.msk [vmem:[%s7 + $0x50] sm:$0xff] %vm7423, %v7384
    %7435 = vst.msk [vmem:[%s7 + $0x58] sm:$0xff] %vm7423, %v7386
    %7436 = vst.msk [vmem:[%s7 + $0x60] sm:$0xff] %vm7423, %v7388
    %7437 = vst.msk [vmem:[%s7 + $0x68] sm:$0xff] %vm7423, %v7390
    %7438 = vst.msk [vmem:[%s7 + $0x70] sm:$0xff] %vm7423, %v7392
    %7439 = vst.msk [vmem:[%s7 + $0x78] sm:$0xff] %vm7423, %v7394
    %7440 = vst.msk [vmem:[%s7 + $0x80] sm:$0xff] %vm7423, %v7396
    %7441 = vst.msk [vmem:[%s7 + $0x88] sm:$0xff] %vm7423, %v7398
    %7442 = vst.msk [vmem:[%s7 + $0x90] sm:$0xff] %vm7423, %v7400
    %7443 = vst.msk [vmem:[%s7 + $0x98] sm:$0xff] %vm7423, %v7402
    %7444 = vst.msk [vmem:[%s7 + $0xa0] sm:$0xff] %vm7423, %v7404
    %7445 = vst.msk [vmem:[%s7 + $0xa8] sm:$0xff] %vm7423, %v7406
    %7446 = vst.msk [vmem:[%s7 + $0xb0] sm:$0xff] %vm7423, %v7408
    %7447 = vst.msk [vmem:[%s7 + $0xb8] sm:$0xff] %vm7423, %v7410
    %7448 = vst.msk [vmem:[%s7 + $0xc0] sm:$0xff] %vm7423, %v7412
    %7449 = vst.msk [vmem:[%s7 + $0xc8] sm:$0xff] %vm7423, %v7414
    %7450 = vst.msk [vmem:[%s7 + $0xd0] sm:$0xff] %vm7423, %v7416
    %7451 = vst.msk [vmem:[%s7 + $0xd8] sm:$0xff] %vm7423, %v7418
    %7452 = vst.msk [vmem:[%s7 + $0xe0] sm:$0xff] %vm7423, %v7420
    %7453 = vst.msk [vmem:[%s7 + $0xe8] sm:$0xff] %vm7423, %v7422
    %v7454 = vld [vmem:[%s5] sm:$0xff]
    %v7455 = vld [vmem:[%s5 + $0x8] sm:$0xff]
    %v7456 = vld [vmem:[%s5 + $0x10] sm:$0xff]
    %v7457 = vld [vmem:[%s5 + $0x18] sm:$0xff]
    %v7458 = vld [vmem:[%s5 + $0x20] sm:$0xff]
    %v7459 = vld [vmem:[%s5 + $0x28] sm:$0xff]
    %v7460 = vld [vmem:[%s5 + $0x30] sm:$0xff]
    %v7461 = vld [vmem:[%s5 + $0x38] sm:$0xff]
    %v7462 = vld [vmem:[%s5 + $0x40] sm:$0xff]
    %v7463 = vld [vmem:[%s5 + $0x48] sm:$0xff]
    %v7464 = vld [vmem:[%s5 + $0x50] sm:$0xff]
    %v7465 = vld [vmem:[%s5 + $0x58] sm:$0xff]
    %v7466 = vld [vmem:[%s5 + $0x60] sm:$0xff]
    %v7467 = vld [vmem:[%s5 + $0x68] sm:$0xff]
    %v7468 = vld [vmem:[%s5 + $0x70] sm:$0xff]
    %v7469 = vld [vmem:[%s5 + $0x78] sm:$0xff]
    %v7470 = vld [vmem:[%s5 + $0x80] sm:$0xff]
    %v7471 = vld [vmem:[%s5 + $0x88] sm:$0xff]
    %v7472 = vld [vmem:[%s5 + $0x90] sm:$0xff]
    %v7473 = vld [vmem:[%s5 + $0x98] sm:$0xff]
    %v7474 = vld [vmem:[%s5 + $0xa0] sm:$0xff]
    %v7475 = vld [vmem:[%s5 + $0xa8] sm:$0xff]
    %v7476 = vld [vmem:[%s5 + $0xb0] sm:$0xff]
    %v7477 = vld [vmem:[%s5 + $0xb8] sm:$0xff]
    %v7478 = vld [vmem:[%s5 + $0xc0] sm:$0xff]
    %v7479 = vld [vmem:[%s5 + $0xc8] sm:$0xff]
    %v7480 = vld [vmem:[%s5 + $0xd0] sm:$0xff]
    %v7481 = vld [vmem:[%s5 + $0xd8] sm:$0xff]
    %v7482 = vld [vmem:[%s5 + $0xe0] sm:$0xff]
    %v7483 = vld [vmem:[%s5 + $0xe8] sm:$0xff]
    %v7484 = vld [vmem:[%s5 + $0xf0] sm:$0xff]
    %v7485 = vld [vmem:[%s5 + $0xf8] sm:$0xff]
    %v7486 = vld [vmem:[%s5 + $0x100] sm:$0xff]
    %v7487 = vld [vmem:[%s5 + $0x108] sm:$0xff]
    %v7488 = vld [vmem:[%s5 + $0x110] sm:$0xff]
    %v7489 = vld [vmem:[%s5 + $0x118] sm:$0xff]
    %v7490 = vld [vmem:[%s5 + $0x120] sm:$0xff]
    %v7491 = vld [vmem:[%s5 + $0x128] sm:$0xff]
    %v7492 = vld [vmem:[%s5 + $0x130] sm:$0xff]
    %v7493 = vld [vmem:[%s5 + $0x138] sm:$0xff]
    %v7494 = vld [vmem:[%s5 + $0x140] sm:$0xff]
    %v7495 = vld [vmem:[%s5 + $0x148] sm:$0xff]
    %v7496 = vld [vmem:[%s6] sm:$0xff]
    %v7497 = vld [vmem:[%s6 + $0x8] sm:$0xff]
    %v7498 = vld [vmem:[%s6 + $0x10] sm:$0xff]
    %v7499 = vld [vmem:[%s6 + $0x18] sm:$0xff]
    %v7500 = vld [vmem:[%s6 + $0x20] sm:$0xff]
    %v7501 = vld [vmem:[%s6 + $0x28] sm:$0xff]
    %v7502 = vld [vmem:[%s6 + $0x30] sm:$0xff]
    %v7503 = vld [vmem:[%s6 + $0x38] sm:$0xff]
    %v7504 = vld [vmem:[%s6 + $0x40] sm:$0xff]
    %v7505 = vld [vmem:[%s6 + $0x48] sm:$0xff]
    %v7506 = vld [vmem:[%s6 + $0x50] sm:$0xff]
    %v7507 = vld [vmem:[%s6 + $0x58] sm:$0xff]
    %v7508 = vld [vmem:[%s6 + $0x60] sm:$0xff]
    %v7509 = vld [vmem:[%s6 + $0x68] sm:$0xff]
    %v7510 = vld [vmem:[%s6 + $0x70] sm:$0xff]
    %v7511 = vld [vmem:[%s6 + $0x78] sm:$0xff]
    %v7512 = vld [vmem:[%s6 + $0x80] sm:$0xff]
    %v7513 = vld [vmem:[%s6 + $0x88] sm:$0xff]
    %v7514 = vld [vmem:[%s6 + $0x90] sm:$0xff]
    %v7515 = vld [vmem:[%s6 + $0x98] sm:$0xff]
    %v7516 = vld [vmem:[%s6 + $0xa0] sm:$0xff]
    %7518 = vset.pattern.permute.xlu0 0
    %7519 = vperm.xlu0 %7518, %v7496
    %v7520 = vpop.permute.xlu0 %7519
    %7523 = vset.pattern.permute.xlu0 0
    %7524 = vperm.xlu0 %7523, %v7497
    %v7525 = vpop.permute.xlu0 %7524
    %7528 = vset.pattern.permute.xlu0 0
    %7529 = vperm.xlu0 %7528, %v7498
    %v7530 = vpop.permute.xlu0 %7529
    %7533 = vset.pattern.permute.xlu0 0
    %7534 = vperm.xlu0 %7533, %v7499
    %v7535 = vpop.permute.xlu0 %7534
    %7538 = vset.pattern.permute.xlu0 0
    %7539 = vperm.xlu0 %7538, %v7500
    %v7540 = vpop.permute.xlu0 %7539
    %7543 = vset.pattern.permute.xlu0 0
    %7544 = vperm.xlu0 %7543, %v7501
    %v7545 = vpop.permute.xlu0 %7544
    %7548 = vset.pattern.permute.xlu0 0
    %7549 = vperm.xlu0 %7548, %v7502
    %v7550 = vpop.permute.xlu0 %7549
    %7553 = vset.pattern.permute.xlu0 0
    %7554 = vperm.xlu0 %7553, %v7503
    %v7555 = vpop.permute.xlu0 %7554
    %7558 = vset.pattern.permute.xlu0 0
    %7559 = vperm.xlu0 %7558, %v7504
    %v7560 = vpop.permute.xlu0 %7559
    %7563 = vset.pattern.permute.xlu0 0
    %7564 = vperm.xlu0 %7563, %v7505
    %v7565 = vpop.permute.xlu0 %7564
    %7568 = vset.pattern.permute.xlu0 0
    %7569 = vperm.xlu0 %7568, %v7506
    %v7570 = vpop.permute.xlu0 %7569
    %7573 = vset.pattern.permute.xlu0 0
    %7574 = vperm.xlu0 %7573, %v7507
    %v7575 = vpop.permute.xlu0 %7574
    %7578 = vset.pattern.permute.xlu0 0
    %7579 = vperm.xlu0 %7578, %v7508
    %v7580 = vpop.permute.xlu0 %7579
    %7583 = vset.pattern.permute.xlu0 0
    %7584 = vperm.xlu0 %7583, %v7509
    %v7585 = vpop.permute.xlu0 %7584
    %7588 = vset.pattern.permute.xlu0 0
    %7589 = vperm.xlu0 %7588, %v7510
    %v7590 = vpop.permute.xlu0 %7589
    %7593 = vset.pattern.permute.xlu0 0
    %7594 = vperm.xlu0 %7593, %v7511
    %v7595 = vpop.permute.xlu0 %7594
    %7598 = vset.pattern.permute.xlu0 0
    %7599 = vperm.xlu0 %7598, %v7512
    %v7600 = vpop.permute.xlu0 %7599
    %7603 = vset.pattern.permute.xlu0 0
    %7604 = vperm.xlu0 %7603, %v7513
    %v7605 = vpop.permute.xlu0 %7604
    %7608 = vset.pattern.permute.xlu0 0
    %7609 = vperm.xlu0 %7608, %v7514
    %v7610 = vpop.permute.xlu0 %7609
    %7613 = vset.pattern.permute.xlu0 0
    %7614 = vperm.xlu0 %7613, %v7515
    %v7615 = vpop.permute.xlu0 %7614
    %7618 = vset.pattern.permute.xlu0 0
    %7619 = vperm.xlu0 %7618, %v7516
    %v7620 = vpop.permute.xlu0 %7619
    %v7623 = vsel %vm103, %v7455, 0
    %v7626 = vsel %vm103, %v7457, 0
    %v7629 = vsel %vm103, %v7459, 0
    %v7632 = vsel %vm103, %v7461, 0
    %v7635 = vsel %vm103, %v7463, 0
    %v7638 = vsel %vm103, %v7465, 0
    %v7641 = vsel %vm103, %v7467, 0
    %v7644 = vsel %vm103, %v7469, 0
    %v7647 = vsel %vm103, %v7471, 0
    %v7650 = vsel %vm103, %v7473, 0
    %v7653 = vsel %vm103, %v7475, 0
    %v7656 = vsel %vm103, %v7477, 0
    %v7659 = vsel %vm103, %v7479, 0
    %v7662 = vsel %vm103, %v7481, 0
    %v7665 = vsel %vm103, %v7483, 0
    %v7668 = vsel %vm103, %v7485, 0
    %v7671 = vsel %vm103, %v7487, 0
    %v7674 = vsel %vm103, %v7489, 0
    %v7677 = vsel %vm103, %v7491, 0
    %v7680 = vsel %vm103, %v7493, 0
    %v7683 = vsel %vm103, %v7495, 0
    %7685 = vmatprep.subr.mxu0 0.0
    %v7686 = vand.u32 %v7213, 4294901760
    %7687 = vmatpush1.msra.mxu0 %v7686
    %7688 = vmatprep.subr.mxu0 0.0
    %v7689 = vand.u32 %v7214, 4294901760
    %7690 = vmatpush1.msra.mxu0 %v7689
    %7691 = vmatprep.subr.mxu0 0.0
    %v7692 = vand.u32 %v7215, 4294901760
    %7693 = vmatpush1.msra.mxu0 %v7692
    %7694 = vmatprep.subr.mxu0 0.0
    %v7695 = vand.u32 %v7216, 4294901760
    %7696 = vmatpush1.msra.mxu0 %v7695
    %7697 = vmatprep.subr.mxu0 0.0
    %v7698 = vand.u32 %v7217, 4294901760
    %7699 = vmatpush1.msra.mxu0 %v7698
    %7700 = vmatprep.subr.mxu0 0.0
    %v7701 = vand.u32 %v7218, 4294901760
    %7702 = vmatpush1.msra.mxu0 %v7701
    %7703 = vmatprep.subr.mxu0 0.0
    %v7704 = vand.u32 %v7219, 4294901760
    %7705 = vmatpush1.msra.mxu0 %v7704
    %7706 = vmatprep.subr.mxu0 0.0
    %v7707 = vand.u32 %v7220, 4294901760
    %7708 = vmatpush1.msra.mxu0 %v7707
    %7709 = vmatprep.subr.mxu0 0.0
    %v7710 = vand.u32 %v7221, 4294901760
    %7711 = vmatpush1.msra.mxu0 %v7710
    %7712 = vmatprep.subr.mxu0 0.0
    %v7713 = vand.u32 %v7222, 4294901760
    %7714 = vmatpush1.msra.mxu0 %v7713
    %7715 = vmatprep.subr.mxu0 0.0
    %v7716 = vand.u32 %v7223, 4294901760
    %7717 = vmatpush1.msra.mxu0 %v7716
    %7718 = vmatprep.subr.mxu0 0.0
    %v7719 = vand.u32 %v7224, 4294901760
    %7720 = vmatpush1.msra.mxu0 %v7719
    %7721 = vmatprep.subr.mxu0 0.0
    %v7722 = vand.u32 %v7225, 4294901760
    %7723 = vmatpush1.msra.mxu0 %v7722
    %7724 = vmatprep.subr.mxu0 0.0
    %v7725 = vand.u32 %v7226, 4294901760
    %7726 = vmatpush1.msra.mxu0 %v7725
    %7727 = vmatprep.subr.mxu0 0.0
    %v7728 = vand.u32 %v7227, 4294901760
    %7729 = vmatpush1.msra.mxu0 %v7728
    %7730 = vmatprep.subr.mxu0 0.0
    %v7731 = vand.u32 %v7228, 4294901760
    %7732 = vmatpush1.msra.mxu0 %v7731
    %7733 = vmatprep.subr.mxu0 0.0
    %v7734 = vand.u32 %v7229, 4294901760
    %7735 = vmatpush1.msra.mxu0 %v7734
    %7736 = vmatprep.subr.mxu0 0.0
    %v7737 = vand.u32 %v7230, 4294901760
    %7738 = vmatpush1.msra.mxu0 %v7737
    %7739 = vmatprep.subr.mxu0 0.0
    %v7740 = vand.u32 %v7231, 4294901760
    %7741 = vmatpush1.msra.mxu0 %v7740
    %7742 = vmatprep.subr.mxu0 0.0
    %v7743 = vand.u32 %v7232, 4294901760
    %7744 = vmatpush1.msra.mxu0 %v7743
    %7745 = vmatprep.subr.mxu0 0.0
    %v7746 = vand.u32 %v7233, 4294901760
    %7747 = vmatpush1.msra.mxu0 %v7746
    %7748 = vmatprep.subr.mxu0 0.0
    %v7749 = vand.u32 %v7234, 4294901760
    %7750 = vmatpush1.msra.mxu0 %v7749
    %7751 = vmatprep.subr.mxu0 0.0
    %v7752 = vand.u32 %v7235, 4294901760
    %7753 = vmatpush1.msra.mxu0 %v7752
    %7754 = vmatprep.subr.mxu0 0.0
    %v7755 = vand.u32 %v7236, 4294901760
    %7756 = vmatpush1.msra.mxu0 %v7755
    %7757 = vmatprep.subr.mxu0 0.0
    %v7758 = vand.u32 %v7237, 4294901760
    %7759 = vmatpush1.msra.mxu0 %v7758
    %7760 = vmatprep.subr.mxu0 0.0
    %v7761 = vand.u32 %v7238, 4294901760
    %7762 = vmatpush1.msra.mxu0 %v7761
    %7763 = vmatprep.subr.mxu0 0.0
    %v7764 = vand.u32 %v7239, 4294901760
    %7765 = vmatpush1.msra.mxu0 %v7764
    %7766 = vmatprep.subr.mxu0 0.0
    %v7767 = vand.u32 %v7240, 4294901760
    %7768 = vmatpush1.msra.mxu0 %v7767
    %7769 = vmatprep.subr.mxu0 0.0
    %v7770 = vand.u32 %v7241, 4294901760
    %7771 = vmatpush1.msra.mxu0 %v7770
    %7772 = vmatprep.subr.mxu0 0.0
    %v7773 = vand.u32 %v7242, 4294901760
    %7774 = vmatpush1.msra.mxu0 %v7773
    %7775 = vmatprep.subr.mxu0 0.0
    %7776 = vmatpush1.msra.mxu0 0.0
    %7777 = vmatprep.subr.mxu0 0.0
    %7778 = vmatpush1.msra.mxu0 0.0
    %v7779 = vand.u32 %v7623, 4294901760
    %v7780 = vsub.f32 %v7623, %v7779
    %v7781 = vand.u32 %v7780, 4294901760
    %v7782 = vsub.f32 %v7780, %v7781
    %v7783 = vand.u32 %v7782, 4294901760
    %7784 = vmatprep.mubr.f32.mxu0 %v7783
    %v7785 = vand.u32 %v7454, 4294901760
    %v7786 = vsub.f32 %v7454, %v7785
    %v7787 = vand.u32 %v7786, 4294901760
    %v7788 = vsub.f32 %v7786, %v7787
    %v7789 = vand.u32 %v7788, 4294901760
    %7790 = vmatmul.mubr.f32.gmra.mrb[0].mxu0 %v7789
    %v7791 = vpop.f32.mrb[0].mxu0
    %v7792 = vadd.f32 %v7520, %v7791
    %v7793 = vpop.f32.mrb[0].mxu0
    %v7794 = vand.u32 %v7626, 4294901760
    %v7795 = vsub.f32 %v7626, %v7794
    %v7796 = vand.u32 %v7795, 4294901760
    %v7797 = vsub.f32 %v7795, %v7796
    %v7798 = vand.u32 %v7797, 4294901760
    %7799 = vmatprep.mubr.f32.mxu0 %v7798
    %v7800 = vand.u32 %v7456, 4294901760
    %v7801 = vsub.f32 %v7456, %v7800
    %v7802 = vand.u32 %v7801, 4294901760
    %v7803 = vsub.f32 %v7801, %v7802
    %v7804 = vand.u32 %v7803, 4294901760
    %7805 = vmatmul.mubr.f32.gmra.mrb[0].mxu0 %v7804
    %v7806 = vpop.f32.mrb[0].mxu0
    %v7807 = vadd.f32 %v7525, %v7806
    %v7808 = vpop.f32.mrb[0].mxu0
    %v7809 = vand.u32 %v7629, 4294901760
    %v7810 = vsub.f32 %v7629, %v7809
    %v7811 = vand.u32 %v7810, 4294901760
    %v7812 = vsub.f32 %v7810, %v7811
    %v7813 = vand.u32 %v7812, 4294901760
    %7814 = vmatprep.mubr.f32.mxu0 %v7813
    %v7815 = vand.u32 %v7458, 4294901760
    %v7816 = vsub.f32 %v7458, %v7815
    %v7817 = vand.u32 %v7816, 4294901760
    %v7818 = vsub.f32 %v7816, %v7817
    %v7819 = vand.u32 %v7818, 4294901760
    %7820 = vmatmul.mubr.f32.gmra.mrb[0].mxu0 %v7819
    %v7821 = vpop.f32.mrb[0].mxu0
    %v7822 = vadd.f32 %v7530, %v7821
    %v7823 = vpop.f32.mrb[0].mxu0
    %v7824 = vand.u32 %v7632, 4294901760
    %v7825 = vsub.f32 %v7632, %v7824
    %v7826 = vand.u32 %v7825, 4294901760
    %v7827 = vsub.f32 %v7825, %v7826
    %v7828 = vand.u32 %v7827, 4294901760
    %7829 = vmatprep.mubr.f32.mxu0 %v7828
    %v7830 = vand.u32 %v7460, 4294901760
    %v7831 = vsub.f32 %v7460, %v7830
    %v7832 = vand.u32 %v7831, 4294901760
    %v7833 = vsub.f32 %v7831, %v7832
    %v7834 = vand.u32 %v7833, 4294901760
    %7835 = vmatmul.mubr.f32.gmra.mrb[0].mxu0 %v7834
    %v7836 = vpop.f32.mrb[0].mxu0
    %v7837 = vadd.f32 %v7535, %v7836
    %v7838 = vpop.f32.mrb[0].mxu0
    %v7839 = vand.u32 %v7635, 4294901760
    %v7840 = vsub.f32 %v7635, %v7839
    %v7841 = vand.u32 %v7840, 4294901760
    %v7842 = vsub.f32 %v7840, %v7841
    %v7843 = vand.u32 %v7842, 4294901760
    %7844 = vmatprep.mubr.f32.mxu0 %v7843
    %v7845 = vand.u32 %v7462, 4294901760
    %v7846 = vsub.f32 %v7462, %v7845
    %v7847 = vand.u32 %v7846, 4294901760
    %v7848 = vsub.f32 %v7846, %v7847
    %v7849 = vand.u32 %v7848, 4294901760
    %7850 = vmatmul.mubr.f32.gmra.mrb[0].mxu0 %v7849
    %v7851 = vpop.f32.mrb[0].mxu0
    %v7852 = vadd.f32 %v7540, %v7851
    %v7853 = vpop.f32.mrb[0].mxu0
    %v7854 = vand.u32 %v7638, 4294901760
    %v7855 = vsub.f32 %v7638, %v7854
    %v7856 = vand.u32 %v7855, 4294901760
    %v7857 = vsub.f32 %v7855, %v7856
    %v7858 = vand.u32 %v7857, 4294901760
    %7859 = vmatprep.mubr.f32.mxu0 %v7858
    %v7860 = vand.u32 %v7464, 4294901760
    %v7861 = vsub.f32 %v7464, %v7860
    %v7862 = vand.u32 %v7861, 4294901760
    %v7863 = vsub.f32 %v7861, %v7862
    %v7864 = vand.u32 %v7863, 4294901760
    %7865 = vmatmul.mubr.f32.gmra.mrb[0].mxu0 %v7864
    %v7866 = vpop.f32.mrb[0].mxu0
    %v7867 = vadd.f32 %v7545, %v7866
    %v7868 = vpop.f32.mrb[0].mxu0
    %v7869 = vand.u32 %v7641, 4294901760
    %v7870 = vsub.f32 %v7641, %v7869
    %v7871 = vand.u32 %v7870, 4294901760
    %v7872 = vsub.f32 %v7870, %v7871
    %v7873 = vand.u32 %v7872, 4294901760
    %7874 = vmatprep.mubr.f32.mxu0 %v7873
    %v7875 = vand.u32 %v7466, 4294901760
    %v7876 = vsub.f32 %v7466, %v7875
    %v7877 = vand.u32 %v7876, 4294901760
    %v7878 = vsub.f32 %v7876, %v7877
    %v7879 = vand.u32 %v7878, 4294901760
    %7880 = vmatmul.mubr.f32.gmra.mrb[0].mxu0 %v7879
    %v7881 = vpop.f32.mrb[0].mxu0
    %v7882 = vadd.f32 %v7550, %v7881
    %v7883 = vpop.f32.mrb[0].mxu0
    %v7884 = vand.u32 %v7644, 4294901760
    %v7885 = vsub.f32 %v7644, %v7884
    %v7886 = vand.u32 %v7885, 4294901760
    %v7887 = vsub.f32 %v7885, %v7886
    %v7888 = vand.u32 %v7887, 4294901760
    %7889 = vmatprep.mubr.f32.mxu0 %v7888
    %v7890 = vand.u32 %v7468, 4294901760
    %v7891 = vsub.f32 %v7468, %v7890
    %v7892 = vand.u32 %v7891, 4294901760
    %v7893 = vsub.f32 %v7891, %v7892
    %v7894 = vand.u32 %v7893, 4294901760
    %7895 = vmatmul.mubr.f32.gmra.mrb[0].mxu0 %v7894
    %v7896 = vpop.f32.mrb[0].mxu0
    %v7897 = vadd.f32 %v7555, %v7896
    %v7898 = vpop.f32.mrb[0].mxu0
    %v7899 = vand.u32 %v7647, 4294901760
    %v7900 = vsub.f32 %v7647, %v7899
    %v7901 = vand.u32 %v7900, 4294901760
    %v7902 = vsub.f32 %v7900, %v7901
    %v7903 = vand.u32 %v7902, 4294901760
    %7904 = vmatprep.mubr.f32.mxu0 %v7903
    %v7905 = vand.u32 %v7470, 4294901760
    %v7906 = vsub.f32 %v7470, %v7905
    %v7907 = vand.u32 %v7906, 4294901760
    %v7908 = vsub.f32 %v7906, %v7907
    %v7909 = vand.u32 %v7908, 4294901760
    %7910 = vmatmul.mubr.f32.gmra.mrb[0].mxu0 %v7909
    %v7911 = vpop.f32.mrb[0].mxu0
    %v7912 = vadd.f32 %v7560, %v7911
    %v7913 = vpop.f32.mrb[0].mxu0
    %v7914 = vand.u32 %v7650, 4294901760
    %v7915 = vsub.f32 %v7650, %v7914
    %v7916 = vand.u32 %v7915, 4294901760
    %v7917 = vsub.f32 %v7915, %v7916
    %v7918 = vand.u32 %v7917, 4294901760
    %7919 = vmatprep.mubr.f32.mxu0 %v7918
    %v7920 = vand.u32 %v7472, 4294901760
    %v7921 = vsub.f32 %v7472, %v7920
    %v7922 = vand.u32 %v7921, 4294901760
    %v7923 = vsub.f32 %v7921, %v7922
    %v7924 = vand.u32 %v7923, 4294901760
    %7925 = vmatmul.mubr.f32.gmra.mrb[0].mxu0 %v7924
    %v7926 = vpop.f32.mrb[0].mxu0
    %v7927 = vadd.f32 %v7565, %v7926
    %v7928 = vpop.f32.mrb[0].mxu0
    %v7929 = vand.u32 %v7653, 4294901760
    %v7930 = vsub.f32 %v7653, %v7929
    %v7931 = vand.u32 %v7930, 4294901760
    %v7932 = vsub.f32 %v7930, %v7931
    %v7933 = vand.u32 %v7932, 4294901760
    %7934 = vmatprep.mubr.f32.mxu0 %v7933
    %v7935 = vand.u32 %v7474, 4294901760
    %v7936 = vsub.f32 %v7474, %v7935
    %v7937 = vand.u32 %v7936, 4294901760
    %v7938 = vsub.f32 %v7936, %v7937
    %v7939 = vand.u32 %v7938, 4294901760
    %7940 = vmatmul.mubr.f32.gmra.mrb[0].mxu0 %v7939
    %v7941 = vpop.f32.mrb[0].mxu0
    %v7942 = vadd.f32 %v7570, %v7941
    %v7943 = vpop.f32.mrb[0].mxu0
    %v7944 = vand.u32 %v7656, 4294901760
    %v7945 = vsub.f32 %v7656, %v7944
    %v7946 = vand.u32 %v7945, 4294901760
    %v7947 = vsub.f32 %v7945, %v7946
    %v7948 = vand.u32 %v7947, 4294901760
    %7949 = vmatprep.mubr.f32.mxu0 %v7948
    %v7950 = vand.u32 %v7476, 4294901760
    %v7951 = vsub.f32 %v7476, %v7950
    %v7952 = vand.u32 %v7951, 4294901760
    %v7953 = vsub.f32 %v7951, %v7952
    %v7954 = vand.u32 %v7953, 4294901760
    %7955 = vmatmul.mubr.f32.gmra.mrb[0].mxu0 %v7954
    %v7956 = vpop.f32.mrb[0].mxu0
    %v7957 = vadd.f32 %v7575, %v7956
    %v7958 = vpop.f32.mrb[0].mxu0
    %v7959 = vand.u32 %v7659, 4294901760
    %v7960 = vsub.f32 %v7659, %v7959
    %v7961 = vand.u32 %v7960, 4294901760
    %v7962 = vsub.f32 %v7960, %v7961
    %v7963 = vand.u32 %v7962, 4294901760
    %7964 = vmatprep.mubr.f32.mxu0 %v7963
    %v7965 = vand.u32 %v7478, 4294901760
    %v7966 = vsub.f32 %v7478, %v7965
    %v7967 = vand.u32 %v7966, 4294901760
    %v7968 = vsub.f32 %v7966, %v7967
    %v7969 = vand.u32 %v7968, 4294901760
    %7970 = vmatmul.mubr.f32.gmra.mrb[0].mxu0 %v7969
    %v7971 = vpop.f32.mrb[0].mxu0
    %v7972 = vadd.f32 %v7580, %v7971
    %v7973 = vpop.f32.mrb[0].mxu0
    %v7974 = vand.u32 %v7662, 4294901760
    %v7975 = vsub.f32 %v7662, %v7974
    %v7976 = vand.u32 %v7975, 4294901760
    %v7977 = vsub.f32 %v7975, %v7976
    %v7978 = vand.u32 %v7977, 4294901760
    %7979 = vmatprep.mubr.f32.mxu0 %v7978
    %v7980 = vand.u32 %v7480, 4294901760
    %v7981 = vsub.f32 %v7480, %v7980
    %v7982 = vand.u32 %v7981, 4294901760
    %v7983 = vsub.f32 %v7981, %v7982
    %v7984 = vand.u32 %v7983, 4294901760
    %7985 = vmatmul.mubr.f32.gmra.mrb[0].mxu0 %v7984
    %v7986 = vpop.f32.mrb[0].mxu0
    %v7987 = vadd.f32 %v7585, %v7986
    %v7988 = vpop.f32.mrb[0].mxu0
    %v7989 = vand.u32 %v7665, 4294901760
    %v7990 = vsub.f32 %v7665, %v7989
    %v7991 = vand.u32 %v7990, 4294901760
    %v7992 = vsub.f32 %v7990, %v7991
    %v7993 = vand.u32 %v7992, 4294901760
    %7994 = vmatprep.mubr.f32.mxu0 %v7993
    %v7995 = vand.u32 %v7482, 4294901760
    %v7996 = vsub.f32 %v7482, %v7995
    %v7997 = vand.u32 %v7996, 4294901760
    %v7998 = vsub.f32 %v7996, %v7997
    %v7999 = vand.u32 %v7998, 4294901760
    %8000 = vmatmul.mubr.f32.gmra.mrb[0].mxu0 %v7999
    %v8001 = vpop.f32.mrb[0].mxu0
    %v8002 = vadd.f32 %v7590, %v8001
    %v8003 = vpop.f32.mrb[0].mxu0
    %v8004 = vand.u32 %v7668, 4294901760
    %v8005 = vsub.f32 %v7668, %v8004
    %v8006 = vand.u32 %v8005, 4294901760
    %v8007 = vsub.f32 %v8005, %v8006
    %v8008 = vand.u32 %v8007, 4294901760
    %8009 = vmatprep.mubr.f32.mxu0 %v8008
    %v8010 = vand.u32 %v7484, 4294901760
    %v8011 = vsub.f32 %v7484, %v8010
    %v8012 = vand.u32 %v8011, 4294901760
    %v8013 = vsub.f32 %v8011, %v8012
    %v8014 = vand.u32 %v8013, 4294901760
    %8015 = vmatmul.mubr.f32.gmra.mrb[0].mxu0 %v8014
    %v8016 = vpop.f32.mrb[0].mxu0
    %v8017 = vadd.f32 %v7595, %v8016
    %v8018 = vpop.f32.mrb[0].mxu0
    %v8019 = vand.u32 %v7671, 4294901760
    %v8020 = vsub.f32 %v7671, %v8019
    %v8021 = vand.u32 %v8020, 4294901760
    %v8022 = vsub.f32 %v8020, %v8021
    %v8023 = vand.u32 %v8022, 4294901760
    %8024 = vmatprep.mubr.f32.mxu0 %v8023
    %v8025 = vand.u32 %v7486, 4294901760
    %v8026 = vsub.f32 %v7486, %v8025
    %v8027 = vand.u32 %v8026, 4294901760
    %v8028 = vsub.f32 %v8026, %v8027
    %v8029 = vand.u32 %v8028, 4294901760
    %8030 = vmatmul.mubr.f32.gmra.mrb[0].mxu0 %v8029
    %v8031 = vpop.f32.mrb[0].mxu0
    %v8032 = vadd.f32 %v7600, %v8031
    %v8033 = vpop.f32.mrb[0].mxu0
    %v8034 = vand.u32 %v7674, 4294901760
    %v8035 = vsub.f32 %v7674, %v8034
    %v8036 = vand.u32 %v8035, 4294901760
    %v8037 = vsub.f32 %v8035, %v8036
    %v8038 = vand.u32 %v8037, 4294901760
    %8039 = vmatprep.mubr.f32.mxu0 %v8038
    %v8040 = vand.u32 %v7488, 4294901760
    %v8041 = vsub.f32 %v7488, %v8040
    %v8042 = vand.u32 %v8041, 4294901760
    %v8043 = vsub.f32 %v8041, %v8042
    %v8044 = vand.u32 %v8043, 4294901760
    %8045 = vmatmul.mubr.f32.gmra.mrb[0].mxu0 %v8044
    %v8046 = vpop.f32.mrb[0].mxu0
    %v8047 = vadd.f32 %v7605, %v8046
    %v8048 = vpop.f32.mrb[0].mxu0
    %v8049 = vand.u32 %v7677, 4294901760
    %v8050 = vsub.f32 %v7677, %v8049
    %v8051 = vand.u32 %v8050, 4294901760
    %v8052 = vsub.f32 %v8050, %v8051
    %v8053 = vand.u32 %v8052, 4294901760
    %8054 = vmatprep.mubr.f32.mxu0 %v8053
    %v8055 = vand.u32 %v7490, 4294901760
    %v8056 = vsub.f32 %v7490, %v8055
    %v8057 = vand.u32 %v8056, 4294901760
    %v8058 = vsub.f32 %v8056, %v8057
    %v8059 = vand.u32 %v8058, 4294901760
    %8060 = vmatmul.mubr.f32.gmra.mrb[0].mxu0 %v8059
    %v8061 = vpop.f32.mrb[0].mxu0
    %v8062 = vadd.f32 %v7610, %v8061
    %v8063 = vpop.f32.mrb[0].mxu0
    %v8064 = vand.u32 %v7680, 4294901760
    %v8065 = vsub.f32 %v7680, %v8064
    %v8066 = vand.u32 %v8065, 4294901760
    %v8067 = vsub.f32 %v8065, %v8066
    %v8068 = vand.u32 %v8067, 4294901760
    %8069 = vmatprep.mubr.f32.mxu0 %v8068
    %v8070 = vand.u32 %v7492, 4294901760
    %v8071 = vsub.f32 %v7492, %v8070
    %v8072 = vand.u32 %v8071, 4294901760
    %v8073 = vsub.f32 %v8071, %v8072
    %v8074 = vand.u32 %v8073, 4294901760
    %8075 = vmatmul.mubr.f32.gmra.mrb[0].mxu0 %v8074
    %v8076 = vpop.f32.mrb[0].mxu0
    %v8077 = vadd.f32 %v7615, %v8076
    %v8078 = vpop.f32.mrb[0].mxu0
    %v8079 = vand.u32 %v7683, 4294901760
    %v8080 = vsub.f32 %v7683, %v8079
    %v8081 = vand.u32 %v8080, 4294901760
    %v8082 = vsub.f32 %v8080, %v8081
    %v8083 = vand.u32 %v8082, 4294901760
    %8084 = vmatprep.mubr.f32.mxu0 %v8083
    %v8085 = vand.u32 %v7494, 4294901760
    %v8086 = vsub.f32 %v7494, %v8085
    %v8087 = vand.u32 %v8086, 4294901760
    %v8088 = vsub.f32 %v8086, %v8087
    %v8089 = vand.u32 %v8088, 4294901760
    %8090 = vmatmul.mubr.f32.gmra.mrb[0].mxu0 %v8089
    %v8091 = vpop.f32.mrb[0].mxu0
    %v8092 = vadd.f32 %v7620, %v8091
    %v8093 = vpop.f32.mrb[0].mxu0
    %8094 = vdwg.mxu0
    %8095 = vmatprep.subr.mxu0 0.0
    %v8096 = vand.u32 %v7213, 4294901760
    %v8097 = vsub.f32 %v7213, %v8096
    %v8098 = vand.u32 %v8097, 4294901760
    %v8099 = vsub.f32 %v8097, %v8098
    %v8100 = vand.u32 %v8099, 4294901760
    %8101 = vmatpush1.msra.mxu0 %v8100
    %8102 = vmatprep.subr.mxu0 0.0
    %v8103 = vand.u32 %v7214, 4294901760
    %v8104 = vsub.f32 %v7214, %v8103
    %v8105 = vand.u32 %v8104, 4294901760
    %v8106 = vsub.f32 %v8104, %v8105
    %v8107 = vand.u32 %v8106, 4294901760
    %8108 = vmatpush1.msra.mxu0 %v8107
    %8109 = vmatprep.subr.mxu0 0.0
    %v8110 = vand.u32 %v7215, 4294901760
    %v8111 = vsub.f32 %v7215, %v8110
    %v8112 = vand.u32 %v8111, 4294901760
    %v8113 = vsub.f32 %v8111, %v8112
    %v8114 = vand.u32 %v8113, 4294901760
    %8115 = vmatpush1.msra.mxu0 %v8114
    %8116 = vmatprep.subr.mxu0 0.0
    %v8117 = vand.u32 %v7216, 4294901760
    %v8118 = vsub.f32 %v7216, %v8117
    %v8119 = vand.u32 %v8118, 4294901760
    %v8120 = vsub.f32 %v8118, %v8119
    %v8121 = vand.u32 %v8120, 4294901760
    %8122 = vmatpush1.msra.mxu0 %v8121
    %8123 = vmatprep.subr.mxu0 0.0
    %v8124 = vand.u32 %v7217, 4294901760
    %v8125 = vsub.f32 %v7217, %v8124
    %v8126 = vand.u32 %v8125, 4294901760
    %v8127 = vsub.f32 %v8125, %v8126
    %v8128 = vand.u32 %v8127, 4294901760
    %8129 = vmatpush1.msra.mxu0 %v8128
    %8130 = vmatprep.subr.mxu0 0.0
    %v8131 = vand.u32 %v7218, 4294901760
    %v8132 = vsub.f32 %v7218, %v8131
    %v8133 = vand.u32 %v8132, 4294901760
    %v8134 = vsub.f32 %v8132, %v8133
    %v8135 = vand.u32 %v8134, 4294901760
    %8136 = vmatpush1.msra.mxu0 %v8135
    %8137 = vmatprep.subr.mxu0 0.0
    %v8138 = vand.u32 %v7219, 4294901760
    %v8139 = vsub.f32 %v7219, %v8138
    %v8140 = vand.u32 %v8139, 4294901760
    %v8141 = vsub.f32 %v8139, %v8140
    %v8142 = vand.u32 %v8141, 4294901760
    %8143 = vmatpush1.msra.mxu0 %v8142
    %8144 = vmatprep.subr.mxu0 0.0
    %v8145 = vand.u32 %v7220, 4294901760
    %v8146 = vsub.f32 %v7220, %v8145
    %v8147 = vand.u32 %v8146, 4294901760
    %v8148 = vsub.f32 %v8146, %v8147
    %v8149 = vand.u32 %v8148, 4294901760
    %8150 = vmatpush1.msra.mxu0 %v8149
    %8151 = vmatprep.subr.mxu0 0.0
    %v8152 = vand.u32 %v7221, 4294901760
    %v8153 = vsub.f32 %v7221, %v8152
    %v8154 = vand.u32 %v8153, 4294901760
    %v8155 = vsub.f32 %v8153, %v8154
    %v8156 = vand.u32 %v8155, 4294901760
    %8157 = vmatpush1.msra.mxu0 %v8156
    %8158 = vmatprep.subr.mxu0 0.0
    %v8159 = vand.u32 %v7222, 4294901760
    %v8160 = vsub.f32 %v7222, %v8159
    %v8161 = vand.u32 %v8160, 4294901760
    %v8162 = vsub.f32 %v8160, %v8161
    %v8163 = vand.u32 %v8162, 4294901760
    %8164 = vmatpush1.msra.mxu0 %v8163
    %8165 = vmatprep.subr.mxu0 0.0
    %v8166 = vand.u32 %v7223, 4294901760
    %v8167 = vsub.f32 %v7223, %v8166
    %v8168 = vand.u32 %v8167, 4294901760
    %v8169 = vsub.f32 %v8167, %v8168
    %v8170 = vand.u32 %v8169, 4294901760
    %8171 = vmatpush1.msra.mxu0 %v8170
    %8172 = vmatprep.subr.mxu0 0.0
    %v8173 = vand.u32 %v7224, 4294901760
    %v8174 = vsub.f32 %v7224, %v8173
    %v8175 = vand.u32 %v8174, 4294901760
    %v8176 = vsub.f32 %v8174, %v8175
    %v8177 = vand.u32 %v8176, 4294901760
    %8178 = vmatpush1.msra.mxu0 %v8177
    %8179 = vmatprep.subr.mxu0 0.0
    %v8180 = vand.u32 %v7225, 4294901760
    %v8181 = vsub.f32 %v7225, %v8180
    %v8182 = vand.u32 %v8181, 4294901760
    %v8183 = vsub.f32 %v8181, %v8182
    %v8184 = vand.u32 %v8183, 4294901760
    %8185 = vmatpush1.msra.mxu0 %v8184
    %8186 = vmatprep.subr.mxu0 0.0
    %v8187 = vand.u32 %v7226, 4294901760
    %v8188 = vsub.f32 %v7226, %v8187
    %v8189 = vand.u32 %v8188, 4294901760
    %v8190 = vsub.f32 %v8188, %v8189
    %v8191 = vand.u32 %v8190, 4294901760
    %8192 = vmatpush1.msra.mxu0 %v8191
    %8193 = vmatprep.subr.mxu0 0.0
    %v8194 = vand.u32 %v7227, 4294901760
    %v8195 = vsub.f32 %v7227, %v8194
    %v8196 = vand.u32 %v8195, 4294901760
    %v8197 = vsub.f32 %v8195, %v8196
    %v8198 = vand.u32 %v8197, 4294901760
    %8199 = vmatpush1.msra.mxu0 %v8198
    %8200 = vmatprep.subr.mxu0 0.0
    %v8201 = vand.u32 %v7228, 4294901760
    %v8202 = vsub.f32 %v7228, %v8201
    %v8203 = vand.u32 %v8202, 4294901760
    %v8204 = vsub.f32 %v8202, %v8203
    %v8205 = vand.u32 %v8204, 4294901760
    %8206 = vmatpush1.msra.mxu0 %v8205
    %8207 = vmatprep.subr.mxu0 0.0
    %v8208 = vand.u32 %v7229, 4294901760
    %v8209 = vsub.f32 %v7229, %v8208
    %v8210 = vand.u32 %v8209, 4294901760
    %v8211 = vsub.f32 %v8209, %v8210
    %v8212 = vand.u32 %v8211, 4294901760
    %8213 = vmatpush1.msra.mxu0 %v8212
    %8214 = vmatprep.subr.mxu0 0.0
    %v8215 = vand.u32 %v7230, 4294901760
    %v8216 = vsub.f32 %v7230, %v8215
    %v8217 = vand.u32 %v8216, 4294901760
    %v8218 = vsub.f32 %v8216, %v8217
    %v8219 = vand.u32 %v8218, 4294901760
    %8220 = vmatpush1.msra.mxu0 %v8219
    %8221 = vmatprep.subr.mxu0 0.0
    %v8222 = vand.u32 %v7231, 4294901760
    %v8223 = vsub.f32 %v7231, %v8222
    %v8224 = vand.u32 %v8223, 4294901760
    %v8225 = vsub.f32 %v8223, %v8224
    %v8226 = vand.u32 %v8225, 4294901760
    %8227 = vmatpush1.msra.mxu0 %v8226
    %8228 = vmatprep.subr.mxu0 0.0
    %v8229 = vand.u32 %v7232, 4294901760
    %v8230 = vsub.f32 %v7232, %v8229
    %v8231 = vand.u32 %v8230, 4294901760
    %v8232 = vsub.f32 %v8230, %v8231
    %v8233 = vand.u32 %v8232, 4294901760
    %8234 = vmatpush1.msra.mxu0 %v8233
    %8235 = vmatprep.subr.mxu0 0.0
    %v8236 = vand.u32 %v7233, 4294901760
    %v8237 = vsub.f32 %v7233, %v8236
    %v8238 = vand.u32 %v8237, 4294901760
    %v8239 = vsub.f32 %v8237, %v8238
    %v8240 = vand.u32 %v8239, 4294901760
    %8241 = vmatpush1.msra.mxu0 %v8240
    %8242 = vmatprep.subr.mxu0 0.0
    %v8243 = vand.u32 %v7234, 4294901760
    %v8244 = vsub.f32 %v7234, %v8243
    %v8245 = vand.u32 %v8244, 4294901760
    %v8246 = vsub.f32 %v8244, %v8245
    %v8247 = vand.u32 %v8246, 4294901760
    %8248 = vmatpush1.msra.mxu0 %v8247
    %8249 = vmatprep.subr.mxu0 0.0
    %v8250 = vand.u32 %v7235, 4294901760
    %v8251 = vsub.f32 %v7235, %v8250
    %v8252 = vand.u32 %v8251, 4294901760
    %v8253 = vsub.f32 %v8251, %v8252
    %v8254 = vand.u32 %v8253, 4294901760
    %8255 = vmatpush1.msra.mxu0 %v8254
    %8256 = vmatprep.subr.mxu0 0.0
    %v8257 = vand.u32 %v7236, 4294901760
    %v8258 = vsub.f32 %v7236, %v8257
    %v8259 = vand.u32 %v8258, 4294901760
    %v8260 = vsub.f32 %v8258, %v8259
    %v8261 = vand.u32 %v8260, 4294901760
    %8262 = vmatpush1.msra.mxu0 %v8261
    %8263 = vmatprep.subr.mxu0 0.0
    %v8264 = vand.u32 %v7237, 4294901760
    %v8265 = vsub.f32 %v7237, %v8264
    %v8266 = vand.u32 %v8265, 4294901760
    %v8267 = vsub.f32 %v8265, %v8266
    %v8268 = vand.u32 %v8267, 4294901760
    %8269 = vmatpush1.msra.mxu0 %v8268
    %8270 = vmatprep.subr.mxu0 0.0
    %v8271 = vand.u32 %v7238, 4294901760
    %v8272 = vsub.f32 %v7238, %v8271
    %v8273 = vand.u32 %v8272, 4294901760
    %v8274 = vsub.f32 %v8272, %v8273
    %v8275 = vand.u32 %v8274, 4294901760
    %8276 = vmatpush1.msra.mxu0 %v8275
    %8277 = vmatprep.subr.mxu0 0.0
    %v8278 = vand.u32 %v7239, 4294901760
    %v8279 = vsub.f32 %v7239, %v8278
    %v8280 = vand.u32 %v8279, 4294901760
    %v8281 = vsub.f32 %v8279, %v8280
    %v8282 = vand.u32 %v8281, 4294901760
    %8283 = vmatpush1.msra.mxu0 %v8282
    %8284 = vmatprep.subr.mxu0 0.0
    %v8285 = vand.u32 %v7240, 4294901760
    %v8286 = vsub.f32 %v7240, %v8285
    %v8287 = vand.u32 %v8286, 4294901760
    %v8288 = vsub.f32 %v8286, %v8287
    %v8289 = vand.u32 %v8288, 4294901760
    %8290 = vmatpush1.msra.mxu0 %v8289
    %8291 = vmatprep.subr.mxu0 0.0
    %v8292 = vand.u32 %v7241, 4294901760
    %v8293 = vsub.f32 %v7241, %v8292
    %v8294 = vand.u32 %v8293, 4294901760
    %v8295 = vsub.f32 %v8293, %v8294
    %v8296 = vand.u32 %v8295, 4294901760
    %8297 = vmatpush1.msra.mxu0 %v8296
    %8298 = vmatprep.subr.mxu0 0.0
    %v8299 = vand.u32 %v7242, 4294901760
    %v8300 = vsub.f32 %v7242, %v8299
    %v8301 = vand.u32 %v8300, 4294901760
    %v8302 = vsub.f32 %v8300, %v8301
    %v8303 = vand.u32 %v8302, 4294901760
    %8304 = vmatpush1.msra.mxu0 %v8303
    %8305 = vmatprep.subr.mxu0 0.0
    %8306 = vmatpush1.msra.mxu0 0.0
    %8307 = vmatprep.subr.mxu0 0.0
    %8308 = vmatpush1.msra.mxu0 0.0
    %v8309 = vand.u32 %v7623, 4294901760
    %8310 = vmatprep.mubr.f32.mxu0 %v8309
    %v8311 = vand.u32 %v7454, 4294901760
    %8312 = vmatmul.mubr.f32.gmra.mrb[0].mxu0 %v8311
    %v8313 = vpop.f32.mrb[0].mxu0
    %v8314 = vadd.f32 %v7792, %v8313
    %v8315 = vpop.f32.mrb[0].mxu0
    %v8316 = vand.u32 %v7626, 4294901760
    %8317 = vmatprep.mubr.f32.mxu0 %v8316
    %v8318 = vand.u32 %v7456, 4294901760
    %8319 = vmatmul.mubr.f32.gmra.mrb[0].mxu0 %v8318
    %v8320 = vpop.f32.mrb[0].mxu0
    %v8321 = vadd.f32 %v7807, %v8320
    %v8322 = vpop.f32.mrb[0].mxu0
    %v8323 = vand.u32 %v7629, 4294901760
    %8324 = vmatprep.mubr.f32.mxu0 %v8323
    %v8325 = vand.u32 %v7458, 4294901760
    %8326 = vmatmul.mubr.f32.gmra.mrb[0].mxu0 %v8325
    %v8327 = vpop.f32.mrb[0].mxu0
    %v8328 = vadd.f32 %v7822, %v8327
    %v8329 = vpop.f32.mrb[0].mxu0
    %v8330 = vand.u32 %v7632, 4294901760
    %8331 = vmatprep.mubr.f32.mxu0 %v8330
    %v8332 = vand.u32 %v7460, 4294901760
    %8333 = vmatmul.mubr.f32.gmra.mrb[0].mxu0 %v8332
    %v8334 = vpop.f32.mrb[0].mxu0
    %v8335 = vadd.f32 %v7837, %v8334
    %v8336 = vpop.f32.mrb[0].mxu0
    %v8337 = vand.u32 %v7635, 4294901760
    %8338 = vmatprep.mubr.f32.mxu0 %v8337
    %v8339 = vand.u32 %v7462, 4294901760
    %8340 = vmatmul.mubr.f32.gmra.mrb[0].mxu0 %v8339
    %v8341 = vpop.f32.mrb[0].mxu0
    %v8342 = vadd.f32 %v7852, %v8341
    %v8343 = vpop.f32.mrb[0].mxu0
    %v8344 = vand.u32 %v7638, 4294901760
    %8345 = vmatprep.mubr.f32.mxu0 %v8344
    %v8346 = vand.u32 %v7464, 4294901760
    %8347 = vmatmul.mubr.f32.gmra.mrb[0].mxu0 %v8346
    %v8348 = vpop.f32.mrb[0].mxu0
    %v8349 = vadd.f32 %v7867, %v8348
    %v8350 = vpop.f32.mrb[0].mxu0
    %v8351 = vand.u32 %v7641, 4294901760
    %8352 = vmatprep.mubr.f32.mxu0 %v8351
    %v8353 = vand.u32 %v7466, 4294901760
    %8354 = vmatmul.mubr.f32.gmra.mrb[0].mxu0 %v8353
    %v8355 = vpop.f32.mrb[0].mxu0
    %v8356 = vadd.f32 %v7882, %v8355
    %v8357 = vpop.f32.mrb[0].mxu0
    %v8358 = vand.u32 %v7644, 4294901760
    %8359 = vmatprep.mubr.f32.mxu0 %v8358
    %v8360 = vand.u32 %v7468, 4294901760
    %8361 = vmatmul.mubr.f32.gmra.mrb[0].mxu0 %v8360
    %v8362 = vpop.f32.mrb[0].mxu0
    %v8363 = vadd.f32 %v7897, %v8362
    %v8364 = vpop.f32.mrb[0].mxu0
    %v8365 = vand.u32 %v7647, 4294901760
    %8366 = vmatprep.mubr.f32.mxu0 %v8365
    %v8367 = vand.u32 %v7470, 4294901760
    %8368 = vmatmul.mubr.f32.gmra.mrb[0].mxu0 %v8367
    %v8369 = vpop.f32.mrb[0].mxu0
    %v8370 = vadd.f32 %v7912, %v8369
    %v8371 = vpop.f32.mrb[0].mxu0
    %v8372 = vand.u32 %v7650, 4294901760
    %8373 = vmatprep.mubr.f32.mxu0 %v8372
    %v8374 = vand.u32 %v7472, 4294901760
    %8375 = vmatmul.mubr.f32.gmra.mrb[0].mxu0 %v8374
    %v8376 = vpop.f32.mrb[0].mxu0
    %v8377 = vadd.f32 %v7927, %v8376
    %v8378 = vpop.f32.mrb[0].mxu0
    %v8379 = vand.u32 %v7653, 4294901760
    %8380 = vmatprep.mubr.f32.mxu0 %v8379
    %v8381 = vand.u32 %v7474, 4294901760
    %8382 = vmatmul.mubr.f32.gmra.mrb[0].mxu0 %v8381
    %v8383 = vpop.f32.mrb[0].mxu0
    %v8384 = vadd.f32 %v7942, %v8383
    %v8385 = vpop.f32.mrb[0].mxu0
    %v8386 = vand.u32 %v7656, 4294901760
    %8387 = vmatprep.mubr.f32.mxu0 %v8386
    %v8388 = vand.u32 %v7476, 4294901760
    %8389 = vmatmul.mubr.f32.gmra.mrb[0].mxu0 %v8388
    %v8390 = vpop.f32.mrb[0].mxu0
    %v8391 = vadd.f32 %v7957, %v8390
    %v8392 = vpop.f32.mrb[0].mxu0
    %v8393 = vand.u32 %v7659, 4294901760
    %8394 = vmatprep.mubr.f32.mxu0 %v8393
    %v8395 = vand.u32 %v7478, 4294901760
    %8396 = vmatmul.mubr.f32.gmra.mrb[0].mxu0 %v8395
    %v8397 = vpop.f32.mrb[0].mxu0
    %v8398 = vadd.f32 %v7972, %v8397
    %v8399 = vpop.f32.mrb[0].mxu0
    %v8400 = vand.u32 %v7662, 4294901760
    %8401 = vmatprep.mubr.f32.mxu0 %v8400
    %v8402 = vand.u32 %v7480, 4294901760
    %8403 = vmatmul.mubr.f32.gmra.mrb[0].mxu0 %v8402
    %v8404 = vpop.f32.mrb[0].mxu0
    %v8405 = vadd.f32 %v7987, %v8404
    %v8406 = vpop.f32.mrb[0].mxu0
    %v8407 = vand.u32 %v7665, 4294901760
    %8408 = vmatprep.mubr.f32.mxu0 %v8407
    %v8409 = vand.u32 %v7482, 4294901760
    %8410 = vmatmul.mubr.f32.gmra.mrb[0].mxu0 %v8409
    %v8411 = vpop.f32.mrb[0].mxu0
    %v8412 = vadd.f32 %v8002, %v8411
    %v8413 = vpop.f32.mrb[0].mxu0
    %v8414 = vand.u32 %v7668, 4294901760
    %8415 = vmatprep.mubr.f32.mxu0 %v8414
    %v8416 = vand.u32 %v7484, 4294901760
    %8417 = vmatmul.mubr.f32.gmra.mrb[0].mxu0 %v8416
    %v8418 = vpop.f32.mrb[0].mxu0
    %v8419 = vadd.f32 %v8017, %v8418
    %v8420 = vpop.f32.mrb[0].mxu0
    %v8421 = vand.u32 %v7671, 4294901760
    %8422 = vmatprep.mubr.f32.mxu0 %v8421
    %v8423 = vand.u32 %v7486, 4294901760
    %8424 = vmatmul.mubr.f32.gmra.mrb[0].mxu0 %v8423
    %v8425 = vpop.f32.mrb[0].mxu0
    %v8426 = vadd.f32 %v8032, %v8425
    %v8427 = vpop.f32.mrb[0].mxu0
    %v8428 = vand.u32 %v7674, 4294901760
    %8429 = vmatprep.mubr.f32.mxu0 %v8428
    %v8430 = vand.u32 %v7488, 4294901760
    %8431 = vmatmul.mubr.f32.gmra.mrb[0].mxu0 %v8430
    %v8432 = vpop.f32.mrb[0].mxu0
    %v8433 = vadd.f32 %v8047, %v8432
    %v8434 = vpop.f32.mrb[0].mxu0
    %v8435 = vand.u32 %v7677, 4294901760
    %8436 = vmatprep.mubr.f32.mxu0 %v8435
    %v8437 = vand.u32 %v7490, 4294901760
    %8438 = vmatmul.mubr.f32.gmra.mrb[0].mxu0 %v8437
    %v8439 = vpop.f32.mrb[0].mxu0
    %v8440 = vadd.f32 %v8062, %v8439
    %v8441 = vpop.f32.mrb[0].mxu0
    %v8442 = vand.u32 %v7680, 4294901760
    %8443 = vmatprep.mubr.f32.mxu0 %v8442
    %v8444 = vand.u32 %v7492, 4294901760
    %8445 = vmatmul.mubr.f32.gmra.mrb[0].mxu0 %v8444
    %v8446 = vpop.f32.mrb[0].mxu0
    %v8447 = vadd.f32 %v8077, %v8446
    %v8448 = vpop.f32.mrb[0].mxu0
    %v8449 = vand.u32 %v7683, 4294901760
    %8450 = vmatprep.mubr.f32.mxu0 %v8449
    %v8451 = vand.u32 %v7494, 4294901760
    %8452 = vmatmul.mubr.f32.gmra.mrb[0].mxu0 %v8451
    %v8453 = vpop.f32.mrb[0].mxu0
    %v8454 = vadd.f32 %v8092, %v8453
    %v8455 = vpop.f32.mrb[0].mxu0
    %8456 = vdwg.mxu0
    %8457 = vmatprep.subr.mxu0 0.0
    %v8458 = vand.u32 %v7213, 4294901760
    %v8459 = vsub.f32 %v7213, %v8458
    %8460 = vmatpush1.msra.mxu0 %v8459
    %8461 = vmatprep.subr.mxu0 0.0
    %v8462 = vand.u32 %v7214, 4294901760
    %v8463 = vsub.f32 %v7214, %v8462
    %8464 = vmatpush1.msra.mxu0 %v8463
    %8465 = vmatprep.subr.mxu0 0.0
    %v8466 = vand.u32 %v7215, 4294901760
    %v8467 = vsub.f32 %v7215, %v8466
    %8468 = vmatpush1.msra.mxu0 %v8467
    %8469 = vmatprep.subr.mxu0 0.0
    %v8470 = vand.u32 %v7216, 4294901760
    %v8471 = vsub.f32 %v7216, %v8470
    %8472 = vmatpush1.msra.mxu0 %v8471
    %8473 = vmatprep.subr.mxu0 0.0
    %v8474 = vand.u32 %v7217, 4294901760
    %v8475 = vsub.f32 %v7217, %v8474
    %8476 = vmatpush1.msra.mxu0 %v8475
    %8477 = vmatprep.subr.mxu0 0.0
    %v8478 = vand.u32 %v7218, 4294901760
    %v8479 = vsub.f32 %v7218, %v8478
    %8480 = vmatpush1.msra.mxu0 %v8479
    %8481 = vmatprep.subr.mxu0 0.0
    %v8482 = vand.u32 %v7219, 4294901760
    %v8483 = vsub.f32 %v7219, %v8482
    %8484 = vmatpush1.msra.mxu0 %v8483
    %8485 = vmatprep.subr.mxu0 0.0
    %v8486 = vand.u32 %v7220, 4294901760
    %v8487 = vsub.f32 %v7220, %v8486
    %8488 = vmatpush1.msra.mxu0 %v8487
    %8489 = vmatprep.subr.mxu0 0.0
    %v8490 = vand.u32 %v7221, 4294901760
    %v8491 = vsub.f32 %v7221, %v8490
    %8492 = vmatpush1.msra.mxu0 %v8491
    %8493 = vmatprep.subr.mxu0 0.0
    %v8494 = vand.u32 %v7222, 4294901760
    %v8495 = vsub.f32 %v7222, %v8494
    %8496 = vmatpush1.msra.mxu0 %v8495
    %8497 = vmatprep.subr.mxu0 0.0
    %v8498 = vand.u32 %v7223, 4294901760
    %v8499 = vsub.f32 %v7223, %v8498
    %8500 = vmatpush1.msra.mxu0 %v8499
    %8501 = vmatprep.subr.mxu0 0.0
    %v8502 = vand.u32 %v7224, 4294901760
    %v8503 = vsub.f32 %v7224, %v8502
    %8504 = vmatpush1.msra.mxu0 %v8503
    %8505 = vmatprep.subr.mxu0 0.0
    %v8506 = vand.u32 %v7225, 4294901760
    %v8507 = vsub.f32 %v7225, %v8506
    %8508 = vmatpush1.msra.mxu0 %v8507
    %8509 = vmatprep.subr.mxu0 0.0
    %v8510 = vand.u32 %v7226, 4294901760
    %v8511 = vsub.f32 %v7226, %v8510
    %8512 = vmatpush1.msra.mxu0 %v8511
    %8513 = vmatprep.subr.mxu0 0.0
    %v8514 = vand.u32 %v7227, 4294901760
    %v8515 = vsub.f32 %v7227, %v8514
    %8516 = vmatpush1.msra.mxu0 %v8515
    %8517 = vmatprep.subr.mxu0 0.0
    %v8518 = vand.u32 %v7228, 4294901760
    %v8519 = vsub.f32 %v7228, %v8518
    %8520 = vmatpush1.msra.mxu0 %v8519
    %8521 = vmatprep.subr.mxu0 0.0
    %v8522 = vand.u32 %v7229, 4294901760
    %v8523 = vsub.f32 %v7229, %v8522
    %8524 = vmatpush1.msra.mxu0 %v8523
    %8525 = vmatprep.subr.mxu0 0.0
    %v8526 = vand.u32 %v7230, 4294901760
    %v8527 = vsub.f32 %v7230, %v8526
    %8528 = vmatpush1.msra.mxu0 %v8527
    %8529 = vmatprep.subr.mxu0 0.0
    %v8530 = vand.u32 %v7231, 4294901760
    %v8531 = vsub.f32 %v7231, %v8530
    %8532 = vmatpush1.msra.mxu0 %v8531
    %8533 = vmatprep.subr.mxu0 0.0
    %v8534 = vand.u32 %v7232, 4294901760
    %v8535 = vsub.f32 %v7232, %v8534
    %8536 = vmatpush1.msra.mxu0 %v8535
    %8537 = vmatprep.subr.mxu0 0.0
    %v8538 = vand.u32 %v7233, 4294901760
    %v8539 = vsub.f32 %v7233, %v8538
    %8540 = vmatpush1.msra.mxu0 %v8539
    %8541 = vmatprep.subr.mxu0 0.0
    %v8542 = vand.u32 %v7234, 4294901760
    %v8543 = vsub.f32 %v7234, %v8542
    %8544 = vmatpush1.msra.mxu0 %v8543
    %8545 = vmatprep.subr.mxu0 0.0
    %v8546 = vand.u32 %v7235, 4294901760
    %v8547 = vsub.f32 %v7235, %v8546
    %8548 = vmatpush1.msra.mxu0 %v8547
    %8549 = vmatprep.subr.mxu0 0.0
    %v8550 = vand.u32 %v7236, 4294901760
    %v8551 = vsub.f32 %v7236, %v8550
    %8552 = vmatpush1.msra.mxu0 %v8551
    %8553 = vmatprep.subr.mxu0 0.0
    %v8554 = vand.u32 %v7237, 4294901760
    %v8555 = vsub.f32 %v7237, %v8554
    %8556 = vmatpush1.msra.mxu0 %v8555
    %8557 = vmatprep.subr.mxu0 0.0
    %v8558 = vand.u32 %v7238, 4294901760
    %v8559 = vsub.f32 %v7238, %v8558
    %8560 = vmatpush1.msra.mxu0 %v8559
    %8561 = vmatprep.subr.mxu0 0.0
    %v8562 = vand.u32 %v7239, 4294901760
    %v8563 = vsub.f32 %v7239, %v8562
    %8564 = vmatpush1.msra.mxu0 %v8563
    %8565 = vmatprep.subr.mxu0 0.0
    %v8566 = vand.u32 %v7240, 4294901760
    %v8567 = vsub.f32 %v7240, %v8566
    %8568 = vmatpush1.msra.mxu0 %v8567
    %8569 = vmatprep.subr.mxu0 0.0
    %v8570 = vand.u32 %v7241, 4294901760
    %v8571 = vsub.f32 %v7241, %v8570
    %8572 = vmatpush1.msra.mxu0 %v8571
    %8573 = vmatprep.subr.mxu0 0.0
    %v8574 = vand.u32 %v7242, 4294901760
    %v8575 = vsub.f32 %v7242, %v8574
    %8576 = vmatpush1.msra.mxu0 %v8575
    %8577 = vmatprep.subr.mxu0 0.0
    %8578 = vmatpush1.msra.mxu0 0.0
    %8579 = vmatprep.subr.mxu0 0.0
    %8580 = vmatpush1.msra.mxu0 0.0
    %v8581 = vand.u32 %v7623, 4294901760
    %v8582 = vsub.f32 %v7623, %v8581
    %8583 = vmatprep.mubr.f32.mxu0 %v8582
    %v8584 = vand.u32 %v7454, 4294901760
    %v8585 = vsub.f32 %v7454, %v8584
    %8586 = vmatmul.mubr.f32.gmra.mrb[0].mxu0 %v8585
    %v8587 = vpop.f32.mrb[0].mxu0
    %v8588 = vadd.f32 %v8314, %v8587
    %v8589 = vpop.f32.mrb[0].mxu0
    %v8590 = vand.u32 %v7626, 4294901760
    %v8591 = vsub.f32 %v7626, %v8590
    %8592 = vmatprep.mubr.f32.mxu0 %v8591
    %v8593 = vand.u32 %v7456, 4294901760
    %v8594 = vsub.f32 %v7456, %v8593
    %8595 = vmatmul.mubr.f32.gmra.mrb[0].mxu0 %v8594
    %v8596 = vpop.f32.mrb[0].mxu0
    %v8597 = vadd.f32 %v8321, %v8596
    %v8598 = vpop.f32.mrb[0].mxu0
    %v8599 = vand.u32 %v7629, 4294901760
    %v8600 = vsub.f32 %v7629, %v8599
    %8601 = vmatprep.mubr.f32.mxu0 %v8600
    %v8602 = vand.u32 %v7458, 4294901760
    %v8603 = vsub.f32 %v7458, %v8602
    %8604 = vmatmul.mubr.f32.gmra.mrb[0].mxu0 %v8603
    %v8605 = vpop.f32.mrb[0].mxu0
    %v8606 = vadd.f32 %v8328, %v8605
    %v8607 = vpop.f32.mrb[0].mxu0
    %v8608 = vand.u32 %v7632, 4294901760
    %v8609 = vsub.f32 %v7632, %v8608
    %8610 = vmatprep.mubr.f32.mxu0 %v8609
    %v8611 = vand.u32 %v7460, 4294901760
    %v8612 = vsub.f32 %v7460, %v8611
    %8613 = vmatmul.mubr.f32.gmra.mrb[0].mxu0 %v8612
    %v8614 = vpop.f32.mrb[0].mxu0
    %v8615 = vadd.f32 %v8335, %v8614
    %v8616 = vpop.f32.mrb[0].mxu0
    %v8617 = vand.u32 %v7635, 4294901760
    %v8618 = vsub.f32 %v7635, %v8617
    %8619 = vmatprep.mubr.f32.mxu0 %v8618
    %v8620 = vand.u32 %v7462, 4294901760
    %v8621 = vsub.f32 %v7462, %v8620
    %8622 = vmatmul.mubr.f32.gmra.mrb[0].mxu0 %v8621
    %v8623 = vpop.f32.mrb[0].mxu0
    %v8624 = vadd.f32 %v8342, %v8623
    %v8625 = vpop.f32.mrb[0].mxu0
    %v8626 = vand.u32 %v7638, 4294901760
    %v8627 = vsub.f32 %v7638, %v8626
    %8628 = vmatprep.mubr.f32.mxu0 %v8627
    %v8629 = vand.u32 %v7464, 4294901760
    %v8630 = vsub.f32 %v7464, %v8629
    %8631 = vmatmul.mubr.f32.gmra.mrb[0].mxu0 %v8630
    %v8632 = vpop.f32.mrb[0].mxu0
    %v8633 = vadd.f32 %v8349, %v8632
    %v8634 = vpop.f32.mrb[0].mxu0
    %v8635 = vand.u32 %v7641, 4294901760
    %v8636 = vsub.f32 %v7641, %v8635
    %8637 = vmatprep.mubr.f32.mxu0 %v8636
    %v8638 = vand.u32 %v7466, 4294901760
    %v8639 = vsub.f32 %v7466, %v8638
    %8640 = vmatmul.mubr.f32.gmra.mrb[0].mxu0 %v8639
    %v8641 = vpop.f32.mrb[0].mxu0
    %v8642 = vadd.f32 %v8356, %v8641
    %v8643 = vpop.f32.mrb[0].mxu0
    %v8644 = vand.u32 %v7644, 4294901760
    %v8645 = vsub.f32 %v7644, %v8644
    %8646 = vmatprep.mubr.f32.mxu0 %v8645
    %v8647 = vand.u32 %v7468, 4294901760
    %v8648 = vsub.f32 %v7468, %v8647
    %8649 = vmatmul.mubr.f32.gmra.mrb[0].mxu0 %v8648
    %v8650 = vpop.f32.mrb[0].mxu0
    %v8651 = vadd.f32 %v8363, %v8650
    %v8652 = vpop.f32.mrb[0].mxu0
    %v8653 = vand.u32 %v7647, 4294901760
    %v8654 = vsub.f32 %v7647, %v8653
    %8655 = vmatprep.mubr.f32.mxu0 %v8654
    %v8656 = vand.u32 %v7470, 4294901760
    %v8657 = vsub.f32 %v7470, %v8656
    %8658 = vmatmul.mubr.f32.gmra.mrb[0].mxu0 %v8657
    %v8659 = vpop.f32.mrb[0].mxu0
    %v8660 = vadd.f32 %v8370, %v8659
    %v8661 = vpop.f32.mrb[0].mxu0
    %v8662 = vand.u32 %v7650, 4294901760
    %v8663 = vsub.f32 %v7650, %v8662
    %8664 = vmatprep.mubr.f32.mxu0 %v8663
    %v8665 = vand.u32 %v7472, 4294901760
    %v8666 = vsub.f32 %v7472, %v8665
    %8667 = vmatmul.mubr.f32.gmra.mrb[0].mxu0 %v8666
    %v8668 = vpop.f32.mrb[0].mxu0
    %v8669 = vadd.f32 %v8377, %v8668
    %v8670 = vpop.f32.mrb[0].mxu0
    %v8671 = vand.u32 %v7653, 4294901760
    %v8672 = vsub.f32 %v7653, %v8671
    %8673 = vmatprep.mubr.f32.mxu0 %v8672
    %v8674 = vand.u32 %v7474, 4294901760
    %v8675 = vsub.f32 %v7474, %v8674
    %8676 = vmatmul.mubr.f32.gmra.mrb[0].mxu0 %v8675
    %v8677 = vpop.f32.mrb[0].mxu0
    %v8678 = vadd.f32 %v8384, %v8677
    %v8679 = vpop.f32.mrb[0].mxu0
    %v8680 = vand.u32 %v7656, 4294901760
    %v8681 = vsub.f32 %v7656, %v8680
    %8682 = vmatprep.mubr.f32.mxu0 %v8681
    %v8683 = vand.u32 %v7476, 4294901760
    %v8684 = vsub.f32 %v7476, %v8683
    %8685 = vmatmul.mubr.f32.gmra.mrb[0].mxu0 %v8684
    %v8686 = vpop.f32.mrb[0].mxu0
    %v8687 = vadd.f32 %v8391, %v8686
    %v8688 = vpop.f32.mrb[0].mxu0
    %v8689 = vand.u32 %v7659, 4294901760
    %v8690 = vsub.f32 %v7659, %v8689
    %8691 = vmatprep.mubr.f32.mxu0 %v8690
    %v8692 = vand.u32 %v7478, 4294901760
    %v8693 = vsub.f32 %v7478, %v8692
    %8694 = vmatmul.mubr.f32.gmra.mrb[0].mxu0 %v8693
    %v8695 = vpop.f32.mrb[0].mxu0
    %v8696 = vadd.f32 %v8398, %v8695
    %v8697 = vpop.f32.mrb[0].mxu0
    %v8698 = vand.u32 %v7662, 4294901760
    %v8699 = vsub.f32 %v7662, %v8698
    %8700 = vmatprep.mubr.f32.mxu0 %v8699
    %v8701 = vand.u32 %v7480, 4294901760
    %v8702 = vsub.f32 %v7480, %v8701
    %8703 = vmatmul.mubr.f32.gmra.mrb[0].mxu0 %v8702
    %v8704 = vpop.f32.mrb[0].mxu0
    %v8705 = vadd.f32 %v8405, %v8704
    %v8706 = vpop.f32.mrb[0].mxu0
    %v8707 = vand.u32 %v7665, 4294901760
    %v8708 = vsub.f32 %v7665, %v8707
    %8709 = vmatprep.mubr.f32.mxu0 %v8708
    %v8710 = vand.u32 %v7482, 4294901760
    %v8711 = vsub.f32 %v7482, %v8710
    %8712 = vmatmul.mubr.f32.gmra.mrb[0].mxu0 %v8711
    %v8713 = vpop.f32.mrb[0].mxu0
    %v8714 = vadd.f32 %v8412, %v8713
    %v8715 = vpop.f32.mrb[0].mxu0
    %v8716 = vand.u32 %v7668, 4294901760
    %v8717 = vsub.f32 %v7668, %v8716
    %8718 = vmatprep.mubr.f32.mxu0 %v8717
    %v8719 = vand.u32 %v7484, 4294901760
    %v8720 = vsub.f32 %v7484, %v8719
    %8721 = vmatmul.mubr.f32.gmra.mrb[0].mxu0 %v8720
    %v8722 = vpop.f32.mrb[0].mxu0
    %v8723 = vadd.f32 %v8419, %v8722
    %v8724 = vpop.f32.mrb[0].mxu0
    %v8725 = vand.u32 %v7671, 4294901760
    %v8726 = vsub.f32 %v7671, %v8725
    %8727 = vmatprep.mubr.f32.mxu0 %v8726
    %v8728 = vand.u32 %v7486, 4294901760
    %v8729 = vsub.f32 %v7486, %v8728
    %8730 = vmatmul.mubr.f32.gmra.mrb[0].mxu0 %v8729
    %v8731 = vpop.f32.mrb[0].mxu0
    %v8732 = vadd.f32 %v8426, %v8731
    %v8733 = vpop.f32.mrb[0].mxu0
    %v8734 = vand.u32 %v7674, 4294901760
    %v8735 = vsub.f32 %v7674, %v8734
    %8736 = vmatprep.mubr.f32.mxu0 %v8735
    %v8737 = vand.u32 %v7488, 4294901760
    %v8738 = vsub.f32 %v7488, %v8737
    %8739 = vmatmul.mubr.f32.gmra.mrb[0].mxu0 %v8738
    %v8740 = vpop.f32.mrb[0].mxu0
    %v8741 = vadd.f32 %v8433, %v8740
    %v8742 = vpop.f32.mrb[0].mxu0
    %v8743 = vand.u32 %v7677, 4294901760
    %v8744 = vsub.f32 %v7677, %v8743
    %8745 = vmatprep.mubr.f32.mxu0 %v8744
    %v8746 = vand.u32 %v7490, 4294901760
    %v8747 = vsub.f32 %v7490, %v8746
    %8748 = vmatmul.mubr.f32.gmra.mrb[0].mxu0 %v8747
    %v8749 = vpop.f32.mrb[0].mxu0
    %v8750 = vadd.f32 %v8440, %v8749
    %v8751 = vpop.f32.mrb[0].mxu0
    %v8752 = vand.u32 %v7680, 4294901760
    %v8753 = vsub.f32 %v7680, %v8752
    %8754 = vmatprep.mubr.f32.mxu0 %v8753
    %v8755 = vand.u32 %v7492, 4294901760
    %v8756 = vsub.f32 %v7492, %v8755
    %8757 = vmatmul.mubr.f32.gmra.mrb[0].mxu0 %v8756
    %v8758 = vpop.f32.mrb[0].mxu0
    %v8759 = vadd.f32 %v8447, %v8758
    %v8760 = vpop.f32.mrb[0].mxu0
    %v8761 = vand.u32 %v7683, 4294901760
    %v8762 = vsub.f32 %v7683, %v8761
    %8763 = vmatprep.mubr.f32.mxu0 %v8762
    %v8764 = vand.u32 %v7494, 4294901760
    %v8765 = vsub.f32 %v7494, %v8764
    %8766 = vmatmul.mubr.f32.gmra.mrb[0].mxu0 %v8765
    %v8767 = vpop.f32.mrb[0].mxu0
    %v8768 = vadd.f32 %v8454, %v8767
    %v8769 = vpop.f32.mrb[0].mxu0
    %8770 = vdwg.mxu0
    %8771 = vmatprep.subr.mxu0 0.0
    %v8772 = vand.u32 %v7213, 4294901760
    %8773 = vmatpush1.msra.mxu0 %v8772
    %8774 = vmatprep.subr.mxu0 0.0
    %v8775 = vand.u32 %v7214, 4294901760
    %8776 = vmatpush1.msra.mxu0 %v8775
    %8777 = vmatprep.subr.mxu0 0.0
    %v8778 = vand.u32 %v7215, 4294901760
    %8779 = vmatpush1.msra.mxu0 %v8778
    %8780 = vmatprep.subr.mxu0 0.0
    %v8781 = vand.u32 %v7216, 4294901760
    %8782 = vmatpush1.msra.mxu0 %v8781
    %8783 = vmatprep.subr.mxu0 0.0
    %v8784 = vand.u32 %v7217, 4294901760
    %8785 = vmatpush1.msra.mxu0 %v8784
    %8786 = vmatprep.subr.mxu0 0.0
    %v8787 = vand.u32 %v7218, 4294901760
    %8788 = vmatpush1.msra.mxu0 %v8787
    %8789 = vmatprep.subr.mxu0 0.0
    %v8790 = vand.u32 %v7219, 4294901760
    %8791 = vmatpush1.msra.mxu0 %v8790
    %8792 = vmatprep.subr.mxu0 0.0
    %v8793 = vand.u32 %v7220, 4294901760
    %8794 = vmatpush1.msra.mxu0 %v8793
    %8795 = vmatprep.subr.mxu0 0.0
    %v8796 = vand.u32 %v7221, 4294901760
    %8797 = vmatpush1.msra.mxu0 %v8796
    %8798 = vmatprep.subr.mxu0 0.0
    %v8799 = vand.u32 %v7222, 4294901760
    %8800 = vmatpush1.msra.mxu0 %v8799
    %8801 = vmatprep.subr.mxu0 0.0
    %v8802 = vand.u32 %v7223, 4294901760
    %8803 = vmatpush1.msra.mxu0 %v8802
    %8804 = vmatprep.subr.mxu0 0.0
    %v8805 = vand.u32 %v7224, 4294901760
    %8806 = vmatpush1.msra.mxu0 %v8805
    %8807 = vmatprep.subr.mxu0 0.0
    %v8808 = vand.u32 %v7225, 4294901760
    %8809 = vmatpush1.msra.mxu0 %v8808
    %8810 = vmatprep.subr.mxu0 0.0
    %v8811 = vand.u32 %v7226, 4294901760
    %8812 = vmatpush1.msra.mxu0 %v8811
    %8813 = vmatprep.subr.mxu0 0.0
    %v8814 = vand.u32 %v7227, 4294901760
    %8815 = vmatpush1.msra.mxu0 %v8814
    %8816 = vmatprep.subr.mxu0 0.0
    %v8817 = vand.u32 %v7228, 4294901760
    %8818 = vmatpush1.msra.mxu0 %v8817
    %8819 = vmatprep.subr.mxu0 0.0
    %v8820 = vand.u32 %v7229, 4294901760
    %8821 = vmatpush1.msra.mxu0 %v8820
    %8822 = vmatprep.subr.mxu0 0.0
    %v8823 = vand.u32 %v7230, 4294901760
    %8824 = vmatpush1.msra.mxu0 %v8823
    %8825 = vmatprep.subr.mxu0 0.0
    %v8826 = vand.u32 %v7231, 4294901760
    %8827 = vmatpush1.msra.mxu0 %v8826
    %8828 = vmatprep.subr.mxu0 0.0
    %v8829 = vand.u32 %v7232, 4294901760
    %8830 = vmatpush1.msra.mxu0 %v8829
    %8831 = vmatprep.subr.mxu0 0.0
    %v8832 = vand.u32 %v7233, 4294901760
    %8833 = vmatpush1.msra.mxu0 %v8832
    %8834 = vmatprep.subr.mxu0 0.0
    %v8835 = vand.u32 %v7234, 4294901760
    %8836 = vmatpush1.msra.mxu0 %v8835
    %8837 = vmatprep.subr.mxu0 0.0
    %v8838 = vand.u32 %v7235, 4294901760
    %8839 = vmatpush1.msra.mxu0 %v8838
    %8840 = vmatprep.subr.mxu0 0.0
    %v8841 = vand.u32 %v7236, 4294901760
    %8842 = vmatpush1.msra.mxu0 %v8841
    %8843 = vmatprep.subr.mxu0 0.0
    %v8844 = vand.u32 %v7237, 4294901760
    %8845 = vmatpush1.msra.mxu0 %v8844
    %8846 = vmatprep.subr.mxu0 0.0
    %v8847 = vand.u32 %v7238, 4294901760
    %8848 = vmatpush1.msra.mxu0 %v8847
    %8849 = vmatprep.subr.mxu0 0.0
    %v8850 = vand.u32 %v7239, 4294901760
    %8851 = vmatpush1.msra.mxu0 %v8850
    %8852 = vmatprep.subr.mxu0 0.0
    %v8853 = vand.u32 %v7240, 4294901760
    %8854 = vmatpush1.msra.mxu0 %v8853
    %8855 = vmatprep.subr.mxu0 0.0
    %v8856 = vand.u32 %v7241, 4294901760
    %8857 = vmatpush1.msra.mxu0 %v8856
    %8858 = vmatprep.subr.mxu0 0.0
    %v8859 = vand.u32 %v7242, 4294901760
    %8860 = vmatpush1.msra.mxu0 %v8859
    %8861 = vmatprep.subr.mxu0 0.0
    %8862 = vmatpush1.msra.mxu0 0.0
    %8863 = vmatprep.subr.mxu0 0.0
    %8864 = vmatpush1.msra.mxu0 0.0
    %v8865 = vand.u32 %v7623, 4294901760
    %v8866 = vsub.f32 %v7623, %v8865
    %v8867 = vand.u32 %v8866, 4294901760
    %8868 = vmatprep.mubr.f32.mxu0 %v8867
    %v8869 = vand.u32 %v7454, 4294901760
    %v8870 = vsub.f32 %v7454, %v8869
    %v8871 = vand.u32 %v8870, 4294901760
    %8872 = vmatmul.mubr.f32.gmra.mrb[0].mxu0 %v8871
    %v8873 = vpop.f32.mrb[0].mxu0
    %v8874 = vadd.f32 %v8588, %v8873
    %v8875 = vpop.f32.mrb[0].mxu0
    %v8876 = vand.u32 %v7626, 4294901760
    %v8877 = vsub.f32 %v7626, %v8876
    %v8878 = vand.u32 %v8877, 4294901760
    %8879 = vmatprep.mubr.f32.mxu0 %v8878
    %v8880 = vand.u32 %v7456, 4294901760
    %v8881 = vsub.f32 %v7456, %v8880
    %v8882 = vand.u32 %v8881, 4294901760
    %8883 = vmatmul.mubr.f32.gmra.mrb[0].mxu0 %v8882
    %v8884 = vpop.f32.mrb[0].mxu0
    %v8885 = vadd.f32 %v8597, %v8884
    %v8886 = vpop.f32.mrb[0].mxu0
    %v8887 = vand.u32 %v7629, 4294901760
    %v8888 = vsub.f32 %v7629, %v8887
    %v8889 = vand.u32 %v8888, 4294901760
    %8890 = vmatprep.mubr.f32.mxu0 %v8889
    %v8891 = vand.u32 %v7458, 4294901760
    %v8892 = vsub.f32 %v7458, %v8891
    %v8893 = vand.u32 %v8892, 4294901760
    %8894 = vmatmul.mubr.f32.gmra.mrb[0].mxu0 %v8893
    %v8895 = vpop.f32.mrb[0].mxu0
    %v8896 = vadd.f32 %v8606, %v8895
    %v8897 = vpop.f32.mrb[0].mxu0
    %v8898 = vand.u32 %v7632, 4294901760
    %v8899 = vsub.f32 %v7632, %v8898
    %v8900 = vand.u32 %v8899, 4294901760
    %8901 = vmatprep.mubr.f32.mxu0 %v8900
    %v8902 = vand.u32 %v7460, 4294901760
    %v8903 = vsub.f32 %v7460, %v8902
    %v8904 = vand.u32 %v8903, 4294901760
    %8905 = vmatmul.mubr.f32.gmra.mrb[0].mxu0 %v8904
    %v8906 = vpop.f32.mrb[0].mxu0
    %v8907 = vadd.f32 %v8615, %v8906
    %v8908 = vpop.f32.mrb[0].mxu0
    %v8909 = vand.u32 %v7635, 4294901760
    %v8910 = vsub.f32 %v7635, %v8909
    %v8911 = vand.u32 %v8910, 4294901760
    %8912 = vmatprep.mubr.f32.mxu0 %v8911
    %v8913 = vand.u32 %v7462, 4294901760
    %v8914 = vsub.f32 %v7462, %v8913
    %v8915 = vand.u32 %v8914, 4294901760
    %8916 = vmatmul.mubr.f32.gmra.mrb[0].mxu0 %v8915
    %v8917 = vpop.f32.mrb[0].mxu0
    %v8918 = vadd.f32 %v8624, %v8917
    %v8919 = vpop.f32.mrb[0].mxu0
    %v8920 = vand.u32 %v7638, 4294901760
    %v8921 = vsub.f32 %v7638, %v8920
    %v8922 = vand.u32 %v8921, 4294901760
    %8923 = vmatprep.mubr.f32.mxu0 %v8922
    %v8924 = vand.u32 %v7464, 4294901760
    %v8925 = vsub.f32 %v7464, %v8924
    %v8926 = vand.u32 %v8925, 4294901760
    %8927 = vmatmul.mubr.f32.gmra.mrb[0].mxu0 %v8926
    %v8928 = vpop.f32.mrb[0].mxu0
    %v8929 = vadd.f32 %v8633, %v8928
    %v8930 = vpop.f32.mrb[0].mxu0
    %v8931 = vand.u32 %v7641, 4294901760
    %v8932 = vsub.f32 %v7641, %v8931
    %v8933 = vand.u32 %v8932, 4294901760
    %8934 = vmatprep.mubr.f32.mxu0 %v8933
    %v8935 = vand.u32 %v7466, 4294901760
    %v8936 = vsub.f32 %v7466, %v8935
    %v8937 = vand.u32 %v8936, 4294901760
    %8938 = vmatmul.mubr.f32.gmra.mrb[0].mxu0 %v8937
    %v8939 = vpop.f32.mrb[0].mxu0
    %v8940 = vadd.f32 %v8642, %v8939
    %v8941 = vpop.f32.mrb[0].mxu0
    %v8942 = vand.u32 %v7644, 4294901760
    %v8943 = vsub.f32 %v7644, %v8942
    %v8944 = vand.u32 %v8943, 4294901760
    %8945 = vmatprep.mubr.f32.mxu0 %v8944
    %v8946 = vand.u32 %v7468, 4294901760
    %v8947 = vsub.f32 %v7468, %v8946
    %v8948 = vand.u32 %v8947, 4294901760
    %8949 = vmatmul.mubr.f32.gmra.mrb[0].mxu0 %v8948
    %v8950 = vpop.f32.mrb[0].mxu0
    %v8951 = vadd.f32 %v8651, %v8950
    %v8952 = vpop.f32.mrb[0].mxu0
    %v8953 = vand.u32 %v7647, 4294901760
    %v8954 = vsub.f32 %v7647, %v8953
    %v8955 = vand.u32 %v8954, 4294901760
    %8956 = vmatprep.mubr.f32.mxu0 %v8955
    %v8957 = vand.u32 %v7470, 4294901760
    %v8958 = vsub.f32 %v7470, %v8957
    %v8959 = vand.u32 %v8958, 4294901760
    %8960 = vmatmul.mubr.f32.gmra.mrb[0].mxu0 %v8959
    %v8961 = vpop.f32.mrb[0].mxu0
    %v8962 = vadd.f32 %v8660, %v8961
    %v8963 = vpop.f32.mrb[0].mxu0
    %v8964 = vand.u32 %v7650, 4294901760
    %v8965 = vsub.f32 %v7650, %v8964
    %v8966 = vand.u32 %v8965, 4294901760
    %8967 = vmatprep.mubr.f32.mxu0 %v8966
    %v8968 = vand.u32 %v7472, 4294901760
    %v8969 = vsub.f32 %v7472, %v8968
    %v8970 = vand.u32 %v8969, 4294901760
    %8971 = vmatmul.mubr.f32.gmra.mrb[0].mxu0 %v8970
    %v8972 = vpop.f32.mrb[0].mxu0
    %v8973 = vadd.f32 %v8669, %v8972
    %v8974 = vpop.f32.mrb[0].mxu0
    %v8975 = vand.u32 %v7653, 4294901760
    %v8976 = vsub.f32 %v7653, %v8975
    %v8977 = vand.u32 %v8976, 4294901760
    %8978 = vmatprep.mubr.f32.mxu0 %v8977
    %v8979 = vand.u32 %v7474, 4294901760
    %v8980 = vsub.f32 %v7474, %v8979
    %v8981 = vand.u32 %v8980, 4294901760
    %8982 = vmatmul.mubr.f32.gmra.mrb[0].mxu0 %v8981
    %v8983 = vpop.f32.mrb[0].mxu0
    %v8984 = vadd.f32 %v8678, %v8983
    %v8985 = vpop.f32.mrb[0].mxu0
    %v8986 = vand.u32 %v7656, 4294901760
    %v8987 = vsub.f32 %v7656, %v8986
    %v8988 = vand.u32 %v8987, 4294901760
    %8989 = vmatprep.mubr.f32.mxu0 %v8988
    %v8990 = vand.u32 %v7476, 4294901760
    %v8991 = vsub.f32 %v7476, %v8990
    %v8992 = vand.u32 %v8991, 4294901760
    %8993 = vmatmul.mubr.f32.gmra.mrb[0].mxu0 %v8992
    %v8994 = vpop.f32.mrb[0].mxu0
    %v8995 = vadd.f32 %v8687, %v8994
    %v8996 = vpop.f32.mrb[0].mxu0
    %v8997 = vand.u32 %v7659, 4294901760
    %v8998 = vsub.f32 %v7659, %v8997
    %v8999 = vand.u32 %v8998, 4294901760
    %9000 = vmatprep.mubr.f32.mxu0 %v8999
    %v9001 = vand.u32 %v7478, 4294901760
    %v9002 = vsub.f32 %v7478, %v9001
    %v9003 = vand.u32 %v9002, 4294901760
    %9004 = vmatmul.mubr.f32.gmra.mrb[0].mxu0 %v9003
    %v9005 = vpop.f32.mrb[0].mxu0
    %v9006 = vadd.f32 %v8696, %v9005
    %v9007 = vpop.f32.mrb[0].mxu0
    %v9008 = vand.u32 %v7662, 4294901760
    %v9009 = vsub.f32 %v7662, %v9008
    %v9010 = vand.u32 %v9009, 4294901760
    %9011 = vmatprep.mubr.f32.mxu0 %v9010
    %v9012 = vand.u32 %v7480, 4294901760
    %v9013 = vsub.f32 %v7480, %v9012
    %v9014 = vand.u32 %v9013, 4294901760
    %9015 = vmatmul.mubr.f32.gmra.mrb[0].mxu0 %v9014
    %v9016 = vpop.f32.mrb[0].mxu0
    %v9017 = vadd.f32 %v8705, %v9016
    %v9018 = vpop.f32.mrb[0].mxu0
    %v9019 = vand.u32 %v7665, 4294901760
    %v9020 = vsub.f32 %v7665, %v9019
    %v9021 = vand.u32 %v9020, 4294901760
    %9022 = vmatprep.mubr.f32.mxu0 %v9021
    %v9023 = vand.u32 %v7482, 4294901760
    %v9024 = vsub.f32 %v7482, %v9023
    %v9025 = vand.u32 %v9024, 4294901760
    %9026 = vmatmul.mubr.f32.gmra.mrb[0].mxu0 %v9025
    %v9027 = vpop.f32.mrb[0].mxu0
    %v9028 = vadd.f32 %v8714, %v9027
    %v9029 = vpop.f32.mrb[0].mxu0
    %v9030 = vand.u32 %v7668, 4294901760
    %v9031 = vsub.f32 %v7668, %v9030
    %v9032 = vand.u32 %v9031, 4294901760
    %9033 = vmatprep.mubr.f32.mxu0 %v9032
    %v9034 = vand.u32 %v7484, 4294901760
    %v9035 = vsub.f32 %v7484, %v9034
    %v9036 = vand.u32 %v9035, 4294901760
    %9037 = vmatmul.mubr.f32.gmra.mrb[0].mxu0 %v9036
    %v9038 = vpop.f32.mrb[0].mxu0
    %v9039 = vadd.f32 %v8723, %v9038
    %v9040 = vpop.f32.mrb[0].mxu0
    %v9041 = vand.u32 %v7671, 4294901760
    %v9042 = vsub.f32 %v7671, %v9041
    %v9043 = vand.u32 %v9042, 4294901760
    %9044 = vmatprep.mubr.f32.mxu0 %v9043
    %v9045 = vand.u32 %v7486, 4294901760
    %v9046 = vsub.f32 %v7486, %v9045
    %v9047 = vand.u32 %v9046, 4294901760
    %9048 = vmatmul.mubr.f32.gmra.mrb[0].mxu0 %v9047
    %v9049 = vpop.f32.mrb[0].mxu0
    %v9050 = vadd.f32 %v8732, %v9049
    %v9051 = vpop.f32.mrb[0].mxu0
    %v9052 = vand.u32 %v7674, 4294901760
    %v9053 = vsub.f32 %v7674, %v9052
    %v9054 = vand.u32 %v9053, 4294901760
    %9055 = vmatprep.mubr.f32.mxu0 %v9054
    %v9056 = vand.u32 %v7488, 4294901760
    %v9057 = vsub.f32 %v7488, %v9056
    %v9058 = vand.u32 %v9057, 4294901760
    %9059 = vmatmul.mubr.f32.gmra.mrb[0].mxu0 %v9058
    %v9060 = vpop.f32.mrb[0].mxu0
    %v9061 = vadd.f32 %v8741, %v9060
    %v9062 = vpop.f32.mrb[0].mxu0
    %v9063 = vand.u32 %v7677, 4294901760
    %v9064 = vsub.f32 %v7677, %v9063
    %v9065 = vand.u32 %v9064, 4294901760
    %9066 = vmatprep.mubr.f32.mxu0 %v9065
    %v9067 = vand.u32 %v7490, 4294901760
    %v9068 = vsub.f32 %v7490, %v9067
    %v9069 = vand.u32 %v9068, 4294901760
    %9070 = vmatmul.mubr.f32.gmra.mrb[0].mxu0 %v9069
    %v9071 = vpop.f32.mrb[0].mxu0
    %v9072 = vadd.f32 %v8750, %v9071
    %v9073 = vpop.f32.mrb[0].mxu0
    %v9074 = vand.u32 %v7680, 4294901760
    %v9075 = vsub.f32 %v7680, %v9074
    %v9076 = vand.u32 %v9075, 4294901760
    %9077 = vmatprep.mubr.f32.mxu0 %v9076
    %v9078 = vand.u32 %v7492, 4294901760
    %v9079 = vsub.f32 %v7492, %v9078
    %v9080 = vand.u32 %v9079, 4294901760
    %9081 = vmatmul.mubr.f32.gmra.mrb[0].mxu0 %v9080
    %v9082 = vpop.f32.mrb[0].mxu0
    %v9083 = vadd.f32 %v8759, %v9082
    %v9084 = vpop.f32.mrb[0].mxu0
    %v9085 = vand.u32 %v7683, 4294901760
    %v9086 = vsub.f32 %v7683, %v9085
    %v9087 = vand.u32 %v9086, 4294901760
    %9088 = vmatprep.mubr.f32.mxu0 %v9087
    %v9089 = vand.u32 %v7494, 4294901760
    %v9090 = vsub.f32 %v7494, %v9089
    %v9091 = vand.u32 %v9090, 4294901760
    %9092 = vmatmul.mubr.f32.gmra.mrb[0].mxu0 %v9091
    %v9093 = vpop.f32.mrb[0].mxu0
    %v9094 = vadd.f32 %v8768, %v9093
    %v9095 = vpop.f32.mrb[0].mxu0
    %9096 = vdwg.mxu0
    %9097 = vmatprep.subr.mxu0 0.0
    %v9098 = vand.u32 %v7213, 4294901760
    %v9099 = vsub.f32 %v7213, %v9098
    %v9100 = vand.u32 %v9099, 4294901760
    %9101 = vmatpush1.msra.mxu0 %v9100
    %9102 = vmatprep.subr.mxu0 0.0
    %v9103 = vand.u32 %v7214, 4294901760
    %v9104 = vsub.f32 %v7214, %v9103
    %v9105 = vand.u32 %v9104, 4294901760
    %9106 = vmatpush1.msra.mxu0 %v9105
    %9107 = vmatprep.subr.mxu0 0.0
    %v9108 = vand.u32 %v7215, 4294901760
    %v9109 = vsub.f32 %v7215, %v9108
    %v9110 = vand.u32 %v9109, 4294901760
    %9111 = vmatpush1.msra.mxu0 %v9110
    %9112 = vmatprep.subr.mxu0 0.0
    %v9113 = vand.u32 %v7216, 4294901760
    %v9114 = vsub.f32 %v7216, %v9113
    %v9115 = vand.u32 %v9114, 4294901760
    %9116 = vmatpush1.msra.mxu0 %v9115
    %9117 = vmatprep.subr.mxu0 0.0
    %v9118 = vand.u32 %v7217, 4294901760
    %v9119 = vsub.f32 %v7217, %v9118
    %v9120 = vand.u32 %v9119, 4294901760
    %9121 = vmatpush1.msra.mxu0 %v9120
    %9122 = vmatprep.subr.mxu0 0.0
    %v9123 = vand.u32 %v7218, 4294901760
    %v9124 = vsub.f32 %v7218, %v9123
    %v9125 = vand.u32 %v9124, 4294901760
    %9126 = vmatpush1.msra.mxu0 %v9125
    %9127 = vmatprep.subr.mxu0 0.0
    %v9128 = vand.u32 %v7219, 4294901760
    %v9129 = vsub.f32 %v7219, %v9128
    %v9130 = vand.u32 %v9129, 4294901760
    %9131 = vmatpush1.msra.mxu0 %v9130
    %9132 = vmatprep.subr.mxu0 0.0
    %v9133 = vand.u32 %v7220, 4294901760
    %v9134 = vsub.f32 %v7220, %v9133
    %v9135 = vand.u32 %v9134, 4294901760
    %9136 = vmatpush1.msra.mxu0 %v9135
    %9137 = vmatprep.subr.mxu0 0.0
    %v9138 = vand.u32 %v7221, 4294901760
    %v9139 = vsub.f32 %v7221, %v9138
    %v9140 = vand.u32 %v9139, 4294901760
    %9141 = vmatpush1.msra.mxu0 %v9140
    %9142 = vmatprep.subr.mxu0 0.0
    %v9143 = vand.u32 %v7222, 4294901760
    %v9144 = vsub.f32 %v7222, %v9143
    %v9145 = vand.u32 %v9144, 4294901760
    %9146 = vmatpush1.msra.mxu0 %v9145
    %9147 = vmatprep.subr.mxu0 0.0
    %v9148 = vand.u32 %v7223, 4294901760
    %v9149 = vsub.f32 %v7223, %v9148
    %v9150 = vand.u32 %v9149, 4294901760
    %9151 = vmatpush1.msra.mxu0 %v9150
    %9152 = vmatprep.subr.mxu0 0.0
    %v9153 = vand.u32 %v7224, 4294901760
    %v9154 = vsub.f32 %v7224, %v9153
    %v9155 = vand.u32 %v9154, 4294901760
    %9156 = vmatpush1.msra.mxu0 %v9155
    %9157 = vmatprep.subr.mxu0 0.0
    %v9158 = vand.u32 %v7225, 4294901760
    %v9159 = vsub.f32 %v7225, %v9158
    %v9160 = vand.u32 %v9159, 4294901760
    %9161 = vmatpush1.msra.mxu0 %v9160
    %9162 = vmatprep.subr.mxu0 0.0
    %v9163 = vand.u32 %v7226, 4294901760
    %v9164 = vsub.f32 %v7226, %v9163
    %v9165 = vand.u32 %v9164, 4294901760
    %9166 = vmatpush1.msra.mxu0 %v9165
    %9167 = vmatprep.subr.mxu0 0.0
    %v9168 = vand.u32 %v7227, 4294901760
    %v9169 = vsub.f32 %v7227, %v9168
    %v9170 = vand.u32 %v9169, 4294901760
    %9171 = vmatpush1.msra.mxu0 %v9170
    %9172 = vmatprep.subr.mxu0 0.0
    %v9173 = vand.u32 %v7228, 4294901760
    %v9174 = vsub.f32 %v7228, %v9173
    %v9175 = vand.u32 %v9174, 4294901760
    %9176 = vmatpush1.msra.mxu0 %v9175
    %9177 = vmatprep.subr.mxu0 0.0
    %v9178 = vand.u32 %v7229, 4294901760
    %v9179 = vsub.f32 %v7229, %v9178
    %v9180 = vand.u32 %v9179, 4294901760
    %9181 = vmatpush1.msra.mxu0 %v9180
    %9182 = vmatprep.subr.mxu0 0.0
    %v9183 = vand.u32 %v7230, 4294901760
    %v9184 = vsub.f32 %v7230, %v9183
    %v9185 = vand.u32 %v9184, 4294901760
    %9186 = vmatpush1.msra.mxu0 %v9185
    %9187 = vmatprep.subr.mxu0 0.0
    %v9188 = vand.u32 %v7231, 4294901760
    %v9189 = vsub.f32 %v7231, %v9188
    %v9190 = vand.u32 %v9189, 4294901760
    %9191 = vmatpush1.msra.mxu0 %v9190
    %9192 = vmatprep.subr.mxu0 0.0
    %v9193 = vand.u32 %v7232, 4294901760
    %v9194 = vsub.f32 %v7232, %v9193
    %v9195 = vand.u32 %v9194, 4294901760
    %9196 = vmatpush1.msra.mxu0 %v9195
    %9197 = vmatprep.subr.mxu0 0.0
    %v9198 = vand.u32 %v7233, 4294901760
    %v9199 = vsub.f32 %v7233, %v9198
    %v9200 = vand.u32 %v9199, 4294901760
    %9201 = vmatpush1.msra.mxu0 %v9200
    %9202 = vmatprep.subr.mxu0 0.0
    %v9203 = vand.u32 %v7234, 4294901760
    %v9204 = vsub.f32 %v7234, %v9203
    %v9205 = vand.u32 %v9204, 4294901760
    %9206 = vmatpush1.msra.mxu0 %v9205
    %9207 = vmatprep.subr.mxu0 0.0
    %v9208 = vand.u32 %v7235, 4294901760
    %v9209 = vsub.f32 %v7235, %v9208
    %v9210 = vand.u32 %v9209, 4294901760
    %9211 = vmatpush1.msra.mxu0 %v9210
    %9212 = vmatprep.subr.mxu0 0.0
    %v9213 = vand.u32 %v7236, 4294901760
    %v9214 = vsub.f32 %v7236, %v9213
    %v9215 = vand.u32 %v9214, 4294901760
    %9216 = vmatpush1.msra.mxu0 %v9215
    %9217 = vmatprep.subr.mxu0 0.0
    %v9218 = vand.u32 %v7237, 4294901760
    %v9219 = vsub.f32 %v7237, %v9218
    %v9220 = vand.u32 %v9219, 4294901760
    %9221 = vmatpush1.msra.mxu0 %v9220
    %9222 = vmatprep.subr.mxu0 0.0
    %v9223 = vand.u32 %v7238, 4294901760
    %v9224 = vsub.f32 %v7238, %v9223
    %v9225 = vand.u32 %v9224, 4294901760
    %9226 = vmatpush1.msra.mxu0 %v9225
    %9227 = vmatprep.subr.mxu0 0.0
    %v9228 = vand.u32 %v7239, 4294901760
    %v9229 = vsub.f32 %v7239, %v9228
    %v9230 = vand.u32 %v9229, 4294901760
    %9231 = vmatpush1.msra.mxu0 %v9230
    %9232 = vmatprep.subr.mxu0 0.0
    %v9233 = vand.u32 %v7240, 4294901760
    %v9234 = vsub.f32 %v7240, %v9233
    %v9235 = vand.u32 %v9234, 4294901760
    %9236 = vmatpush1.msra.mxu0 %v9235
    %9237 = vmatprep.subr.mxu0 0.0
    %v9238 = vand.u32 %v7241, 4294901760
    %v9239 = vsub.f32 %v7241, %v9238
    %v9240 = vand.u32 %v9239, 4294901760
    %9241 = vmatpush1.msra.mxu0 %v9240
    %9242 = vmatprep.subr.mxu0 0.0
    %v9243 = vand.u32 %v7242, 4294901760
    %v9244 = vsub.f32 %v7242, %v9243
    %v9245 = vand.u32 %v9244, 4294901760
    %9246 = vmatpush1.msra.mxu0 %v9245
    %9247 = vmatprep.subr.mxu0 0.0
    %9248 = vmatpush1.msra.mxu0 0.0
    %9249 = vmatprep.subr.mxu0 0.0
    %9250 = vmatpush1.msra.mxu0 0.0
    %v9251 = vand.u32 %v7623, 4294901760
    %9252 = vmatprep.mubr.f32.mxu0 %v9251
    %v9253 = vand.u32 %v7454, 4294901760
    %9254 = vmatmul.mubr.f32.gmra.mrb[0].mxu0 %v9253
    %v9255 = vpop.f32.mrb[0].mxu0
    %v9256 = vadd.f32 %v8874, %v9255
    %v9257 = vpop.f32.mrb[0].mxu0
    %v9258 = vand.u32 %v7626, 4294901760
    %9259 = vmatprep.mubr.f32.mxu0 %v9258
    %v9260 = vand.u32 %v7456, 4294901760
    %9261 = vmatmul.mubr.f32.gmra.mrb[0].mxu0 %v9260
    %v9262 = vpop.f32.mrb[0].mxu0
    %v9263 = vadd.f32 %v8885, %v9262
    %v9264 = vpop.f32.mrb[0].mxu0
    %v9265 = vand.u32 %v7629, 4294901760
    %9266 = vmatprep.mubr.f32.mxu0 %v9265
    %v9267 = vand.u32 %v7458, 4294901760
    %9268 = vmatmul.mubr.f32.gmra.mrb[0].mxu0 %v9267
    %v9269 = vpop.f32.mrb[0].mxu0
    %v9270 = vadd.f32 %v8896, %v9269
    %v9271 = vpop.f32.mrb[0].mxu0
    %v9272 = vand.u32 %v7632, 4294901760
    %9273 = vmatprep.mubr.f32.mxu0 %v9272
    %v9274 = vand.u32 %v7460, 4294901760
    %9275 = vmatmul.mubr.f32.gmra.mrb[0].mxu0 %v9274
    %v9276 = vpop.f32.mrb[0].mxu0
    %v9277 = vadd.f32 %v8907, %v9276
    %v9278 = vpop.f32.mrb[0].mxu0
    %v9279 = vand.u32 %v7635, 4294901760
    %9280 = vmatprep.mubr.f32.mxu0 %v9279
    %v9281 = vand.u32 %v7462, 4294901760
    %9282 = vmatmul.mubr.f32.gmra.mrb[0].mxu0 %v9281
    %v9283 = vpop.f32.mrb[0].mxu0
    %v9284 = vadd.f32 %v8918, %v9283
    %v9285 = vpop.f32.mrb[0].mxu0
    %v9286 = vand.u32 %v7638, 4294901760
    %9287 = vmatprep.mubr.f32.mxu0 %v9286
    %v9288 = vand.u32 %v7464, 4294901760
    %9289 = vmatmul.mubr.f32.gmra.mrb[0].mxu0 %v9288
    %v9290 = vpop.f32.mrb[0].mxu0
    %v9291 = vadd.f32 %v8929, %v9290
    %v9292 = vpop.f32.mrb[0].mxu0
    %v9293 = vand.u32 %v7641, 4294901760
    %9294 = vmatprep.mubr.f32.mxu0 %v9293
    %v9295 = vand.u32 %v7466, 4294901760
    %9296 = vmatmul.mubr.f32.gmra.mrb[0].mxu0 %v9295
    %v9297 = vpop.f32.mrb[0].mxu0
    %v9298 = vadd.f32 %v8940, %v9297
    %v9299 = vpop.f32.mrb[0].mxu0
    %v9300 = vand.u32 %v7644, 4294901760
    %9301 = vmatprep.mubr.f32.mxu0 %v9300
    %v9302 = vand.u32 %v7468, 4294901760
    %9303 = vmatmul.mubr.f32.gmra.mrb[0].mxu0 %v9302
    %v9304 = vpop.f32.mrb[0].mxu0
    %v9305 = vadd.f32 %v8951, %v9304
    %v9306 = vpop.f32.mrb[0].mxu0
    %v9307 = vand.u32 %v7647, 4294901760
    %9308 = vmatprep.mubr.f32.mxu0 %v9307
    %v9309 = vand.u32 %v7470, 4294901760
    %9310 = vmatmul.mubr.f32.gmra.mrb[0].mxu0 %v9309
    %v9311 = vpop.f32.mrb[0].mxu0
    %v9312 = vadd.f32 %v8962, %v9311
    %v9313 = vpop.f32.mrb[0].mxu0
    %v9314 = vand.u32 %v7650, 4294901760
    %9315 = vmatprep.mubr.f32.mxu0 %v9314
    %v9316 = vand.u32 %v7472, 4294901760
    %9317 = vmatmul.mubr.f32.gmra.mrb[0].mxu0 %v9316
    %v9318 = vpop.f32.mrb[0].mxu0
    %v9319 = vadd.f32 %v8973, %v9318
    %v9320 = vpop.f32.mrb[0].mxu0
    %v9321 = vand.u32 %v7653, 4294901760
    %9322 = vmatprep.mubr.f32.mxu0 %v9321
    %v9323 = vand.u32 %v7474, 4294901760
    %9324 = vmatmul.mubr.f32.gmra.mrb[0].mxu0 %v9323
    %v9325 = vpop.f32.mrb[0].mxu0
    %v9326 = vadd.f32 %v8984, %v9325
    %v9327 = vpop.f32.mrb[0].mxu0
    %v9328 = vand.u32 %v7656, 4294901760
    %9329 = vmatprep.mubr.f32.mxu0 %v9328
    %v9330 = vand.u32 %v7476, 4294901760
    %9331 = vmatmul.mubr.f32.gmra.mrb[0].mxu0 %v9330
    %v9332 = vpop.f32.mrb[0].mxu0
    %v9333 = vadd.f32 %v8995, %v9332
    %v9334 = vpop.f32.mrb[0].mxu0
    %v9335 = vand.u32 %v7659, 4294901760
    %9336 = vmatprep.mubr.f32.mxu0 %v9335
    %v9337 = vand.u32 %v7478, 4294901760
    %9338 = vmatmul.mubr.f32.gmra.mrb[0].mxu0 %v9337
    %v9339 = vpop.f32.mrb[0].mxu0
    %v9340 = vadd.f32 %v9006, %v9339
    %v9341 = vpop.f32.mrb[0].mxu0
    %v9342 = vand.u32 %v7662, 4294901760
    %9343 = vmatprep.mubr.f32.mxu0 %v9342
    %v9344 = vand.u32 %v7480, 4294901760
    %9345 = vmatmul.mubr.f32.gmra.mrb[0].mxu0 %v9344
    %v9346 = vpop.f32.mrb[0].mxu0
    %v9347 = vadd.f32 %v9017, %v9346
    %v9348 = vpop.f32.mrb[0].mxu0
    %v9349 = vand.u32 %v7665, 4294901760
    %9350 = vmatprep.mubr.f32.mxu0 %v9349
    %v9351 = vand.u32 %v7482, 4294901760
    %9352 = vmatmul.mubr.f32.gmra.mrb[0].mxu0 %v9351
    %v9353 = vpop.f32.mrb[0].mxu0
    %v9354 = vadd.f32 %v9028, %v9353
    %v9355 = vpop.f32.mrb[0].mxu0
    %v9356 = vand.u32 %v7668, 4294901760
    %9357 = vmatprep.mubr.f32.mxu0 %v9356
    %v9358 = vand.u32 %v7484, 4294901760
    %9359 = vmatmul.mubr.f32.gmra.mrb[0].mxu0 %v9358
    %v9360 = vpop.f32.mrb[0].mxu0
    %v9361 = vadd.f32 %v9039, %v9360
    %v9362 = vpop.f32.mrb[0].mxu0
    %v9363 = vand.u32 %v7671, 4294901760
    %9364 = vmatprep.mubr.f32.mxu0 %v9363
    %v9365 = vand.u32 %v7486, 4294901760
    %9366 = vmatmul.mubr.f32.gmra.mrb[0].mxu0 %v9365
    %v9367 = vpop.f32.mrb[0].mxu0
    %v9368 = vadd.f32 %v9050, %v9367
    %v9369 = vpop.f32.mrb[0].mxu0
    %v9370 = vand.u32 %v7674, 4294901760
    %9371 = vmatprep.mubr.f32.mxu0 %v9370
    %v9372 = vand.u32 %v7488, 4294901760
    %9373 = vmatmul.mubr.f32.gmra.mrb[0].mxu0 %v9372
    %v9374 = vpop.f32.mrb[0].mxu0
    %v9375 = vadd.f32 %v9061, %v9374
    %v9376 = vpop.f32.mrb[0].mxu0
    %v9377 = vand.u32 %v7677, 4294901760
    %9378 = vmatprep.mubr.f32.mxu0 %v9377
    %v9379 = vand.u32 %v7490, 4294901760
    %9380 = vmatmul.mubr.f32.gmra.mrb[0].mxu0 %v9379
    %v9381 = vpop.f32.mrb[0].mxu0
    %v9382 = vadd.f32 %v9072, %v9381
    %v9383 = vpop.f32.mrb[0].mxu0
    %v9384 = vand.u32 %v7680, 4294901760
    %9385 = vmatprep.mubr.f32.mxu0 %v9384
    %v9386 = vand.u32 %v7492, 4294901760
    %9387 = vmatmul.mubr.f32.gmra.mrb[0].mxu0 %v9386
    %v9388 = vpop.f32.mrb[0].mxu0
    %v9389 = vadd.f32 %v9083, %v9388
    %v9390 = vpop.f32.mrb[0].mxu0
    %v9391 = vand.u32 %v7683, 4294901760
    %9392 = vmatprep.mubr.f32.mxu0 %v9391
    %v9393 = vand.u32 %v7494, 4294901760
    %9394 = vmatmul.mubr.f32.gmra.mrb[0].mxu0 %v9393
    %v9395 = vpop.f32.mrb[0].mxu0
    %v9396 = vadd.f32 %v9094, %v9395
    %v9397 = vpop.f32.mrb[0].mxu0
    %9398 = vdwg.mxu0
    %9399 = vmatprep.subr.mxu0 0.0
    %v9400 = vand.u32 %v7213, 4294901760
    %9401 = vmatpush1.msra.mxu0 %v9400
    %9402 = vmatprep.subr.mxu0 0.0
    %v9403 = vand.u32 %v7214, 4294901760
    %9404 = vmatpush1.msra.mxu0 %v9403
    %9405 = vmatprep.subr.mxu0 0.0
    %v9406 = vand.u32 %v7215, 4294901760
    %9407 = vmatpush1.msra.mxu0 %v9406
    %9408 = vmatprep.subr.mxu0 0.0
    %v9409 = vand.u32 %v7216, 4294901760
    %9410 = vmatpush1.msra.mxu0 %v9409
    %9411 = vmatprep.subr.mxu0 0.0
    %v9412 = vand.u32 %v7217, 4294901760
    %9413 = vmatpush1.msra.mxu0 %v9412
    %9414 = vmatprep.subr.mxu0 0.0
    %v9415 = vand.u32 %v7218, 4294901760
    %9416 = vmatpush1.msra.mxu0 %v9415
    %9417 = vmatprep.subr.mxu0 0.0
    %v9418 = vand.u32 %v7219, 4294901760
    %9419 = vmatpush1.msra.mxu0 %v9418
    %9420 = vmatprep.subr.mxu0 0.0
    %v9421 = vand.u32 %v7220, 4294901760
    %9422 = vmatpush1.msra.mxu0 %v9421
    %9423 = vmatprep.subr.mxu0 0.0
    %v9424 = vand.u32 %v7221, 4294901760
    %9425 = vmatpush1.msra.mxu0 %v9424
    %9426 = vmatprep.subr.mxu0 0.0
    %v9427 = vand.u32 %v7222, 4294901760
    %9428 = vmatpush1.msra.mxu0 %v9427
    %9429 = vmatprep.subr.mxu0 0.0
    %v9430 = vand.u32 %v7223, 4294901760
    %9431 = vmatpush1.msra.mxu0 %v9430
    %9432 = vmatprep.subr.mxu0 0.0
    %v9433 = vand.u32 %v7224, 4294901760
    %9434 = vmatpush1.msra.mxu0 %v9433
    %9435 = vmatprep.subr.mxu0 0.0
    %v9436 = vand.u32 %v7225, 4294901760
    %9437 = vmatpush1.msra.mxu0 %v9436
    %9438 = vmatprep.subr.mxu0 0.0
    %v9439 = vand.u32 %v7226, 4294901760
    %9440 = vmatpush1.msra.mxu0 %v9439
    %9441 = vmatprep.subr.mxu0 0.0
    %v9442 = vand.u32 %v7227, 4294901760
    %9443 = vmatpush1.msra.mxu0 %v9442
    %9444 = vmatprep.subr.mxu0 0.0
    %v9445 = vand.u32 %v7228, 4294901760
    %9446 = vmatpush1.msra.mxu0 %v9445
    %9447 = vmatprep.subr.mxu0 0.0
    %v9448 = vand.u32 %v7229, 4294901760
    %9449 = vmatpush1.msra.mxu0 %v9448
    %9450 = vmatprep.subr.mxu0 0.0
    %v9451 = vand.u32 %v7230, 4294901760
    %9452 = vmatpush1.msra.mxu0 %v9451
    %9453 = vmatprep.subr.mxu0 0.0
    %v9454 = vand.u32 %v7231, 4294901760
    %9455 = vmatpush1.msra.mxu0 %v9454
    %9456 = vmatprep.subr.mxu0 0.0
    %v9457 = vand.u32 %v7232, 4294901760
    %9458 = vmatpush1.msra.mxu0 %v9457
    %9459 = vmatprep.subr.mxu0 0.0
    %v9460 = vand.u32 %v7233, 4294901760
    %9461 = vmatpush1.msra.mxu0 %v9460
    %9462 = vmatprep.subr.mxu0 0.0
    %v9463 = vand.u32 %v7234, 4294901760
    %9464 = vmatpush1.msra.mxu0 %v9463
    %9465 = vmatprep.subr.mxu0 0.0
    %v9466 = vand.u32 %v7235, 4294901760
    %9467 = vmatpush1.msra.mxu0 %v9466
    %9468 = vmatprep.subr.mxu0 0.0
    %v9469 = vand.u32 %v7236, 4294901760
    %9470 = vmatpush1.msra.mxu0 %v9469
    %9471 = vmatprep.subr.mxu0 0.0
    %v9472 = vand.u32 %v7237, 4294901760
    %9473 = vmatpush1.msra.mxu0 %v9472
    %9474 = vmatprep.subr.mxu0 0.0
    %v9475 = vand.u32 %v7238, 4294901760
    %9476 = vmatpush1.msra.mxu0 %v9475
    %9477 = vmatprep.subr.mxu0 0.0
    %v9478 = vand.u32 %v7239, 4294901760
    %9479 = vmatpush1.msra.mxu0 %v9478
    %9480 = vmatprep.subr.mxu0 0.0
    %v9481 = vand.u32 %v7240, 4294901760
    %9482 = vmatpush1.msra.mxu0 %v9481
    %9483 = vmatprep.subr.mxu0 0.0
    %v9484 = vand.u32 %v7241, 4294901760
    %9485 = vmatpush1.msra.mxu0 %v9484
    %9486 = vmatprep.subr.mxu0 0.0
    %v9487 = vand.u32 %v7242, 4294901760
    %9488 = vmatpush1.msra.mxu0 %v9487
    %9489 = vmatprep.subr.mxu0 0.0
    %9490 = vmatpush1.msra.mxu0 0.0
    %9491 = vmatprep.subr.mxu0 0.0
    %9492 = vmatpush1.msra.mxu0 0.0
    %v9493 = vand.u32 %v7623, 4294901760
    %9494 = vmatprep.mubr.f32.mxu0 %v9493
    %v9495 = vand.u32 %v7454, 4294901760
    %9496 = vmatmul.mubr.f32.gmra.mrb[0].mxu0 %v9495
    %v9497 = vpop.f32.mrb[0].mxu0
    %v9498 = vadd.f32 %v9256, %v9497
    %v9499 = vpop.f32.mrb[0].mxu0
    %v9500 = vand.u32 %v7626, 4294901760
    %9501 = vmatprep.mubr.f32.mxu0 %v9500
    %v9502 = vand.u32 %v7456, 4294901760
    %9503 = vmatmul.mubr.f32.gmra.mrb[0].mxu0 %v9502
    %v9504 = vpop.f32.mrb[0].mxu0
    %v9505 = vadd.f32 %v9263, %v9504
    %v9506 = vpop.f32.mrb[0].mxu0
    %v9507 = vand.u32 %v7629, 4294901760
    %9508 = vmatprep.mubr.f32.mxu0 %v9507
    %v9509 = vand.u32 %v7458, 4294901760
    %9510 = vmatmul.mubr.f32.gmra.mrb[0].mxu0 %v9509
    %v9511 = vpop.f32.mrb[0].mxu0
    %v9512 = vadd.f32 %v9270, %v9511
    %v9513 = vpop.f32.mrb[0].mxu0
    %v9514 = vand.u32 %v7632, 4294901760
    %9515 = vmatprep.mubr.f32.mxu0 %v9514
    %v9516 = vand.u32 %v7460, 4294901760
    %9517 = vmatmul.mubr.f32.gmra.mrb[0].mxu0 %v9516
    %v9518 = vpop.f32.mrb[0].mxu0
    %v9519 = vadd.f32 %v9277, %v9518
    %v9520 = vpop.f32.mrb[0].mxu0
    %v9521 = vand.u32 %v7635, 4294901760
    %9522 = vmatprep.mubr.f32.mxu0 %v9521
    %v9523 = vand.u32 %v7462, 4294901760
    %9524 = vmatmul.mubr.f32.gmra.mrb[0].mxu0 %v9523
    %v9525 = vpop.f32.mrb[0].mxu0
    %v9526 = vadd.f32 %v9284, %v9525
    %v9527 = vpop.f32.mrb[0].mxu0
    %v9528 = vand.u32 %v7638, 4294901760
    %9529 = vmatprep.mubr.f32.mxu0 %v9528
    %v9530 = vand.u32 %v7464, 4294901760
    %9531 = vmatmul.mubr.f32.gmra.mrb[0].mxu0 %v9530
    %v9532 = vpop.f32.mrb[0].mxu0
    %v9533 = vadd.f32 %v9291, %v9532
    %v9534 = vpop.f32.mrb[0].mxu0
    %v9535 = vand.u32 %v7641, 4294901760
    %9536 = vmatprep.mubr.f32.mxu0 %v9535
    %v9537 = vand.u32 %v7466, 4294901760
    %9538 = vmatmul.mubr.f32.gmra.mrb[0].mxu0 %v9537
    %v9539 = vpop.f32.mrb[0].mxu0
    %v9540 = vadd.f32 %v9298, %v9539
    %v9541 = vpop.f32.mrb[0].mxu0
    %v9542 = vand.u32 %v7644, 4294901760
    %9543 = vmatprep.mubr.f32.mxu0 %v9542
    %v9544 = vand.u32 %v7468, 4294901760
    %9545 = vmatmul.mubr.f32.gmra.mrb[0].mxu0 %v9544
    %v9546 = vpop.f32.mrb[0].mxu0
    %v9547 = vadd.f32 %v9305, %v9546
    %v9548 = vpop.f32.mrb[0].mxu0
    %v9549 = vand.u32 %v7647, 4294901760
    %9550 = vmatprep.mubr.f32.mxu0 %v9549
    %v9551 = vand.u32 %v7470, 4294901760
    %9552 = vmatmul.mubr.f32.gmra.mrb[0].mxu0 %v9551
    %v9553 = vpop.f32.mrb[0].mxu0
    %v9554 = vadd.f32 %v9312, %v9553
    %v9555 = vpop.f32.mrb[0].mxu0
    %v9556 = vand.u32 %v7650, 4294901760
    %9557 = vmatprep.mubr.f32.mxu0 %v9556
    %v9558 = vand.u32 %v7472, 4294901760
    %9559 = vmatmul.mubr.f32.gmra.mrb[0].mxu0 %v9558
    %v9560 = vpop.f32.mrb[0].mxu0
    %v9561 = vadd.f32 %v9319, %v9560
    %v9562 = vpop.f32.mrb[0].mxu0
    %v9563 = vand.u32 %v7653, 4294901760
    %9564 = vmatprep.mubr.f32.mxu0 %v9563
    %v9565 = vand.u32 %v7474, 4294901760
    %9566 = vmatmul.mubr.f32.gmra.mrb[0].mxu0 %v9565
    %v9567 = vpop.f32.mrb[0].mxu0
    %v9568 = vadd.f32 %v9326, %v9567
    %v9569 = vpop.f32.mrb[0].mxu0
    %v9570 = vand.u32 %v7656, 4294901760
    %9571 = vmatprep.mubr.f32.mxu0 %v9570
    %v9572 = vand.u32 %v7476, 4294901760
    %9573 = vmatmul.mubr.f32.gmra.mrb[0].mxu0 %v9572
    %v9574 = vpop.f32.mrb[0].mxu0
    %v9575 = vadd.f32 %v9333, %v9574
    %v9576 = vpop.f32.mrb[0].mxu0
    %v9577 = vand.u32 %v7659, 4294901760
    %9578 = vmatprep.mubr.f32.mxu0 %v9577
    %v9579 = vand.u32 %v7478, 4294901760
    %9580 = vmatmul.mubr.f32.gmra.mrb[0].mxu0 %v9579
    %v9581 = vpop.f32.mrb[0].mxu0
    %v9582 = vadd.f32 %v9340, %v9581
    %v9583 = vpop.f32.mrb[0].mxu0
    %v9584 = vand.u32 %v7662, 4294901760
    %9585 = vmatprep.mubr.f32.mxu0 %v9584
    %v9586 = vand.u32 %v7480, 4294901760
    %9587 = vmatmul.mubr.f32.gmra.mrb[0].mxu0 %v9586
    %v9588 = vpop.f32.mrb[0].mxu0
    %v9589 = vadd.f32 %v9347, %v9588
    %v9590 = vpop.f32.mrb[0].mxu0
    %v9591 = vand.u32 %v7665, 4294901760
    %9592 = vmatprep.mubr.f32.mxu0 %v9591
    %v9593 = vand.u32 %v7482, 4294901760
    %9594 = vmatmul.mubr.f32.gmra.mrb[0].mxu0 %v9593
    %v9595 = vpop.f32.mrb[0].mxu0
    %v9596 = vadd.f32 %v9354, %v9595
    %v9597 = vpop.f32.mrb[0].mxu0
    %v9598 = vand.u32 %v7668, 4294901760
    %9599 = vmatprep.mubr.f32.mxu0 %v9598
    %v9600 = vand.u32 %v7484, 4294901760
    %9601 = vmatmul.mubr.f32.gmra.mrb[0].mxu0 %v9600
    %v9602 = vpop.f32.mrb[0].mxu0
    %v9603 = vadd.f32 %v9361, %v9602
    %v9604 = vpop.f32.mrb[0].mxu0
    %v9605 = vand.u32 %v7671, 4294901760
    %9606 = vmatprep.mubr.f32.mxu0 %v9605
    %v9607 = vand.u32 %v7486, 4294901760
    %9608 = vmatmul.mubr.f32.gmra.mrb[0].mxu0 %v9607
    %v9609 = vpop.f32.mrb[0].mxu0
    %v9610 = vadd.f32 %v9368, %v9609
    %v9611 = vpop.f32.mrb[0].mxu0
    %v9612 = vand.u32 %v7674, 4294901760
    %9613 = vmatprep.mubr.f32.mxu0 %v9612
    %v9614 = vand.u32 %v7488, 4294901760
    %9615 = vmatmul.mubr.f32.gmra.mrb[0].mxu0 %v9614
    %v9616 = vpop.f32.mrb[0].mxu0
    %v9617 = vadd.f32 %v9375, %v9616
    %v9618 = vpop.f32.mrb[0].mxu0
    %v9619 = vand.u32 %v7677, 4294901760
    %9620 = vmatprep.mubr.f32.mxu0 %v9619
    %v9621 = vand.u32 %v7490, 4294901760
    %9622 = vmatmul.mubr.f32.gmra.mrb[0].mxu0 %v9621
    %v9623 = vpop.f32.mrb[0].mxu0
    %v9624 = vadd.f32 %v9382, %v9623
    %v9625 = vpop.f32.mrb[0].mxu0
    %v9626 = vand.u32 %v7680, 4294901760
    %9627 = vmatprep.mubr.f32.mxu0 %v9626
    %v9628 = vand.u32 %v7492, 4294901760
    %9629 = vmatmul.mubr.f32.gmra.mrb[0].mxu0 %v9628
    %v9630 = vpop.f32.mrb[0].mxu0
    %v9631 = vadd.f32 %v9389, %v9630
    %v9632 = vpop.f32.mrb[0].mxu0
    %v9633 = vand.u32 %v7683, 4294901760
    %9634 = vmatprep.mubr.f32.mxu0 %v9633
    %v9635 = vand.u32 %v7494, 4294901760
    %9636 = vmatmul.mubr.f32.gmra.mrb[0].mxu0 %v9635
    %v9637 = vpop.f32.mrb[0].mxu0
    %v9638 = vadd.f32 %v9396, %v9637
    %v9639 = vpop.f32.mrb[0].mxu0
    %9640 = vdwg.mxu0
    %v9641 = vxor.u32 %v9498, 2147483648
    %v9642 = vxor.u32 %v9505, 2147483648
    %v9643 = vxor.u32 %v9512, 2147483648
    %v9644 = vxor.u32 %v9519, 2147483648
    %v9645 = vxor.u32 %v9526, 2147483648
    %v9646 = vxor.u32 %v9533, 2147483648
    %v9647 = vxor.u32 %v9540, 2147483648
    %v9648 = vxor.u32 %v9547, 2147483648
    %v9649 = vxor.u32 %v9554, 2147483648
    %v9650 = vxor.u32 %v9561, 2147483648
    %v9651 = vxor.u32 %v9568, 2147483648
    %v9652 = vxor.u32 %v9575, 2147483648
    %v9653 = vxor.u32 %v9582, 2147483648
    %v9654 = vxor.u32 %v9589, 2147483648
    %v9655 = vxor.u32 %v9596, 2147483648
    %v9656 = vxor.u32 %v9603, 2147483648
    %v9657 = vxor.u32 %v9610, 2147483648
    %v9658 = vxor.u32 %v9617, 2147483648
    %v9659 = vxor.u32 %v9624, 2147483648
    %v9660 = vxor.u32 %v9631, 2147483648
    %v9661 = vxor.u32 %v9638, 2147483648
    %v9662 = vmul.f32 %v9641, 1.442695
    %v9663 = vpow.pop %v9662
    %v9664 = vmul.f32 %v9642, 1.442695
    %v9665 = vpow.pop %v9664
    %v9666 = vmul.f32 %v9643, 1.442695
    %v9667 = vpow.pop %v9666
    %v9668 = vmul.f32 %v9644, 1.442695
    %v9669 = vpow.pop %v9668
    %v9670 = vmul.f32 %v9645, 1.442695
    %v9671 = vpow.pop %v9670
    %v9672 = vmul.f32 %v9646, 1.442695
    %v9673 = vpow.pop %v9672
    %v9674 = vmul.f32 %v9647, 1.442695
    %v9675 = vpow.pop %v9674
    %v9676 = vmul.f32 %v9648, 1.442695
    %v9677 = vpow.pop %v9676
    %v9678 = vmul.f32 %v9649, 1.442695
    %v9679 = vpow.pop %v9678
    %v9680 = vmul.f32 %v9650, 1.442695
    %v9681 = vpow.pop %v9680
    %v9682 = vmul.f32 %v9651, 1.442695
    %v9683 = vpow.pop %v9682
    %v9684 = vmul.f32 %v9652, 1.442695
    %v9685 = vpow.pop %v9684
    %v9686 = vmul.f32 %v9653, 1.442695
    %v9687 = vpow.pop %v9686
    %v9688 = vmul.f32 %v9654, 1.442695
    %v9689 = vpow.pop %v9688
    %v9690 = vmul.f32 %v9655, 1.442695
    %v9691 = vpow.pop %v9690
    %v9692 = vmul.f32 %v9656, 1.442695
    %v9693 = vpow.pop %v9692
    %v9694 = vmul.f32 %v9657, 1.442695
    %v9695 = vpow.pop %v9694
    %v9696 = vmul.f32 %v9658, 1.442695
    %v9697 = vpow.pop %v9696
    %v9698 = vmul.f32 %v9659, 1.442695
    %v9699 = vpow.pop %v9698
    %v9700 = vmul.f32 %v9660, 1.442695
    %v9701 = vpow.pop %v9700
    %v9702 = vmul.f32 %v9661, 1.442695
    %v9703 = vpow.pop %v9702
    %v9704 = vadd.f32 %v9663, 1.0
    %v9705 = vadd.f32 %v9665, 1.0
    %v9706 = vadd.f32 %v9667, 1.0
    %v9707 = vadd.f32 %v9669, 1.0
    %v9708 = vadd.f32 %v9671, 1.0
    %v9709 = vadd.f32 %v9673, 1.0
    %v9710 = vadd.f32 %v9675, 1.0
    %v9711 = vadd.f32 %v9677, 1.0
    %v9712 = vadd.f32 %v9679, 1.0
    %v9713 = vadd.f32 %v9681, 1.0
    %v9714 = vadd.f32 %v9683, 1.0
    %v9715 = vadd.f32 %v9685, 1.0
    %v9716 = vadd.f32 %v9687, 1.0
    %v9717 = vadd.f32 %v9689, 1.0
    %v9718 = vadd.f32 %v9691, 1.0
    %v9719 = vadd.f32 %v9693, 1.0
    %v9720 = vadd.f32 %v9695, 1.0
    %v9721 = vadd.f32 %v9697, 1.0
    %v9722 = vadd.f32 %v9699, 1.0
    %v9723 = vadd.f32 %v9701, 1.0
    %v9724 = vadd.f32 %v9703, 1.0
    %v9725 = vrcp.pop %v9704
    %v9726 = vmul.f32 1.0, %v9725
    %v9727 = vrcp.pop %v9705
    %v9728 = vmul.f32 1.0, %v9727
    %v9729 = vrcp.pop %v9706
    %v9730 = vmul.f32 1.0, %v9729
    %v9731 = vrcp.pop %v9707
    %v9732 = vmul.f32 1.0, %v9731
    %v9733 = vrcp.pop %v9708
    %v9734 = vmul.f32 1.0, %v9733
    %v9735 = vrcp.pop %v9709
    %v9736 = vmul.f32 1.0, %v9735
    %v9737 = vrcp.pop %v9710
    %v9738 = vmul.f32 1.0, %v9737
    %v9739 = vrcp.pop %v9711
    %v9740 = vmul.f32 1.0, %v9739
    %v9741 = vrcp.pop %v9712
    %v9742 = vmul.f32 1.0, %v9741
    %v9743 = vrcp.pop %v9713
    %v9744 = vmul.f32 1.0, %v9743
    %v9745 = vrcp.pop %v9714
    %v9746 = vmul.f32 1.0, %v9745
    %v9747 = vrcp.pop %v9715
    %v9748 = vmul.f32 1.0, %v9747
    %v9749 = vrcp.pop %v9716
    %v9750 = vmul.f32 1.0, %v9749
    %v9751 = vrcp.pop %v9717
    %v9752 = vmul.f32 1.0, %v9751
    %v9753 = vrcp.pop %v9718
    %v9754 = vmul.f32 1.0, %v9753
    %v9755 = vrcp.pop %v9719
    %v9756 = vmul.f32 1.0, %v9755
    %v9757 = vrcp.pop %v9720
    %v9758 = vmul.f32 1.0, %v9757
    %v9759 = vrcp.pop %v9721
    %v9760 = vmul.f32 1.0, %v9759
    %v9761 = vrcp.pop %v9722
    %v9762 = vmul.f32 1.0, %v9761
    %v9763 = vrcp.pop %v9723
    %v9764 = vmul.f32 1.0, %v9763
    %v9765 = vrcp.pop %v9724
    %v9766 = vmul.f32 1.0, %v9765
    %9788 = vrot.lane.b32.xlu0 %v9726, 127
    %v9789 = vpop.permute.xlu0 %9788
    %9790 = vrot.lane.b32.xlu0 %v9728, 127
    %v9791 = vpop.permute.xlu0 %9790
    %9792 = vrot.lane.b32.xlu0 %v9730, 127
    %v9793 = vpop.permute.xlu0 %9792
    %9794 = vrot.lane.b32.xlu0 %v9732, 127
    %v9795 = vpop.permute.xlu0 %9794
    %9796 = vrot.lane.b32.xlu0 %v9734, 127
    %v9797 = vpop.permute.xlu0 %9796
    %9798 = vrot.lane.b32.xlu0 %v9736, 127
    %v9799 = vpop.permute.xlu0 %9798
    %9800 = vrot.lane.b32.xlu0 %v9738, 127
    %v9801 = vpop.permute.xlu0 %9800
    %9802 = vrot.lane.b32.xlu0 %v9740, 127
    %v9803 = vpop.permute.xlu0 %9802
    %9804 = vrot.lane.b32.xlu0 %v9742, 127
    %v9805 = vpop.permute.xlu0 %9804
    %9806 = vrot.lane.b32.xlu0 %v9744, 127
    %v9807 = vpop.permute.xlu0 %9806
    %9808 = vrot.lane.b32.xlu0 %v9746, 127
    %v9809 = vpop.permute.xlu0 %9808
    %9810 = vrot.lane.b32.xlu0 %v9748, 127
    %v9811 = vpop.permute.xlu0 %9810
    %9812 = vrot.lane.b32.xlu0 %v9750, 127
    %v9813 = vpop.permute.xlu0 %9812
    %9814 = vrot.lane.b32.xlu0 %v9752, 127
    %v9815 = vpop.permute.xlu0 %9814
    %9816 = vrot.lane.b32.xlu0 %v9754, 127
    %v9817 = vpop.permute.xlu0 %9816
    %9818 = vrot.lane.b32.xlu0 %v9756, 127
    %v9819 = vpop.permute.xlu0 %9818
    %9820 = vrot.lane.b32.xlu0 %v9758, 127
    %v9821 = vpop.permute.xlu0 %9820
    %9822 = vrot.lane.b32.xlu0 %v9760, 127
    %v9823 = vpop.permute.xlu0 %9822
    %9824 = vrot.lane.b32.xlu0 %v9762, 127
    %v9825 = vpop.permute.xlu0 %9824
    %9826 = vrot.lane.b32.xlu0 %v9764, 127
    %v9827 = vpop.permute.xlu0 %9826
    %9828 = vrot.lane.b32.xlu0 %v9766, 127
    %v9829 = vpop.permute.xlu0 %9828
    %vm9851 = vcmask 228352
    %9852 = vst.msk [vmem:[#allocation2] sm:$0xff] %vm9851, %v9789
    %9853 = vst.msk [vmem:[#allocation2 + $0x8] sm:$0xff] %vm9851, %v9791
    %9854 = vst.msk [vmem:[#allocation2 + $0x10] sm:$0xff] %vm9851, %v9793
    %9855 = vst.msk [vmem:[#allocation2 + $0x18] sm:$0xff] %vm9851, %v9795
    %9856 = vst.msk [vmem:[#allocation2 + $0x20] sm:$0xff] %vm9851, %v9797
    %9857 = vst.msk [vmem:[#allocation2 + $0x28] sm:$0xff] %vm9851, %v9799
    %9858 = vst.msk [vmem:[#allocation2 + $0x30] sm:$0xff] %vm9851, %v9801
    %9859 = vst.msk [vmem:[#allocation2 + $0x38] sm:$0xff] %vm9851, %v9803
    %9860 = vst.msk [vmem:[#allocation2 + $0x40] sm:$0xff] %vm9851, %v9805
    %9861 = vst.msk [vmem:[#allocation2 + $0x48] sm:$0xff] %vm9851, %v9807
    %9862 = vst.msk [vmem:[#allocation2 + $0x50] sm:$0xff] %vm9851, %v9809
    %9863 = vst.msk [vmem:[#allocation2 + $0x58] sm:$0xff] %vm9851, %v9811
    %9864 = vst.msk [vmem:[#allocation2 + $0x60] sm:$0xff] %vm9851, %v9813
    %9865 = vst.msk [vmem:[#allocation2 + $0x68] sm:$0xff] %vm9851, %v9815
    %9866 = vst.msk [vmem:[#allocation2 + $0x70] sm:$0xff] %vm9851, %v9817
    %9867 = vst.msk [vmem:[#allocation2 + $0x78] sm:$0xff] %vm9851, %v9819
    %9868 = vst.msk [vmem:[#allocation2 + $0x80] sm:$0xff] %vm9851, %v9821
    %9869 = vst.msk [vmem:[#allocation2 + $0x88] sm:$0xff] %vm9851, %v9823
    %9870 = vst.msk [vmem:[#allocation2 + $0x90] sm:$0xff] %vm9851, %v9825
    %9871 = vst.msk [vmem:[#allocation2 + $0x98] sm:$0xff] %vm9851, %v9827
    %9872 = vst.msk [vmem:[#allocation2 + $0xa0] sm:$0xff] %vm9851, %v9829
    // Predicated region
    $region30: #{model_forward.1} parent=1 // pred_check
      _
    $region31: #{model_forward.1} parent=1 // pred_check_branch
      %9874 = sbr.rel (0) target = $region33
    $region32: #{model_forward.1} parent=1 // pred_region
      _
    $region33: #{model_forward.1} parent=1 // pred_fallthru
      _
    // Predicated region
    $region34: #{model_forward.1} parent=1 // pred_check
      _
    $region35: #{model_forward.1} parent=1 // pred_check_branch
      %9876 = sbr.rel (0) target = $region37
    $region36: #{model_forward.1} parent=1 // pred_region
      %s9878 = ssub.s32 2688, 2688
      %9879 = vsyncadd [#allocation3], %s9878
      %s9880 = sshll.u32 [#allocation2], 4
      %s9881 = int_to_ptr.vmem [resolvable:$true] %s9880
      %9886 = dma.vmem_to_hbm [thread:$0]  %s9881, 2688, %s8, [#allocation3], 128, 128, 8
    $region37: #{model_forward.1} parent=1 // pred_fallthru
      _
    // Predicated region
    $region38: #{model_forward.1} parent=1 // pred_check
      _
    $region39: #{model_forward.1} parent=1 // pred_check_branch
      %9888 = sbr.rel (0) target = $region41
    $region40: #{model_forward.1} parent=1 // pred_region
      _
    $region41: #{model_forward.1} parent=1 // pred_fallthru
      _
    // Predicated region
    $region42: #{model_forward.1} parent=1 // pred_check
      _
    $region43: #{model_forward.1} parent=1 // pred_check_branch
      %9890 = sbr.rel (0) target = $region45
    $region44: #{model_forward.1} parent=1 // pred_region
      %9891 = dma.done [#allocation3], 2688
    $region45: #{model_forward.1} parent=1 // pred_fallthru
      _
    %9892 = vsyncpa [#allocation3], 1

</llo_original>
